<compile_context>
chip_gen: v7x
topology: tpu7x:2x2x1
jax: 0.10.0
libtpu: 0.0.40
codegen_flags: <defaults>
</compile_context>

<pallas_src>
import jax
import jax.numpy as jnp
from jax.experimental import pallas as pl
from jax.experimental.pallas import tpu as pltpu


# ---------------------------------------------------------------------------
# Helpers
# ---------------------------------------------------------------------------
def _tap_offsets(H, W):
    """Flat-index offset of each of the 27 taps (kd, kh, kw), kd/kh/kw in 0..2."""
    HW = H * W
    return [(kd - 1) * HW + (kh - 1) * W + (kw - 1)
            for kd in range(3) for kh in range(3) for kw in range(3)]


def _make_tap_mask(D, H, W):
    """(27, D*H*W) f32 0/1 mask: row t is 1 where tap t's source voxel is valid."""
    dd, hh, ww = jnp.meshgrid(jnp.arange(D), jnp.arange(H), jnp.arange(W),
                              indexing="ij")
    rows = []
    for kd in range(3):
        for kh in range(3):
            for kw in range(3):
                valid = ((dd + kd - 1 >= 0) & (dd + kd - 1 < D) &
                         (hh + kh - 1 >= 0) & (hh + kh - 1 < H) &
                         (ww + kw - 1 >= 0) & (ww + kw - 1 < W))
                rows.append(valid.reshape(-1))
    return jnp.stack(rows, axis=0).astype(jnp.float32)


# ---------------------------------------------------------------------------
# Fused Pallas kernel: conv1+ReLU -> conv2+ReLU -> global-avg-pool -> FC
# ---------------------------------------------------------------------------
def _make_kernel(D, H, W, C1, C2, pad):
    HW = H * W
    DHW = D * HW
    offsets = _tap_offsets(H, W)

    def kernel(x_ref, mask_ref, w1_ref, b1_ref, w2_ref, b2_ref,
               wfc_ref, bfc_ref, o_ref,
               xpad_ref, pat1_ref, h1pad_ref, pat2_ref):
        f32 = jnp.float32

        # ---------------- conv1 (1 -> C1) -----------------------------------
        # Stage input into lane-padded scratch: interior at lane offset `pad`
        # (multiple of 128 -> aligned stores); zero only the two halo regions.
        xpad_ref[:, pl.ds(0, pad)] = jnp.zeros((1, pad), f32)
        xpad_ref[:, pl.ds(pad + DHW, pad)] = jnp.zeros((1, pad), f32)
        xpad_ref[:, pl.ds(pad, DHW)] = x_ref[...]

        # im2col rows = lane-shifted views of the padded input; h/w wrap
        # positions are zeroed by the mask, d overflow lands in the zero halo.
        for t, off in enumerate(offsets):
            tap = xpad_ref[:, pl.ds(pad + off, DHW)]                # (1, DHW)
            pat1_ref[pl.ds(t, 1), :] = tap * mask_ref[pl.ds(t, 1), :]

        h1 = jnp.dot(w1_ref[...], pat1_ref[...].astype(jnp.bfloat16),
                     preferred_element_type=f32)                     # (C1, DHW)
        h1 = jnp.maximum(h1 + b1_ref[...], 0.0)

        # ---------------- conv2 (C1 -> C2) -----------------------------------
        h1pad_ref[:, pl.ds(0, pad)] = jnp.zeros((C1, pad), f32)
        h1pad_ref[:, pl.ds(pad + DHW, pad)] = jnp.zeros((C1, pad), f32)
        h1pad_ref[:, pl.ds(pad, DHW)] = h1

        for t, off in enumerate(offsets):
            tap = h1pad_ref[:, pl.ds(pad + off, DHW)]                # (C1, DHW)
            pat2_ref[pl.ds(t * C1, C1), :] = (
                tap * mask_ref[pl.ds(t, 1), :]).astype(jnp.bfloat16)

        h2 = jnp.dot(w2_ref[...], pat2_ref[...],
                     preferred_element_type=f32)                     # (C2, DHW)
        h2 = jnp.maximum(h2 + b2_ref[...], 0.0)

        # ---------------- global average pool + FC ---------------------------
        pooled = jnp.sum(h2, axis=1, keepdims=True) * f32(1.0 / DHW)  # (C2, 1)
        o_ref[...] = (jnp.dot(wfc_ref[...], pooled, preferred_element_type=f32)
                      + bfc_ref[...])                                 # (OUT, 1)

    return kernel


# ---------------------------------------------------------------------------
# Wrapper
# ---------------------------------------------------------------------------
def cnn_3d_encoder_forward(x_ncdhw, params):
    """Forward pass equivalent to CNN_3D_Encoder(input) with heatmap_size=(9,16).

    x_ncdhw: (N, C, D, H, W)  -- PyTorch NCDHW convention (C == 1).
    returns: (N, output_size)
    """
    x = x_ncdhw.astype(jnp.float32)
    N, Cin, D, H, W = x.shape
    assert Cin == 1, "encoder expects a single input channel"
    HW, DHW = H * W, D * H * W
    C1 = params["w1"].shape[-1]
    C2 = params["w2"].shape[-1]
    OUT = params["w_fc"].shape[-1]

    # Lane padding for the flat (d*HW + h*W + w) index: covers the largest tap
    # offset HW + W + 1, rounded to a multiple of 128 so interior stores align.
    pad = pl.cdiv(HW + W + 1, 128) * 128

    x_flat = x.reshape(N, 1, DHW)                       # size-1 channel dropped

    # Conv weights in (Cout, 27*Cin) im2col layout, bf16 for the MXU.
    # TODO(synk): real PyTorch Conv3d weights are (Cout, Cin, kd, kh, kw);
    #             transpose to (kd, kh, kw, Cin, Cout) before this reshape
    #             when loading an actual checkpoint.
    w1_k = params["w1"].reshape(27 * Cin, C1).T.astype(jnp.bfloat16)   # (C1, 27)
    w2_k = params["w2"].reshape(27 * C1, C2).T.astype(jnp.bfloat16)    # (C2, 27*C1)
    wfc_t = params["w_fc"].T.astype(jnp.float32)                       # (OUT, C2)
    b1_c = params["b1"].reshape(C1, 1).astype(jnp.float32)
    b2_c = params["b2"].reshape(C2, 1).astype(jnp.float32)
    bfc_c = params["b_fc"].reshape(OUT, 1).astype(jnp.float32)
    tap_mask = _make_tap_mask(D, H, W)                                 # (27, DHW)

    kernel = _make_kernel(D, H, W, C1, C2, pad)

    out = pl.pallas_call(
        kernel,
        out_shape=jax.ShapeDtypeStruct((N, OUT, 1), jnp.float32),
        grid=(N,),
        in_specs=[
            pl.BlockSpec((None, 1, DHW), lambda n: (n, 0, 0)),     # x (one element)
            pl.BlockSpec((27, DHW), lambda n: (0, 0)),             # tap validity mask
            pl.BlockSpec((C1, 27), lambda n: (0, 0)),              # conv1 weight
            pl.BlockSpec((C1, 1), lambda n: (0, 0)),               # conv1 bias
            pl.BlockSpec((C2, 27 * C1), lambda n: (0, 0)),         # conv2 weight
            pl.BlockSpec((C2, 1), lambda n: (0, 0)),               # conv2 bias
            pl.BlockSpec((OUT, C2), lambda n: (0, 0)),             # fc weight^T
            pl.BlockSpec((OUT, 1), lambda n: (0, 0)),              # fc bias
        ],
        out_specs=pl.BlockSpec((None, OUT, 1), lambda n: (n, 0, 0)),
        scratch_shapes=[
            pltpu.VMEM((1, DHW + 2 * pad), jnp.float32),           # lane-padded x
            pltpu.VMEM((27, DHW), jnp.float32),                    # conv1 im2col
            pltpu.VMEM((C1, DHW + 2 * pad), jnp.float32),          # lane-padded h1
            pltpu.VMEM((27 * C1, DHW), jnp.bfloat16),              # conv2 im2col
        ],
        compiler_params=pltpu.CompilerParams(
            dimension_semantics=("parallel",)),                    # batch across TCs
    )(x_flat, tap_mask, w1_k, b1_c, w2_k, b2_c, wfc_t, bfc_c)

    return out.reshape(N, OUT)


# ---------------------------------------------------------------------------
# Pure-JAX reference (for correctness check)
# ---------------------------------------------------------------------------
def reference_forward(x_ncdhw, params):
    x = jnp.transpose(x_ncdhw, (0, 2, 3, 4, 1)).astype(jnp.float32)

    def conv(x, w, b):
        dn = jax.lax.conv_dimension_numbers(
            x.shape, w.shape, ("NDHWC", "DHWIO", "NDHWC"))
        y = jax.lax.conv_general_dilated(
            x, w, window_strides=(1, 1, 1), padding="SAME", dimension_numbers=dn)
        return jnp.maximum(y + b.reshape(1, 1, 1, 1, -1), 0.0)

    h1 = conv(x, params["w1"], params["b1"])
    h2 = conv(h1, params["w2"], params["b2"])
    pooled = jnp.mean(h2, axis=(1, 2, 3))
    return pooled @ params["w_fc"] + params["b_fc"]


# ---------------------------------------------------------------------------
# Main
# ---------------------------------------------------------------------------
if __name__ == "__main__":
    # Small, deterministic shapes consistent with heatmap_size=(9, 16):
    #   batch N=2, in-channels=1, depth (frames) D=8, H=9, W=16, output_size=32.
    N, Cin, D, H, W = 2, 1, 8, 9, 16
    C1, C2, OUT = 16, 32, 32

    key = jax.random.PRNGKey(0)
    kx, k1, k2, k3, k4, k5, k6 = jax.random.split(key, 7)

    x = jax.random.normal(kx, (N, Cin, D, H, W), dtype=jnp.float32)

    params = {
        "w1": 0.1 * jax.random.normal(k1, (3, 3, 3, Cin, C1), dtype=jnp.float32),
        "b1": 0.1 * jax.random.normal(k2, (1, C1), dtype=jnp.float32),
        "w2": 0.1 * jax.random.normal(k3, (3, 3, 3, C1, C2), dtype=jnp.float32),
        "b2": 0.1 * jax.random.normal(k4, (1, C2), dtype=jnp.float32),
        "w_fc": 0.1 * jax.random.normal(k5, (C2, OUT), dtype=jnp.float32),
        "b_fc": 0.1 * jax.random.normal(k6, (1, OUT), dtype=jnp.float32),
    }

    out = jax.block_until_ready(cnn_3d_encoder_forward(x, params))
    ref = jax.block_until_ready(reference_forward(x, params))

    assert out.shape == (N, OUT), out.shape
    # bf16 MXU operands (f32 accumulation) -> looser tolerance than pure f32.
    assert jnp.allclose(out, ref, atol=2e-2, rtol=2e-2), (
        f"max abs err = {jnp.max(jnp.abs(out - ref))}"
    )
    print("KERNEL_OK")
</pallas_src>

<mosaic_0001>
module attributes {stable_mosaic.version = 11 : i64} {
  func.func @kernel(%arg0: i32, %arg1: memref<1x1x1152xf32, #tpu.memory_space<vmem>>, %arg2: memref<27x1152xf32, #tpu.memory_space<vmem>>, %arg3: memref<16x27xbf16, #tpu.memory_space<vmem>>, %arg4: memref<16x1xf32, #tpu.memory_space<vmem>>, %arg5: memref<32x432xbf16, #tpu.memory_space<vmem>>, %arg6: memref<32x1xf32, #tpu.memory_space<vmem>>, %arg7: memref<32x32xf32, #tpu.memory_space<vmem>>, %arg8: memref<32x1xf32, #tpu.memory_space<vmem>>, %arg9: memref<1x32x1xf32, #tpu.memory_space<vmem>>, %arg10: memref<1x1664xf32, #tpu.memory_space<vmem>>, %arg11: memref<27x1152xf32, #tpu.memory_space<vmem>>, %arg12: memref<16x1664xf32, #tpu.memory_space<vmem>>, %arg13: memref<432x1152xbf16, #tpu.memory_space<vmem>>) attributes {dimension_semantics = [#tpu.dimension_semantics<parallel>], iteration_bounds = array<i64: 2>, scalar_prefetch = 0 : i64, scratch_operands = 4 : i64, tpu.core_type = #tpu.core_type<tc>, window_params = [{transform_indices = @transform_0, window_bounds = array<i64: 1, 1, 1152>}, {pipeline_mode = #tpu.pipeline_mode<synchronous>, transform_indices = @transform_1, window_bounds = array<i64: 27, 1152>}, {pipeline_mode = #tpu.pipeline_mode<synchronous>, transform_indices = @transform_2, window_bounds = array<i64: 16, 27>}, {pipeline_mode = #tpu.pipeline_mode<synchronous>, transform_indices = @transform_3, window_bounds = array<i64: 16, 1>}, {pipeline_mode = #tpu.pipeline_mode<synchronous>, transform_indices = @transform_4, window_bounds = array<i64: 32, 432>}, {pipeline_mode = #tpu.pipeline_mode<synchronous>, transform_indices = @transform_5, window_bounds = array<i64: 32, 1>}, {pipeline_mode = #tpu.pipeline_mode<synchronous>, transform_indices = @transform_6, window_bounds = array<i64: 32, 32>}, {pipeline_mode = #tpu.pipeline_mode<synchronous>, transform_indices = @transform_7, window_bounds = array<i64: 32, 1>}, {transform_indices = @transform_8, window_bounds = array<i64: 1, 32, 1>}]} {
    %cst = arith.constant 0.000000e+00 : f32
    %0 = vector.broadcast %cst : f32 to vector<1x256xf32>
    %c0 = arith.constant 0 : index
    %c0_0 = arith.constant 0 : index
    %1 = vector.load %arg10[%c0, %c0_0] : memref<1x1664xf32, #tpu.memory_space<vmem>>, vector<1x256xf32>
    tpu.vector_store %arg10[%c0, %c0_0], %0 {strides = array<i32>} : memref<1x1664xf32, #tpu.memory_space<vmem>>, vector<1x256xf32>,
    %cst_1 = arith.constant 0.000000e+00 : f32
    %2 = vector.broadcast %cst_1 : f32 to vector<1x256xf32>
    %c0_2 = arith.constant 0 : index
    %c1408 = arith.constant 1408 : index
    %3 = vector.load %arg10[%c0_2, %c1408] : memref<1x1664xf32, #tpu.memory_space<vmem>>, vector<1x256xf32>
    tpu.vector_store %arg10[%c0_2, %c1408], %2 {strides = array<i32>} : memref<1x1664xf32, #tpu.memory_space<vmem>>, vector<1x256xf32>,
    %c0_3 = arith.constant 0 : index
    %c0_4 = arith.constant 0 : index
    %c0_5 = arith.constant 0 : index
    %4 = vector.load %arg1[%c0_3, %c0_4, %c0_5] : memref<1x1x1152xf32, #tpu.memory_space<vmem>>, vector<1x1x1152xf32>
    %5 = vector.shape_cast %4 : vector<1x1x1152xf32> to vector<1x1152xf32>
    %c0_6 = arith.constant 0 : index
    %c256 = arith.constant 256 : index
    %6 = vector.load %arg10[%c0_6, %c256] : memref<1x1664xf32, #tpu.memory_space<vmem>>, vector<1x1152xf32>
    tpu.vector_store %arg10[%c0_6, %c256], %5 {strides = array<i32>} : memref<1x1664xf32, #tpu.memory_space<vmem>>, vector<1x1152xf32>,
    %c0_7 = arith.constant 0 : index
    %c95 = arith.constant 95 : index
    %7 = vector.load %arg10[%c0_7, %c95] : memref<1x1664xf32, #tpu.memory_space<vmem>>, vector<1x1152xf32>
    %c0_8 = arith.constant 0 : index
    %c0_9 = arith.constant 0 : index
    %8 = vector.load %arg2[%c0_8, %c0_9] : memref<27x1152xf32, #tpu.memory_space<vmem>>, vector<1x1152xf32>
    %9 = arith.mulf %7, %8 : vector<1x1152xf32>
    %c0_10 = arith.constant 0 : index
    %c0_11 = arith.constant 0 : index
    %10 = vector.load %arg11[%c0_10, %c0_11] : memref<27x1152xf32, #tpu.memory_space<vmem>>, vector<1x1152xf32>
    tpu.vector_store %arg11[%c0_10, %c0_11], %9 {strides = array<i32>} : memref<27x1152xf32, #tpu.memory_space<vmem>>, vector<1x1152xf32>,
    %c0_12 = arith.constant 0 : index
    %c96 = arith.constant 96 : index
    %11 = vector.load %arg10[%c0_12, %c96] : memref<1x1664xf32, #tpu.memory_space<vmem>>, vector<1x1152xf32>
    %c1 = arith.constant 1 : index
    %c0_13 = arith.constant 0 : index
    %12 = vector.load %arg2[%c1, %c0_13] : memref<27x1152xf32, #tpu.memory_space<vmem>>, vector<1x1152xf32>
    %13 = arith.mulf %11, %12 : vector<1x1152xf32>
    %c1_14 = arith.constant 1 : index
    %c0_15 = arith.constant 0 : index
    %14 = vector.load %arg11[%c1_14, %c0_15] : memref<27x1152xf32, #tpu.memory_space<vmem>>, vector<1x1152xf32>
    tpu.vector_store %arg11[%c1_14, %c0_15], %13 {strides = array<i32>} : memref<27x1152xf32, #tpu.memory_space<vmem>>, vector<1x1152xf32>,
    %c0_16 = arith.constant 0 : index
    %c97 = arith.constant 97 : index
    %15 = vector.load %arg10[%c0_16, %c97] : memref<1x1664xf32, #tpu.memory_space<vmem>>, vector<1x1152xf32>
    %c2 = arith.constant 2 : index
    %c0_17 = arith.constant 0 : index
    %16 = vector.load %arg2[%c2, %c0_17] : memref<27x1152xf32, #tpu.memory_space<vmem>>, vector<1x1152xf32>
    %17 = arith.mulf %15, %16 : vector<1x1152xf32>
    %c2_18 = arith.constant 2 : index
    %c0_19 = arith.constant 0 : index
    %18 = vector.load %arg11[%c2_18, %c0_19] : memref<27x1152xf32, #tpu.memory_space<vmem>>, vector<1x1152xf32>
    tpu.vector_store %arg11[%c2_18, %c0_19], %17 {strides = array<i32>} : memref<27x1152xf32, #tpu.memory_space<vmem>>, vector<1x1152xf32>,
    %c0_20 = arith.constant 0 : index
    %c111 = arith.constant 111 : index
    %19 = vector.load %arg10[%c0_20, %c111] : memref<1x1664xf32, #tpu.memory_space<vmem>>, vector<1x1152xf32>
    %c3 = arith.constant 3 : index
    %c0_21 = arith.constant 0 : index
    %20 = vector.load %arg2[%c3, %c0_21] : memref<27x1152xf32, #tpu.memory_space<vmem>>, vector<1x1152xf32>
    %21 = arith.mulf %19, %20 : vector<1x1152xf32>
    %c3_22 = arith.constant 3 : index
    %c0_23 = arith.constant 0 : index
    %22 = vector.load %arg11[%c3_22, %c0_23] : memref<27x1152xf32, #tpu.memory_space<vmem>>, vector<1x1152xf32>
    tpu.vector_store %arg11[%c3_22, %c0_23], %21 {strides = array<i32>} : memref<27x1152xf32, #tpu.memory_space<vmem>>, vector<1x1152xf32>,
    %c0_24 = arith.constant 0 : index
    %c112 = arith.constant 112 : index
    %23 = vector.load %arg10[%c0_24, %c112] : memref<1x1664xf32, #tpu.memory_space<vmem>>, vector<1x1152xf32>
    %c4 = arith.constant 4 : index
    %c0_25 = arith.constant 0 : index
    %24 = vector.load %arg2[%c4, %c0_25] : memref<27x1152xf32, #tpu.memory_space<vmem>>, vector<1x1152xf32>
    %25 = arith.mulf %23, %24 : vector<1x1152xf32>
    %c4_26 = arith.constant 4 : index
    %c0_27 = arith.constant 0 : index
    %26 = vector.load %arg11[%c4_26, %c0_27] : memref<27x1152xf32, #tpu.memory_space<vmem>>, vector<1x1152xf32>
    tpu.vector_store %arg11[%c4_26, %c0_27], %25 {strides = array<i32>} : memref<27x1152xf32, #tpu.memory_space<vmem>>, vector<1x1152xf32>,
    %c0_28 = arith.constant 0 : index
    %c113 = arith.constant 113 : index
    %27 = vector.load %arg10[%c0_28, %c113] : memref<1x1664xf32, #tpu.memory_space<vmem>>, vector<1x1152xf32>
    %c5 = arith.constant 5 : index
    %c0_29 = arith.constant 0 : index
    %28 = vector.load %arg2[%c5, %c0_29] : memref<27x1152xf32, #tpu.memory_space<vmem>>, vector<1x1152xf32>
    %29 = arith.mulf %27, %28 : vector<1x1152xf32>
    %c5_30 = arith.constant 5 : index
    %c0_31 = arith.constant 0 : index
    %30 = vector.load %arg11[%c5_30, %c0_31] : memref<27x1152xf32, #tpu.memory_space<vmem>>, vector<1x1152xf32>
    tpu.vector_store %arg11[%c5_30, %c0_31], %29 {strides = array<i32>} : memref<27x1152xf32, #tpu.memory_space<vmem>>, vector<1x1152xf32>,
    %c0_32 = arith.constant 0 : index
    %c127 = arith.constant 127 : index
    %31 = vector.load %arg10[%c0_32, %c127] : memref<1x1664xf32, #tpu.memory_space<vmem>>, vector<1x1152xf32>
    %c6 = arith.constant 6 : index
    %c0_33 = arith.constant 0 : index
    %32 = vector.load %arg2[%c6, %c0_33] : memref<27x1152xf32, #tpu.memory_space<vmem>>, vector<1x1152xf32>
    %33 = arith.mulf %31, %32 : vector<1x1152xf32>
    %c6_34 = arith.constant 6 : index
    %c0_35 = arith.constant 0 : index
    %34 = vector.load %arg11[%c6_34, %c0_35] : memref<27x1152xf32, #tpu.memory_space<vmem>>, vector<1x1152xf32>
    tpu.vector_store %arg11[%c6_34, %c0_35], %33 {strides = array<i32>} : memref<27x1152xf32, #tpu.memory_space<vmem>>, vector<1x1152xf32>,
    %c0_36 = arith.constant 0 : index
    %c128 = arith.constant 128 : index
    %35 = vector.load %arg10[%c0_36, %c128] : memref<1x1664xf32, #tpu.memory_space<vmem>>, vector<1x1152xf32>
    %c7 = arith.constant 7 : index
    %c0_37 = arith.constant 0 : index
    %36 = vector.load %arg2[%c7, %c0_37] : memref<27x1152xf32, #tpu.memory_space<vmem>>, vector<1x1152xf32>
    %37 = arith.mulf %35, %36 : vector<1x1152xf32>
    %c7_38 = arith.constant 7 : index
    %c0_39 = arith.constant 0 : index
    %38 = vector.load %arg11[%c7_38, %c0_39] : memref<27x1152xf32, #tpu.memory_space<vmem>>, vector<1x1152xf32>
    tpu.vector_store %arg11[%c7_38, %c0_39], %37 {strides = array<i32>} : memref<27x1152xf32, #tpu.memory_space<vmem>>, vector<1x1152xf32>,
    %c0_40 = arith.constant 0 : index
    %c129 = arith.constant 129 : index
    %39 = vector.load %arg10[%c0_40, %c129] : memref<1x1664xf32, #tpu.memory_space<vmem>>, vector<1x1152xf32>
    %c8 = arith.constant 8 : index
    %c0_41 = arith.constant 0 : index
    %40 = vector.load %arg2[%c8, %c0_41] : memref<27x1152xf32, #tpu.memory_space<vmem>>, vector<1x1152xf32>
    %41 = arith.mulf %39, %40 : vector<1x1152xf32>
    %c8_42 = arith.constant 8 : index
    %c0_43 = arith.constant 0 : index
    %42 = vector.load %arg11[%c8_42, %c0_43] : memref<27x1152xf32, #tpu.memory_space<vmem>>, vector<1x1152xf32>
    tpu.vector_store %arg11[%c8_42, %c0_43], %41 {strides = array<i32>} : memref<27x1152xf32, #tpu.memory_space<vmem>>, vector<1x1152xf32>,
    %c0_44 = arith.constant 0 : index
    %c239 = arith.constant 239 : index
    %43 = vector.load %arg10[%c0_44, %c239] : memref<1x1664xf32, #tpu.memory_space<vmem>>, vector<1x1152xf32>
    %c9 = arith.constant 9 : index
    %c0_45 = arith.constant 0 : index
    %44 = vector.load %arg2[%c9, %c0_45] : memref<27x1152xf32, #tpu.memory_space<vmem>>, vector<1x1152xf32>
    %45 = arith.mulf %43, %44 : vector<1x1152xf32>
    %c9_46 = arith.constant 9 : index
    %c0_47 = arith.constant 0 : index
    %46 = vector.load %arg11[%c9_46, %c0_47] : memref<27x1152xf32, #tpu.memory_space<vmem>>, vector<1x1152xf32>
    tpu.vector_store %arg11[%c9_46, %c0_47], %45 {strides = array<i32>} : memref<27x1152xf32, #tpu.memory_space<vmem>>, vector<1x1152xf32>,
    %c0_48 = arith.constant 0 : index
    %c240 = arith.constant 240 : index
    %47 = vector.load %arg10[%c0_48, %c240] : memref<1x1664xf32, #tpu.memory_space<vmem>>, vector<1x1152xf32>
    %c10 = arith.constant 10 : index
    %c0_49 = arith.constant 0 : index
    %48 = vector.load %arg2[%c10, %c0_49] : memref<27x1152xf32, #tpu.memory_space<vmem>>, vector<1x1152xf32>
    %49 = arith.mulf %47, %48 : vector<1x1152xf32>
    %c10_50 = arith.constant 10 : index
    %c0_51 = arith.constant 0 : index
    %50 = vector.load %arg11[%c10_50, %c0_51] : memref<27x1152xf32, #tpu.memory_space<vmem>>, vector<1x1152xf32>
    tpu.vector_store %arg11[%c10_50, %c0_51], %49 {strides = array<i32>} : memref<27x1152xf32, #tpu.memory_space<vmem>>, vector<1x1152xf32>,
    %c0_52 = arith.constant 0 : index
    %c241 = arith.constant 241 : index
    %51 = vector.load %arg10[%c0_52, %c241] : memref<1x1664xf32, #tpu.memory_space<vmem>>, vector<1x1152xf32>
    %c11 = arith.constant 11 : index
    %c0_53 = arith.constant 0 : index
    %52 = vector.load %arg2[%c11, %c0_53] : memref<27x1152xf32, #tpu.memory_space<vmem>>, vector<1x1152xf32>
    %53 = arith.mulf %51, %52 : vector<1x1152xf32>
    %c11_54 = arith.constant 11 : index
    %c0_55 = arith.constant 0 : index
    %54 = vector.load %arg11[%c11_54, %c0_55] : memref<27x1152xf32, #tpu.memory_space<vmem>>, vector<1x1152xf32>
    tpu.vector_store %arg11[%c11_54, %c0_55], %53 {strides = array<i32>} : memref<27x1152xf32, #tpu.memory_space<vmem>>, vector<1x1152xf32>,
    %c0_56 = arith.constant 0 : index
    %c255 = arith.constant 255 : index
    %55 = vector.load %arg10[%c0_56, %c255] : memref<1x1664xf32, #tpu.memory_space<vmem>>, vector<1x1152xf32>
    %c12 = arith.constant 12 : index
    %c0_57 = arith.constant 0 : index
    %56 = vector.load %arg2[%c12, %c0_57] : memref<27x1152xf32, #tpu.memory_space<vmem>>, vector<1x1152xf32>
    %57 = arith.mulf %55, %56 : vector<1x1152xf32>
    %c12_58 = arith.constant 12 : index
    %c0_59 = arith.constant 0 : index
    %58 = vector.load %arg11[%c12_58, %c0_59] : memref<27x1152xf32, #tpu.memory_space<vmem>>, vector<1x1152xf32>
    tpu.vector_store %arg11[%c12_58, %c0_59], %57 {strides = array<i32>} : memref<27x1152xf32, #tpu.memory_space<vmem>>, vector<1x1152xf32>,
    %c0_60 = arith.constant 0 : index
    %c256_61 = arith.constant 256 : index
    %59 = vector.load %arg10[%c0_60, %c256_61] : memref<1x1664xf32, #tpu.memory_space<vmem>>, vector<1x1152xf32>
    %c13 = arith.constant 13 : index
    %c0_62 = arith.constant 0 : index
    %60 = vector.load %arg2[%c13, %c0_62] : memref<27x1152xf32, #tpu.memory_space<vmem>>, vector<1x1152xf32>
    %61 = arith.mulf %59, %60 : vector<1x1152xf32>
    %c13_63 = arith.constant 13 : index
    %c0_64 = arith.constant 0 : index
    %62 = vector.load %arg11[%c13_63, %c0_64] : memref<27x1152xf32, #tpu.memory_space<vmem>>, vector<1x1152xf32>
    tpu.vector_store %arg11[%c13_63, %c0_64], %61 {strides = array<i32>} : memref<27x1152xf32, #tpu.memory_space<vmem>>, vector<1x1152xf32>,
    %c0_65 = arith.constant 0 : index
    %c257 = arith.constant 257 : index
    %63 = vector.load %arg10[%c0_65, %c257] : memref<1x1664xf32, #tpu.memory_space<vmem>>, vector<1x1152xf32>
    %c14 = arith.constant 14 : index
    %c0_66 = arith.constant 0 : index
    %64 = vector.load %arg2[%c14, %c0_66] : memref<27x1152xf32, #tpu.memory_space<vmem>>, vector<1x1152xf32>
    %65 = arith.mulf %63, %64 : vector<1x1152xf32>
    %c14_67 = arith.constant 14 : index
    %c0_68 = arith.constant 0 : index
    %66 = vector.load %arg11[%c14_67, %c0_68] : memref<27x1152xf32, #tpu.memory_space<vmem>>, vector<1x1152xf32>
    tpu.vector_store %arg11[%c14_67, %c0_68], %65 {strides = array<i32>} : memref<27x1152xf32, #tpu.memory_space<vmem>>, vector<1x1152xf32>,
    %c0_69 = arith.constant 0 : index
    %c271 = arith.constant 271 : index
    %67 = vector.load %arg10[%c0_69, %c271] : memref<1x1664xf32, #tpu.memory_space<vmem>>, vector<1x1152xf32>
    %c15 = arith.constant 15 : index
    %c0_70 = arith.constant 0 : index
    %68 = vector.load %arg2[%c15, %c0_70] : memref<27x1152xf32, #tpu.memory_space<vmem>>, vector<1x1152xf32>
    %69 = arith.mulf %67, %68 : vector<1x1152xf32>
    %c15_71 = arith.constant 15 : index
    %c0_72 = arith.constant 0 : index
    %70 = vector.load %arg11[%c15_71, %c0_72] : memref<27x1152xf32, #tpu.memory_space<vmem>>, vector<1x1152xf32>
    tpu.vector_store %arg11[%c15_71, %c0_72], %69 {strides = array<i32>} : memref<27x1152xf32, #tpu.memory_space<vmem>>, vector<1x1152xf32>,
    %c0_73 = arith.constant 0 : index
    %c272 = arith.constant 272 : index
    %71 = vector.load %arg10[%c0_73, %c272] : memref<1x1664xf32, #tpu.memory_space<vmem>>, vector<1x1152xf32>
    %c16 = arith.constant 16 : index
    %c0_74 = arith.constant 0 : index
    %72 = vector.load %arg2[%c16, %c0_74] : memref<27x1152xf32, #tpu.memory_space<vmem>>, vector<1x1152xf32>
    %73 = arith.mulf %71, %72 : vector<1x1152xf32>
    %c16_75 = arith.constant 16 : index
    %c0_76 = arith.constant 0 : index
    %74 = vector.load %arg11[%c16_75, %c0_76] : memref<27x1152xf32, #tpu.memory_space<vmem>>, vector<1x1152xf32>
    tpu.vector_store %arg11[%c16_75, %c0_76], %73 {strides = array<i32>} : memref<27x1152xf32, #tpu.memory_space<vmem>>, vector<1x1152xf32>,
    %c0_77 = arith.constant 0 : index
    %c273 = arith.constant 273 : index
    %75 = vector.load %arg10[%c0_77, %c273] : memref<1x1664xf32, #tpu.memory_space<vmem>>, vector<1x1152xf32>
    %c17 = arith.constant 17 : index
    %c0_78 = arith.constant 0 : index
    %76 = vector.load %arg2[%c17, %c0_78] : memref<27x1152xf32, #tpu.memory_space<vmem>>, vector<1x1152xf32>
    %77 = arith.mulf %75, %76 : vector<1x1152xf32>
    %c17_79 = arith.constant 17 : index
    %c0_80 = arith.constant 0 : index
    %78 = vector.load %arg11[%c17_79, %c0_80] : memref<27x1152xf32, #tpu.memory_space<vmem>>, vector<1x1152xf32>
    tpu.vector_store %arg11[%c17_79, %c0_80], %77 {strides = array<i32>} : memref<27x1152xf32, #tpu.memory_space<vmem>>, vector<1x1152xf32>,
    %c0_81 = arith.constant 0 : index
    %c383 = arith.constant 383 : index
    %79 = vector.load %arg10[%c0_81, %c383] : memref<1x1664xf32, #tpu.memory_space<vmem>>, vector<1x1152xf32>
    %c18 = arith.constant 18 : index
    %c0_82 = arith.constant 0 : index
    %80 = vector.load %arg2[%c18, %c0_82] : memref<27x1152xf32, #tpu.memory_space<vmem>>, vector<1x1152xf32>
    %81 = arith.mulf %79, %80 : vector<1x1152xf32>
    %c18_83 = arith.constant 18 : index
    %c0_84 = arith.constant 0 : index
    %82 = vector.load %arg11[%c18_83, %c0_84] : memref<27x1152xf32, #tpu.memory_space<vmem>>, vector<1x1152xf32>
    tpu.vector_store %arg11[%c18_83, %c0_84], %81 {strides = array<i32>} : memref<27x1152xf32, #tpu.memory_space<vmem>>, vector<1x1152xf32>,
    %c0_85 = arith.constant 0 : index
    %c384 = arith.constant 384 : index
    %83 = vector.load %arg10[%c0_85, %c384] : memref<1x1664xf32, #tpu.memory_space<vmem>>, vector<1x1152xf32>
    %c19 = arith.constant 19 : index
    %c0_86 = arith.constant 0 : index
    %84 = vector.load %arg2[%c19, %c0_86] : memref<27x1152xf32, #tpu.memory_space<vmem>>, vector<1x1152xf32>
    %85 = arith.mulf %83, %84 : vector<1x1152xf32>
    %c19_87 = arith.constant 19 : index
    %c0_88 = arith.constant 0 : index
    %86 = vector.load %arg11[%c19_87, %c0_88] : memref<27x1152xf32, #tpu.memory_space<vmem>>, vector<1x1152xf32>
    tpu.vector_store %arg11[%c19_87, %c0_88], %85 {strides = array<i32>} : memref<27x1152xf32, #tpu.memory_space<vmem>>, vector<1x1152xf32>,
    %c0_89 = arith.constant 0 : index
    %c385 = arith.constant 385 : index
    %87 = vector.load %arg10[%c0_89, %c385] : memref<1x1664xf32, #tpu.memory_space<vmem>>, vector<1x1152xf32>
    %c20 = arith.constant 20 : index
    %c0_90 = arith.constant 0 : index
    %88 = vector.load %arg2[%c20, %c0_90] : memref<27x1152xf32, #tpu.memory_space<vmem>>, vector<1x1152xf32>
    %89 = arith.mulf %87, %88 : vector<1x1152xf32>
    %c20_91 = arith.constant 20 : index
    %c0_92 = arith.constant 0 : index
    %90 = vector.load %arg11[%c20_91, %c0_92] : memref<27x1152xf32, #tpu.memory_space<vmem>>, vector<1x1152xf32>
    tpu.vector_store %arg11[%c20_91, %c0_92], %89 {strides = array<i32>} : memref<27x1152xf32, #tpu.memory_space<vmem>>, vector<1x1152xf32>,
    %c0_93 = arith.constant 0 : index
    %c399 = arith.constant 399 : index
    %91 = vector.load %arg10[%c0_93, %c399] : memref<1x1664xf32, #tpu.memory_space<vmem>>, vector<1x1152xf32>
    %c21 = arith.constant 21 : index
    %c0_94 = arith.constant 0 : index
    %92 = vector.load %arg2[%c21, %c0_94] : memref<27x1152xf32, #tpu.memory_space<vmem>>, vector<1x1152xf32>
    %93 = arith.mulf %91, %92 : vector<1x1152xf32>
    %c21_95 = arith.constant 21 : index
    %c0_96 = arith.constant 0 : index
    %94 = vector.load %arg11[%c21_95, %c0_96] : memref<27x1152xf32, #tpu.memory_space<vmem>>, vector<1x1152xf32>
    tpu.vector_store %arg11[%c21_95, %c0_96], %93 {strides = array<i32>} : memref<27x1152xf32, #tpu.memory_space<vmem>>, vector<1x1152xf32>,
    %c0_97 = arith.constant 0 : index
    %c400 = arith.constant 400 : index
    %95 = vector.load %arg10[%c0_97, %c400] : memref<1x1664xf32, #tpu.memory_space<vmem>>, vector<1x1152xf32>
    %c22 = arith.constant 22 : index
    %c0_98 = arith.constant 0 : index
    %96 = vector.load %arg2[%c22, %c0_98] : memref<27x1152xf32, #tpu.memory_space<vmem>>, vector<1x1152xf32>
    %97 = arith.mulf %95, %96 : vector<1x1152xf32>
    %c22_99 = arith.constant 22 : index
    %c0_100 = arith.constant 0 : index
    %98 = vector.load %arg11[%c22_99, %c0_100] : memref<27x1152xf32, #tpu.memory_space<vmem>>, vector<1x1152xf32>
    tpu.vector_store %arg11[%c22_99, %c0_100], %97 {strides = array<i32>} : memref<27x1152xf32, #tpu.memory_space<vmem>>, vector<1x1152xf32>,
    %c0_101 = arith.constant 0 : index
    %c401 = arith.constant 401 : index
    %99 = vector.load %arg10[%c0_101, %c401] : memref<1x1664xf32, #tpu.memory_space<vmem>>, vector<1x1152xf32>
    %c23 = arith.constant 23 : index
    %c0_102 = arith.constant 0 : index
    %100 = vector.load %arg2[%c23, %c0_102] : memref<27x1152xf32, #tpu.memory_space<vmem>>, vector<1x1152xf32>
    %101 = arith.mulf %99, %100 : vector<1x1152xf32>
    %c23_103 = arith.constant 23 : index
    %c0_104 = arith.constant 0 : index
    %102 = vector.load %arg11[%c23_103, %c0_104] : memref<27x1152xf32, #tpu.memory_space<vmem>>, vector<1x1152xf32>
    tpu.vector_store %arg11[%c23_103, %c0_104], %101 {strides = array<i32>} : memref<27x1152xf32, #tpu.memory_space<vmem>>, vector<1x1152xf32>,
    %c0_105 = arith.constant 0 : index
    %c415 = arith.constant 415 : index
    %103 = vector.load %arg10[%c0_105, %c415] : memref<1x1664xf32, #tpu.memory_space<vmem>>, vector<1x1152xf32>
    %c24 = arith.constant 24 : index
    %c0_106 = arith.constant 0 : index
    %104 = vector.load %arg2[%c24, %c0_106] : memref<27x1152xf32, #tpu.memory_space<vmem>>, vector<1x1152xf32>
    %105 = arith.mulf %103, %104 : vector<1x1152xf32>
    %c24_107 = arith.constant 24 : index
    %c0_108 = arith.constant 0 : index
    %106 = vector.load %arg11[%c24_107, %c0_108] : memref<27x1152xf32, #tpu.memory_space<vmem>>, vector<1x1152xf32>
    tpu.vector_store %arg11[%c24_107, %c0_108], %105 {strides = array<i32>} : memref<27x1152xf32, #tpu.memory_space<vmem>>, vector<1x1152xf32>,
    %c0_109 = arith.constant 0 : index
    %c416 = arith.constant 416 : index
    %107 = vector.load %arg10[%c0_109, %c416] : memref<1x1664xf32, #tpu.memory_space<vmem>>, vector<1x1152xf32>
    %c25 = arith.constant 25 : index
    %c0_110 = arith.constant 0 : index
    %108 = vector.load %arg2[%c25, %c0_110] : memref<27x1152xf32, #tpu.memory_space<vmem>>, vector<1x1152xf32>
    %109 = arith.mulf %107, %108 : vector<1x1152xf32>
    %c25_111 = arith.constant 25 : index
    %c0_112 = arith.constant 0 : index
    %110 = vector.load %arg11[%c25_111, %c0_112] : memref<27x1152xf32, #tpu.memory_space<vmem>>, vector<1x1152xf32>
    tpu.vector_store %arg11[%c25_111, %c0_112], %109 {strides = array<i32>} : memref<27x1152xf32, #tpu.memory_space<vmem>>, vector<1x1152xf32>,
    %c0_113 = arith.constant 0 : index
    %c417 = arith.constant 417 : index
    %111 = vector.load %arg10[%c0_113, %c417] : memref<1x1664xf32, #tpu.memory_space<vmem>>, vector<1x1152xf32>
    %c26 = arith.constant 26 : index
    %c0_114 = arith.constant 0 : index
    %112 = vector.load %arg2[%c26, %c0_114] : memref<27x1152xf32, #tpu.memory_space<vmem>>, vector<1x1152xf32>
    %113 = arith.mulf %111, %112 : vector<1x1152xf32>
    %c26_115 = arith.constant 26 : index
    %c0_116 = arith.constant 0 : index
    %114 = vector.load %arg11[%c26_115, %c0_116] : memref<27x1152xf32, #tpu.memory_space<vmem>>, vector<1x1152xf32>
    tpu.vector_store %arg11[%c26_115, %c0_116], %113 {strides = array<i32>} : memref<27x1152xf32, #tpu.memory_space<vmem>>, vector<1x1152xf32>,
    %c0_117 = arith.constant 0 : index
    %c0_118 = arith.constant 0 : index
    %115 = vector.load %arg3[%c0_117, %c0_118] : memref<16x27xbf16, #tpu.memory_space<vmem>>, vector<16x27xbf16>
    %c0_119 = arith.constant 0 : index
    %c0_120 = arith.constant 0 : index
    %116 = vector.load %arg11[%c0_119, %c0_120] : memref<27x1152xf32, #tpu.memory_space<vmem>>, vector<27x1152xf32>
    %117 = arith.truncf %116 : vector<27x1152xf32> to vector<27x1152xbf16>
    %cst_121 = arith.constant dense<0.000000e+00> : vector<16x1152xf32>
    %118 = tpu.matmul %115, %117, %cst_121 {dimension_numbers = #tpu.dot_dimension_numbers<[1], [0], [0], [1], [0, 0, 1, 1], [], []>} : vector<16x27xbf16>, vector<27x1152xbf16>, vector<16x1152xf32> -> vector<16x1152xf32>
    %c0_122 = arith.constant 0 : index
    %c0_123 = arith.constant 0 : index
    %119 = vector.load %arg4[%c0_122, %c0_123] : memref<16x1xf32, #tpu.memory_space<vmem>>, vector<16x1xf32>
    %120 = vector.broadcast %119 : vector<16x1xf32> to vector<16x1152xf32>
    %121 = arith.addf %118, %120 : vector<16x1152xf32>
    %cst_124 = arith.constant 0.000000e+00 : f32
    %122 = vector.broadcast %cst_124 : f32 to vector<16x1152xf32>
    %123 = arith.maximumf %121, %122 : vector<16x1152xf32>
    %cst_125 = arith.constant 0.000000e+00 : f32
    %124 = vector.broadcast %cst_125 : f32 to vector<16x256xf32>
    %c0_126 = arith.constant 0 : index
    %c0_127 = arith.constant 0 : index
    %125 = vector.load %arg12[%c0_126, %c0_127] : memref<16x1664xf32, #tpu.memory_space<vmem>>, vector<16x256xf32>
    tpu.vector_store %arg12[%c0_126, %c0_127], %124 {strides = array<i32>} : memref<16x1664xf32, #tpu.memory_space<vmem>>, vector<16x256xf32>,
    %cst_128 = arith.constant 0.000000e+00 : f32
    %126 = vector.broadcast %cst_128 : f32 to vector<16x256xf32>
    %c0_129 = arith.constant 0 : index
    %c1408_130 = arith.constant 1408 : index
    %127 = vector.load %arg12[%c0_129, %c1408_130] : memref<16x1664xf32, #tpu.memory_space<vmem>>, vector<16x256xf32>
    tpu.vector_store %arg12[%c0_129, %c1408_130], %126 {strides = array<i32>} : memref<16x1664xf32, #tpu.memory_space<vmem>>, vector<16x256xf32>,
    %c0_131 = arith.constant 0 : index
    %c256_132 = arith.constant 256 : index
    %128 = vector.load %arg12[%c0_131, %c256_132] : memref<16x1664xf32, #tpu.memory_space<vmem>>, vector<16x1152xf32>
    tpu.vector_store %arg12[%c0_131, %c256_132], %123 {strides = array<i32>} : memref<16x1664xf32, #tpu.memory_space<vmem>>, vector<16x1152xf32>,
    %c0_133 = arith.constant 0 : index
    %c95_134 = arith.constant 95 : index
    %129 = vector.load %arg12[%c0_133, %c95_134] : memref<16x1664xf32, #tpu.memory_space<vmem>>, vector<16x1152xf32>
    %c0_135 = arith.constant 0 : index
    %c0_136 = arith.constant 0 : index
    %130 = vector.load %arg2[%c0_135, %c0_136] : memref<27x1152xf32, #tpu.memory_space<vmem>>, vector<1x1152xf32>
    %131 = vector.broadcast %130 : vector<1x1152xf32> to vector<16x1152xf32>
    %132 = arith.mulf %129, %131 : vector<16x1152xf32>
    %133 = arith.truncf %132 : vector<16x1152xf32> to vector<16x1152xbf16>
    %c0_137 = arith.constant 0 : index
    %c0_138 = arith.constant 0 : index
    %134 = vector.load %arg13[%c0_137, %c0_138] : memref<432x1152xbf16, #tpu.memory_space<vmem>>, vector<16x1152xbf16>
    tpu.vector_store %arg13[%c0_137, %c0_138], %133 {strides = array<i32>} : memref<432x1152xbf16, #tpu.memory_space<vmem>>, vector<16x1152xbf16>,
    %c0_139 = arith.constant 0 : index
    %c96_140 = arith.constant 96 : index
    %135 = vector.load %arg12[%c0_139, %c96_140] : memref<16x1664xf32, #tpu.memory_space<vmem>>, vector<16x1152xf32>
    %c1_141 = arith.constant 1 : index
    %c0_142 = arith.constant 0 : index
    %136 = vector.load %arg2[%c1_141, %c0_142] : memref<27x1152xf32, #tpu.memory_space<vmem>>, vector<1x1152xf32>
    %137 = vector.broadcast %136 : vector<1x1152xf32> to vector<16x1152xf32>
    %138 = arith.mulf %135, %137 : vector<16x1152xf32>
    %139 = arith.truncf %138 : vector<16x1152xf32> to vector<16x1152xbf16>
    %c16_143 = arith.constant 16 : index
    %c0_144 = arith.constant 0 : index
    %140 = vector.load %arg13[%c16_143, %c0_144] : memref<432x1152xbf16, #tpu.memory_space<vmem>>, vector<16x1152xbf16>
    tpu.vector_store %arg13[%c16_143, %c0_144], %139 {strides = array<i32>} : memref<432x1152xbf16, #tpu.memory_space<vmem>>, vector<16x1152xbf16>,
    %c0_145 = arith.constant 0 : index
    %c97_146 = arith.constant 97 : index
    %141 = vector.load %arg12[%c0_145, %c97_146] : memref<16x1664xf32, #tpu.memory_space<vmem>>, vector<16x1152xf32>
    %c2_147 = arith.constant 2 : index
    %c0_148 = arith.constant 0 : index
    %142 = vector.load %arg2[%c2_147, %c0_148] : memref<27x1152xf32, #tpu.memory_space<vmem>>, vector<1x1152xf32>
    %143 = vector.broadcast %142 : vector<1x1152xf32> to vector<16x1152xf32>
    %144 = arith.mulf %141, %143 : vector<16x1152xf32>
    %145 = arith.truncf %144 : vector<16x1152xf32> to vector<16x1152xbf16>
    %c32 = arith.constant 32 : index
    %c0_149 = arith.constant 0 : index
    %146 = vector.load %arg13[%c32, %c0_149] : memref<432x1152xbf16, #tpu.memory_space<vmem>>, vector<16x1152xbf16>
    tpu.vector_store %arg13[%c32, %c0_149], %145 {strides = array<i32>} : memref<432x1152xbf16, #tpu.memory_space<vmem>>, vector<16x1152xbf16>,
    %c0_150 = arith.constant 0 : index
    %c111_151 = arith.constant 111 : index
    %147 = vector.load %arg12[%c0_150, %c111_151] : memref<16x1664xf32, #tpu.memory_space<vmem>>, vector<16x1152xf32>
    %c3_152 = arith.constant 3 : index
    %c0_153 = arith.constant 0 : index
    %148 = vector.load %arg2[%c3_152, %c0_153] : memref<27x1152xf32, #tpu.memory_space<vmem>>, vector<1x1152xf32>
    %149 = vector.broadcast %148 : vector<1x1152xf32> to vector<16x1152xf32>
    %150 = arith.mulf %147, %149 : vector<16x1152xf32>
    %151 = arith.truncf %150 : vector<16x1152xf32> to vector<16x1152xbf16>
    %c48 = arith.constant 48 : index
    %c0_154 = arith.constant 0 : index
    %152 = vector.load %arg13[%c48, %c0_154] : memref<432x1152xbf16, #tpu.memory_space<vmem>>, vector<16x1152xbf16>
    tpu.vector_store %arg13[%c48, %c0_154], %151 {strides = array<i32>} : memref<432x1152xbf16, #tpu.memory_space<vmem>>, vector<16x1152xbf16>,
    %c0_155 = arith.constant 0 : index
    %c112_156 = arith.constant 112 : index
    %153 = vector.load %arg12[%c0_155, %c112_156] : memref<16x1664xf32, #tpu.memory_space<vmem>>, vector<16x1152xf32>
    %c4_157 = arith.constant 4 : index
    %c0_158 = arith.constant 0 : index
    %154 = vector.load %arg2[%c4_157, %c0_158] : memref<27x1152xf32, #tpu.memory_space<vmem>>, vector<1x1152xf32>
    %155 = vector.broadcast %154 : vector<1x1152xf32> to vector<16x1152xf32>
    %156 = arith.mulf %153, %155 : vector<16x1152xf32>
    %157 = arith.truncf %156 : vector<16x1152xf32> to vector<16x1152xbf16>
    %c64 = arith.constant 64 : index
    %c0_159 = arith.constant 0 : index
    %158 = vector.load %arg13[%c64, %c0_159] : memref<432x1152xbf16, #tpu.memory_space<vmem>>, vector<16x1152xbf16>
    tpu.vector_store %arg13[%c64, %c0_159], %157 {strides = array<i32>} : memref<432x1152xbf16, #tpu.memory_space<vmem>>, vector<16x1152xbf16>,
    %c0_160 = arith.constant 0 : index
    %c113_161 = arith.constant 113 : index
    %159 = vector.load %arg12[%c0_160, %c113_161] : memref<16x1664xf32, #tpu.memory_space<vmem>>, vector<16x1152xf32>
    %c5_162 = arith.constant 5 : index
    %c0_163 = arith.constant 0 : index
    %160 = vector.load %arg2[%c5_162, %c0_163] : memref<27x1152xf32, #tpu.memory_space<vmem>>, vector<1x1152xf32>
    %161 = vector.broadcast %160 : vector<1x1152xf32> to vector<16x1152xf32>
    %162 = arith.mulf %159, %161 : vector<16x1152xf32>
    %163 = arith.truncf %162 : vector<16x1152xf32> to vector<16x1152xbf16>
    %c80 = arith.constant 80 : index
    %c0_164 = arith.constant 0 : index
    %164 = vector.load %arg13[%c80, %c0_164] : memref<432x1152xbf16, #tpu.memory_space<vmem>>, vector<16x1152xbf16>
    tpu.vector_store %arg13[%c80, %c0_164], %163 {strides = array<i32>} : memref<432x1152xbf16, #tpu.memory_space<vmem>>, vector<16x1152xbf16>,
    %c0_165 = arith.constant 0 : index
    %c127_166 = arith.constant 127 : index
    %165 = vector.load %arg12[%c0_165, %c127_166] : memref<16x1664xf32, #tpu.memory_space<vmem>>, vector<16x1152xf32>
    %c6_167 = arith.constant 6 : index
    %c0_168 = arith.constant 0 : index
    %166 = vector.load %arg2[%c6_167, %c0_168] : memref<27x1152xf32, #tpu.memory_space<vmem>>, vector<1x1152xf32>
    %167 = vector.broadcast %166 : vector<1x1152xf32> to vector<16x1152xf32>
    %168 = arith.mulf %165, %167 : vector<16x1152xf32>
    %169 = arith.truncf %168 : vector<16x1152xf32> to vector<16x1152xbf16>
    %c96_169 = arith.constant 96 : index
    %c0_170 = arith.constant 0 : index
    %170 = vector.load %arg13[%c96_169, %c0_170] : memref<432x1152xbf16, #tpu.memory_space<vmem>>, vector<16x1152xbf16>
    tpu.vector_store %arg13[%c96_169, %c0_170], %169 {strides = array<i32>} : memref<432x1152xbf16, #tpu.memory_space<vmem>>, vector<16x1152xbf16>,
    %c0_171 = arith.constant 0 : index
    %c128_172 = arith.constant 128 : index
    %171 = vector.load %arg12[%c0_171, %c128_172] : memref<16x1664xf32, #tpu.memory_space<vmem>>, vector<16x1152xf32>
    %c7_173 = arith.constant 7 : index
    %c0_174 = arith.constant 0 : index
    %172 = vector.load %arg2[%c7_173, %c0_174] : memref<27x1152xf32, #tpu.memory_space<vmem>>, vector<1x1152xf32>
    %173 = vector.broadcast %172 : vector<1x1152xf32> to vector<16x1152xf32>
    %174 = arith.mulf %171, %173 : vector<16x1152xf32>
    %175 = arith.truncf %174 : vector<16x1152xf32> to vector<16x1152xbf16>
    %c112_175 = arith.constant 112 : index
    %c0_176 = arith.constant 0 : index
    %176 = vector.load %arg13[%c112_175, %c0_176] : memref<432x1152xbf16, #tpu.memory_space<vmem>>, vector<16x1152xbf16>
    tpu.vector_store %arg13[%c112_175, %c0_176], %175 {strides = array<i32>} : memref<432x1152xbf16, #tpu.memory_space<vmem>>, vector<16x1152xbf16>,
    %c0_177 = arith.constant 0 : index
    %c129_178 = arith.constant 129 : index
    %177 = vector.load %arg12[%c0_177, %c129_178] : memref<16x1664xf32, #tpu.memory_space<vmem>>, vector<16x1152xf32>
    %c8_179 = arith.constant 8 : index
    %c0_180 = arith.constant 0 : index
    %178 = vector.load %arg2[%c8_179, %c0_180] : memref<27x1152xf32, #tpu.memory_space<vmem>>, vector<1x1152xf32>
    %179 = vector.broadcast %178 : vector<1x1152xf32> to vector<16x1152xf32>
    %180 = arith.mulf %177, %179 : vector<16x1152xf32>
    %181 = arith.truncf %180 : vector<16x1152xf32> to vector<16x1152xbf16>
    %c128_181 = arith.constant 128 : index
    %c0_182 = arith.constant 0 : index
    %182 = vector.load %arg13[%c128_181, %c0_182] : memref<432x1152xbf16, #tpu.memory_space<vmem>>, vector<16x1152xbf16>
    tpu.vector_store %arg13[%c128_181, %c0_182], %181 {strides = array<i32>} : memref<432x1152xbf16, #tpu.memory_space<vmem>>, vector<16x1152xbf16>,
    %c0_183 = arith.constant 0 : index
    %c239_184 = arith.constant 239 : index
    %183 = vector.load %arg12[%c0_183, %c239_184] : memref<16x1664xf32, #tpu.memory_space<vmem>>, vector<16x1152xf32>
    %c9_185 = arith.constant 9 : index
    %c0_186 = arith.constant 0 : index
    %184 = vector.load %arg2[%c9_185, %c0_186] : memref<27x1152xf32, #tpu.memory_space<vmem>>, vector<1x1152xf32>
    %185 = vector.broadcast %184 : vector<1x1152xf32> to vector<16x1152xf32>
    %186 = arith.mulf %183, %185 : vector<16x1152xf32>
    %187 = arith.truncf %186 : vector<16x1152xf32> to vector<16x1152xbf16>
    %c144 = arith.constant 144 : index
    %c0_187 = arith.constant 0 : index
    %188 = vector.load %arg13[%c144, %c0_187] : memref<432x1152xbf16, #tpu.memory_space<vmem>>, vector<16x1152xbf16>
    tpu.vector_store %arg13[%c144, %c0_187], %187 {strides = array<i32>} : memref<432x1152xbf16, #tpu.memory_space<vmem>>, vector<16x1152xbf16>,
    %c0_188 = arith.constant 0 : index
    %c240_189 = arith.constant 240 : index
    %189 = vector.load %arg12[%c0_188, %c240_189] : memref<16x1664xf32, #tpu.memory_space<vmem>>, vector<16x1152xf32>
    %c10_190 = arith.constant 10 : index
    %c0_191 = arith.constant 0 : index
    %190 = vector.load %arg2[%c10_190, %c0_191] : memref<27x1152xf32, #tpu.memory_space<vmem>>, vector<1x1152xf32>
    %191 = vector.broadcast %190 : vector<1x1152xf32> to vector<16x1152xf32>
    %192 = arith.mulf %189, %191 : vector<16x1152xf32>
    %193 = arith.truncf %192 : vector<16x1152xf32> to vector<16x1152xbf16>
    %c160 = arith.constant 160 : index
    %c0_192 = arith.constant 0 : index
    %194 = vector.load %arg13[%c160, %c0_192] : memref<432x1152xbf16, #tpu.memory_space<vmem>>, vector<16x1152xbf16>
    tpu.vector_store %arg13[%c160, %c0_192], %193 {strides = array<i32>} : memref<432x1152xbf16, #tpu.memory_space<vmem>>, vector<16x1152xbf16>,
    %c0_193 = arith.constant 0 : index
    %c241_194 = arith.constant 241 : index
    %195 = vector.load %arg12[%c0_193, %c241_194] : memref<16x1664xf32, #tpu.memory_space<vmem>>, vector<16x1152xf32>
    %c11_195 = arith.constant 11 : index
    %c0_196 = arith.constant 0 : index
    %196 = vector.load %arg2[%c11_195, %c0_196] : memref<27x1152xf32, #tpu.memory_space<vmem>>, vector<1x1152xf32>
    %197 = vector.broadcast %196 : vector<1x1152xf32> to vector<16x1152xf32>
    %198 = arith.mulf %195, %197 : vector<16x1152xf32>
    %199 = arith.truncf %198 : vector<16x1152xf32> to vector<16x1152xbf16>
    %c176 = arith.constant 176 : index
    %c0_197 = arith.constant 0 : index
    %200 = vector.load %arg13[%c176, %c0_197] : memref<432x1152xbf16, #tpu.memory_space<vmem>>, vector<16x1152xbf16>
    tpu.vector_store %arg13[%c176, %c0_197], %199 {strides = array<i32>} : memref<432x1152xbf16, #tpu.memory_space<vmem>>, vector<16x1152xbf16>,
    %c0_198 = arith.constant 0 : index
    %c255_199 = arith.constant 255 : index
    %201 = vector.load %arg12[%c0_198, %c255_199] : memref<16x1664xf32, #tpu.memory_space<vmem>>, vector<16x1152xf32>
    %c12_200 = arith.constant 12 : index
    %c0_201 = arith.constant 0 : index
    %202 = vector.load %arg2[%c12_200, %c0_201] : memref<27x1152xf32, #tpu.memory_space<vmem>>, vector<1x1152xf32>
    %203 = vector.broadcast %202 : vector<1x1152xf32> to vector<16x1152xf32>
    %204 = arith.mulf %201, %203 : vector<16x1152xf32>
    %205 = arith.truncf %204 : vector<16x1152xf32> to vector<16x1152xbf16>
    %c192 = arith.constant 192 : index
    %c0_202 = arith.constant 0 : index
    %206 = vector.load %arg13[%c192, %c0_202] : memref<432x1152xbf16, #tpu.memory_space<vmem>>, vector<16x1152xbf16>
    tpu.vector_store %arg13[%c192, %c0_202], %205 {strides = array<i32>} : memref<432x1152xbf16, #tpu.memory_space<vmem>>, vector<16x1152xbf16>,
    %c0_203 = arith.constant 0 : index
    %c256_204 = arith.constant 256 : index
    %207 = vector.load %arg12[%c0_203, %c256_204] : memref<16x1664xf32, #tpu.memory_space<vmem>>, vector<16x1152xf32>
    %c13_205 = arith.constant 13 : index
    %c0_206 = arith.constant 0 : index
    %208 = vector.load %arg2[%c13_205, %c0_206] : memref<27x1152xf32, #tpu.memory_space<vmem>>, vector<1x1152xf32>
    %209 = vector.broadcast %208 : vector<1x1152xf32> to vector<16x1152xf32>
    %210 = arith.mulf %207, %209 : vector<16x1152xf32>
    %211 = arith.truncf %210 : vector<16x1152xf32> to vector<16x1152xbf16>
    %c208 = arith.constant 208 : index
    %c0_207 = arith.constant 0 : index
    %212 = vector.load %arg13[%c208, %c0_207] : memref<432x1152xbf16, #tpu.memory_space<vmem>>, vector<16x1152xbf16>
    tpu.vector_store %arg13[%c208, %c0_207], %211 {strides = array<i32>} : memref<432x1152xbf16, #tpu.memory_space<vmem>>, vector<16x1152xbf16>,
    %c0_208 = arith.constant 0 : index
    %c257_209 = arith.constant 257 : index
    %213 = vector.load %arg12[%c0_208, %c257_209] : memref<16x1664xf32, #tpu.memory_space<vmem>>, vector<16x1152xf32>
    %c14_210 = arith.constant 14 : index
    %c0_211 = arith.constant 0 : index
    %214 = vector.load %arg2[%c14_210, %c0_211] : memref<27x1152xf32, #tpu.memory_space<vmem>>, vector<1x1152xf32>
    %215 = vector.broadcast %214 : vector<1x1152xf32> to vector<16x1152xf32>
    %216 = arith.mulf %213, %215 : vector<16x1152xf32>
    %217 = arith.truncf %216 : vector<16x1152xf32> to vector<16x1152xbf16>
    %c224 = arith.constant 224 : index
    %c0_212 = arith.constant 0 : index
    %218 = vector.load %arg13[%c224, %c0_212] : memref<432x1152xbf16, #tpu.memory_space<vmem>>, vector<16x1152xbf16>
    tpu.vector_store %arg13[%c224, %c0_212], %217 {strides = array<i32>} : memref<432x1152xbf16, #tpu.memory_space<vmem>>, vector<16x1152xbf16>,
    %c0_213 = arith.constant 0 : index
    %c271_214 = arith.constant 271 : index
    %219 = vector.load %arg12[%c0_213, %c271_214] : memref<16x1664xf32, #tpu.memory_space<vmem>>, vector<16x1152xf32>
    %c15_215 = arith.constant 15 : index
    %c0_216 = arith.constant 0 : index
    %220 = vector.load %arg2[%c15_215, %c0_216] : memref<27x1152xf32, #tpu.memory_space<vmem>>, vector<1x1152xf32>
    %221 = vector.broadcast %220 : vector<1x1152xf32> to vector<16x1152xf32>
    %222 = arith.mulf %219, %221 : vector<16x1152xf32>
    %223 = arith.truncf %222 : vector<16x1152xf32> to vector<16x1152xbf16>
    %c240_217 = arith.constant 240 : index
    %c0_218 = arith.constant 0 : index
    %224 = vector.load %arg13[%c240_217, %c0_218] : memref<432x1152xbf16, #tpu.memory_space<vmem>>, vector<16x1152xbf16>
    tpu.vector_store %arg13[%c240_217, %c0_218], %223 {strides = array<i32>} : memref<432x1152xbf16, #tpu.memory_space<vmem>>, vector<16x1152xbf16>,
    %c0_219 = arith.constant 0 : index
    %c272_220 = arith.constant 272 : index
    %225 = vector.load %arg12[%c0_219, %c272_220] : memref<16x1664xf32, #tpu.memory_space<vmem>>, vector<16x1152xf32>
    %c16_221 = arith.constant 16 : index
    %c0_222 = arith.constant 0 : index
    %226 = vector.load %arg2[%c16_221, %c0_222] : memref<27x1152xf32, #tpu.memory_space<vmem>>, vector<1x1152xf32>
    %227 = vector.broadcast %226 : vector<1x1152xf32> to vector<16x1152xf32>
    %228 = arith.mulf %225, %227 : vector<16x1152xf32>
    %229 = arith.truncf %228 : vector<16x1152xf32> to vector<16x1152xbf16>
    %c256_223 = arith.constant 256 : index
    %c0_224 = arith.constant 0 : index
    %230 = vector.load %arg13[%c256_223, %c0_224] : memref<432x1152xbf16, #tpu.memory_space<vmem>>, vector<16x1152xbf16>
    tpu.vector_store %arg13[%c256_223, %c0_224], %229 {strides = array<i32>} : memref<432x1152xbf16, #tpu.memory_space<vmem>>, vector<16x1152xbf16>,
    %c0_225 = arith.constant 0 : index
    %c273_226 = arith.constant 273 : index
    %231 = vector.load %arg12[%c0_225, %c273_226] : memref<16x1664xf32, #tpu.memory_space<vmem>>, vector<16x1152xf32>
    %c17_227 = arith.constant 17 : index
    %c0_228 = arith.constant 0 : index
    %232 = vector.load %arg2[%c17_227, %c0_228] : memref<27x1152xf32, #tpu.memory_space<vmem>>, vector<1x1152xf32>
    %233 = vector.broadcast %232 : vector<1x1152xf32> to vector<16x1152xf32>
    %234 = arith.mulf %231, %233 : vector<16x1152xf32>
    %235 = arith.truncf %234 : vector<16x1152xf32> to vector<16x1152xbf16>
    %c272_229 = arith.constant 272 : index
    %c0_230 = arith.constant 0 : index
    %236 = vector.load %arg13[%c272_229, %c0_230] : memref<432x1152xbf16, #tpu.memory_space<vmem>>, vector<16x1152xbf16>
    tpu.vector_store %arg13[%c272_229, %c0_230], %235 {strides = array<i32>} : memref<432x1152xbf16, #tpu.memory_space<vmem>>, vector<16x1152xbf16>,
    %c0_231 = arith.constant 0 : index
    %c383_232 = arith.constant 383 : index
    %237 = vector.load %arg12[%c0_231, %c383_232] : memref<16x1664xf32, #tpu.memory_space<vmem>>, vector<16x1152xf32>
    %c18_233 = arith.constant 18 : index
    %c0_234 = arith.constant 0 : index
    %238 = vector.load %arg2[%c18_233, %c0_234] : memref<27x1152xf32, #tpu.memory_space<vmem>>, vector<1x1152xf32>
    %239 = vector.broadcast %238 : vector<1x1152xf32> to vector<16x1152xf32>
    %240 = arith.mulf %237, %239 : vector<16x1152xf32>
    %241 = arith.truncf %240 : vector<16x1152xf32> to vector<16x1152xbf16>
    %c288 = arith.constant 288 : index
    %c0_235 = arith.constant 0 : index
    %242 = vector.load %arg13[%c288, %c0_235] : memref<432x1152xbf16, #tpu.memory_space<vmem>>, vector<16x1152xbf16>
    tpu.vector_store %arg13[%c288, %c0_235], %241 {strides = array<i32>} : memref<432x1152xbf16, #tpu.memory_space<vmem>>, vector<16x1152xbf16>,
    %c0_236 = arith.constant 0 : index
    %c384_237 = arith.constant 384 : index
    %243 = vector.load %arg12[%c0_236, %c384_237] : memref<16x1664xf32, #tpu.memory_space<vmem>>, vector<16x1152xf32>
    %c19_238 = arith.constant 19 : index
    %c0_239 = arith.constant 0 : index
    %244 = vector.load %arg2[%c19_238, %c0_239] : memref<27x1152xf32, #tpu.memory_space<vmem>>, vector<1x1152xf32>
    %245 = vector.broadcast %244 : vector<1x1152xf32> to vector<16x1152xf32>
    %246 = arith.mulf %243, %245 : vector<16x1152xf32>
    %247 = arith.truncf %246 : vector<16x1152xf32> to vector<16x1152xbf16>
    %c304 = arith.constant 304 : index
    %c0_240 = arith.constant 0 : index
    %248 = vector.load %arg13[%c304, %c0_240] : memref<432x1152xbf16, #tpu.memory_space<vmem>>, vector<16x1152xbf16>
    tpu.vector_store %arg13[%c304, %c0_240], %247 {strides = array<i32>} : memref<432x1152xbf16, #tpu.memory_space<vmem>>, vector<16x1152xbf16>,
    %c0_241 = arith.constant 0 : index
    %c385_242 = arith.constant 385 : index
    %249 = vector.load %arg12[%c0_241, %c385_242] : memref<16x1664xf32, #tpu.memory_space<vmem>>, vector<16x1152xf32>
    %c20_243 = arith.constant 20 : index
    %c0_244 = arith.constant 0 : index
    %250 = vector.load %arg2[%c20_243, %c0_244] : memref<27x1152xf32, #tpu.memory_space<vmem>>, vector<1x1152xf32>
    %251 = vector.broadcast %250 : vector<1x1152xf32> to vector<16x1152xf32>
    %252 = arith.mulf %249, %251 : vector<16x1152xf32>
    %253 = arith.truncf %252 : vector<16x1152xf32> to vector<16x1152xbf16>
    %c320 = arith.constant 320 : index
    %c0_245 = arith.constant 0 : index
    %254 = vector.load %arg13[%c320, %c0_245] : memref<432x1152xbf16, #tpu.memory_space<vmem>>, vector<16x1152xbf16>
    tpu.vector_store %arg13[%c320, %c0_245], %253 {strides = array<i32>} : memref<432x1152xbf16, #tpu.memory_space<vmem>>, vector<16x1152xbf16>,
    %c0_246 = arith.constant 0 : index
    %c399_247 = arith.constant 399 : index
    %255 = vector.load %arg12[%c0_246, %c399_247] : memref<16x1664xf32, #tpu.memory_space<vmem>>, vector<16x1152xf32>
    %c21_248 = arith.constant 21 : index
    %c0_249 = arith.constant 0 : index
    %256 = vector.load %arg2[%c21_248, %c0_249] : memref<27x1152xf32, #tpu.memory_space<vmem>>, vector<1x1152xf32>
    %257 = vector.broadcast %256 : vector<1x1152xf32> to vector<16x1152xf32>
    %258 = arith.mulf %255, %257 : vector<16x1152xf32>
    %259 = arith.truncf %258 : vector<16x1152xf32> to vector<16x1152xbf16>
    %c336 = arith.constant 336 : index
    %c0_250 = arith.constant 0 : index
    %260 = vector.load %arg13[%c336, %c0_250] : memref<432x1152xbf16, #tpu.memory_space<vmem>>, vector<16x1152xbf16>
    tpu.vector_store %arg13[%c336, %c0_250], %259 {strides = array<i32>} : memref<432x1152xbf16, #tpu.memory_space<vmem>>, vector<16x1152xbf16>,
    %c0_251 = arith.constant 0 : index
    %c400_252 = arith.constant 400 : index
    %261 = vector.load %arg12[%c0_251, %c400_252] : memref<16x1664xf32, #tpu.memory_space<vmem>>, vector<16x1152xf32>
    %c22_253 = arith.constant 22 : index
    %c0_254 = arith.constant 0 : index
    %262 = vector.load %arg2[%c22_253, %c0_254] : memref<27x1152xf32, #tpu.memory_space<vmem>>, vector<1x1152xf32>
    %263 = vector.broadcast %262 : vector<1x1152xf32> to vector<16x1152xf32>
    %264 = arith.mulf %261, %263 : vector<16x1152xf32>
    %265 = arith.truncf %264 : vector<16x1152xf32> to vector<16x1152xbf16>
    %c352 = arith.constant 352 : index
    %c0_255 = arith.constant 0 : index
    %266 = vector.load %arg13[%c352, %c0_255] : memref<432x1152xbf16, #tpu.memory_space<vmem>>, vector<16x1152xbf16>
    tpu.vector_store %arg13[%c352, %c0_255], %265 {strides = array<i32>} : memref<432x1152xbf16, #tpu.memory_space<vmem>>, vector<16x1152xbf16>,
    %c0_256 = arith.constant 0 : index
    %c401_257 = arith.constant 401 : index
    %267 = vector.load %arg12[%c0_256, %c401_257] : memref<16x1664xf32, #tpu.memory_space<vmem>>, vector<16x1152xf32>
    %c23_258 = arith.constant 23 : index
    %c0_259 = arith.constant 0 : index
    %268 = vector.load %arg2[%c23_258, %c0_259] : memref<27x1152xf32, #tpu.memory_space<vmem>>, vector<1x1152xf32>
    %269 = vector.broadcast %268 : vector<1x1152xf32> to vector<16x1152xf32>
    %270 = arith.mulf %267, %269 : vector<16x1152xf32>
    %271 = arith.truncf %270 : vector<16x1152xf32> to vector<16x1152xbf16>
    %c368 = arith.constant 368 : index
    %c0_260 = arith.constant 0 : index
    %272 = vector.load %arg13[%c368, %c0_260] : memref<432x1152xbf16, #tpu.memory_space<vmem>>, vector<16x1152xbf16>
    tpu.vector_store %arg13[%c368, %c0_260], %271 {strides = array<i32>} : memref<432x1152xbf16, #tpu.memory_space<vmem>>, vector<16x1152xbf16>,
    %c0_261 = arith.constant 0 : index
    %c415_262 = arith.constant 415 : index
    %273 = vector.load %arg12[%c0_261, %c415_262] : memref<16x1664xf32, #tpu.memory_space<vmem>>, vector<16x1152xf32>
    %c24_263 = arith.constant 24 : index
    %c0_264 = arith.constant 0 : index
    %274 = vector.load %arg2[%c24_263, %c0_264] : memref<27x1152xf32, #tpu.memory_space<vmem>>, vector<1x1152xf32>
    %275 = vector.broadcast %274 : vector<1x1152xf32> to vector<16x1152xf32>
    %276 = arith.mulf %273, %275 : vector<16x1152xf32>
    %277 = arith.truncf %276 : vector<16x1152xf32> to vector<16x1152xbf16>
    %c384_265 = arith.constant 384 : index
    %c0_266 = arith.constant 0 : index
    %278 = vector.load %arg13[%c384_265, %c0_266] : memref<432x1152xbf16, #tpu.memory_space<vmem>>, vector<16x1152xbf16>
    tpu.vector_store %arg13[%c384_265, %c0_266], %277 {strides = array<i32>} : memref<432x1152xbf16, #tpu.memory_space<vmem>>, vector<16x1152xbf16>,
    %c0_267 = arith.constant 0 : index
    %c416_268 = arith.constant 416 : index
    %279 = vector.load %arg12[%c0_267, %c416_268] : memref<16x1664xf32, #tpu.memory_space<vmem>>, vector<16x1152xf32>
    %c25_269 = arith.constant 25 : index
    %c0_270 = arith.constant 0 : index
    %280 = vector.load %arg2[%c25_269, %c0_270] : memref<27x1152xf32, #tpu.memory_space<vmem>>, vector<1x1152xf32>
    %281 = vector.broadcast %280 : vector<1x1152xf32> to vector<16x1152xf32>
    %282 = arith.mulf %279, %281 : vector<16x1152xf32>
    %283 = arith.truncf %282 : vector<16x1152xf32> to vector<16x1152xbf16>
    %c400_271 = arith.constant 400 : index
    %c0_272 = arith.constant 0 : index
    %284 = vector.load %arg13[%c400_271, %c0_272] : memref<432x1152xbf16, #tpu.memory_space<vmem>>, vector<16x1152xbf16>
    tpu.vector_store %arg13[%c400_271, %c0_272], %283 {strides = array<i32>} : memref<432x1152xbf16, #tpu.memory_space<vmem>>, vector<16x1152xbf16>,
    %c0_273 = arith.constant 0 : index
    %c417_274 = arith.constant 417 : index
    %285 = vector.load %arg12[%c0_273, %c417_274] : memref<16x1664xf32, #tpu.memory_space<vmem>>, vector<16x1152xf32>
    %c26_275 = arith.constant 26 : index
    %c0_276 = arith.constant 0 : index
    %286 = vector.load %arg2[%c26_275, %c0_276] : memref<27x1152xf32, #tpu.memory_space<vmem>>, vector<1x1152xf32>
    %287 = vector.broadcast %286 : vector<1x1152xf32> to vector<16x1152xf32>
    %288 = arith.mulf %285, %287 : vector<16x1152xf32>
    %289 = arith.truncf %288 : vector<16x1152xf32> to vector<16x1152xbf16>
    %c416_277 = arith.constant 416 : index
    %c0_278 = arith.constant 0 : index
    %290 = vector.load %arg13[%c416_277, %c0_278] : memref<432x1152xbf16, #tpu.memory_space<vmem>>, vector<16x1152xbf16>
    tpu.vector_store %arg13[%c416_277, %c0_278], %289 {strides = array<i32>} : memref<432x1152xbf16, #tpu.memory_space<vmem>>, vector<16x1152xbf16>,
    %c0_279 = arith.constant 0 : index
    %c0_280 = arith.constant 0 : index
    %291 = vector.load %arg5[%c0_279, %c0_280] : memref<32x432xbf16, #tpu.memory_space<vmem>>, vector<32x432xbf16>
    %c0_281 = arith.constant 0 : index
    %c0_282 = arith.constant 0 : index
    %292 = vector.load %arg13[%c0_281, %c0_282] : memref<432x1152xbf16, #tpu.memory_space<vmem>>, vector<432x1152xbf16>
    %cst_283 = arith.constant dense<0.000000e+00> : vector<32x1152xf32>
    %293 = tpu.matmul %291, %292, %cst_283 {dimension_numbers = #tpu.dot_dimension_numbers<[1], [0], [0], [1], [0, 0, 1, 1], [], []>} : vector<32x432xbf16>, vector<432x1152xbf16>, vector<32x1152xf32> -> vector<32x1152xf32>
    %c0_284 = arith.constant 0 : index
    %c0_285 = arith.constant 0 : index
    %294 = vector.load %arg6[%c0_284, %c0_285] : memref<32x1xf32, #tpu.memory_space<vmem>>, vector<32x1xf32>
    %295 = vector.broadcast %294 : vector<32x1xf32> to vector<32x1152xf32>
    %296 = arith.addf %293, %295 : vector<32x1152xf32>
    %cst_286 = arith.constant 0.000000e+00 : f32
    %297 = vector.broadcast %cst_286 : f32 to vector<32x1152xf32>
    %298 = arith.maximumf %296, %297 : vector<32x1152xf32>
    %cst_287 = arith.constant dense<0.000000e+00> : vector<32xf32>
    %299 = vector.multi_reduction <add>, %298, %cst_287 [1] : vector<32x1152xf32> to vector<32xf32>
    %300 = vector.shape_cast %299 : vector<32xf32> to vector<32x1xf32>
    %cst_288 = arith.constant 8.68055562E-4 : f32
    %301 = vector.broadcast %cst_288 : f32 to vector<32x1xf32>
    %302 = arith.mulf %300, %301 : vector<32x1xf32>
    %c0_289 = arith.constant 0 : index
    %c0_290 = arith.constant 0 : index
    %303 = vector.load %arg7[%c0_289, %c0_290] : memref<32x32xf32, #tpu.memory_space<vmem>>, vector<32x32xf32>
    %cst_291 = arith.constant dense<0.000000e+00> : vector<32x1xf32>
    %304 = tpu.matmul %303, %302, %cst_291 {dimension_numbers = #tpu.dot_dimension_numbers<[1], [0], [0], [1], [0, 0, 1, 1], [], []>} : vector<32x32xf32>, vector<32x1xf32>, vector<32x1xf32> -> vector<32x1xf32>
    %c0_292 = arith.constant 0 : index
    %c0_293 = arith.constant 0 : index
    %305 = vector.load %arg8[%c0_292, %c0_293] : memref<32x1xf32, #tpu.memory_space<vmem>>, vector<32x1xf32>
    %306 = arith.addf %304, %305 : vector<32x1xf32>
    %c0_294 = arith.constant 0 : index
    %c0_295 = arith.constant 0 : index
    %c0_296 = arith.constant 0 : index
    %307 = vector.load %arg9[%c0_294, %c0_295, %c0_296] : memref<1x32x1xf32, #tpu.memory_space<vmem>>, vector<1x32x1xf32>
    %308 = vector.shape_cast %307 : vector<1x32x1xf32> to vector<32x1xf32>
    %309 = vector.shape_cast %306 : vector<32x1xf32> to vector<1x32x1xf32>
    tpu.vector_store %arg9[%c0_294, %c0_295, %c0_296], %309 {strides = array<i32>} : memref<1x32x1xf32, #tpu.memory_space<vmem>>, vector<1x32x1xf32>,
    return
  }
  func.func @transform_0(%arg0: i32) -> (i32, i32, i32) {
    %c0_i32 = arith.constant 0 : i32
    %c0_i32_0 = arith.constant 0 : i32
    %c0_i32_1 = arith.constant 0 : i32
    return %arg0, %c0_i32, %c0_i32_0 : i32, i32, i32
  }
  func.func @transform_1(%arg0: i32) -> (i32, i32) {
    %c0_i32 = arith.constant 0 : i32
    %c0_i32_0 = arith.constant 0 : i32
    %c0_i32_1 = arith.constant 0 : i32
    return %c0_i32, %c0_i32_0 : i32, i32
  }
  func.func @transform_2(%arg0: i32) -> (i32, i32) {
    %c0_i32 = arith.constant 0 : i32
    %c0_i32_0 = arith.constant 0 : i32
    %c0_i32_1 = arith.constant 0 : i32
    return %c0_i32, %c0_i32_0 : i32, i32
  }
  func.func @transform_3(%arg0: i32) -> (i32, i32) {
    %c0_i32 = arith.constant 0 : i32
    %c0_i32_0 = arith.constant 0 : i32
    %c0_i32_1 = arith.constant 0 : i32
    return %c0_i32, %c0_i32_0 : i32, i32
  }
  func.func @transform_4(%arg0: i32) -> (i32, i32) {
    %c0_i32 = arith.constant 0 : i32
    %c0_i32_0 = arith.constant 0 : i32
    %c0_i32_1 = arith.constant 0 : i32
    return %c0_i32, %c0_i32_0 : i32, i32
  }
  func.func @transform_5(%arg0: i32) -> (i32, i32) {
    %c0_i32 = arith.constant 0 : i32
    %c0_i32_0 = arith.constant 0 : i32
    %c0_i32_1 = arith.constant 0 : i32
    return %c0_i32, %c0_i32_0 : i32, i32
  }
  func.func @transform_6(%arg0: i32) -> (i32, i32) {
    %c0_i32 = arith.constant 0 : i32
    %c0_i32_0 = arith.constant 0 : i32
    %c0_i32_1 = arith.constant 0 : i32
    return %c0_i32, %c0_i32_0 : i32, i32
  }
  func.func @transform_7(%arg0: i32) -> (i32, i32) {
    %c0_i32 = arith.constant 0 : i32
    %c0_i32_0 = arith.constant 0 : i32
    %c0_i32_1 = arith.constant 0 : i32
    return %c0_i32, %c0_i32_0 : i32, i32
  }
  func.func @transform_8(%arg0: i32) -> (i32, i32, i32) {
    %c0_i32 = arith.constant 0 : i32
    %c0_i32_0 = arith.constant 0 : i32
    %c0_i32_1 = arith.constant 0 : i32
    return %arg0, %c0_i32, %c0_i32_0 : i32, i32, i32
  }
}

</mosaic_0001>

<llo_original>
// kernel: tpu_custom_call.1
$region0: #{tpu_custom_call.1}
  #allocation0 [shape = 'u32[]', space=smem, size = 0x4, offset = 0x4, fixed_abs, tag = 'smem constant byte address 0x4 - core index']
  #allocation1 [shape = 'u32[144,128]{1,0:T(1,128)}', space=vmem, size = 0x12000, scoped, tag = 'internal scratch']
  #allocation2 [shape = 'f32[1,1664]{1,0:T(1,128)}', space=vmem, size = 0x1a00, scoped, tag = 'scratch operand']
  #allocation3 [shape = 'f32[27,1152]{1,0:T(8,128)}', space=vmem, size = 0x24000, scoped, tag = 'scratch operand']
  #allocation4 [shape = 'f32[16,1664]{1,0:T(8,128)}', space=vmem, size = 0x1a000, scoped, tag = 'scratch operand']
  #allocation5 [shape = 'bf16[432,1152]{1,0:T(16,128)(2,1)}', space=vmem, size = 0xf3000, scoped, tag = 'scratch operand']
  %s0 = inlined_call_operand.hbm [shape: f32[2,1,1152], index: 0, kind: input, shape index: {}]
  %s1 = inlined_call_operand.hbm [shape: f32[27,1152], index: 1, kind: input, shape index: {}]
  %s2 = inlined_call_operand.hbm [shape: bf16[16,27], index: 2, kind: input, shape index: {}]
  %s3 = inlined_call_operand.vmem [shape: f32[16,1], index: 3, kind: input, shape index: {}]
  %s4 = inlined_call_operand.vmem [shape: bf16[32,432], index: 4, kind: input, shape index: {}]
  %s5 = inlined_call_operand.vmem [shape: f32[32,1], index: 5, kind: input, shape index: {}]
  %s6 = inlined_call_operand.vmem [shape: f32[32,32], index: 6, kind: input, shape index: {}]
  %s7 = inlined_call_operand.vmem [shape: f32[32,1], index: 7, kind: input, shape index: {}]
  %s8 = inlined_call_operand.vmem [shape: f32[2,32,1], index: 8, kind: output, shape index: {}]
  %s9 = sld [smem:[#allocation0]]
  $region77: #{tpu_custom_call.1} parent=0
    _
  %s11 = ssub.s32 1, %s9
  %s12 = scalar_select 0, %s11, %s9
  $region1: #{tpu_custom_call.1} parent=0
    #allocation6 [shape = 'u8[9216]{0}', space=vmem, size = 0x2400, scoped, tag = 'input window, operand 0']
    #allocation7 [shape = 's32[2]{0}', space=sflag, size = 0x8, scoped, tag = 'scoped memory for tpu_custom_call.1']
    #allocation8 [shape = 'u8[147456]{0}', space=vmem, size = 0x24000, scoped, tag = 'input window, operand 1, single buffered']
    #allocation9 [shape = 's32[1]{0}', space=sflag, size = 0x4, scoped, tag = 'scoped memory for tpu_custom_call.1']
    #allocation10 [shape = 'u8[4096]{0}', space=vmem, size = 0x1000, scoped, tag = 'input window, operand 2, single buffered']
    %13 = vsyncpa [#allocation7], 0
    %s14 = scalar_lea.sflag [#allocation7], 1
    %15 = vsyncpa %s14, 0
    %16 = vsyncpa [#allocation9], 0
    loop: start=0, step=1, limit=4
    $region2: #{tpu_custom_call.1} parent=1 // loop_pre_header
      _
    $region3: #{tpu_custom_call.1} parent=1 // loop_header
      %s18 = sphi 0, %s22
      %p19 = scmp.ge.s32.totalorder %s18, 4
      %s28 = sphi 0, %s30
      %s31 = sphi 0, %s28
      %s32 = sphi 0, %s31
      %s48 = sphi 0, %s32
      %s52 = sphi 0, %s52
      %s54 = sphi 0, %s52
      %s55 = sphi 0, %s54
      %s69 = sphi 0, %s55
      %s73 = sphi 0, %s73
      %s75 = sphi 0, %s73
      %s76 = sphi 0, %s75
      %s90 = sphi 0, %s76
      %s94 = sphi 0, %s94
      %s96 = sphi 0, %s94
      %s97 = sphi 0, %s96
      %s111 = sphi 0, %s97
      %s115 = sphi 0, %s115
      %s117 = sphi 0, %s115
      %s118 = sphi 0, %s117
      %s132 = sphi 0, %s118
      %s136 = sphi 0, %s136
      %s138 = sphi 0, %s136
      %s139 = sphi 0, %s138
      %s153 = sphi 0, %s139
      %s157 = sphi 0, %s157
      %s159 = sphi 0, %s157
      %s160 = sphi 0, %s159
      %s174 = sphi 0, %s160
      %s178 = sphi 0, %s178
      %s180 = sphi 0, %s178
      %s181 = sphi 0, %s180
      %s195 = sphi 0, %s181
      %s201 = sphi 0, %s203
      %s204 = sphi 0, %s201
      %s205 = sphi 0, %s204
      %s221 = sphi 0, %s205
    $region4: #{tpu_custom_call.1} parent=1 // loop_header_branch
      %21 = sbr.rel (%p19) target = $region8
    $region5: #{tpu_custom_call.1} parent=1 // loop_body
      %s23 = ssub.s32 %s18, 1
      %s24 = ssub.s32 %s18, 2
      %s25 = sadd.s32 %s18, 1
      %s26 = ssub.s32 %s18, %s25
      %p27 = scmp.eq.s32.totalorder %s26, 0
      %s29 = sadd.s32 %s28, 1
      %s30 = scalar_select %p27, %s28, %s29
      %p33 = pneg %p27
      %p34 = scmp.eq.s32.totalorder %s18, 1
      %p35 = por %p33, %p34
      %p36 = scmp.ne.s32.totalorder %s28, %s31
      %p37 = scmp.eq.s32.totalorder %s18, 0
      %p38 = por %p36, %p37
      %p39 = scmp.ne.s32.totalorder %s28, %s31
      %p40 = scmp.eq.s32.totalorder %s23, 1
      %p41 = por %p39, %p40
      %p42 = scmp.ne.s32.totalorder %s31, %s32
      %p43 = scmp.eq.s32.totalorder %s23, 0
      %p44 = por %p42, %p43
      %p45 = scmp.ne.s32.totalorder %s31, %s32
      %p46 = scmp.eq.s32.totalorder %s24, 1
      %p47 = por %p45, %p46
      %p49 = scmp.ne.s32.totalorder %s32, %s48
      %p50 = scmp.eq.s32.totalorder %s24, 0
      %p51 = por %p49, %p50
      %s53 = sadd.s32 %s52, 1
      %p56 = scmp.eq.s32.totalorder %s18, 1
      %p57 = scmp.ne.s32.totalorder %s52, %s54
      %p58 = scmp.eq.s32.totalorder %s18, 0
      %p59 = por %p57, %p58
      %p60 = scmp.ne.s32.totalorder %s52, %s54
      %p61 = scmp.eq.s32.totalorder %s23, 1
      %p62 = por %p60, %p61
      %p63 = scmp.ne.s32.totalorder %s54, %s55
      %p64 = scmp.eq.s32.totalorder %s23, 0
      %p65 = por %p63, %p64
      %p66 = scmp.ne.s32.totalorder %s54, %s55
      %p67 = scmp.eq.s32.totalorder %s24, 1
      %p68 = por %p66, %p67
      %p70 = scmp.ne.s32.totalorder %s55, %s69
      %p71 = scmp.eq.s32.totalorder %s24, 0
      %p72 = por %p70, %p71
      %s74 = sadd.s32 %s73, 1
      %p77 = scmp.eq.s32.totalorder %s18, 1
      %p78 = scmp.ne.s32.totalorder %s73, %s75
      %p79 = scmp.eq.s32.totalorder %s18, 0
      %p80 = por %p78, %p79
      %p81 = scmp.ne.s32.totalorder %s73, %s75
      %p82 = scmp.eq.s32.totalorder %s23, 1
      %p83 = por %p81, %p82
      %p84 = scmp.ne.s32.totalorder %s75, %s76
      %p85 = scmp.eq.s32.totalorder %s23, 0
      %p86 = por %p84, %p85
      %p87 = scmp.ne.s32.totalorder %s75, %s76
      %p88 = scmp.eq.s32.totalorder %s24, 1
      %p89 = por %p87, %p88
      %p91 = scmp.ne.s32.totalorder %s76, %s90
      %p92 = scmp.eq.s32.totalorder %s24, 0
      %p93 = por %p91, %p92
      %s95 = sadd.s32 %s94, 1
      %p98 = scmp.eq.s32.totalorder %s18, 1
      %p99 = scmp.ne.s32.totalorder %s94, %s96
      %p100 = scmp.eq.s32.totalorder %s18, 0
      %p101 = por %p99, %p100
      %p102 = scmp.ne.s32.totalorder %s94, %s96
      %p103 = scmp.eq.s32.totalorder %s23, 1
      %p104 = por %p102, %p103
      %p105 = scmp.ne.s32.totalorder %s96, %s97
      %p106 = scmp.eq.s32.totalorder %s23, 0
      %p107 = por %p105, %p106
      %p108 = scmp.ne.s32.totalorder %s96, %s97
      %p109 = scmp.eq.s32.totalorder %s24, 1
      %p110 = por %p108, %p109
      %p112 = scmp.ne.s32.totalorder %s97, %s111
      %p113 = scmp.eq.s32.totalorder %s24, 0
      %p114 = por %p112, %p113
      %s116 = sadd.s32 %s115, 1
      %p119 = scmp.eq.s32.totalorder %s18, 1
      %p120 = scmp.ne.s32.totalorder %s115, %s117
      %p121 = scmp.eq.s32.totalorder %s18, 0
      %p122 = por %p120, %p121
      %p123 = scmp.ne.s32.totalorder %s115, %s117
      %p124 = scmp.eq.s32.totalorder %s23, 1
      %p125 = por %p123, %p124
      %p126 = scmp.ne.s32.totalorder %s117, %s118
      %p127 = scmp.eq.s32.totalorder %s23, 0
      %p128 = por %p126, %p127
      %p129 = scmp.ne.s32.totalorder %s117, %s118
      %p130 = scmp.eq.s32.totalorder %s24, 1
      %p131 = por %p129, %p130
      %p133 = scmp.ne.s32.totalorder %s118, %s132
      %p134 = scmp.eq.s32.totalorder %s24, 0
      %p135 = por %p133, %p134
      %s137 = sadd.s32 %s136, 1
      %p140 = scmp.eq.s32.totalorder %s18, 1
      %p141 = scmp.ne.s32.totalorder %s136, %s138
      %p142 = scmp.eq.s32.totalorder %s18, 0
      %p143 = por %p141, %p142
      %p144 = scmp.ne.s32.totalorder %s136, %s138
      %p145 = scmp.eq.s32.totalorder %s23, 1
      %p146 = por %p144, %p145
      %p147 = scmp.ne.s32.totalorder %s138, %s139
      %p148 = scmp.eq.s32.totalorder %s23, 0
      %p149 = por %p147, %p148
      %p150 = scmp.ne.s32.totalorder %s138, %s139
      %p151 = scmp.eq.s32.totalorder %s24, 1
      %p152 = por %p150, %p151
      %p154 = scmp.ne.s32.totalorder %s139, %s153
      %p155 = scmp.eq.s32.totalorder %s24, 0
      %p156 = por %p154, %p155
      %s158 = sadd.s32 %s157, 1
      %p161 = scmp.eq.s32.totalorder %s18, 1
      %p162 = scmp.ne.s32.totalorder %s157, %s159
      %p163 = scmp.eq.s32.totalorder %s18, 0
      %p164 = por %p162, %p163
      %p165 = scmp.ne.s32.totalorder %s157, %s159
      %p166 = scmp.eq.s32.totalorder %s23, 1
      %p167 = por %p165, %p166
      %p168 = scmp.ne.s32.totalorder %s159, %s160
      %p169 = scmp.eq.s32.totalorder %s23, 0
      %p170 = por %p168, %p169
      %p171 = scmp.ne.s32.totalorder %s159, %s160
      %p172 = scmp.eq.s32.totalorder %s24, 1
      %p173 = por %p171, %p172
      %p175 = scmp.ne.s32.totalorder %s160, %s174
      %p176 = scmp.eq.s32.totalorder %s24, 0
      %p177 = por %p175, %p176
      %s179 = sadd.s32 %s178, 1
      %p182 = scmp.eq.s32.totalorder %s18, 1
      %p183 = scmp.ne.s32.totalorder %s178, %s180
      %p184 = scmp.eq.s32.totalorder %s18, 0
      %p185 = por %p183, %p184
      %p186 = scmp.ne.s32.totalorder %s178, %s180
      %p187 = scmp.eq.s32.totalorder %s23, 1
      %p188 = por %p186, %p187
      %p189 = scmp.ne.s32.totalorder %s180, %s181
      %p190 = scmp.eq.s32.totalorder %s23, 0
      %p191 = por %p189, %p190
      %p192 = scmp.ne.s32.totalorder %s180, %s181
      %p193 = scmp.eq.s32.totalorder %s24, 1
      %p194 = por %p192, %p193
      %p196 = scmp.ne.s32.totalorder %s181, %s195
      %p197 = scmp.eq.s32.totalorder %s24, 0
      %p198 = por %p196, %p197
      %s199 = ssub.s32 %s18, %s25
      %p200 = scmp.eq.s32.totalorder %s199, 0
      %s202 = sadd.s32 %s201, 1
      %s203 = scalar_select %p200, %s201, %s202
      %p206 = pneg %p200
      %p207 = scmp.eq.s32.totalorder %s18, 1
      %p208 = por %p206, %p207
      %p209 = scmp.ne.s32.totalorder %s201, %s204
      %p210 = scmp.eq.s32.totalorder %s18, 0
      %p211 = por %p209, %p210
      %p212 = scmp.ne.s32.totalorder %s201, %s204
      %p213 = scmp.eq.s32.totalorder %s23, 1
      %p214 = por %p212, %p213
      %p215 = scmp.ne.s32.totalorder %s204, %s205
      %p216 = scmp.eq.s32.totalorder %s23, 0
      %p217 = por %p215, %p216
      %p218 = scmp.ne.s32.totalorder %s204, %s205
      %p219 = scmp.eq.s32.totalorder %s24, 1
      %p220 = por %p218, %p219
      %p222 = scmp.ne.s32.totalorder %s205, %s221
      %p223 = scmp.eq.s32.totalorder %s24, 0
      %p224 = por %p222, %p223
      %p225 = scmp.le.s32.totalorder 1, %s18
      %p226 = scmp.lt.s32.totalorder %s18, 3
      %p227 = pnand %p225, %p226
      %p228 = pneg %p227
      // Predicated region
      $region9: #{tpu_custom_call.1} parent=5 // pred_check
        _
      $region10: #{tpu_custom_call.1} parent=5 // pred_check_branch
        %230 = sbr.rel (%p227) target = $region12
      $region11: #{tpu_custom_call.1} parent=5 // pred_region
        %s231 = ssub.s32 %s18, 1
        // Predicated region
        $region13: #{tpu_custom_call.1} parent=11 // pred_check
          %p232 = pneg %p65
        $region14: #{tpu_custom_call.1} parent=11 // pred_check_branch
          %234 = sbr.rel (%p232) target = $region16
        $region15: #{tpu_custom_call.1} parent=11 // pred_region
          %s236 = ssub.s32 4608, 4608
          %237 = vsyncadd [#allocation9], %s236
          %s238 = sshll.u32 [#allocation8], 4
          %s239 = int_to_ptr.vmem [resolvable:$true] %s238
          %244 = dma.hbm_to_vmem [thread:$0]  %s1, 4608, %s239, [#allocation9], 1152, 1152, 72
        $region16: #{tpu_custom_call.1} parent=11 // pred_fallthru
          _
        // Predicated region
        $region17: #{tpu_custom_call.1} parent=11 // pred_check
          %p245 = pneg %p86
        $region18: #{tpu_custom_call.1} parent=11 // pred_check_branch
          %247 = sbr.rel (%p245) target = $region20
        $region19: #{tpu_custom_call.1} parent=11 // pred_region
          %s249 = ssub.s32 128, 128
          %250 = vsyncadd [#allocation9], %s249
          %s251 = sshll.u32 [#allocation10], 4
          %s252 = int_to_ptr.vmem [resolvable:$true] %s251
          %257 = dma.hbm_to_vmem [thread:$0]  %s2, 128, %s252, [#allocation9], 64, 64, 4
        $region20: #{tpu_custom_call.1} parent=11 // pred_fallthru
          _
        // Predicated region
        $region21: #{tpu_custom_call.1} parent=11 // pred_check
          %p258 = pneg %p107
        $region22: #{tpu_custom_call.1} parent=11 // pred_check_branch
          %260 = sbr.rel (%p258) target = $region24
        $region23: #{tpu_custom_call.1} parent=11 // pred_region
          _
        $region24: #{tpu_custom_call.1} parent=11 // pred_fallthru
          _
        // Predicated region
        $region25: #{tpu_custom_call.1} parent=11 // pred_check
          %p261 = pneg %p128
        $region26: #{tpu_custom_call.1} parent=11 // pred_check_branch
          %263 = sbr.rel (%p261) target = $region28
        $region27: #{tpu_custom_call.1} parent=11 // pred_region
          _
        $region28: #{tpu_custom_call.1} parent=11 // pred_fallthru
          _
        // Predicated region
        $region29: #{tpu_custom_call.1} parent=11 // pred_check
          %p264 = pneg %p149
        $region30: #{tpu_custom_call.1} parent=11 // pred_check_branch
          %266 = sbr.rel (%p264) target = $region32
        $region31: #{tpu_custom_call.1} parent=11 // pred_region
          _
        $region32: #{tpu_custom_call.1} parent=11 // pred_fallthru
          _
        // Predicated region
        $region33: #{tpu_custom_call.1} parent=11 // pred_check
          %p267 = pneg %p170
        $region34: #{tpu_custom_call.1} parent=11 // pred_check_branch
          %269 = sbr.rel (%p267) target = $region36
        $region35: #{tpu_custom_call.1} parent=11 // pred_region
          _
        $region36: #{tpu_custom_call.1} parent=11 // pred_fallthru
          _
        // Predicated region
        $region37: #{tpu_custom_call.1} parent=11 // pred_check
          %p270 = pneg %p191
        $region38: #{tpu_custom_call.1} parent=11 // pred_check_branch
          %272 = sbr.rel (%p270) target = $region40
        $region39: #{tpu_custom_call.1} parent=11 // pred_region
          _
        $region40: #{tpu_custom_call.1} parent=11 // pred_fallthru
          _
      $region12: #{tpu_custom_call.1} parent=5 // pred_fallthru
        _
      %p273 = scmp.lt.s32.totalorder %s18, 2
      // Predicated region
      $region41: #{tpu_custom_call.1} parent=5 // pred_check
        %p274 = pneg %p273
      $region42: #{tpu_custom_call.1} parent=5 // pred_check_branch
        %276 = sbr.rel (%p274) target = $region44
      $region43: #{tpu_custom_call.1} parent=5 // pred_region
        // Predicated region
        $region45: #{tpu_custom_call.1} parent=43 // pred_check
          %p277 = pneg %p38
        $region46: #{tpu_custom_call.1} parent=43 // pred_check_branch
          %279 = sbr.rel (%p277) target = $region48
        $region47: #{tpu_custom_call.1} parent=43 // pred_region
          %s280 = sand.u32 %s28, 1
          %s281 = scalar_lea.sflag [#allocation7], %s280
          %s282 = sand.u32 %s28, 1
          %s283 = smul.addr %s282, 9
          %s284 = scalar_lea.vmem [#allocation6], %s283
          %s286 = ssub.s32 144, 144
          %287 = vsyncadd %s281, %s286
          %s288 = smul.addr %s18, 9
          %s289 = smul.addr %s288, 16
          %s290 = scalar_lea.hbm %s0, %s289
          %s292 = sshll.u32 %s284, 4
          %s293 = int_to_ptr.vmem [resolvable:$true] %s292
          %295 = dma.hbm_to_vmem [thread:$0]  %s290, 144, %s293, %s281
        $region48: #{tpu_custom_call.1} parent=43 // pred_fallthru
          _
      $region44: #{tpu_custom_call.1} parent=5 // pred_fallthru
        _
      %p296 = scmp.le.s32.totalorder 1, %s18
      %p297 = scmp.lt.s32.totalorder %s18, 3
      %p298 = pnand %p296, %p297
      %p299 = pneg %p298
      // Predicated region
      $region49: #{tpu_custom_call.1} parent=5 // pred_check
        _
      $region50: #{tpu_custom_call.1} parent=5 // pred_check_branch
        %301 = sbr.rel (%p298) target = $region52
      $region51: #{tpu_custom_call.1} parent=5 // pred_region
        %s302 = ssub.s32 %s18, 1
        %s303 = sand.u32 %s31, 1
        %s304 = scalar_lea.sflag [#allocation7], %s303
        %s305 = sand.u32 %s31, 1
        %s306 = smul.addr %s305, 9
        %s307 = scalar_lea.vmem [#allocation6], %s306
        // Predicated region
        $region53: #{tpu_custom_call.1} parent=51 // pred_check
          %p308 = pneg %p44
        $region54: #{tpu_custom_call.1} parent=51 // pred_check_branch
          %310 = sbr.rel (%p308) target = $region56
        $region55: #{tpu_custom_call.1} parent=51 // pred_region
          %311 = dma.done %s304, 144
        $region56: #{tpu_custom_call.1} parent=51 // pred_fallthru
          _
        // Predicated region
        $region57: #{tpu_custom_call.1} parent=51 // pred_check
          %p312 = pneg %p65
        $region58: #{tpu_custom_call.1} parent=51 // pred_check_branch
          %314 = sbr.rel (%p312) target = $region60
        $region59: #{tpu_custom_call.1} parent=51 // pred_region
          %315 = dma.done [#allocation9], 4608
        $region60: #{tpu_custom_call.1} parent=51 // pred_fallthru
          _
        // Predicated region
        $region61: #{tpu_custom_call.1} parent=51 // pred_check
          %p316 = pneg %p86
        $region62: #{tpu_custom_call.1} parent=51 // pred_check_branch
          %318 = sbr.rel (%p316) target = $region64
        $region63: #{tpu_custom_call.1} parent=51 // pred_region
          %319 = dma.done [#allocation9], 128
        $region64: #{tpu_custom_call.1} parent=51 // pred_fallthru
          _
        %s320 = sand.u32 %s31, 1
        %s321 = scalar_lea.sflag [#allocation7], %s320
        %s322 = sand.u32 %s31, 1
        %s323 = smul.addr %s322, 9
        %s324 = scalar_lea.vmem [#allocation6], %s323
        %p325 = pneg %p44
        %p326 = pneg %p41
        %p327 = pneg %p65
        %p328 = pneg %p62
        %p329 = pneg %p86
        %p330 = pneg %p83
        %p331 = pneg %p107
        %p332 = pneg %p104
        %p333 = pneg %p128
        %p334 = pneg %p125
        %p335 = pneg %p149
        %p336 = pneg %p146
        %p337 = pneg %p170
        %p338 = pneg %p167
        %p339 = pneg %p191
        %p340 = pneg %p188
        %p341 = pneg %p217
        %p342 = pneg %p214
        %p343 = scmp.lt.s32.totalorder %s23, 1
        %s344 = scalar_select %p343, %s23, 1
        %s345 = smul.addr %s344, 4
        %s346 = smul.addr %s345, 8
        %s347 = scalar_lea.vmem %s8, %s346
        %p348 = scmp.lt.s32.totalorder %s23, 1
        %s349 = scalar_select %p348, %s23, 1
        %s350 = smul.addr %s349, 4
        %s351 = smul.addr %s350, 8
        %s352 = scalar_lea.vmem %s8, %s351
        %v354 = vlaneseq
        %vm355 = vcmp.ge.s32.totalorder %v354, 0
        %vm356 = vcmp.lt.s32.totalorder %v354, 256
        %vm357 = vmand %vm355, %vm356
        %358 = vst.msk [vmem:[#allocation2] sm:$0x3] %vm357, 0.0
        %359 = vst.msk [vmem:[#allocation2 + $0xb] sm:$0x3] %vm357, 0.0
        %v360 = vld [vmem:[%s307] sm:$0xff]
        %v361 = vld [vmem:[%s307 + $0x8] sm:$0x1]
        %362 = vst [vmem:[#allocation2 + $0x2] sm:$0xff] %v360
        %vm363 = vcmp.lt.s32.totalorder %v354, 128
        %vm364 = vmand %vm355, %vm363
        %365 = vst.msk [vmem:[#allocation2 + $0xa] sm:$0x1] %vm364, %v361
        %v366 = vld [vmem:[#allocation2] sm:$0xff]
        %v367 = vld [vmem:[#allocation2 + $0x8] sm:$0x3]
        %v368 = vld [vmem:[#allocation8] ss:$8 sm:$0xf]
        %v369 = vld [vmem:[#allocation8] ss:$8 sm:$0xf0]
        %v370 = vor.u32 %v368, %v369
        %s371 = scalar_lea.vmem [#allocation8], 64
        %v372 = vld [vmem:[%s371] ss:$8 sm:$0x1]
        %375 = vrot.lane.b32.xlu0 %v370, 95
        %v376 = vpop.permute.xlu0 %375
        %377 = vrot.lane.b32.xlu0 %v372, 95
        %v378 = vpop.permute.xlu0 %377
        %v379 = vrot.slane %v376, 7
        %v380 = vrot.slane %v378, 7
        %vm381 = vcmask 777216
        %v382 = vsel %vm381, %v379, %v376
        %vm383 = vcmask 1040384
        %v384 = vsel %vm383, %v379, %v380
        %v385 = vsel %vm381, %v384, %v378
        %v388 = vmul.f32 %v366, %v382
        %v389 = vmul.f32 %v367, %v385
        %392 = vrot.lane.b32.xlu0 %v388, 33
        %v393 = vpop.permute.xlu0 %392
        %394 = vrot.lane.b32.xlu0 %v389, 33
        %v395 = vpop.permute.xlu0 %394
        %v396 = vrot.slane %v393, 1
        %v397 = vrot.slane %v395, 1
        %vm398 = vcmask 1046528
        %v399 = vsel %vm398, %v396, %v397
        %vm400 = vcmask 269312
        %v401 = vsel %vm400, %v393, %v399
        %v402 = vsel %vm400, %v395, %v397
        %405 = vst [vmem:[#allocation3] ss:$8 sm:$0xf] %v401
        %406 = vst [vmem:[#allocation3] ss:$8 sm:$0xf0] %v401
        %s407 = scalar_lea.vmem [#allocation3], 64
        %408 = vst.msk [vmem:[%s407] ss:$8 sm:$0x1] %vm364, %v402
        %409 = vst.msk [vmem:[%s407] ss:$8 sm:$0x0] %vm364, %v402
        %v410 = vld [vmem:[#allocation2] sm:$0xff]
        %v411 = vld [vmem:[#allocation2 + $0x8] sm:$0x3]
        %s412 = scalar_lea.vmem [#allocation8], 1
        %v413 = vld [vmem:[%s412] ss:$8 sm:$0xf]
        %v414 = vld [vmem:[%s412] ss:$8 sm:$0xf0]
        %v415 = vor.u32 %v413, %v414
        %s416 = scalar_lea.vmem [#allocation8], 65
        %v417 = vld [vmem:[%s416] ss:$8 sm:$0x1]
        %420 = vrot.lane.b32.xlu0 %v415, 96
        %v421 = vpop.permute.xlu0 %420
        %422 = vrot.lane.b32.xlu0 %v417, 96
        %v423 = vpop.permute.xlu0 %422
        %v424 = vrot.slane %v421, 7
        %v425 = vrot.slane %v423, 7
        %vm426 = vcmask 785408
        %v427 = vsel %vm426, %v424, %v421
        %v428 = vsel %vm383, %v424, %v425
        %v429 = vsel %vm426, %v428, %v423
        %v432 = vmul.f32 %v410, %v427
        %v433 = vmul.f32 %v411, %v429
        %436 = vrot.lane.b32.xlu0 %v432, 32
        %v437 = vpop.permute.xlu0 %436
        %438 = vrot.lane.b32.xlu0 %v433, 32
        %v439 = vpop.permute.xlu0 %438
        %v440 = vrot.slane %v437, 1
        %v441 = vrot.slane %v439, 1
        %v442 = vsel %vm398, %v440, %v441
        %vm443 = vcmask 261120
        %v444 = vsel %vm443, %v437, %v442
        %v445 = vsel %vm443, %v439, %v441
        %s448 = scalar_lea.vmem [#allocation3], 1
        %449 = vst [vmem:[%s448] ss:$8 sm:$0xf] %v444
        %450 = vst [vmem:[%s448] ss:$8 sm:$0xf0] %v444
        %s451 = scalar_lea.vmem [#allocation3], 65
        %452 = vst.msk [vmem:[%s451] ss:$8 sm:$0x1] %vm364, %v445
        %453 = vst.msk [vmem:[%s451] ss:$8 sm:$0x0] %vm364, %v445
        %v454 = vld [vmem:[#allocation2] sm:$0xff]
        %v455 = vld [vmem:[#allocation2 + $0x8] sm:$0x3]
        %s456 = scalar_lea.vmem [#allocation8], 2
        %v457 = vld [vmem:[%s456] ss:$8 sm:$0xf]
        %v458 = vld [vmem:[%s456] ss:$8 sm:$0xf0]
        %v459 = vor.u32 %v457, %v458
        %s460 = scalar_lea.vmem [#allocation8], 66
        %v461 = vld [vmem:[%s460] ss:$8 sm:$0x1]
        %464 = vrot.lane.b32.xlu0 %v459, 97
        %v465 = vpop.permute.xlu0 %464
        %466 = vrot.lane.b32.xlu0 %v461, 97
        %v467 = vpop.permute.xlu0 %466
        %v468 = vrot.slane %v465, 7
        %v469 = vrot.slane %v467, 7
        %vm470 = vcmask 793600
        %v471 = vsel %vm470, %v468, %v465
        %v472 = vsel %vm383, %v468, %v469
        %v473 = vsel %vm470, %v472, %v467
        %v476 = vmul.f32 %v454, %v471
        %v477 = vmul.f32 %v455, %v473
        %480 = vrot.lane.b32.xlu0 %v476, 31
        %v481 = vpop.permute.xlu0 %480
        %482 = vrot.lane.b32.xlu0 %v477, 31
        %v483 = vpop.permute.xlu0 %482
        %v484 = vrot.slane %v481, 1
        %v485 = vrot.slane %v483, 1
        %v486 = vsel %vm398, %v484, %v485
        %vm487 = vcmask 252928
        %v488 = vsel %vm487, %v481, %v486
        %v489 = vsel %vm487, %v483, %v485
        %s492 = scalar_lea.vmem [#allocation3], 2
        %493 = vst [vmem:[%s492] ss:$8 sm:$0xf] %v488
        %494 = vst [vmem:[%s492] ss:$8 sm:$0xf0] %v488
        %s495 = scalar_lea.vmem [#allocation3], 66
        %496 = vst.msk [vmem:[%s495] ss:$8 sm:$0x1] %vm364, %v489
        %497 = vst.msk [vmem:[%s495] ss:$8 sm:$0x0] %vm364, %v489
        %v498 = vld [vmem:[#allocation2] sm:$0xff]
        %v499 = vld [vmem:[#allocation2 + $0x8] sm:$0x3]
        %s500 = scalar_lea.vmem [#allocation8], 3
        %v501 = vld [vmem:[%s500] ss:$8 sm:$0xf]
        %v502 = vld [vmem:[%s500] ss:$8 sm:$0xf0]
        %v503 = vor.u32 %v501, %v502
        %s504 = scalar_lea.vmem [#allocation8], 67
        %v505 = vld [vmem:[%s504] ss:$8 sm:$0x1]
        %508 = vrot.lane.b32.xlu0 %v503, 111
        %v509 = vpop.permute.xlu0 %508
        %510 = vrot.lane.b32.xlu0 %v505, 111
        %v511 = vpop.permute.xlu0 %510
        %v512 = vrot.slane %v509, 7
        %v513 = vrot.slane %v511, 7
        %vm514 = vcmask 908288
        %v515 = vsel %vm514, %v512, %v509
        %v516 = vsel %vm383, %v512, %v513
        %v517 = vsel %vm514, %v516, %v511
        %v520 = vmul.f32 %v498, %v515
        %v521 = vmul.f32 %v499, %v517
        %524 = vrot.lane.b32.xlu0 %v520, 17
        %v525 = vpop.permute.xlu0 %524
        %526 = vrot.lane.b32.xlu0 %v521, 17
        %v527 = vpop.permute.xlu0 %526
        %v528 = vrot.slane %v525, 1
        %v529 = vrot.slane %v527, 1
        %v530 = vsel %vm398, %v528, %v529
        %vm531 = vcmask 138240
        %v532 = vsel %vm531, %v525, %v530
        %v533 = vsel %vm531, %v527, %v529
        %s536 = scalar_lea.vmem [#allocation3], 3
        %537 = vst [vmem:[%s536] ss:$8 sm:$0xf] %v532
        %538 = vst [vmem:[%s536] ss:$8 sm:$0xf0] %v532
        %s539 = scalar_lea.vmem [#allocation3], 67
        %540 = vst.msk [vmem:[%s539] ss:$8 sm:$0x1] %vm364, %v533
        %541 = vst.msk [vmem:[%s539] ss:$8 sm:$0x0] %vm364, %v533
        %v542 = vld [vmem:[#allocation2] sm:$0xff]
        %v543 = vld [vmem:[#allocation2 + $0x8] sm:$0x3]
        %s544 = scalar_lea.vmem [#allocation8], 4
        %v545 = vld [vmem:[%s544] ss:$8 sm:$0xf]
        %v546 = vld [vmem:[%s544] ss:$8 sm:$0xf0]
        %v547 = vor.u32 %v545, %v546
        %s548 = scalar_lea.vmem [#allocation8], 68
        %v549 = vld [vmem:[%s548] ss:$8 sm:$0x1]
        %552 = vrot.lane.b32.xlu0 %v547, 112
        %v553 = vpop.permute.xlu0 %552
        %554 = vrot.lane.b32.xlu0 %v549, 112
        %v555 = vpop.permute.xlu0 %554
        %v556 = vrot.slane %v553, 7
        %v557 = vrot.slane %v555, 7
        %vm558 = vcmask 916480
        %v559 = vsel %vm558, %v556, %v553
        %v560 = vsel %vm383, %v556, %v557
        %v561 = vsel %vm558, %v560, %v555
        %v564 = vmul.f32 %v542, %v559
        %v565 = vmul.f32 %v543, %v561
        %568 = vrot.lane.b32.xlu0 %v564, 16
        %v569 = vpop.permute.xlu0 %568
        %570 = vrot.lane.b32.xlu0 %v565, 16
        %v571 = vpop.permute.xlu0 %570
        %v572 = vrot.slane %v569, 1
        %v573 = vrot.slane %v571, 1
        %v574 = vsel %vm398, %v572, %v573
        %vm575 = vcmask 130048
        %v576 = vsel %vm575, %v569, %v574
        %v577 = vsel %vm575, %v571, %v573
        %s580 = scalar_lea.vmem [#allocation3], 4
        %581 = vst [vmem:[%s580] ss:$8 sm:$0xf] %v576
        %582 = vst [vmem:[%s580] ss:$8 sm:$0xf0] %v576
        %s583 = scalar_lea.vmem [#allocation3], 68
        %584 = vst.msk [vmem:[%s583] ss:$8 sm:$0x1] %vm364, %v577
        %585 = vst.msk [vmem:[%s583] ss:$8 sm:$0x0] %vm364, %v577
        %v586 = vld [vmem:[#allocation2] sm:$0xff]
        %v587 = vld [vmem:[#allocation2 + $0x8] sm:$0x3]
        %s588 = scalar_lea.vmem [#allocation8], 5
        %v589 = vld [vmem:[%s588] ss:$8 sm:$0xf]
        %v590 = vld [vmem:[%s588] ss:$8 sm:$0xf0]
        %v591 = vor.u32 %v589, %v590
        %s592 = scalar_lea.vmem [#allocation8], 69
        %v593 = vld [vmem:[%s592] ss:$8 sm:$0x1]
        %596 = vrot.lane.b32.xlu0 %v591, 113
        %v597 = vpop.permute.xlu0 %596
        %598 = vrot.lane.b32.xlu0 %v593, 113
        %v599 = vpop.permute.xlu0 %598
        %v600 = vrot.slane %v597, 7
        %v601 = vrot.slane %v599, 7
        %vm602 = vcmask 924672
        %v603 = vsel %vm602, %v600, %v597
        %v604 = vsel %vm383, %v600, %v601
        %v605 = vsel %vm602, %v604, %v599
        %v608 = vmul.f32 %v586, %v603
        %v609 = vmul.f32 %v587, %v605
        %612 = vrot.lane.b32.xlu0 %v608, 15
        %v613 = vpop.permute.xlu0 %612
        %614 = vrot.lane.b32.xlu0 %v609, 15
        %v615 = vpop.permute.xlu0 %614
        %v616 = vrot.slane %v613, 1
        %v617 = vrot.slane %v615, 1
        %v618 = vsel %vm398, %v616, %v617
        %vm619 = vcmask 121856
        %v620 = vsel %vm619, %v613, %v618
        %v621 = vsel %vm619, %v615, %v617
        %s624 = scalar_lea.vmem [#allocation3], 5
        %625 = vst [vmem:[%s624] ss:$8 sm:$0xf] %v620
        %626 = vst [vmem:[%s624] ss:$8 sm:$0xf0] %v620
        %s627 = scalar_lea.vmem [#allocation3], 69
        %628 = vst.msk [vmem:[%s627] ss:$8 sm:$0x1] %vm364, %v621
        %629 = vst.msk [vmem:[%s627] ss:$8 sm:$0x0] %vm364, %v621
        %v630 = vld [vmem:[#allocation2] sm:$0xff]
        %v631 = vld [vmem:[#allocation2 + $0x8] sm:$0x3]
        %s632 = scalar_lea.vmem [#allocation8], 6
        %v633 = vld [vmem:[%s632] ss:$8 sm:$0xf]
        %v634 = vld [vmem:[%s632] ss:$8 sm:$0xf0]
        %v635 = vor.u32 %v633, %v634
        %s636 = scalar_lea.vmem [#allocation8], 70
        %v637 = vld [vmem:[%s636] ss:$8 sm:$0x1]
        %640 = vrot.lane.b32.xlu0 %v635, 127
        %v641 = vpop.permute.xlu0 %640
        %642 = vrot.lane.b32.xlu0 %v637, 127
        %v643 = vpop.permute.xlu0 %642
        %v644 = vrot.slane %v641, 7
        %v645 = vrot.slane %v643, 7
        %vm646 = vcmask 1039360
        %v647 = vsel %vm646, %v644, %v641
        %v648 = vsel %vm383, %v644, %v645
        %v649 = vsel %vm646, %v648, %v643
        %v652 = vmul.f32 %v630, %v647
        %v653 = vmul.f32 %v631, %v649
        %656 = vrot.lane.b32.xlu0 %v652, 1
        %v657 = vpop.permute.xlu0 %656
        %658 = vrot.lane.b32.xlu0 %v653, 1
        %v659 = vpop.permute.xlu0 %658
        %v660 = vrot.slane %v657, 1
        %v661 = vrot.slane %v659, 1
        %v662 = vsel %vm398, %v660, %v661
        %vm663 = vcmask 7168
        %v664 = vsel %vm663, %v657, %v662
        %v665 = vsel %vm663, %v659, %v661
        %s668 = scalar_lea.vmem [#allocation3], 6
        %669 = vst [vmem:[%s668] ss:$8 sm:$0xf] %v664
        %670 = vst [vmem:[%s668] ss:$8 sm:$0xf0] %v664
        %s671 = scalar_lea.vmem [#allocation3], 70
        %672 = vst.msk [vmem:[%s671] ss:$8 sm:$0x1] %vm364, %v665
        %673 = vst.msk [vmem:[%s671] ss:$8 sm:$0x0] %vm364, %v665
        %v674 = vld [vmem:[#allocation2 + $0x1] sm:$0xff]
        %v675 = vld [vmem:[#allocation2 + $0x9] sm:$0x1]
        %s676 = scalar_lea.vmem [#allocation8], 7
        %v677 = vld [vmem:[%s676] ss:$8 sm:$0xf]
        %v678 = vld [vmem:[%s676] ss:$8 sm:$0xf0]
        %v679 = vor.u32 %v677, %v678
        %s680 = scalar_lea.vmem [#allocation8], 71
        %v681 = vld [vmem:[%s680] ss:$8 sm:$0x1]
        %v682 = vmul.f32 %v674, %v679
        %v683 = vmul.f32 %v675, %v681
        %s684 = scalar_lea.vmem [#allocation3], 7
        %685 = vst [vmem:[%s684] ss:$8 sm:$0xf] %v682
        %686 = vst [vmem:[%s684] ss:$8 sm:$0xf0] %v682
        %s687 = scalar_lea.vmem [#allocation3], 71
        %688 = vst.msk [vmem:[%s687] ss:$8 sm:$0x1] %vm364, %v683
        %689 = vst.msk [vmem:[%s687] ss:$8 sm:$0x0] %vm364, %v683
        %v690 = vld [vmem:[#allocation2 + $0x1] sm:$0xff]
        %v691 = vld [vmem:[#allocation2 + $0x9] sm:$0x3]
        %s692 = scalar_lea.vmem [#allocation8], 72
        %v693 = vld [vmem:[%s692] ss:$8 sm:$0xf]
        %v694 = vld [vmem:[%s692] ss:$8 sm:$0xf0]
        %v695 = vor.u32 %v693, %v694
        %s696 = scalar_lea.vmem [#allocation8], 136
        %v697 = vld [vmem:[%s696] ss:$8 sm:$0x1]
        %700 = vrot.lane.b32.xlu0 %v695, 1
        %v701 = vpop.permute.xlu0 %700
        %702 = vrot.lane.b32.xlu0 %v697, 1
        %v703 = vpop.permute.xlu0 %702
        %v704 = vrot.slane %v701, 7
        %v705 = vrot.slane %v703, 7
        %v706 = vsel %vm663, %v704, %v701
        %v707 = vsel %vm383, %v704, %v705
        %v708 = vsel %vm663, %v707, %v703
        %v711 = vmul.f32 %v690, %v706
        %v712 = vmul.f32 %v691, %v708
        %715 = vrot.lane.b32.xlu0 %v711, 127
        %v716 = vpop.permute.xlu0 %715
        %717 = vrot.lane.b32.xlu0 %v712, 127
        %v718 = vpop.permute.xlu0 %717
        %v719 = vrot.slane %v716, 1
        %v720 = vrot.slane %v718, 1
        %v721 = vsel %vm398, %v719, %v720
        %v722 = vsel %vm646, %v716, %v721
        %v723 = vsel %vm646, %v718, %v720
        %s726 = scalar_lea.vmem [#allocation3], 72
        %727 = vst [vmem:[%s726] ss:$8 sm:$0xf] %v722
        %728 = vst [vmem:[%s726] ss:$8 sm:$0xf0] %v722
        %s729 = scalar_lea.vmem [#allocation3], 136
        %730 = vst.msk [vmem:[%s729] ss:$8 sm:$0x1] %vm364, %v723
        %731 = vst.msk [vmem:[%s729] ss:$8 sm:$0x0] %vm364, %v723
        %v732 = vld [vmem:[#allocation2 + $0x1] sm:$0xff]
        %v733 = vld [vmem:[#allocation2 + $0x9] sm:$0x3]
        %s734 = scalar_lea.vmem [#allocation8], 73
        %v735 = vld [vmem:[%s734] ss:$8 sm:$0xf]
        %v736 = vld [vmem:[%s734] ss:$8 sm:$0xf0]
        %v737 = vor.u32 %v735, %v736
        %s738 = scalar_lea.vmem [#allocation8], 137
        %v739 = vld [vmem:[%s738] ss:$8 sm:$0x1]
        %742 = vrot.lane.b32.xlu0 %v737, 111
        %v743 = vpop.permute.xlu0 %742
        %744 = vrot.lane.b32.xlu0 %v739, 111
        %v745 = vpop.permute.xlu0 %744
        %v746 = vrot.slane %v743, 7
        %v747 = vrot.slane %v745, 7
        %v748 = vsel %vm514, %v746, %v743
        %v749 = vsel %vm383, %v746, %v747
        %v750 = vsel %vm514, %v749, %v745
        %v753 = vmul.f32 %v732, %v748
        %v754 = vmul.f32 %v733, %v750
        %757 = vrot.lane.b32.xlu0 %v753, 17
        %v758 = vpop.permute.xlu0 %757
        %759 = vrot.lane.b32.xlu0 %v754, 17
        %v760 = vpop.permute.xlu0 %759
        %v761 = vrot.slane %v758, 1
        %v762 = vrot.slane %v760, 1
        %v763 = vsel %vm398, %v761, %v762
        %v764 = vsel %vm531, %v758, %v763
        %v765 = vsel %vm531, %v760, %v762
        %s768 = scalar_lea.vmem [#allocation3], 73
        %769 = vst [vmem:[%s768] ss:$8 sm:$0xf] %v764
        %770 = vst [vmem:[%s768] ss:$8 sm:$0xf0] %v764
        %s771 = scalar_lea.vmem [#allocation3], 137
        %772 = vst.msk [vmem:[%s771] ss:$8 sm:$0x1] %vm364, %v765
        %773 = vst.msk [vmem:[%s771] ss:$8 sm:$0x0] %vm364, %v765
        %v774 = vld [vmem:[#allocation2 + $0x1] sm:$0xff]
        %v775 = vld [vmem:[#allocation2 + $0x9] sm:$0x3]
        %s776 = scalar_lea.vmem [#allocation8], 74
        %v777 = vld [vmem:[%s776] ss:$8 sm:$0xf]
        %v778 = vld [vmem:[%s776] ss:$8 sm:$0xf0]
        %v779 = vor.u32 %v777, %v778
        %s780 = scalar_lea.vmem [#allocation8], 138
        %v781 = vld [vmem:[%s780] ss:$8 sm:$0x1]
        %784 = vrot.lane.b32.xlu0 %v779, 112
        %v785 = vpop.permute.xlu0 %784
        %786 = vrot.lane.b32.xlu0 %v781, 112
        %v787 = vpop.permute.xlu0 %786
        %v788 = vrot.slane %v785, 7
        %v789 = vrot.slane %v787, 7
        %v790 = vsel %vm558, %v788, %v785
        %v791 = vsel %vm383, %v788, %v789
        %v792 = vsel %vm558, %v791, %v787
        %v795 = vmul.f32 %v774, %v790
        %v796 = vmul.f32 %v775, %v792
        %799 = vrot.lane.b32.xlu0 %v795, 16
        %v800 = vpop.permute.xlu0 %799
        %801 = vrot.lane.b32.xlu0 %v796, 16
        %v802 = vpop.permute.xlu0 %801
        %v803 = vrot.slane %v800, 1
        %v804 = vrot.slane %v802, 1
        %v805 = vsel %vm398, %v803, %v804
        %v806 = vsel %vm575, %v800, %v805
        %v807 = vsel %vm575, %v802, %v804
        %s810 = scalar_lea.vmem [#allocation3], 74
        %811 = vst [vmem:[%s810] ss:$8 sm:$0xf] %v806
        %812 = vst [vmem:[%s810] ss:$8 sm:$0xf0] %v806
        %s813 = scalar_lea.vmem [#allocation3], 138
        %814 = vst.msk [vmem:[%s813] ss:$8 sm:$0x1] %vm364, %v807
        %815 = vst.msk [vmem:[%s813] ss:$8 sm:$0x0] %vm364, %v807
        %v816 = vld [vmem:[#allocation2 + $0x1] sm:$0xff]
        %v817 = vld [vmem:[#allocation2 + $0x9] sm:$0x3]
        %s818 = scalar_lea.vmem [#allocation8], 75
        %v819 = vld [vmem:[%s818] ss:$8 sm:$0xf]
        %v820 = vld [vmem:[%s818] ss:$8 sm:$0xf0]
        %v821 = vor.u32 %v819, %v820
        %s822 = scalar_lea.vmem [#allocation8], 139
        %v823 = vld [vmem:[%s822] ss:$8 sm:$0x1]
        %826 = vrot.lane.b32.xlu0 %v821, 113
        %v827 = vpop.permute.xlu0 %826
        %828 = vrot.lane.b32.xlu0 %v823, 113
        %v829 = vpop.permute.xlu0 %828
        %v830 = vrot.slane %v827, 7
        %v831 = vrot.slane %v829, 7
        %v832 = vsel %vm602, %v830, %v827
        %v833 = vsel %vm383, %v830, %v831
        %v834 = vsel %vm602, %v833, %v829
        %v837 = vmul.f32 %v816, %v832
        %v838 = vmul.f32 %v817, %v834
        %841 = vrot.lane.b32.xlu0 %v837, 15
        %v842 = vpop.permute.xlu0 %841
        %843 = vrot.lane.b32.xlu0 %v838, 15
        %v844 = vpop.permute.xlu0 %843
        %v845 = vrot.slane %v842, 1
        %v846 = vrot.slane %v844, 1
        %v847 = vsel %vm398, %v845, %v846
        %v848 = vsel %vm619, %v842, %v847
        %v849 = vsel %vm619, %v844, %v846
        %s852 = scalar_lea.vmem [#allocation3], 75
        %853 = vst [vmem:[%s852] ss:$8 sm:$0xf] %v848
        %854 = vst [vmem:[%s852] ss:$8 sm:$0xf0] %v848
        %s855 = scalar_lea.vmem [#allocation3], 139
        %856 = vst.msk [vmem:[%s855] ss:$8 sm:$0x1] %vm364, %v849
        %857 = vst.msk [vmem:[%s855] ss:$8 sm:$0x0] %vm364, %v849
        %v858 = vld [vmem:[#allocation2 + $0x1] sm:$0xff]
        %v859 = vld [vmem:[#allocation2 + $0x9] sm:$0x3]
        %s860 = scalar_lea.vmem [#allocation8], 76
        %v861 = vld [vmem:[%s860] ss:$8 sm:$0xf]
        %v862 = vld [vmem:[%s860] ss:$8 sm:$0xf0]
        %v863 = vor.u32 %v861, %v862
        %s864 = scalar_lea.vmem [#allocation8], 140
        %v865 = vld [vmem:[%s864] ss:$8 sm:$0x1]
        %868 = vrot.lane.b32.xlu0 %v863, 127
        %v869 = vpop.permute.xlu0 %868
        %870 = vrot.lane.b32.xlu0 %v865, 127
        %v871 = vpop.permute.xlu0 %870
        %v872 = vrot.slane %v869, 7
        %v873 = vrot.slane %v871, 7
        %v874 = vsel %vm646, %v872, %v869
        %v875 = vsel %vm383, %v872, %v873
        %v876 = vsel %vm646, %v875, %v871
        %v879 = vmul.f32 %v858, %v874
        %v880 = vmul.f32 %v859, %v876
        %883 = vrot.lane.b32.xlu0 %v879, 1
        %v884 = vpop.permute.xlu0 %883
        %885 = vrot.lane.b32.xlu0 %v880, 1
        %v886 = vpop.permute.xlu0 %885
        %v887 = vrot.slane %v884, 1
        %v888 = vrot.slane %v886, 1
        %v889 = vsel %vm398, %v887, %v888
        %v890 = vsel %vm663, %v884, %v889
        %v891 = vsel %vm663, %v886, %v888
        %s894 = scalar_lea.vmem [#allocation3], 76
        %895 = vst [vmem:[%s894] ss:$8 sm:$0xf] %v890
        %896 = vst [vmem:[%s894] ss:$8 sm:$0xf0] %v890
        %s897 = scalar_lea.vmem [#allocation3], 140
        %898 = vst.msk [vmem:[%s897] ss:$8 sm:$0x1] %vm364, %v891
        %899 = vst.msk [vmem:[%s897] ss:$8 sm:$0x0] %vm364, %v891
        %v900 = vld [vmem:[#allocation2 + $0x2] sm:$0xff]
        %v901 = vld [vmem:[#allocation2 + $0xa] sm:$0x1]
        %s902 = scalar_lea.vmem [#allocation8], 77
        %v903 = vld [vmem:[%s902] ss:$8 sm:$0xf]
        %v904 = vld [vmem:[%s902] ss:$8 sm:$0xf0]
        %v905 = vor.u32 %v903, %v904
        %s906 = scalar_lea.vmem [#allocation8], 141
        %v907 = vld [vmem:[%s906] ss:$8 sm:$0x1]
        %v908 = vmul.f32 %v900, %v905
        %v909 = vmul.f32 %v901, %v907
        %s910 = scalar_lea.vmem [#allocation3], 77
        %911 = vst [vmem:[%s910] ss:$8 sm:$0xf] %v908
        %912 = vst [vmem:[%s910] ss:$8 sm:$0xf0] %v908
        %s913 = scalar_lea.vmem [#allocation3], 141
        %914 = vst.msk [vmem:[%s913] ss:$8 sm:$0x1] %vm364, %v909
        %915 = vst.msk [vmem:[%s913] ss:$8 sm:$0x0] %vm364, %v909
        %v916 = vld [vmem:[#allocation2 + $0x2] sm:$0xff]
        %v917 = vld [vmem:[#allocation2 + $0xa] sm:$0x3]
        %s918 = scalar_lea.vmem [#allocation8], 78
        %v919 = vld [vmem:[%s918] ss:$8 sm:$0xf]
        %v920 = vld [vmem:[%s918] ss:$8 sm:$0xf0]
        %v921 = vor.u32 %v919, %v920
        %s922 = scalar_lea.vmem [#allocation8], 142
        %v923 = vld [vmem:[%s922] ss:$8 sm:$0x1]
        %926 = vrot.lane.b32.xlu0 %v921, 1
        %v927 = vpop.permute.xlu0 %926
        %928 = vrot.lane.b32.xlu0 %v923, 1
        %v929 = vpop.permute.xlu0 %928
        %v930 = vrot.slane %v927, 7
        %v931 = vrot.slane %v929, 7
        %v932 = vsel %vm663, %v930, %v927
        %v933 = vsel %vm383, %v930, %v931
        %v934 = vsel %vm663, %v933, %v929
        %v937 = vmul.f32 %v916, %v932
        %v938 = vmul.f32 %v917, %v934
        %941 = vrot.lane.b32.xlu0 %v937, 127
        %v942 = vpop.permute.xlu0 %941
        %943 = vrot.lane.b32.xlu0 %v938, 127
        %v944 = vpop.permute.xlu0 %943
        %v945 = vrot.slane %v942, 1
        %v946 = vrot.slane %v944, 1
        %v947 = vsel %vm398, %v945, %v946
        %v948 = vsel %vm646, %v942, %v947
        %v949 = vsel %vm646, %v944, %v946
        %s952 = scalar_lea.vmem [#allocation3], 78
        %953 = vst [vmem:[%s952] ss:$8 sm:$0xf] %v948
        %954 = vst [vmem:[%s952] ss:$8 sm:$0xf0] %v948
        %s955 = scalar_lea.vmem [#allocation3], 142
        %956 = vst.msk [vmem:[%s955] ss:$8 sm:$0x1] %vm364, %v949
        %957 = vst.msk [vmem:[%s955] ss:$8 sm:$0x0] %vm364, %v949
        %v958 = vld [vmem:[#allocation2 + $0x2] sm:$0xff]
        %v959 = vld [vmem:[#allocation2 + $0xa] sm:$0x3]
        %s960 = scalar_lea.vmem [#allocation8], 79
        %v961 = vld [vmem:[%s960] ss:$8 sm:$0xf]
        %v962 = vld [vmem:[%s960] ss:$8 sm:$0xf0]
        %v963 = vor.u32 %v961, %v962
        %s964 = scalar_lea.vmem [#allocation8], 143
        %v965 = vld [vmem:[%s964] ss:$8 sm:$0x1]
        %968 = vrot.lane.b32.xlu0 %v963, 15
        %v969 = vpop.permute.xlu0 %968
        %970 = vrot.lane.b32.xlu0 %v965, 15
        %v971 = vpop.permute.xlu0 %970
        %v972 = vrot.slane %v969, 7
        %v973 = vrot.slane %v971, 7
        %v974 = vsel %vm619, %v972, %v969
        %v975 = vsel %vm383, %v972, %v973
        %v976 = vsel %vm619, %v975, %v971
        %v979 = vmul.f32 %v958, %v974
        %v980 = vmul.f32 %v959, %v976
        %983 = vrot.lane.b32.xlu0 %v979, 113
        %v984 = vpop.permute.xlu0 %983
        %985 = vrot.lane.b32.xlu0 %v980, 113
        %v986 = vpop.permute.xlu0 %985
        %v987 = vrot.slane %v984, 1
        %v988 = vrot.slane %v986, 1
        %v989 = vsel %vm398, %v987, %v988
        %v990 = vsel %vm602, %v984, %v989
        %v991 = vsel %vm602, %v986, %v988
        %s994 = scalar_lea.vmem [#allocation3], 79
        %995 = vst [vmem:[%s994] ss:$8 sm:$0xf] %v990
        %996 = vst [vmem:[%s994] ss:$8 sm:$0xf0] %v990
        %s997 = scalar_lea.vmem [#allocation3], 143
        %998 = vst.msk [vmem:[%s997] ss:$8 sm:$0x1] %vm364, %v991
        %999 = vst.msk [vmem:[%s997] ss:$8 sm:$0x0] %vm364, %v991
        %v1000 = vld [vmem:[#allocation2 + $0x2] sm:$0xff]
        %v1001 = vld [vmem:[#allocation2 + $0xa] sm:$0x3]
        %s1002 = scalar_lea.vmem [#allocation8], 144
        %v1003 = vld [vmem:[%s1002] ss:$8 sm:$0xf]
        %v1004 = vld [vmem:[%s1002] ss:$8 sm:$0xf0]
        %v1005 = vor.u32 %v1003, %v1004
        %s1006 = scalar_lea.vmem [#allocation8], 208
        %v1007 = vld [vmem:[%s1006] ss:$8 sm:$0x1]
        %1010 = vrot.lane.b32.xlu0 %v1005, 16
        %v1011 = vpop.permute.xlu0 %1010
        %1012 = vrot.lane.b32.xlu0 %v1007, 16
        %v1013 = vpop.permute.xlu0 %1012
        %v1014 = vrot.slane %v1011, 7
        %v1015 = vrot.slane %v1013, 7
        %v1016 = vsel %vm575, %v1014, %v1011
        %v1017 = vsel %vm383, %v1014, %v1015
        %v1018 = vsel %vm575, %v1017, %v1013
        %v1021 = vmul.f32 %v1000, %v1016
        %v1022 = vmul.f32 %v1001, %v1018
        %1025 = vrot.lane.b32.xlu0 %v1021, 112
        %v1026 = vpop.permute.xlu0 %1025
        %1027 = vrot.lane.b32.xlu0 %v1022, 112
        %v1028 = vpop.permute.xlu0 %1027
        %v1029 = vrot.slane %v1026, 1
        %v1030 = vrot.slane %v1028, 1
        %v1031 = vsel %vm398, %v1029, %v1030
        %v1032 = vsel %vm558, %v1026, %v1031
        %v1033 = vsel %vm558, %v1028, %v1030
        %s1036 = scalar_lea.vmem [#allocation3], 144
        %1037 = vst [vmem:[%s1036] ss:$8 sm:$0xf] %v1032
        %1038 = vst [vmem:[%s1036] ss:$8 sm:$0xf0] %v1032
        %s1039 = scalar_lea.vmem [#allocation3], 208
        %1040 = vst.msk [vmem:[%s1039] ss:$8 sm:$0x1] %vm364, %v1033
        %1041 = vst.msk [vmem:[%s1039] ss:$8 sm:$0x0] %vm364, %v1033
        %v1042 = vld [vmem:[#allocation2 + $0x2] sm:$0xff]
        %v1043 = vld [vmem:[#allocation2 + $0xa] sm:$0x3]
        %s1044 = scalar_lea.vmem [#allocation8], 145
        %v1045 = vld [vmem:[%s1044] ss:$8 sm:$0xf]
        %v1046 = vld [vmem:[%s1044] ss:$8 sm:$0xf0]
        %v1047 = vor.u32 %v1045, %v1046
        %s1048 = scalar_lea.vmem [#allocation8], 209
        %v1049 = vld [vmem:[%s1048] ss:$8 sm:$0x1]
        %1052 = vrot.lane.b32.xlu0 %v1047, 17
        %v1053 = vpop.permute.xlu0 %1052
        %1054 = vrot.lane.b32.xlu0 %v1049, 17
        %v1055 = vpop.permute.xlu0 %1054
        %v1056 = vrot.slane %v1053, 7
        %v1057 = vrot.slane %v1055, 7
        %v1058 = vsel %vm531, %v1056, %v1053
        %v1059 = vsel %vm383, %v1056, %v1057
        %v1060 = vsel %vm531, %v1059, %v1055
        %v1063 = vmul.f32 %v1042, %v1058
        %v1064 = vmul.f32 %v1043, %v1060
        %1067 = vrot.lane.b32.xlu0 %v1063, 111
        %v1068 = vpop.permute.xlu0 %1067
        %1069 = vrot.lane.b32.xlu0 %v1064, 111
        %v1070 = vpop.permute.xlu0 %1069
        %v1071 = vrot.slane %v1068, 1
        %v1072 = vrot.slane %v1070, 1
        %v1073 = vsel %vm398, %v1071, %v1072
        %v1074 = vsel %vm514, %v1068, %v1073
        %v1075 = vsel %vm514, %v1070, %v1072
        %s1078 = scalar_lea.vmem [#allocation3], 145
        %1079 = vst [vmem:[%s1078] ss:$8 sm:$0xf] %v1074
        %1080 = vst [vmem:[%s1078] ss:$8 sm:$0xf0] %v1074
        %s1081 = scalar_lea.vmem [#allocation3], 209
        %1082 = vst.msk [vmem:[%s1081] ss:$8 sm:$0x1] %vm364, %v1075
        %1083 = vst.msk [vmem:[%s1081] ss:$8 sm:$0x0] %vm364, %v1075
        %v1084 = vld [vmem:[#allocation2 + $0x2] sm:$0xff]
        %v1085 = vld [vmem:[#allocation2 + $0xa] sm:$0x3]
        %s1086 = scalar_lea.vmem [#allocation8], 146
        %v1087 = vld [vmem:[%s1086] ss:$8 sm:$0xf]
        %v1088 = vld [vmem:[%s1086] ss:$8 sm:$0xf0]
        %v1089 = vor.u32 %v1087, %v1088
        %s1090 = scalar_lea.vmem [#allocation8], 210
        %v1091 = vld [vmem:[%s1090] ss:$8 sm:$0x1]
        %1094 = vrot.lane.b32.xlu0 %v1089, 127
        %v1095 = vpop.permute.xlu0 %1094
        %1096 = vrot.lane.b32.xlu0 %v1091, 127
        %v1097 = vpop.permute.xlu0 %1096
        %v1098 = vrot.slane %v1095, 7
        %v1099 = vrot.slane %v1097, 7
        %v1100 = vsel %vm646, %v1098, %v1095
        %v1101 = vsel %vm383, %v1098, %v1099
        %v1102 = vsel %vm646, %v1101, %v1097
        %v1105 = vmul.f32 %v1084, %v1100
        %v1106 = vmul.f32 %v1085, %v1102
        %1109 = vrot.lane.b32.xlu0 %v1105, 1
        %v1110 = vpop.permute.xlu0 %1109
        %1111 = vrot.lane.b32.xlu0 %v1106, 1
        %v1112 = vpop.permute.xlu0 %1111
        %v1113 = vrot.slane %v1110, 1
        %v1114 = vrot.slane %v1112, 1
        %v1115 = vsel %vm398, %v1113, %v1114
        %v1116 = vsel %vm663, %v1110, %v1115
        %v1117 = vsel %vm663, %v1112, %v1114
        %s1120 = scalar_lea.vmem [#allocation3], 146
        %1121 = vst [vmem:[%s1120] ss:$8 sm:$0xf] %v1116
        %1122 = vst [vmem:[%s1120] ss:$8 sm:$0xf0] %v1116
        %s1123 = scalar_lea.vmem [#allocation3], 210
        %1124 = vst.msk [vmem:[%s1123] ss:$8 sm:$0x1] %vm364, %v1117
        %1125 = vst.msk [vmem:[%s1123] ss:$8 sm:$0x0] %vm364, %v1117
        %v1126 = vld [vmem:[#allocation2 + $0x3] sm:$0xff]
        %v1127 = vld [vmem:[#allocation2 + $0xb] sm:$0x1]
        %s1128 = scalar_lea.vmem [#allocation8], 147
        %v1129 = vld [vmem:[%s1128] ss:$8 sm:$0xf]
        %v1130 = vld [vmem:[%s1128] ss:$8 sm:$0xf0]
        %v1131 = vor.u32 %v1129, %v1130
        %s1132 = scalar_lea.vmem [#allocation8], 211
        %v1133 = vld [vmem:[%s1132] ss:$8 sm:$0x1]
        %v1134 = vmul.f32 %v1126, %v1131
        %v1135 = vmul.f32 %v1127, %v1133
        %s1136 = scalar_lea.vmem [#allocation3], 147
        %1137 = vst [vmem:[%s1136] ss:$8 sm:$0xf] %v1134
        %1138 = vst [vmem:[%s1136] ss:$8 sm:$0xf0] %v1134
        %s1139 = scalar_lea.vmem [#allocation3], 211
        %1140 = vst.msk [vmem:[%s1139] ss:$8 sm:$0x1] %vm364, %v1135
        %1141 = vst.msk [vmem:[%s1139] ss:$8 sm:$0x0] %vm364, %v1135
        %v1142 = vld [vmem:[#allocation2 + $0x3] sm:$0xff]
        %v1143 = vld [vmem:[#allocation2 + $0xb] sm:$0x3]
        %s1144 = scalar_lea.vmem [#allocation8], 148
        %v1145 = vld [vmem:[%s1144] ss:$8 sm:$0xf]
        %v1146 = vld [vmem:[%s1144] ss:$8 sm:$0xf0]
        %v1147 = vor.u32 %v1145, %v1146
        %s1148 = scalar_lea.vmem [#allocation8], 212
        %v1149 = vld [vmem:[%s1148] ss:$8 sm:$0x1]
        %1152 = vrot.lane.b32.xlu0 %v1147, 1
        %v1153 = vpop.permute.xlu0 %1152
        %1154 = vrot.lane.b32.xlu0 %v1149, 1
        %v1155 = vpop.permute.xlu0 %1154
        %v1156 = vrot.slane %v1153, 7
        %v1157 = vrot.slane %v1155, 7
        %v1158 = vsel %vm663, %v1156, %v1153
        %v1159 = vsel %vm383, %v1156, %v1157
        %v1160 = vsel %vm663, %v1159, %v1155
        %v1163 = vmul.f32 %v1142, %v1158
        %v1164 = vmul.f32 %v1143, %v1160
        %1167 = vrot.lane.b32.xlu0 %v1163, 127
        %v1168 = vpop.permute.xlu0 %1167
        %1169 = vrot.lane.b32.xlu0 %v1164, 127
        %v1170 = vpop.permute.xlu0 %1169
        %v1171 = vrot.slane %v1168, 1
        %v1172 = vrot.slane %v1170, 1
        %v1173 = vsel %vm398, %v1171, %v1172
        %v1174 = vsel %vm646, %v1168, %v1173
        %v1175 = vsel %vm646, %v1170, %v1172
        %s1178 = scalar_lea.vmem [#allocation3], 148
        %1179 = vst [vmem:[%s1178] ss:$8 sm:$0xf] %v1174
        %1180 = vst [vmem:[%s1178] ss:$8 sm:$0xf0] %v1174
        %s1181 = scalar_lea.vmem [#allocation3], 212
        %1182 = vst.msk [vmem:[%s1181] ss:$8 sm:$0x1] %vm364, %v1175
        %1183 = vst.msk [vmem:[%s1181] ss:$8 sm:$0x0] %vm364, %v1175
        %v1184 = vld [vmem:[#allocation2 + $0x3] sm:$0xff]
        %v1185 = vld [vmem:[#allocation2 + $0xb] sm:$0x3]
        %s1186 = scalar_lea.vmem [#allocation8], 149
        %v1187 = vld [vmem:[%s1186] ss:$8 sm:$0xf]
        %v1188 = vld [vmem:[%s1186] ss:$8 sm:$0xf0]
        %v1189 = vor.u32 %v1187, %v1188
        %s1190 = scalar_lea.vmem [#allocation8], 213
        %v1191 = vld [vmem:[%s1190] ss:$8 sm:$0x1]
        %1194 = vrot.lane.b32.xlu0 %v1189, 15
        %v1195 = vpop.permute.xlu0 %1194
        %1196 = vrot.lane.b32.xlu0 %v1191, 15
        %v1197 = vpop.permute.xlu0 %1196
        %v1198 = vrot.slane %v1195, 7
        %v1199 = vrot.slane %v1197, 7
        %v1200 = vsel %vm619, %v1198, %v1195
        %v1201 = vsel %vm383, %v1198, %v1199
        %v1202 = vsel %vm619, %v1201, %v1197
        %v1205 = vmul.f32 %v1184, %v1200
        %v1206 = vmul.f32 %v1185, %v1202
        %1209 = vrot.lane.b32.xlu0 %v1205, 113
        %v1210 = vpop.permute.xlu0 %1209
        %1211 = vrot.lane.b32.xlu0 %v1206, 113
        %v1212 = vpop.permute.xlu0 %1211
        %v1213 = vrot.slane %v1210, 1
        %v1214 = vrot.slane %v1212, 1
        %v1215 = vsel %vm398, %v1213, %v1214
        %v1216 = vsel %vm602, %v1210, %v1215
        %v1217 = vsel %vm602, %v1212, %v1214
        %s1220 = scalar_lea.vmem [#allocation3], 149
        %1221 = vst [vmem:[%s1220] ss:$8 sm:$0xf] %v1216
        %1222 = vst [vmem:[%s1220] ss:$8 sm:$0xf0] %v1216
        %s1223 = scalar_lea.vmem [#allocation3], 213
        %1224 = vst.msk [vmem:[%s1223] ss:$8 sm:$0x1] %vm364, %v1217
        %1225 = vst.msk [vmem:[%s1223] ss:$8 sm:$0x0] %vm364, %v1217
        %v1226 = vld [vmem:[#allocation2 + $0x3] sm:$0xff]
        %v1227 = vld [vmem:[#allocation2 + $0xb] sm:$0x3]
        %s1228 = scalar_lea.vmem [#allocation8], 150
        %v1229 = vld [vmem:[%s1228] ss:$8 sm:$0xf]
        %v1230 = vld [vmem:[%s1228] ss:$8 sm:$0xf0]
        %v1231 = vor.u32 %v1229, %v1230
        %s1232 = scalar_lea.vmem [#allocation8], 214
        %v1233 = vld [vmem:[%s1232] ss:$8 sm:$0x1]
        %1236 = vrot.lane.b32.xlu0 %v1231, 16
        %v1237 = vpop.permute.xlu0 %1236
        %1238 = vrot.lane.b32.xlu0 %v1233, 16
        %v1239 = vpop.permute.xlu0 %1238
        %v1240 = vrot.slane %v1237, 7
        %v1241 = vrot.slane %v1239, 7
        %v1242 = vsel %vm575, %v1240, %v1237
        %v1243 = vsel %vm383, %v1240, %v1241
        %v1244 = vsel %vm575, %v1243, %v1239
        %v1247 = vmul.f32 %v1226, %v1242
        %v1248 = vmul.f32 %v1227, %v1244
        %1251 = vrot.lane.b32.xlu0 %v1247, 112
        %v1252 = vpop.permute.xlu0 %1251
        %1253 = vrot.lane.b32.xlu0 %v1248, 112
        %v1254 = vpop.permute.xlu0 %1253
        %v1255 = vrot.slane %v1252, 1
        %v1256 = vrot.slane %v1254, 1
        %v1257 = vsel %vm398, %v1255, %v1256
        %v1258 = vsel %vm558, %v1252, %v1257
        %v1259 = vsel %vm558, %v1254, %v1256
        %s1262 = scalar_lea.vmem [#allocation3], 150
        %1263 = vst [vmem:[%s1262] ss:$8 sm:$0xf] %v1258
        %1264 = vst [vmem:[%s1262] ss:$8 sm:$0xf0] %v1258
        %s1265 = scalar_lea.vmem [#allocation3], 214
        %1266 = vst.msk [vmem:[%s1265] ss:$8 sm:$0x1] %vm364, %v1259
        %1267 = vst.msk [vmem:[%s1265] ss:$8 sm:$0x0] %vm364, %v1259
        %v1268 = vld [vmem:[#allocation2 + $0x3] sm:$0xff]
        %v1269 = vld [vmem:[#allocation2 + $0xb] sm:$0x3]
        %s1270 = scalar_lea.vmem [#allocation8], 151
        %v1271 = vld [vmem:[%s1270] ss:$8 sm:$0xf]
        %v1272 = vld [vmem:[%s1270] ss:$8 sm:$0xf0]
        %v1273 = vor.u32 %v1271, %v1272
        %s1274 = scalar_lea.vmem [#allocation8], 215
        %v1275 = vld [vmem:[%s1274] ss:$8 sm:$0x1]
        %1278 = vrot.lane.b32.xlu0 %v1273, 17
        %v1279 = vpop.permute.xlu0 %1278
        %1280 = vrot.lane.b32.xlu0 %v1275, 17
        %v1281 = vpop.permute.xlu0 %1280
        %v1282 = vrot.slane %v1279, 7
        %v1283 = vrot.slane %v1281, 7
        %v1284 = vsel %vm531, %v1282, %v1279
        %v1285 = vsel %vm383, %v1282, %v1283
        %v1286 = vsel %vm531, %v1285, %v1281
        %v1289 = vmul.f32 %v1268, %v1284
        %v1290 = vmul.f32 %v1269, %v1286
        %1293 = vrot.lane.b32.xlu0 %v1289, 111
        %v1294 = vpop.permute.xlu0 %1293
        %1295 = vrot.lane.b32.xlu0 %v1290, 111
        %v1296 = vpop.permute.xlu0 %1295
        %v1297 = vrot.slane %v1294, 1
        %v1298 = vrot.slane %v1296, 1
        %v1299 = vsel %vm398, %v1297, %v1298
        %v1300 = vsel %vm514, %v1294, %v1299
        %v1301 = vsel %vm514, %v1296, %v1298
        %s1304 = scalar_lea.vmem [#allocation3], 151
        %1305 = vst [vmem:[%s1304] ss:$8 sm:$0xf] %v1300
        %1306 = vst [vmem:[%s1304] ss:$8 sm:$0xf0] %v1300
        %s1307 = scalar_lea.vmem [#allocation3], 215
        %1308 = vst.msk [vmem:[%s1307] ss:$8 sm:$0x1] %vm364, %v1301
        %1309 = vst.msk [vmem:[%s1307] ss:$8 sm:$0x0] %vm364, %v1301
        %v1310 = vld [vmem:[#allocation2 + $0x3] sm:$0xff]
        %v1311 = vld [vmem:[#allocation2 + $0xb] sm:$0x3]
        %s1312 = scalar_lea.vmem [#allocation8], 216
        %v1313 = vld [vmem:[%s1312] ss:$8 sm:$0xf]
        %v1314 = vld [vmem:[%s1312] ss:$8 sm:$0xf0]
        %v1315 = vor.u32 %v1313, %v1314
        %s1316 = scalar_lea.vmem [#allocation8], 280
        %v1317 = vld [vmem:[%s1316] ss:$8 sm:$0x1]
        %1320 = vrot.lane.b32.xlu0 %v1315, 31
        %v1321 = vpop.permute.xlu0 %1320
        %1322 = vrot.lane.b32.xlu0 %v1317, 31
        %v1323 = vpop.permute.xlu0 %1322
        %v1324 = vrot.slane %v1321, 7
        %v1325 = vrot.slane %v1323, 7
        %v1326 = vsel %vm487, %v1324, %v1321
        %v1327 = vsel %vm383, %v1324, %v1325
        %v1328 = vsel %vm487, %v1327, %v1323
        %v1331 = vmul.f32 %v1310, %v1326
        %v1332 = vmul.f32 %v1311, %v1328
        %1335 = vrot.lane.b32.xlu0 %v1331, 97
        %v1336 = vpop.permute.xlu0 %1335
        %1337 = vrot.lane.b32.xlu0 %v1332, 97
        %v1338 = vpop.permute.xlu0 %1337
        %v1339 = vrot.slane %v1336, 1
        %v1340 = vrot.slane %v1338, 1
        %v1341 = vsel %vm398, %v1339, %v1340
        %v1342 = vsel %vm470, %v1336, %v1341
        %v1343 = vsel %vm470, %v1338, %v1340
        %s1346 = scalar_lea.vmem [#allocation3], 216
        %1347 = vst [vmem:[%s1346] ss:$8 sm:$0xf] %v1342
        %1348 = vst [vmem:[%s1346] ss:$8 sm:$0xf0] %v1342
        %s1349 = scalar_lea.vmem [#allocation3], 280
        %1350 = vst.msk [vmem:[%s1349] ss:$8 sm:$0x1] %vm364, %v1343
        %1351 = vst.msk [vmem:[%s1349] ss:$8 sm:$0x0] %vm364, %v1343
        %v1352 = vld [vmem:[#allocation2 + $0x3] sm:$0xff]
        %v1353 = vld [vmem:[#allocation2 + $0xb] sm:$0x3]
        %s1354 = scalar_lea.vmem [#allocation8], 217
        %v1355 = vld [vmem:[%s1354] ss:$8 sm:$0xf]
        %v1356 = vld [vmem:[%s1354] ss:$8 sm:$0xf0]
        %v1357 = vor.u32 %v1355, %v1356
        %s1358 = scalar_lea.vmem [#allocation8], 281
        %v1359 = vld [vmem:[%s1358] ss:$8 sm:$0x1]
        %1362 = vrot.lane.b32.xlu0 %v1357, 32
        %v1363 = vpop.permute.xlu0 %1362
        %1364 = vrot.lane.b32.xlu0 %v1359, 32
        %v1365 = vpop.permute.xlu0 %1364
        %v1366 = vrot.slane %v1363, 7
        %v1367 = vrot.slane %v1365, 7
        %v1368 = vsel %vm443, %v1366, %v1363
        %v1369 = vsel %vm383, %v1366, %v1367
        %v1370 = vsel %vm443, %v1369, %v1365
        %v1373 = vmul.f32 %v1352, %v1368
        %v1374 = vmul.f32 %v1353, %v1370
        %1377 = vrot.lane.b32.xlu0 %v1373, 96
        %v1378 = vpop.permute.xlu0 %1377
        %1379 = vrot.lane.b32.xlu0 %v1374, 96
        %v1380 = vpop.permute.xlu0 %1379
        %v1381 = vrot.slane %v1378, 1
        %v1382 = vrot.slane %v1380, 1
        %v1383 = vsel %vm398, %v1381, %v1382
        %v1384 = vsel %vm426, %v1378, %v1383
        %v1385 = vsel %vm426, %v1380, %v1382
        %s1388 = scalar_lea.vmem [#allocation3], 217
        %1389 = vst [vmem:[%s1388] ss:$8 sm:$0xf] %v1384
        %1390 = vst [vmem:[%s1388] ss:$8 sm:$0xf0] %v1384
        %s1391 = scalar_lea.vmem [#allocation3], 281
        %1392 = vst.msk [vmem:[%s1391] ss:$8 sm:$0x1] %vm364, %v1385
        %1393 = vst.msk [vmem:[%s1391] ss:$8 sm:$0x0] %vm364, %v1385
        %v1394 = vld [vmem:[#allocation2 + $0x3] sm:$0xff]
        %v1395 = vld [vmem:[#allocation2 + $0xb] sm:$0x3]
        %s1396 = scalar_lea.vmem [#allocation8], 218
        %v1397 = vld [vmem:[%s1396] ss:$8 sm:$0xf]
        %v1398 = vld [vmem:[%s1396] ss:$8 sm:$0xf0]
        %v1399 = vor.u32 %v1397, %v1398
        %s1400 = scalar_lea.vmem [#allocation8], 282
        %v1401 = vld [vmem:[%s1400] ss:$8 sm:$0x1]
        %1404 = vrot.lane.b32.xlu0 %v1399, 33
        %v1405 = vpop.permute.xlu0 %1404
        %1406 = vrot.lane.b32.xlu0 %v1401, 33
        %v1407 = vpop.permute.xlu0 %1406
        %v1408 = vrot.slane %v1405, 7
        %v1409 = vrot.slane %v1407, 7
        %v1410 = vsel %vm400, %v1408, %v1405
        %v1411 = vsel %vm383, %v1408, %v1409
        %v1412 = vsel %vm400, %v1411, %v1407
        %v1415 = vmul.f32 %v1394, %v1410
        %v1416 = vmul.f32 %v1395, %v1412
        %1419 = vrot.lane.b32.xlu0 %v1415, 95
        %v1420 = vpop.permute.xlu0 %1419
        %1421 = vrot.lane.b32.xlu0 %v1416, 95
        %v1422 = vpop.permute.xlu0 %1421
        %v1423 = vrot.slane %v1420, 1
        %v1424 = vrot.slane %v1422, 1
        %v1425 = vsel %vm398, %v1423, %v1424
        %v1426 = vsel %vm381, %v1420, %v1425
        %v1427 = vsel %vm381, %v1422, %v1424
        %s1430 = scalar_lea.vmem [#allocation3], 218
        %1431 = vst [vmem:[%s1430] ss:$8 sm:$0xf] %v1426
        %1432 = vst [vmem:[%s1430] ss:$8 sm:$0xf0] %v1426
        %s1433 = scalar_lea.vmem [#allocation3], 282
        %1434 = vst.msk [vmem:[%s1433] ss:$8 sm:$0x1] %vm364, %v1427
        %1435 = vst.msk [vmem:[%s1433] ss:$8 sm:$0x0] %vm364, %v1427
        %v1436 = vld [vmem:[#allocation10] sm:$0xf]
        %v1437 = vld [vmem:[#allocation10 + $0x4] sm:$0xf]
        %v1438 = vld [vmem:[#allocation3] sm:$0xff]
        %v1439 = vld [vmem:[#allocation3 + $0x8] sm:$0xff]
        %v1440 = vld [vmem:[#allocation3 + $0x10] sm:$0xff]
        %v1441 = vld [vmem:[#allocation3 + $0x18] sm:$0xff]
        %v1442 = vld [vmem:[#allocation3 + $0x20] sm:$0xff]
        %v1443 = vld [vmem:[#allocation3 + $0x28] sm:$0xff]
        %v1444 = vld [vmem:[#allocation3 + $0x30] sm:$0xff]
        %v1445 = vld [vmem:[#allocation3 + $0x38] sm:$0xff]
        %v1446 = vld [vmem:[#allocation3 + $0x40] sm:$0xff]
        %v1447 = vld [vmem:[#allocation3 + $0x48] sm:$0xff]
        %v1448 = vld [vmem:[#allocation3 + $0x50] sm:$0xff]
        %v1449 = vld [vmem:[#allocation3 + $0x58] sm:$0xff]
        %v1450 = vld [vmem:[#allocation3 + $0x60] sm:$0xff]
        %v1451 = vld [vmem:[#allocation3 + $0x68] sm:$0xff]
        %v1452 = vld [vmem:[#allocation3 + $0x70] sm:$0xff]
        %v1453 = vld [vmem:[#allocation3 + $0x78] sm:$0xff]
        %v1454 = vld [vmem:[#allocation3 + $0x80] sm:$0xff]
        %v1455 = vld [vmem:[#allocation3 + $0x88] sm:$0xff]
        %v1456 = vld [vmem:[#allocation3 + $0x90] sm:$0xff]
        %v1457 = vld [vmem:[#allocation3 + $0x98] sm:$0xff]
        %v1458 = vld [vmem:[#allocation3 + $0xa0] sm:$0xff]
        %v1459 = vld [vmem:[#allocation3 + $0xa8] sm:$0xff]
        %v1460 = vld [vmem:[#allocation3 + $0xb0] sm:$0xff]
        %v1461 = vld [vmem:[#allocation3 + $0xb8] sm:$0xff]
        %v1462 = vld [vmem:[#allocation3 + $0xc0] sm:$0xff]
        %v1463 = vld [vmem:[#allocation3 + $0xc8] sm:$0xff]
        %v1464 = vld [vmem:[#allocation3 + $0xd0] sm:$0xff]
        %v1465 = vld [vmem:[#allocation3 + $0xd8] sm:$0x7]
        %v1466 = vld [vmem:[#allocation3 + $0xe0] sm:$0x7]
        %v1467 = vld [vmem:[#allocation3 + $0xe8] sm:$0x7]
        %v1468 = vld [vmem:[#allocation3 + $0xf0] sm:$0x7]
        %v1469 = vld [vmem:[#allocation3 + $0xf8] sm:$0x7]
        %v1470 = vld [vmem:[#allocation3 + $0x100] sm:$0x7]
        %v1471 = vld [vmem:[#allocation3 + $0x108] sm:$0x7]
        %v1472 = vld [vmem:[#allocation3 + $0x110] sm:$0x7]
        %v1473 = vld [vmem:[#allocation3 + $0x118] sm:$0x7]
        %v1474 = vpack.c.bf16 %v1447, %v1438
        %v1475 = vpack.c.bf16 %v1448, %v1439
        %v1476 = vpack.c.bf16 %v1449, %v1440
        %v1477 = vpack.c.bf16 %v1450, %v1441
        %v1478 = vpack.c.bf16 %v1451, %v1442
        %v1479 = vpack.c.bf16 %v1452, %v1443
        %v1480 = vpack.c.bf16 %v1453, %v1444
        %v1481 = vpack.c.bf16 %v1454, %v1445
        %v1482 = vpack.c.bf16 %v1455, %v1446
        %v1483 = vpack.c.bf16 %v1465, %v1456
        %v1484 = vpack.c.bf16 %v1466, %v1457
        %v1485 = vpack.c.bf16 %v1467, %v1458
        %v1486 = vpack.c.bf16 %v1468, %v1459
        %v1487 = vpack.c.bf16 %v1469, %v1460
        %v1488 = vpack.c.bf16 %v1470, %v1461
        %v1489 = vpack.c.bf16 %v1471, %v1462
        %v1490 = vpack.c.bf16 %v1472, %v1463
        %v1491 = vpack.c.bf16 %v1473, %v1464
        %v1492 = vld [vmem:[%s3] sm:$0xff]
        %v1493 = vld [vmem:[%s3 + $0x8] sm:$0xff]
        %1495 = vset.pattern.permute.xlu0 0
        %1496 = vperm.xlu0 %1495, %v1492
        %v1497 = vpop.permute.xlu0 %1496
        %1500 = vset.pattern.permute.xlu0 0
        %1501 = vperm.xlu0 %1500, %v1493
        %v1502 = vpop.permute.xlu0 %1501
        %v1506 = vunpack.c.l.b16 %v1436
        %v1507 = vunpack.c.l.b16 %v1437
        %v1508 = vpack.c.b16 %v1507, %v1506
        %vm1509 = vcmask 220160
        %v1511 = vsel %vm1509, %v1508, 0
        %vm1513 = vcmask 1044480
        %vm1514 = vcmask 1045504
        %v1515 = vsel %vm1513, 4294967295, 65535
        %v1516 = vsel %vm1514, %v1515, 0
        %v1518 = vand.u32 %v1483, %v1516
        %v1521 = vand.u32 %v1484, %v1516
        %v1524 = vand.u32 %v1485, %v1516
        %v1527 = vand.u32 %v1486, %v1516
        %v1530 = vand.u32 %v1487, %v1516
        %v1533 = vand.u32 %v1488, %v1516
        %v1536 = vand.u32 %v1489, %v1516
        %v1539 = vand.u32 %v1490, %v1516
        %v1542 = vand.u32 %v1491, %v1516
        %1544 = vmatprep.subr.bf16.mxu0 %v1475
        %1545 = vmatpush1.bf16.msra.mxu0 %v1474
        %1546 = vmatprep.subr.bf16.mxu0 %v1521
        %1547 = vmatpush1.bf16.msra.mxu0 %v1518
        %1548 = vmatprep.subr.bf16.mxu0 0
        %1549 = vmatpush1.bf16.msra.mxu0 0
        %1550 = vmatprep.subr.bf16.mxu0 0
        %1551 = vmatpush1.bf16.msra.mxu0 0
        %1552 = vmatprep.subr.bf16.mxu0 0
        %1553 = vmatpush1.bf16.msra.mxu0 0
        %1554 = vmatprep.subr.bf16.mxu0 0
        %1555 = vmatpush1.bf16.msra.mxu0 0
        %1556 = vmatprep.subr.bf16.mxu0 0
        %1557 = vmatpush1.bf16.msra.mxu0 0
        %1558 = vmatprep.subr.bf16.mxu0 0
        %1559 = vmatpush1.bf16.msra.mxu0 0
        %1560 = vmatprep.subr.bf16.mxu0 0
        %1561 = vmatpush1.bf16.msra.mxu0 0
        %1562 = vmatprep.subr.bf16.mxu0 0
        %1563 = vmatpush1.bf16.msra.mxu0 0
        %1564 = vmatprep.subr.bf16.mxu0 0
        %1565 = vmatpush1.bf16.msra.mxu0 0
        %1566 = vmatprep.subr.bf16.mxu0 0
        %1567 = vmatpush1.bf16.msra.mxu0 0
        %1568 = vmatprep.subr.bf16.mxu0 0
        %1569 = vmatpush1.bf16.msra.mxu0 0
        %1570 = vmatprep.subr.bf16.mxu0 0
        %1571 = vmatpush1.bf16.msra.mxu0 0
        %1572 = vmatprep.subr.bf16.mxu0 0
        %1573 = vmatpush1.bf16.msra.mxu0 0
        %1574 = vmatprep.subr.bf16.mxu0 0
        %1575 = vmatpush1.bf16.msra.mxu0 0
        %1576 = vmatprep.mubr.bf16.mxu0 0
        %1577 = vmatmul.mubr.bf16.gmra.mrb[0].mxu0 %v1511
        %v1578 = vpop.f32.mrb[0].mxu0
        %v1579 = vadd.f32 %v1497, %v1578
        %v1580 = vpop.f32.mrb[0].mxu0
        %v1581 = vadd.f32 %v1497, %v1580
        %v1582 = vpop.f32.mrb[0].mxu0
        %v1583 = vadd.f32 %v1502, %v1582
        %v1584 = vpop.f32.mrb[0].mxu0
        %v1585 = vadd.f32 %v1502, %v1584
        %1586 = vdwg.mxu0
        %1587 = vmatprep.subr.bf16.mxu0 %v1477
        %1588 = vmatpush1.bf16.msra.mxu0 %v1476
        %1589 = vmatprep.subr.bf16.mxu0 %v1527
        %1590 = vmatpush1.bf16.msra.mxu0 %v1524
        %1591 = vmatprep.subr.bf16.mxu0 0
        %1592 = vmatpush1.bf16.msra.mxu0 0
        %1593 = vmatprep.subr.bf16.mxu0 0
        %1594 = vmatpush1.bf16.msra.mxu0 0
        %1595 = vmatprep.subr.bf16.mxu0 0
        %1596 = vmatpush1.bf16.msra.mxu0 0
        %1597 = vmatprep.subr.bf16.mxu0 0
        %1598 = vmatpush1.bf16.msra.mxu0 0
        %1599 = vmatprep.subr.bf16.mxu0 0
        %1600 = vmatpush1.bf16.msra.mxu0 0
        %1601 = vmatprep.subr.bf16.mxu0 0
        %1602 = vmatpush1.bf16.msra.mxu0 0
        %1603 = vmatprep.subr.bf16.mxu0 0
        %1604 = vmatpush1.bf16.msra.mxu0 0
        %1605 = vmatprep.subr.bf16.mxu0 0
        %1606 = vmatpush1.bf16.msra.mxu0 0
        %1607 = vmatprep.subr.bf16.mxu0 0
        %1608 = vmatpush1.bf16.msra.mxu0 0
        %1609 = vmatprep.subr.bf16.mxu0 0
        %1610 = vmatpush1.bf16.msra.mxu0 0
        %1611 = vmatprep.subr.bf16.mxu0 0
        %1612 = vmatpush1.bf16.msra.mxu0 0
        %1613 = vmatprep.subr.bf16.mxu0 0
        %1614 = vmatpush1.bf16.msra.mxu0 0
        %1615 = vmatprep.subr.bf16.mxu0 0
        %1616 = vmatpush1.bf16.msra.mxu0 0
        %1617 = vmatprep.subr.bf16.mxu0 0
        %1618 = vmatpush1.bf16.msra.mxu0 0
        %1619 = vmatprep.mubr.bf16.mxu0 0
        %1620 = vmatmul.mubr.bf16.gmra.mrb[0].mxu0 %v1511
        %v1621 = vpop.f32.mrb[0].mxu0
        %v1622 = vadd.f32 %v1497, %v1621
        %v1623 = vpop.f32.mrb[0].mxu0
        %v1624 = vadd.f32 %v1497, %v1623
        %v1625 = vpop.f32.mrb[0].mxu0
        %v1626 = vadd.f32 %v1502, %v1625
        %v1627 = vpop.f32.mrb[0].mxu0
        %v1628 = vadd.f32 %v1502, %v1627
        %1629 = vdwg.mxu0
        %1630 = vmatprep.subr.bf16.mxu0 %v1479
        %1631 = vmatpush1.bf16.msra.mxu0 %v1478
        %1632 = vmatprep.subr.bf16.mxu0 %v1533
        %1633 = vmatpush1.bf16.msra.mxu0 %v1530
        %1634 = vmatprep.subr.bf16.mxu0 0
        %1635 = vmatpush1.bf16.msra.mxu0 0
        %1636 = vmatprep.subr.bf16.mxu0 0
        %1637 = vmatpush1.bf16.msra.mxu0 0
        %1638 = vmatprep.subr.bf16.mxu0 0
        %1639 = vmatpush1.bf16.msra.mxu0 0
        %1640 = vmatprep.subr.bf16.mxu0 0
        %1641 = vmatpush1.bf16.msra.mxu0 0
        %1642 = vmatprep.subr.bf16.mxu0 0
        %1643 = vmatpush1.bf16.msra.mxu0 0
        %1644 = vmatprep.subr.bf16.mxu0 0
        %1645 = vmatpush1.bf16.msra.mxu0 0
        %1646 = vmatprep.subr.bf16.mxu0 0
        %1647 = vmatpush1.bf16.msra.mxu0 0
        %1648 = vmatprep.subr.bf16.mxu0 0
        %1649 = vmatpush1.bf16.msra.mxu0 0
        %1650 = vmatprep.subr.bf16.mxu0 0
        %1651 = vmatpush1.bf16.msra.mxu0 0
        %1652 = vmatprep.subr.bf16.mxu0 0
        %1653 = vmatpush1.bf16.msra.mxu0 0
        %1654 = vmatprep.subr.bf16.mxu0 0
        %1655 = vmatpush1.bf16.msra.mxu0 0
        %1656 = vmatprep.subr.bf16.mxu0 0
        %1657 = vmatpush1.bf16.msra.mxu0 0
        %1658 = vmatprep.subr.bf16.mxu0 0
        %1659 = vmatpush1.bf16.msra.mxu0 0
        %1660 = vmatprep.subr.bf16.mxu0 0
        %1661 = vmatpush1.bf16.msra.mxu0 0
        %1662 = vmatprep.mubr.bf16.mxu0 0
        %1663 = vmatmul.mubr.bf16.gmra.mrb[0].mxu0 %v1511
        %v1664 = vpop.f32.mrb[0].mxu0
        %v1665 = vadd.f32 %v1497, %v1664
        %v1666 = vpop.f32.mrb[0].mxu0
        %v1667 = vadd.f32 %v1497, %v1666
        %v1668 = vpop.f32.mrb[0].mxu0
        %v1669 = vadd.f32 %v1502, %v1668
        %v1670 = vpop.f32.mrb[0].mxu0
        %v1671 = vadd.f32 %v1502, %v1670
        %1672 = vdwg.mxu0
        %1673 = vmatprep.subr.bf16.mxu0 %v1481
        %1674 = vmatpush1.bf16.msra.mxu0 %v1480
        %1675 = vmatprep.subr.bf16.mxu0 %v1539
        %1676 = vmatpush1.bf16.msra.mxu0 %v1536
        %1677 = vmatprep.subr.bf16.mxu0 0
        %1678 = vmatpush1.bf16.msra.mxu0 0
        %1679 = vmatprep.subr.bf16.mxu0 0
        %1680 = vmatpush1.bf16.msra.mxu0 0
        %1681 = vmatprep.subr.bf16.mxu0 0
        %1682 = vmatpush1.bf16.msra.mxu0 0
        %1683 = vmatprep.subr.bf16.mxu0 0
        %1684 = vmatpush1.bf16.msra.mxu0 0
        %1685 = vmatprep.subr.bf16.mxu0 0
        %1686 = vmatpush1.bf16.msra.mxu0 0
        %1687 = vmatprep.subr.bf16.mxu0 0
        %1688 = vmatpush1.bf16.msra.mxu0 0
        %1689 = vmatprep.subr.bf16.mxu0 0
        %1690 = vmatpush1.bf16.msra.mxu0 0
        %1691 = vmatprep.subr.bf16.mxu0 0
        %1692 = vmatpush1.bf16.msra.mxu0 0
        %1693 = vmatprep.subr.bf16.mxu0 0
        %1694 = vmatpush1.bf16.msra.mxu0 0
        %1695 = vmatprep.subr.bf16.mxu0 0
        %1696 = vmatpush1.bf16.msra.mxu0 0
        %1697 = vmatprep.subr.bf16.mxu0 0
        %1698 = vmatpush1.bf16.msra.mxu0 0
        %1699 = vmatprep.subr.bf16.mxu0 0
        %1700 = vmatpush1.bf16.msra.mxu0 0
        %1701 = vmatprep.subr.bf16.mxu0 0
        %1702 = vmatpush1.bf16.msra.mxu0 0
        %1703 = vmatprep.subr.bf16.mxu0 0
        %1704 = vmatpush1.bf16.msra.mxu0 0
        %1705 = vmatprep.mubr.bf16.mxu0 0
        %1706 = vmatmul.mubr.bf16.gmra.mrb[0].mxu0 %v1511
        %v1707 = vpop.f32.mrb[0].mxu0
        %v1708 = vadd.f32 %v1497, %v1707
        %v1709 = vpop.f32.mrb[0].mxu0
        %v1710 = vadd.f32 %v1497, %v1709
        %v1711 = vpop.f32.mrb[0].mxu0
        %v1712 = vadd.f32 %v1502, %v1711
        %v1713 = vpop.f32.mrb[0].mxu0
        %v1714 = vadd.f32 %v1502, %v1713
        %1715 = vdwg.mxu0
        %1716 = vmatprep.subr.bf16.mxu0 0
        %1717 = vmatpush1.bf16.msra.mxu0 %v1482
        %1718 = vmatprep.subr.bf16.mxu0 0
        %1719 = vmatpush1.bf16.msra.mxu0 %v1542
        %1720 = vmatprep.subr.bf16.mxu0 0
        %1721 = vmatpush1.bf16.msra.mxu0 0
        %1722 = vmatprep.subr.bf16.mxu0 0
        %1723 = vmatpush1.bf16.msra.mxu0 0
        %1724 = vmatprep.subr.bf16.mxu0 0
        %1725 = vmatpush1.bf16.msra.mxu0 0
        %1726 = vmatprep.subr.bf16.mxu0 0
        %1727 = vmatpush1.bf16.msra.mxu0 0
        %1728 = vmatprep.subr.bf16.mxu0 0
        %1729 = vmatpush1.bf16.msra.mxu0 0
        %1730 = vmatprep.subr.bf16.mxu0 0
        %1731 = vmatpush1.bf16.msra.mxu0 0
        %1732 = vmatprep.subr.bf16.mxu0 0
        %1733 = vmatpush1.bf16.msra.mxu0 0
        %1734 = vmatprep.subr.bf16.mxu0 0
        %1735 = vmatpush1.bf16.msra.mxu0 0
        %1736 = vmatprep.subr.bf16.mxu0 0
        %1737 = vmatpush1.bf16.msra.mxu0 0
        %1738 = vmatprep.subr.bf16.mxu0 0
        %1739 = vmatpush1.bf16.msra.mxu0 0
        %1740 = vmatprep.subr.bf16.mxu0 0
        %1741 = vmatpush1.bf16.msra.mxu0 0
        %1742 = vmatprep.subr.bf16.mxu0 0
        %1743 = vmatpush1.bf16.msra.mxu0 0
        %1744 = vmatprep.subr.bf16.mxu0 0
        %1745 = vmatpush1.bf16.msra.mxu0 0
        %1746 = vmatprep.subr.bf16.mxu0 0
        %1747 = vmatpush1.bf16.msra.mxu0 0
        %1748 = vmatprep.mubr.bf16.mxu0 0
        %1749 = vmatmul.mubr.bf16.gmra.mrb[0].mxu0 %v1511
        %v1750 = vpop.f32.mrb[0].mxu0
        %v1751 = vadd.f32 %v1497, %v1750
        %v1752 = vpop.f32.mrb[0].mxu0
        %v1753 = vpop.f32.mrb[0].mxu0
        %v1754 = vadd.f32 %v1502, %v1753
        %v1755 = vpop.f32.mrb[0].mxu0
        %1756 = vdwg.mxu0
        %v1757 = vmax.f32 %v1579, 0.0
        %v1758 = vmax.f32 %v1581, 0.0
        %v1759 = vmax.f32 %v1622, 0.0
        %v1760 = vmax.f32 %v1624, 0.0
        %v1761 = vmax.f32 %v1665, 0.0
        %v1762 = vmax.f32 %v1667, 0.0
        %v1763 = vmax.f32 %v1708, 0.0
        %v1764 = vmax.f32 %v1710, 0.0
        %v1765 = vmax.f32 %v1751, 0.0
        %v1766 = vmax.f32 %v1583, 0.0
        %v1767 = vmax.f32 %v1585, 0.0
        %v1768 = vmax.f32 %v1626, 0.0
        %v1769 = vmax.f32 %v1628, 0.0
        %v1770 = vmax.f32 %v1669, 0.0
        %v1771 = vmax.f32 %v1671, 0.0
        %v1772 = vmax.f32 %v1712, 0.0
        %v1773 = vmax.f32 %v1714, 0.0
        %v1774 = vmax.f32 %v1754, 0.0
        %1775 = vst [vmem:[#allocation4] sm:$0xff] 0.0
        %1776 = vst [vmem:[#allocation4 + $0x8] sm:$0xff] 0.0
        %1777 = vst [vmem:[#allocation4 + $0x68] sm:$0xff] 0.0
        %1778 = vst [vmem:[#allocation4 + $0x70] sm:$0xff] 0.0
        %1779 = vst [vmem:[#allocation4 + $0x58] sm:$0xff] 0.0
        %1780 = vst [vmem:[#allocation4 + $0x60] sm:$0xff] 0.0
        %1781 = vst [vmem:[#allocation4 + $0xc0] sm:$0xff] 0.0
        %1782 = vst [vmem:[#allocation4 + $0xc8] sm:$0xff] 0.0
        %1783 = vst [vmem:[#allocation4 + $0x10] sm:$0xff] %v1757
        %1784 = vst [vmem:[#allocation4 + $0x18] sm:$0xff] %v1758
        %1785 = vst [vmem:[#allocation4 + $0x20] sm:$0xff] %v1759
        %1786 = vst [vmem:[#allocation4 + $0x28] sm:$0xff] %v1760
        %1787 = vst [vmem:[#allocation4 + $0x30] sm:$0xff] %v1761
        %1788 = vst [vmem:[#allocation4 + $0x38] sm:$0xff] %v1762
        %1789 = vst [vmem:[#allocation4 + $0x40] sm:$0xff] %v1763
        %1790 = vst [vmem:[#allocation4 + $0x48] sm:$0xff] %v1764
        %1791 = vst [vmem:[#allocation4 + $0x50] sm:$0xff] %v1765
        %1792 = vst [vmem:[#allocation4 + $0x78] sm:$0xff] %v1766
        %1793 = vst [vmem:[#allocation4 + $0x80] sm:$0xff] %v1767
        %1794 = vst [vmem:[#allocation4 + $0x88] sm:$0xff] %v1768
        %1795 = vst [vmem:[#allocation4 + $0x90] sm:$0xff] %v1769
        %1796 = vst [vmem:[#allocation4 + $0x98] sm:$0xff] %v1770
        %1797 = vst [vmem:[#allocation4 + $0xa0] sm:$0xff] %v1771
        %1798 = vst [vmem:[#allocation4 + $0xa8] sm:$0xff] %v1772
        %1799 = vst [vmem:[#allocation4 + $0xb0] sm:$0xff] %v1773
        %1800 = vst [vmem:[#allocation4 + $0xb8] sm:$0xff] %v1774
        %v1801 = vld [vmem:[#allocation4] sm:$0xff]
        %v1802 = vld [vmem:[#allocation4 + $0x8] sm:$0xff]
        %v1803 = vld [vmem:[#allocation4 + $0x10] sm:$0xff]
        %v1804 = vld [vmem:[#allocation4 + $0x18] sm:$0xff]
        %v1805 = vld [vmem:[#allocation4 + $0x20] sm:$0xff]
        %v1806 = vld [vmem:[#allocation4 + $0x28] sm:$0xff]
        %v1807 = vld [vmem:[#allocation4 + $0x30] sm:$0xff]
        %v1808 = vld [vmem:[#allocation4 + $0x38] sm:$0xff]
        %v1809 = vld [vmem:[#allocation4 + $0x40] sm:$0xff]
        %v1810 = vld [vmem:[#allocation4 + $0x48] sm:$0xff]
        %v1811 = vld [vmem:[#allocation4 + $0x68] sm:$0xff]
        %v1812 = vld [vmem:[#allocation4 + $0x70] sm:$0xff]
        %v1813 = vld [vmem:[#allocation4 + $0x78] sm:$0xff]
        %v1814 = vld [vmem:[#allocation4 + $0x80] sm:$0xff]
        %v1815 = vld [vmem:[#allocation4 + $0x88] sm:$0xff]
        %v1816 = vld [vmem:[#allocation4 + $0x90] sm:$0xff]
        %v1817 = vld [vmem:[#allocation4 + $0x98] sm:$0xff]
        %v1818 = vld [vmem:[#allocation4 + $0xa0] sm:$0xff]
        %v1819 = vld [vmem:[#allocation4 + $0xa8] sm:$0xff]
        %v1820 = vld [vmem:[#allocation4 + $0xb0] sm:$0xff]
        %v1821 = vld [vmem:[#allocation8] ss:$8 sm:$0xf]
        %v1822 = vld [vmem:[#allocation8] ss:$8 sm:$0xf0]
        %v1823 = vor.u32 %v1821, %v1822
        %v1824 = vld [vmem:[%s371] ss:$8 sm:$0x1]
        %v1827 = vlaneseq
        %v1828 = vshrl.u32 %v1827, 7
        %v1829 = vsub.s32 0, %v1828
        %v1830 = vrot.slane %v1823, %v1829
        %v1831 = vlaneseq
        %v1832 = vshrl.u32 %v1831, 7
        %v1833 = vsub.s32 1, %v1832
        %v1834 = vrot.slane %v1823, %v1833
        %v1835 = vlaneseq
        %v1836 = vshrl.u32 %v1835, 7
        %v1837 = vsub.s32 2, %v1836
        %v1838 = vrot.slane %v1823, %v1837
        %v1839 = vlaneseq
        %v1840 = vshrl.u32 %v1839, 7
        %v1841 = vsub.s32 3, %v1840
        %v1842 = vrot.slane %v1823, %v1841
        %v1843 = vlaneseq
        %v1844 = vshrl.u32 %v1843, 7
        %v1845 = vsub.s32 4, %v1844
        %v1846 = vrot.slane %v1823, %v1845
        %v1847 = vlaneseq
        %v1848 = vshrl.u32 %v1847, 7
        %v1849 = vsub.s32 5, %v1848
        %v1850 = vrot.slane %v1823, %v1849
        %v1851 = vlaneseq
        %v1852 = vshrl.u32 %v1851, 7
        %v1853 = vsub.s32 6, %v1852
        %v1854 = vrot.slane %v1823, %v1853
        %v1855 = vlaneseq
        %v1856 = vshrl.u32 %v1855, 7
        %v1857 = vsub.s32 7, %v1856
        %v1858 = vrot.slane %v1823, %v1857
        %v1859 = vlaneseq
        %v1860 = vshrl.u32 %v1859, 7
        %v1861 = vsub.s32 0, %v1860
        %v1862 = vrot.slane %v1824, %v1861
        %1863 = vrot.lane.b32.xlu0 %v1830, 95
        %v1864 = vpop.permute.xlu0 %1863
        %1865 = vrot.lane.b32.xlu0 %v1834, 95
        %v1866 = vpop.permute.xlu0 %1865
        %1867 = vrot.lane.b32.xlu0 %v1838, 95
        %v1868 = vpop.permute.xlu0 %1867
        %1869 = vrot.lane.b32.xlu0 %v1842, 95
        %v1870 = vpop.permute.xlu0 %1869
        %1871 = vrot.lane.b32.xlu0 %v1846, 95
        %v1872 = vpop.permute.xlu0 %1871
        %1873 = vrot.lane.b32.xlu0 %v1850, 95
        %v1874 = vpop.permute.xlu0 %1873
        %1875 = vrot.lane.b32.xlu0 %v1854, 95
        %v1876 = vpop.permute.xlu0 %1875
        %1877 = vrot.lane.b32.xlu0 %v1858, 95
        %v1878 = vpop.permute.xlu0 %1877
        %1879 = vrot.lane.b32.xlu0 %v1862, 95
        %v1880 = vpop.permute.xlu0 %1879
        %v1881 = vsel %vm381, %v1864, %v1866
        %v1882 = vsel %vm381, %v1866, %v1868
        %v1883 = vsel %vm381, %v1868, %v1870
        %v1884 = vsel %vm381, %v1870, %v1872
        %v1885 = vsel %vm381, %v1872, %v1874
        %v1886 = vsel %vm381, %v1874, %v1876
        %v1887 = vsel %vm381, %v1876, %v1878
        %v1888 = vsel %vm381, %v1878, %v1880
        %v1899 = vmul.f32 %v1801, %v1864
        %v1900 = vmul.f32 %v1802, %v1881
        %v1901 = vmul.f32 %v1803, %v1882
        %v1902 = vmul.f32 %v1804, %v1883
        %v1903 = vmul.f32 %v1805, %v1884
        %v1904 = vmul.f32 %v1806, %v1885
        %v1905 = vmul.f32 %v1807, %v1886
        %v1906 = vmul.f32 %v1808, %v1887
        %v1907 = vmul.f32 %v1809, %v1888
        %v1908 = vmul.f32 %v1810, %v1880
        %v1909 = vmul.f32 %v1811, %v1864
        %v1910 = vmul.f32 %v1812, %v1881
        %v1911 = vmul.f32 %v1813, %v1882
        %v1912 = vmul.f32 %v1814, %v1883
        %v1913 = vmul.f32 %v1815, %v1884
        %v1914 = vmul.f32 %v1816, %v1885
        %v1915 = vmul.f32 %v1817, %v1886
        %v1916 = vmul.f32 %v1818, %v1887
        %v1917 = vmul.f32 %v1819, %v1888
        %v1918 = vmul.f32 %v1820, %v1880
        %v1919 = vpack.c.bf16 %v1909, %v1899
        %v1920 = vpack.c.bf16 %v1910, %v1900
        %v1921 = vpack.c.bf16 %v1911, %v1901
        %v1922 = vpack.c.bf16 %v1912, %v1902
        %v1923 = vpack.c.bf16 %v1913, %v1903
        %v1924 = vpack.c.bf16 %v1914, %v1904
        %v1925 = vpack.c.bf16 %v1915, %v1905
        %v1926 = vpack.c.bf16 %v1916, %v1906
        %v1927 = vpack.c.bf16 %v1917, %v1907
        %v1928 = vpack.c.bf16 %v1918, %v1908
        %1939 = vrot.lane.b32.xlu0 %v1919, 33
        %v1940 = vpop.permute.xlu0 %1939
        %1941 = vrot.lane.b32.xlu0 %v1920, 33
        %v1942 = vpop.permute.xlu0 %1941
        %1943 = vrot.lane.b32.xlu0 %v1921, 33
        %v1944 = vpop.permute.xlu0 %1943
        %1945 = vrot.lane.b32.xlu0 %v1922, 33
        %v1946 = vpop.permute.xlu0 %1945
        %1947 = vrot.lane.b32.xlu0 %v1923, 33
        %v1948 = vpop.permute.xlu0 %1947
        %1949 = vrot.lane.b32.xlu0 %v1924, 33
        %v1950 = vpop.permute.xlu0 %1949
        %1951 = vrot.lane.b32.xlu0 %v1925, 33
        %v1952 = vpop.permute.xlu0 %1951
        %1953 = vrot.lane.b32.xlu0 %v1926, 33
        %v1954 = vpop.permute.xlu0 %1953
        %1955 = vrot.lane.b32.xlu0 %v1927, 33
        %v1956 = vpop.permute.xlu0 %1955
        %1957 = vrot.lane.b32.xlu0 %v1928, 33
        %v1958 = vpop.permute.xlu0 %1957
        %vm1959 = vcmask 269312
        %v1960 = vsel %vm1959, %v1940, %v1942
        %v1961 = vsel %vm1959, %v1942, %v1944
        %v1962 = vsel %vm1959, %v1944, %v1946
        %v1963 = vsel %vm1959, %v1946, %v1948
        %v1964 = vsel %vm1959, %v1948, %v1950
        %v1965 = vsel %vm1959, %v1950, %v1952
        %v1966 = vsel %vm1959, %v1952, %v1954
        %v1967 = vsel %vm1959, %v1954, %v1956
        %v1968 = vsel %vm1959, %v1956, %v1958
        %1978 = vst [vmem:[#allocation5] sm:$0xff] %v1960
        %1979 = vst [vmem:[#allocation5 + $0x8] sm:$0xff] %v1961
        %1980 = vst [vmem:[#allocation5 + $0x10] sm:$0xff] %v1962
        %1981 = vst [vmem:[#allocation5 + $0x18] sm:$0xff] %v1963
        %1982 = vst [vmem:[#allocation5 + $0x20] sm:$0xff] %v1964
        %1983 = vst [vmem:[#allocation5 + $0x28] sm:$0xff] %v1965
        %1984 = vst [vmem:[#allocation5 + $0x30] sm:$0xff] %v1966
        %1985 = vst [vmem:[#allocation5 + $0x38] sm:$0xff] %v1967
        %1986 = vst [vmem:[#allocation5 + $0x40] sm:$0xff] %v1968
        %v1987 = vld [vmem:[#allocation4] sm:$0xff]
        %v1988 = vld [vmem:[#allocation4 + $0x8] sm:$0xff]
        %v1989 = vld [vmem:[#allocation4 + $0x10] sm:$0xff]
        %v1990 = vld [vmem:[#allocation4 + $0x18] sm:$0xff]
        %v1991 = vld [vmem:[#allocation4 + $0x20] sm:$0xff]
        %v1992 = vld [vmem:[#allocation4 + $0x28] sm:$0xff]
        %v1993 = vld [vmem:[#allocation4 + $0x30] sm:$0xff]
        %v1994 = vld [vmem:[#allocation4 + $0x38] sm:$0xff]
        %v1995 = vld [vmem:[#allocation4 + $0x40] sm:$0xff]
        %v1996 = vld [vmem:[#allocation4 + $0x48] sm:$0xff]
        %v1997 = vld [vmem:[#allocation4 + $0x68] sm:$0xff]
        %v1998 = vld [vmem:[#allocation4 + $0x70] sm:$0xff]
        %v1999 = vld [vmem:[#allocation4 + $0x78] sm:$0xff]
        %v2000 = vld [vmem:[#allocation4 + $0x80] sm:$0xff]
        %v2001 = vld [vmem:[#allocation4 + $0x88] sm:$0xff]
        %v2002 = vld [vmem:[#allocation4 + $0x90] sm:$0xff]
        %v2003 = vld [vmem:[#allocation4 + $0x98] sm:$0xff]
        %v2004 = vld [vmem:[#allocation4 + $0xa0] sm:$0xff]
        %v2005 = vld [vmem:[#allocation4 + $0xa8] sm:$0xff]
        %v2006 = vld [vmem:[#allocation4 + $0xb0] sm:$0xff]
        %v2007 = vld [vmem:[%s412] ss:$8 sm:$0xf]
        %v2008 = vld [vmem:[%s412] ss:$8 sm:$0xf0]
        %v2009 = vor.u32 %v2007, %v2008
        %v2010 = vld [vmem:[%s416] ss:$8 sm:$0x1]
        %v2013 = vlaneseq
        %v2014 = vshrl.u32 %v2013, 7
        %v2015 = vsub.s32 0, %v2014
        %v2016 = vrot.slane %v2009, %v2015
        %v2017 = vlaneseq
        %v2018 = vshrl.u32 %v2017, 7
        %v2019 = vsub.s32 1, %v2018
        %v2020 = vrot.slane %v2009, %v2019
        %v2021 = vlaneseq
        %v2022 = vshrl.u32 %v2021, 7
        %v2023 = vsub.s32 2, %v2022
        %v2024 = vrot.slane %v2009, %v2023
        %v2025 = vlaneseq
        %v2026 = vshrl.u32 %v2025, 7
        %v2027 = vsub.s32 3, %v2026
        %v2028 = vrot.slane %v2009, %v2027
        %v2029 = vlaneseq
        %v2030 = vshrl.u32 %v2029, 7
        %v2031 = vsub.s32 4, %v2030
        %v2032 = vrot.slane %v2009, %v2031
        %v2033 = vlaneseq
        %v2034 = vshrl.u32 %v2033, 7
        %v2035 = vsub.s32 5, %v2034
        %v2036 = vrot.slane %v2009, %v2035
        %v2037 = vlaneseq
        %v2038 = vshrl.u32 %v2037, 7
        %v2039 = vsub.s32 6, %v2038
        %v2040 = vrot.slane %v2009, %v2039
        %v2041 = vlaneseq
        %v2042 = vshrl.u32 %v2041, 7
        %v2043 = vsub.s32 7, %v2042
        %v2044 = vrot.slane %v2009, %v2043
        %v2045 = vlaneseq
        %v2046 = vshrl.u32 %v2045, 7
        %v2047 = vsub.s32 0, %v2046
        %v2048 = vrot.slane %v2010, %v2047
        %2049 = vrot.lane.b32.xlu0 %v2016, 96
        %v2050 = vpop.permute.xlu0 %2049
        %2051 = vrot.lane.b32.xlu0 %v2020, 96
        %v2052 = vpop.permute.xlu0 %2051
        %2053 = vrot.lane.b32.xlu0 %v2024, 96
        %v2054 = vpop.permute.xlu0 %2053
        %2055 = vrot.lane.b32.xlu0 %v2028, 96
        %v2056 = vpop.permute.xlu0 %2055
        %2057 = vrot.lane.b32.xlu0 %v2032, 96
        %v2058 = vpop.permute.xlu0 %2057
        %2059 = vrot.lane.b32.xlu0 %v2036, 96
        %v2060 = vpop.permute.xlu0 %2059
        %2061 = vrot.lane.b32.xlu0 %v2040, 96
        %v2062 = vpop.permute.xlu0 %2061
        %2063 = vrot.lane.b32.xlu0 %v2044, 96
        %v2064 = vpop.permute.xlu0 %2063
        %2065 = vrot.lane.b32.xlu0 %v2048, 96
        %v2066 = vpop.permute.xlu0 %2065
        %v2067 = vsel %vm426, %v2050, %v2052
        %v2068 = vsel %vm426, %v2052, %v2054
        %v2069 = vsel %vm426, %v2054, %v2056
        %v2070 = vsel %vm426, %v2056, %v2058
        %v2071 = vsel %vm426, %v2058, %v2060
        %v2072 = vsel %vm426, %v2060, %v2062
        %v2073 = vsel %vm426, %v2062, %v2064
        %v2074 = vsel %vm426, %v2064, %v2066
        %v2085 = vmul.f32 %v1987, %v2050
        %v2086 = vmul.f32 %v1988, %v2067
        %v2087 = vmul.f32 %v1989, %v2068
        %v2088 = vmul.f32 %v1990, %v2069
        %v2089 = vmul.f32 %v1991, %v2070
        %v2090 = vmul.f32 %v1992, %v2071
        %v2091 = vmul.f32 %v1993, %v2072
        %v2092 = vmul.f32 %v1994, %v2073
        %v2093 = vmul.f32 %v1995, %v2074
        %v2094 = vmul.f32 %v1996, %v2066
        %v2095 = vmul.f32 %v1997, %v2050
        %v2096 = vmul.f32 %v1998, %v2067
        %v2097 = vmul.f32 %v1999, %v2068
        %v2098 = vmul.f32 %v2000, %v2069
        %v2099 = vmul.f32 %v2001, %v2070
        %v2100 = vmul.f32 %v2002, %v2071
        %v2101 = vmul.f32 %v2003, %v2072
        %v2102 = vmul.f32 %v2004, %v2073
        %v2103 = vmul.f32 %v2005, %v2074
        %v2104 = vmul.f32 %v2006, %v2066
        %v2105 = vpack.c.bf16 %v2095, %v2085
        %v2106 = vpack.c.bf16 %v2096, %v2086
        %v2107 = vpack.c.bf16 %v2097, %v2087
        %v2108 = vpack.c.bf16 %v2098, %v2088
        %v2109 = vpack.c.bf16 %v2099, %v2089
        %v2110 = vpack.c.bf16 %v2100, %v2090
        %v2111 = vpack.c.bf16 %v2101, %v2091
        %v2112 = vpack.c.bf16 %v2102, %v2092
        %v2113 = vpack.c.bf16 %v2103, %v2093
        %v2114 = vpack.c.bf16 %v2104, %v2094
        %2125 = vrot.lane.b32.xlu0 %v2105, 32
        %v2126 = vpop.permute.xlu0 %2125
        %2127 = vrot.lane.b32.xlu0 %v2106, 32
        %v2128 = vpop.permute.xlu0 %2127
        %2129 = vrot.lane.b32.xlu0 %v2107, 32
        %v2130 = vpop.permute.xlu0 %2129
        %2131 = vrot.lane.b32.xlu0 %v2108, 32
        %v2132 = vpop.permute.xlu0 %2131
        %2133 = vrot.lane.b32.xlu0 %v2109, 32
        %v2134 = vpop.permute.xlu0 %2133
        %2135 = vrot.lane.b32.xlu0 %v2110, 32
        %v2136 = vpop.permute.xlu0 %2135
        %2137 = vrot.lane.b32.xlu0 %v2111, 32
        %v2138 = vpop.permute.xlu0 %2137
        %2139 = vrot.lane.b32.xlu0 %v2112, 32
        %v2140 = vpop.permute.xlu0 %2139
        %2141 = vrot.lane.b32.xlu0 %v2113, 32
        %v2142 = vpop.permute.xlu0 %2141
        %2143 = vrot.lane.b32.xlu0 %v2114, 32
        %v2144 = vpop.permute.xlu0 %2143
        %vm2145 = vcmask 261120
        %v2146 = vsel %vm2145, %v2126, %v2128
        %v2147 = vsel %vm2145, %v2128, %v2130
        %v2148 = vsel %vm2145, %v2130, %v2132
        %v2149 = vsel %vm2145, %v2132, %v2134
        %v2150 = vsel %vm2145, %v2134, %v2136
        %v2151 = vsel %vm2145, %v2136, %v2138
        %v2152 = vsel %vm2145, %v2138, %v2140
        %v2153 = vsel %vm2145, %v2140, %v2142
        %v2154 = vsel %vm2145, %v2142, %v2144
        %2164 = vst [vmem:[#allocation5 + $0x48] sm:$0xff] %v2146
        %2165 = vst [vmem:[#allocation5 + $0x50] sm:$0xff] %v2147
        %2166 = vst [vmem:[#allocation5 + $0x58] sm:$0xff] %v2148
        %2167 = vst [vmem:[#allocation5 + $0x60] sm:$0xff] %v2149
        %2168 = vst [vmem:[#allocation5 + $0x68] sm:$0xff] %v2150
        %2169 = vst [vmem:[#allocation5 + $0x70] sm:$0xff] %v2151
        %2170 = vst [vmem:[#allocation5 + $0x78] sm:$0xff] %v2152
        %2171 = vst [vmem:[#allocation5 + $0x80] sm:$0xff] %v2153
        %2172 = vst [vmem:[#allocation5 + $0x88] sm:$0xff] %v2154
        %v2173 = vld [vmem:[#allocation4] sm:$0xff]
        %v2174 = vld [vmem:[#allocation4 + $0x8] sm:$0xff]
        %v2175 = vld [vmem:[#allocation4 + $0x10] sm:$0xff]
        %v2176 = vld [vmem:[#allocation4 + $0x18] sm:$0xff]
        %v2177 = vld [vmem:[#allocation4 + $0x20] sm:$0xff]
        %v2178 = vld [vmem:[#allocation4 + $0x28] sm:$0xff]
        %v2179 = vld [vmem:[#allocation4 + $0x30] sm:$0xff]
        %v2180 = vld [vmem:[#allocation4 + $0x38] sm:$0xff]
        %v2181 = vld [vmem:[#allocation4 + $0x40] sm:$0xff]
        %v2182 = vld [vmem:[#allocation4 + $0x48] sm:$0xff]
        %v2183 = vld [vmem:[#allocation4 + $0x68] sm:$0xff]
        %v2184 = vld [vmem:[#allocation4 + $0x70] sm:$0xff]
        %v2185 = vld [vmem:[#allocation4 + $0x78] sm:$0xff]
        %v2186 = vld [vmem:[#allocation4 + $0x80] sm:$0xff]
        %v2187 = vld [vmem:[#allocation4 + $0x88] sm:$0xff]
        %v2188 = vld [vmem:[#allocation4 + $0x90] sm:$0xff]
        %v2189 = vld [vmem:[#allocation4 + $0x98] sm:$0xff]
        %v2190 = vld [vmem:[#allocation4 + $0xa0] sm:$0xff]
        %v2191 = vld [vmem:[#allocation4 + $0xa8] sm:$0xff]
        %v2192 = vld [vmem:[#allocation4 + $0xb0] sm:$0xff]
        %v2193 = vld [vmem:[%s456] ss:$8 sm:$0xf]
        %v2194 = vld [vmem:[%s456] ss:$8 sm:$0xf0]
        %v2195 = vor.u32 %v2193, %v2194
        %v2196 = vld [vmem:[%s460] ss:$8 sm:$0x1]
        %v2199 = vlaneseq
        %v2200 = vshrl.u32 %v2199, 7
        %v2201 = vsub.s32 0, %v2200
        %v2202 = vrot.slane %v2195, %v2201
        %v2203 = vlaneseq
        %v2204 = vshrl.u32 %v2203, 7
        %v2205 = vsub.s32 1, %v2204
        %v2206 = vrot.slane %v2195, %v2205
        %v2207 = vlaneseq
        %v2208 = vshrl.u32 %v2207, 7
        %v2209 = vsub.s32 2, %v2208
        %v2210 = vrot.slane %v2195, %v2209
        %v2211 = vlaneseq
        %v2212 = vshrl.u32 %v2211, 7
        %v2213 = vsub.s32 3, %v2212
        %v2214 = vrot.slane %v2195, %v2213
        %v2215 = vlaneseq
        %v2216 = vshrl.u32 %v2215, 7
        %v2217 = vsub.s32 4, %v2216
        %v2218 = vrot.slane %v2195, %v2217
        %v2219 = vlaneseq
        %v2220 = vshrl.u32 %v2219, 7
        %v2221 = vsub.s32 5, %v2220
        %v2222 = vrot.slane %v2195, %v2221
        %v2223 = vlaneseq
        %v2224 = vshrl.u32 %v2223, 7
        %v2225 = vsub.s32 6, %v2224
        %v2226 = vrot.slane %v2195, %v2225
        %v2227 = vlaneseq
        %v2228 = vshrl.u32 %v2227, 7
        %v2229 = vsub.s32 7, %v2228
        %v2230 = vrot.slane %v2195, %v2229
        %v2231 = vlaneseq
        %v2232 = vshrl.u32 %v2231, 7
        %v2233 = vsub.s32 0, %v2232
        %v2234 = vrot.slane %v2196, %v2233
        %2235 = vrot.lane.b32.xlu0 %v2202, 97
        %v2236 = vpop.permute.xlu0 %2235
        %2237 = vrot.lane.b32.xlu0 %v2206, 97
        %v2238 = vpop.permute.xlu0 %2237
        %2239 = vrot.lane.b32.xlu0 %v2210, 97
        %v2240 = vpop.permute.xlu0 %2239
        %2241 = vrot.lane.b32.xlu0 %v2214, 97
        %v2242 = vpop.permute.xlu0 %2241
        %2243 = vrot.lane.b32.xlu0 %v2218, 97
        %v2244 = vpop.permute.xlu0 %2243
        %2245 = vrot.lane.b32.xlu0 %v2222, 97
        %v2246 = vpop.permute.xlu0 %2245
        %2247 = vrot.lane.b32.xlu0 %v2226, 97
        %v2248 = vpop.permute.xlu0 %2247
        %2249 = vrot.lane.b32.xlu0 %v2230, 97
        %v2250 = vpop.permute.xlu0 %2249
        %2251 = vrot.lane.b32.xlu0 %v2234, 97
        %v2252 = vpop.permute.xlu0 %2251
        %v2253 = vsel %vm470, %v2236, %v2238
        %v2254 = vsel %vm470, %v2238, %v2240
        %v2255 = vsel %vm470, %v2240, %v2242
        %v2256 = vsel %vm470, %v2242, %v2244
        %v2257 = vsel %vm470, %v2244, %v2246
        %v2258 = vsel %vm470, %v2246, %v2248
        %v2259 = vsel %vm470, %v2248, %v2250
        %v2260 = vsel %vm470, %v2250, %v2252
        %v2271 = vmul.f32 %v2173, %v2236
        %v2272 = vmul.f32 %v2174, %v2253
        %v2273 = vmul.f32 %v2175, %v2254
        %v2274 = vmul.f32 %v2176, %v2255
        %v2275 = vmul.f32 %v2177, %v2256
        %v2276 = vmul.f32 %v2178, %v2257
        %v2277 = vmul.f32 %v2179, %v2258
        %v2278 = vmul.f32 %v2180, %v2259
        %v2279 = vmul.f32 %v2181, %v2260
        %v2280 = vmul.f32 %v2182, %v2252
        %v2281 = vmul.f32 %v2183, %v2236
        %v2282 = vmul.f32 %v2184, %v2253
        %v2283 = vmul.f32 %v2185, %v2254
        %v2284 = vmul.f32 %v2186, %v2255
        %v2285 = vmul.f32 %v2187, %v2256
        %v2286 = vmul.f32 %v2188, %v2257
        %v2287 = vmul.f32 %v2189, %v2258
        %v2288 = vmul.f32 %v2190, %v2259
        %v2289 = vmul.f32 %v2191, %v2260
        %v2290 = vmul.f32 %v2192, %v2252
        %v2291 = vpack.c.bf16 %v2281, %v2271
        %v2292 = vpack.c.bf16 %v2282, %v2272
        %v2293 = vpack.c.bf16 %v2283, %v2273
        %v2294 = vpack.c.bf16 %v2284, %v2274
        %v2295 = vpack.c.bf16 %v2285, %v2275
        %v2296 = vpack.c.bf16 %v2286, %v2276
        %v2297 = vpack.c.bf16 %v2287, %v2277
        %v2298 = vpack.c.bf16 %v2288, %v2278
        %v2299 = vpack.c.bf16 %v2289, %v2279
        %v2300 = vpack.c.bf16 %v2290, %v2280
        %2311 = vrot.lane.b32.xlu0 %v2291, 31
        %v2312 = vpop.permute.xlu0 %2311
        %2313 = vrot.lane.b32.xlu0 %v2292, 31
        %v2314 = vpop.permute.xlu0 %2313
        %2315 = vrot.lane.b32.xlu0 %v2293, 31
        %v2316 = vpop.permute.xlu0 %2315
        %2317 = vrot.lane.b32.xlu0 %v2294, 31
        %v2318 = vpop.permute.xlu0 %2317
        %2319 = vrot.lane.b32.xlu0 %v2295, 31
        %v2320 = vpop.permute.xlu0 %2319
        %2321 = vrot.lane.b32.xlu0 %v2296, 31
        %v2322 = vpop.permute.xlu0 %2321
        %2323 = vrot.lane.b32.xlu0 %v2297, 31
        %v2324 = vpop.permute.xlu0 %2323
        %2325 = vrot.lane.b32.xlu0 %v2298, 31
        %v2326 = vpop.permute.xlu0 %2325
        %2327 = vrot.lane.b32.xlu0 %v2299, 31
        %v2328 = vpop.permute.xlu0 %2327
        %2329 = vrot.lane.b32.xlu0 %v2300, 31
        %v2330 = vpop.permute.xlu0 %2329
        %vm2331 = vcmask 252928
        %v2332 = vsel %vm2331, %v2312, %v2314
        %v2333 = vsel %vm2331, %v2314, %v2316
        %v2334 = vsel %vm2331, %v2316, %v2318
        %v2335 = vsel %vm2331, %v2318, %v2320
        %v2336 = vsel %vm2331, %v2320, %v2322
        %v2337 = vsel %vm2331, %v2322, %v2324
        %v2338 = vsel %vm2331, %v2324, %v2326
        %v2339 = vsel %vm2331, %v2326, %v2328
        %v2340 = vsel %vm2331, %v2328, %v2330
        %2350 = vst [vmem:[#allocation5 + $0x90] sm:$0xff] %v2332
        %2351 = vst [vmem:[#allocation5 + $0x98] sm:$0xff] %v2333
        %2352 = vst [vmem:[#allocation5 + $0xa0] sm:$0xff] %v2334
        %2353 = vst [vmem:[#allocation5 + $0xa8] sm:$0xff] %v2335
        %2354 = vst [vmem:[#allocation5 + $0xb0] sm:$0xff] %v2336
        %2355 = vst [vmem:[#allocation5 + $0xb8] sm:$0xff] %v2337
        %2356 = vst [vmem:[#allocation5 + $0xc0] sm:$0xff] %v2338
        %2357 = vst [vmem:[#allocation5 + $0xc8] sm:$0xff] %v2339
        %2358 = vst [vmem:[#allocation5 + $0xd0] sm:$0xff] %v2340
        %v2359 = vld [vmem:[#allocation4] sm:$0xff]
        %v2360 = vld [vmem:[#allocation4 + $0x8] sm:$0xff]
        %v2361 = vld [vmem:[#allocation4 + $0x10] sm:$0xff]
        %v2362 = vld [vmem:[#allocation4 + $0x18] sm:$0xff]
        %v2363 = vld [vmem:[#allocation4 + $0x20] sm:$0xff]
        %v2364 = vld [vmem:[#allocation4 + $0x28] sm:$0xff]
        %v2365 = vld [vmem:[#allocation4 + $0x30] sm:$0xff]
        %v2366 = vld [vmem:[#allocation4 + $0x38] sm:$0xff]
        %v2367 = vld [vmem:[#allocation4 + $0x40] sm:$0xff]
        %v2368 = vld [vmem:[#allocation4 + $0x48] sm:$0xff]
        %v2369 = vld [vmem:[#allocation4 + $0x68] sm:$0xff]
        %v2370 = vld [vmem:[#allocation4 + $0x70] sm:$0xff]
        %v2371 = vld [vmem:[#allocation4 + $0x78] sm:$0xff]
        %v2372 = vld [vmem:[#allocation4 + $0x80] sm:$0xff]
        %v2373 = vld [vmem:[#allocation4 + $0x88] sm:$0xff]
        %v2374 = vld [vmem:[#allocation4 + $0x90] sm:$0xff]
        %v2375 = vld [vmem:[#allocation4 + $0x98] sm:$0xff]
        %v2376 = vld [vmem:[#allocation4 + $0xa0] sm:$0xff]
        %v2377 = vld [vmem:[#allocation4 + $0xa8] sm:$0xff]
        %v2378 = vld [vmem:[#allocation4 + $0xb0] sm:$0xff]
        %v2379 = vld [vmem:[%s500] ss:$8 sm:$0xf]
        %v2380 = vld [vmem:[%s500] ss:$8 sm:$0xf0]
        %v2381 = vor.u32 %v2379, %v2380
        %v2382 = vld [vmem:[%s504] ss:$8 sm:$0x1]
        %v2385 = vlaneseq
        %v2386 = vshrl.u32 %v2385, 7
        %v2387 = vsub.s32 0, %v2386
        %v2388 = vrot.slane %v2381, %v2387
        %v2389 = vlaneseq
        %v2390 = vshrl.u32 %v2389, 7
        %v2391 = vsub.s32 1, %v2390
        %v2392 = vrot.slane %v2381, %v2391
        %v2393 = vlaneseq
        %v2394 = vshrl.u32 %v2393, 7
        %v2395 = vsub.s32 2, %v2394
        %v2396 = vrot.slane %v2381, %v2395
        %v2397 = vlaneseq
        %v2398 = vshrl.u32 %v2397, 7
        %v2399 = vsub.s32 3, %v2398
        %v2400 = vrot.slane %v2381, %v2399
        %v2401 = vlaneseq
        %v2402 = vshrl.u32 %v2401, 7
        %v2403 = vsub.s32 4, %v2402
        %v2404 = vrot.slane %v2381, %v2403
        %v2405 = vlaneseq
        %v2406 = vshrl.u32 %v2405, 7
        %v2407 = vsub.s32 5, %v2406
        %v2408 = vrot.slane %v2381, %v2407
        %v2409 = vlaneseq
        %v2410 = vshrl.u32 %v2409, 7
        %v2411 = vsub.s32 6, %v2410
        %v2412 = vrot.slane %v2381, %v2411
        %v2413 = vlaneseq
        %v2414 = vshrl.u32 %v2413, 7
        %v2415 = vsub.s32 7, %v2414
        %v2416 = vrot.slane %v2381, %v2415
        %v2417 = vlaneseq
        %v2418 = vshrl.u32 %v2417, 7
        %v2419 = vsub.s32 0, %v2418
        %v2420 = vrot.slane %v2382, %v2419
        %2421 = vrot.lane.b32.xlu0 %v2388, 111
        %v2422 = vpop.permute.xlu0 %2421
        %2423 = vrot.lane.b32.xlu0 %v2392, 111
        %v2424 = vpop.permute.xlu0 %2423
        %2425 = vrot.lane.b32.xlu0 %v2396, 111
        %v2426 = vpop.permute.xlu0 %2425
        %2427 = vrot.lane.b32.xlu0 %v2400, 111
        %v2428 = vpop.permute.xlu0 %2427
        %2429 = vrot.lane.b32.xlu0 %v2404, 111
        %v2430 = vpop.permute.xlu0 %2429
        %2431 = vrot.lane.b32.xlu0 %v2408, 111
        %v2432 = vpop.permute.xlu0 %2431
        %2433 = vrot.lane.b32.xlu0 %v2412, 111
        %v2434 = vpop.permute.xlu0 %2433
        %2435 = vrot.lane.b32.xlu0 %v2416, 111
        %v2436 = vpop.permute.xlu0 %2435
        %2437 = vrot.lane.b32.xlu0 %v2420, 111
        %v2438 = vpop.permute.xlu0 %2437
        %v2439 = vsel %vm514, %v2422, %v2424
        %v2440 = vsel %vm514, %v2424, %v2426
        %v2441 = vsel %vm514, %v2426, %v2428
        %v2442 = vsel %vm514, %v2428, %v2430
        %v2443 = vsel %vm514, %v2430, %v2432
        %v2444 = vsel %vm514, %v2432, %v2434
        %v2445 = vsel %vm514, %v2434, %v2436
        %v2446 = vsel %vm514, %v2436, %v2438
        %v2457 = vmul.f32 %v2359, %v2422
        %v2458 = vmul.f32 %v2360, %v2439
        %v2459 = vmul.f32 %v2361, %v2440
        %v2460 = vmul.f32 %v2362, %v2441
        %v2461 = vmul.f32 %v2363, %v2442
        %v2462 = vmul.f32 %v2364, %v2443
        %v2463 = vmul.f32 %v2365, %v2444
        %v2464 = vmul.f32 %v2366, %v2445
        %v2465 = vmul.f32 %v2367, %v2446
        %v2466 = vmul.f32 %v2368, %v2438
        %v2467 = vmul.f32 %v2369, %v2422
        %v2468 = vmul.f32 %v2370, %v2439
        %v2469 = vmul.f32 %v2371, %v2440
        %v2470 = vmul.f32 %v2372, %v2441
        %v2471 = vmul.f32 %v2373, %v2442
        %v2472 = vmul.f32 %v2374, %v2443
        %v2473 = vmul.f32 %v2375, %v2444
        %v2474 = vmul.f32 %v2376, %v2445
        %v2475 = vmul.f32 %v2377, %v2446
        %v2476 = vmul.f32 %v2378, %v2438
        %v2477 = vpack.c.bf16 %v2467, %v2457
        %v2478 = vpack.c.bf16 %v2468, %v2458
        %v2479 = vpack.c.bf16 %v2469, %v2459
        %v2480 = vpack.c.bf16 %v2470, %v2460
        %v2481 = vpack.c.bf16 %v2471, %v2461
        %v2482 = vpack.c.bf16 %v2472, %v2462
        %v2483 = vpack.c.bf16 %v2473, %v2463
        %v2484 = vpack.c.bf16 %v2474, %v2464
        %v2485 = vpack.c.bf16 %v2475, %v2465
        %v2486 = vpack.c.bf16 %v2476, %v2466
        %2497 = vrot.lane.b32.xlu0 %v2477, 17
        %v2498 = vpop.permute.xlu0 %2497
        %2499 = vrot.lane.b32.xlu0 %v2478, 17
        %v2500 = vpop.permute.xlu0 %2499
        %2501 = vrot.lane.b32.xlu0 %v2479, 17
        %v2502 = vpop.permute.xlu0 %2501
        %2503 = vrot.lane.b32.xlu0 %v2480, 17
        %v2504 = vpop.permute.xlu0 %2503
        %2505 = vrot.lane.b32.xlu0 %v2481, 17
        %v2506 = vpop.permute.xlu0 %2505
        %2507 = vrot.lane.b32.xlu0 %v2482, 17
        %v2508 = vpop.permute.xlu0 %2507
        %2509 = vrot.lane.b32.xlu0 %v2483, 17
        %v2510 = vpop.permute.xlu0 %2509
        %2511 = vrot.lane.b32.xlu0 %v2484, 17
        %v2512 = vpop.permute.xlu0 %2511
        %2513 = vrot.lane.b32.xlu0 %v2485, 17
        %v2514 = vpop.permute.xlu0 %2513
        %2515 = vrot.lane.b32.xlu0 %v2486, 17
        %v2516 = vpop.permute.xlu0 %2515
        %vm2517 = vcmask 138240
        %v2518 = vsel %vm2517, %v2498, %v2500
        %v2519 = vsel %vm2517, %v2500, %v2502
        %v2520 = vsel %vm2517, %v2502, %v2504
        %v2521 = vsel %vm2517, %v2504, %v2506
        %v2522 = vsel %vm2517, %v2506, %v2508
        %v2523 = vsel %vm2517, %v2508, %v2510
        %v2524 = vsel %vm2517, %v2510, %v2512
        %v2525 = vsel %vm2517, %v2512, %v2514
        %v2526 = vsel %vm2517, %v2514, %v2516
        %2536 = vst [vmem:[#allocation5 + $0xd8] sm:$0xff] %v2518
        %2537 = vst [vmem:[#allocation5 + $0xe0] sm:$0xff] %v2519
        %2538 = vst [vmem:[#allocation5 + $0xe8] sm:$0xff] %v2520
        %2539 = vst [vmem:[#allocation5 + $0xf0] sm:$0xff] %v2521
        %2540 = vst [vmem:[#allocation5 + $0xf8] sm:$0xff] %v2522
        %2541 = vst [vmem:[#allocation5 + $0x100] sm:$0xff] %v2523
        %2542 = vst [vmem:[#allocation5 + $0x108] sm:$0xff] %v2524
        %2543 = vst [vmem:[#allocation5 + $0x110] sm:$0xff] %v2525
        %2544 = vst [vmem:[#allocation5 + $0x118] sm:$0xff] %v2526
        %v2545 = vld [vmem:[#allocation4] sm:$0xff]
        %v2546 = vld [vmem:[#allocation4 + $0x8] sm:$0xff]
        %v2547 = vld [vmem:[#allocation4 + $0x10] sm:$0xff]
        %v2548 = vld [vmem:[#allocation4 + $0x18] sm:$0xff]
        %v2549 = vld [vmem:[#allocation4 + $0x20] sm:$0xff]
        %v2550 = vld [vmem:[#allocation4 + $0x28] sm:$0xff]
        %v2551 = vld [vmem:[#allocation4 + $0x30] sm:$0xff]
        %v2552 = vld [vmem:[#allocation4 + $0x38] sm:$0xff]
        %v2553 = vld [vmem:[#allocation4 + $0x40] sm:$0xff]
        %v2554 = vld [vmem:[#allocation4 + $0x48] sm:$0xff]
        %v2555 = vld [vmem:[#allocation4 + $0x68] sm:$0xff]
        %v2556 = vld [vmem:[#allocation4 + $0x70] sm:$0xff]
        %v2557 = vld [vmem:[#allocation4 + $0x78] sm:$0xff]
        %v2558 = vld [vmem:[#allocation4 + $0x80] sm:$0xff]
        %v2559 = vld [vmem:[#allocation4 + $0x88] sm:$0xff]
        %v2560 = vld [vmem:[#allocation4 + $0x90] sm:$0xff]
        %v2561 = vld [vmem:[#allocation4 + $0x98] sm:$0xff]
        %v2562 = vld [vmem:[#allocation4 + $0xa0] sm:$0xff]
        %v2563 = vld [vmem:[#allocation4 + $0xa8] sm:$0xff]
        %v2564 = vld [vmem:[#allocation4 + $0xb0] sm:$0xff]
        %v2565 = vld [vmem:[%s544] ss:$8 sm:$0xf]
        %v2566 = vld [vmem:[%s544] ss:$8 sm:$0xf0]
        %v2567 = vor.u32 %v2565, %v2566
        %v2568 = vld [vmem:[%s548] ss:$8 sm:$0x1]
        %v2571 = vlaneseq
        %v2572 = vshrl.u32 %v2571, 7
        %v2573 = vsub.s32 0, %v2572
        %v2574 = vrot.slane %v2567, %v2573
        %v2575 = vlaneseq
        %v2576 = vshrl.u32 %v2575, 7
        %v2577 = vsub.s32 1, %v2576
        %v2578 = vrot.slane %v2567, %v2577
        %v2579 = vlaneseq
        %v2580 = vshrl.u32 %v2579, 7
        %v2581 = vsub.s32 2, %v2580
        %v2582 = vrot.slane %v2567, %v2581
        %v2583 = vlaneseq
        %v2584 = vshrl.u32 %v2583, 7
        %v2585 = vsub.s32 3, %v2584
        %v2586 = vrot.slane %v2567, %v2585
        %v2587 = vlaneseq
        %v2588 = vshrl.u32 %v2587, 7
        %v2589 = vsub.s32 4, %v2588
        %v2590 = vrot.slane %v2567, %v2589
        %v2591 = vlaneseq
        %v2592 = vshrl.u32 %v2591, 7
        %v2593 = vsub.s32 5, %v2592
        %v2594 = vrot.slane %v2567, %v2593
        %v2595 = vlaneseq
        %v2596 = vshrl.u32 %v2595, 7
        %v2597 = vsub.s32 6, %v2596
        %v2598 = vrot.slane %v2567, %v2597
        %v2599 = vlaneseq
        %v2600 = vshrl.u32 %v2599, 7
        %v2601 = vsub.s32 7, %v2600
        %v2602 = vrot.slane %v2567, %v2601
        %v2603 = vlaneseq
        %v2604 = vshrl.u32 %v2603, 7
        %v2605 = vsub.s32 0, %v2604
        %v2606 = vrot.slane %v2568, %v2605
        %2607 = vrot.lane.b32.xlu0 %v2574, 112
        %v2608 = vpop.permute.xlu0 %2607
        %2609 = vrot.lane.b32.xlu0 %v2578, 112
        %v2610 = vpop.permute.xlu0 %2609
        %2611 = vrot.lane.b32.xlu0 %v2582, 112
        %v2612 = vpop.permute.xlu0 %2611
        %2613 = vrot.lane.b32.xlu0 %v2586, 112
        %v2614 = vpop.permute.xlu0 %2613
        %2615 = vrot.lane.b32.xlu0 %v2590, 112
        %v2616 = vpop.permute.xlu0 %2615
        %2617 = vrot.lane.b32.xlu0 %v2594, 112
        %v2618 = vpop.permute.xlu0 %2617
        %2619 = vrot.lane.b32.xlu0 %v2598, 112
        %v2620 = vpop.permute.xlu0 %2619
        %2621 = vrot.lane.b32.xlu0 %v2602, 112
        %v2622 = vpop.permute.xlu0 %2621
        %2623 = vrot.lane.b32.xlu0 %v2606, 112
        %v2624 = vpop.permute.xlu0 %2623
        %v2625 = vsel %vm558, %v2608, %v2610
        %v2626 = vsel %vm558, %v2610, %v2612
        %v2627 = vsel %vm558, %v2612, %v2614
        %v2628 = vsel %vm558, %v2614, %v2616
        %v2629 = vsel %vm558, %v2616, %v2618
        %v2630 = vsel %vm558, %v2618, %v2620
        %v2631 = vsel %vm558, %v2620, %v2622
        %v2632 = vsel %vm558, %v2622, %v2624
        %v2643 = vmul.f32 %v2545, %v2608
        %v2644 = vmul.f32 %v2546, %v2625
        %v2645 = vmul.f32 %v2547, %v2626
        %v2646 = vmul.f32 %v2548, %v2627
        %v2647 = vmul.f32 %v2549, %v2628
        %v2648 = vmul.f32 %v2550, %v2629
        %v2649 = vmul.f32 %v2551, %v2630
        %v2650 = vmul.f32 %v2552, %v2631
        %v2651 = vmul.f32 %v2553, %v2632
        %v2652 = vmul.f32 %v2554, %v2624
        %v2653 = vmul.f32 %v2555, %v2608
        %v2654 = vmul.f32 %v2556, %v2625
        %v2655 = vmul.f32 %v2557, %v2626
        %v2656 = vmul.f32 %v2558, %v2627
        %v2657 = vmul.f32 %v2559, %v2628
        %v2658 = vmul.f32 %v2560, %v2629
        %v2659 = vmul.f32 %v2561, %v2630
        %v2660 = vmul.f32 %v2562, %v2631
        %v2661 = vmul.f32 %v2563, %v2632
        %v2662 = vmul.f32 %v2564, %v2624
        %v2663 = vpack.c.bf16 %v2653, %v2643
        %v2664 = vpack.c.bf16 %v2654, %v2644
        %v2665 = vpack.c.bf16 %v2655, %v2645
        %v2666 = vpack.c.bf16 %v2656, %v2646
        %v2667 = vpack.c.bf16 %v2657, %v2647
        %v2668 = vpack.c.bf16 %v2658, %v2648
        %v2669 = vpack.c.bf16 %v2659, %v2649
        %v2670 = vpack.c.bf16 %v2660, %v2650
        %v2671 = vpack.c.bf16 %v2661, %v2651
        %v2672 = vpack.c.bf16 %v2662, %v2652
        %2683 = vrot.lane.b32.xlu0 %v2663, 16
        %v2684 = vpop.permute.xlu0 %2683
        %2685 = vrot.lane.b32.xlu0 %v2664, 16
        %v2686 = vpop.permute.xlu0 %2685
        %2687 = vrot.lane.b32.xlu0 %v2665, 16
        %v2688 = vpop.permute.xlu0 %2687
        %2689 = vrot.lane.b32.xlu0 %v2666, 16
        %v2690 = vpop.permute.xlu0 %2689
        %2691 = vrot.lane.b32.xlu0 %v2667, 16
        %v2692 = vpop.permute.xlu0 %2691
        %2693 = vrot.lane.b32.xlu0 %v2668, 16
        %v2694 = vpop.permute.xlu0 %2693
        %2695 = vrot.lane.b32.xlu0 %v2669, 16
        %v2696 = vpop.permute.xlu0 %2695
        %2697 = vrot.lane.b32.xlu0 %v2670, 16
        %v2698 = vpop.permute.xlu0 %2697
        %2699 = vrot.lane.b32.xlu0 %v2671, 16
        %v2700 = vpop.permute.xlu0 %2699
        %2701 = vrot.lane.b32.xlu0 %v2672, 16
        %v2702 = vpop.permute.xlu0 %2701
        %vm2703 = vcmask 130048
        %v2704 = vsel %vm2703, %v2684, %v2686
        %v2705 = vsel %vm2703, %v2686, %v2688
        %v2706 = vsel %vm2703, %v2688, %v2690
        %v2707 = vsel %vm2703, %v2690, %v2692
        %v2708 = vsel %vm2703, %v2692, %v2694
        %v2709 = vsel %vm2703, %v2694, %v2696
        %v2710 = vsel %vm2703, %v2696, %v2698
        %v2711 = vsel %vm2703, %v2698, %v2700
        %v2712 = vsel %vm2703, %v2700, %v2702
        %2722 = vst [vmem:[#allocation5 + $0x120] sm:$0xff] %v2704
        %2723 = vst [vmem:[#allocation5 + $0x128] sm:$0xff] %v2705
        %2724 = vst [vmem:[#allocation5 + $0x130] sm:$0xff] %v2706
        %2725 = vst [vmem:[#allocation5 + $0x138] sm:$0xff] %v2707
        %2726 = vst [vmem:[#allocation5 + $0x140] sm:$0xff] %v2708
        %2727 = vst [vmem:[#allocation5 + $0x148] sm:$0xff] %v2709
        %2728 = vst [vmem:[#allocation5 + $0x150] sm:$0xff] %v2710
        %2729 = vst [vmem:[#allocation5 + $0x158] sm:$0xff] %v2711
        %2730 = vst [vmem:[#allocation5 + $0x160] sm:$0xff] %v2712
        %v2731 = vld [vmem:[#allocation4] sm:$0xff]
        %v2732 = vld [vmem:[#allocation4 + $0x8] sm:$0xff]
        %v2733 = vld [vmem:[#allocation4 + $0x10] sm:$0xff]
        %v2734 = vld [vmem:[#allocation4 + $0x18] sm:$0xff]
        %v2735 = vld [vmem:[#allocation4 + $0x20] sm:$0xff]
        %v2736 = vld [vmem:[#allocation4 + $0x28] sm:$0xff]
        %v2737 = vld [vmem:[#allocation4 + $0x30] sm:$0xff]
        %v2738 = vld [vmem:[#allocation4 + $0x38] sm:$0xff]
        %v2739 = vld [vmem:[#allocation4 + $0x40] sm:$0xff]
        %v2740 = vld [vmem:[#allocation4 + $0x48] sm:$0xff]
        %v2741 = vld [vmem:[#allocation4 + $0x68] sm:$0xff]
        %v2742 = vld [vmem:[#allocation4 + $0x70] sm:$0xff]
        %v2743 = vld [vmem:[#allocation4 + $0x78] sm:$0xff]
        %v2744 = vld [vmem:[#allocation4 + $0x80] sm:$0xff]
        %v2745 = vld [vmem:[#allocation4 + $0x88] sm:$0xff]
        %v2746 = vld [vmem:[#allocation4 + $0x90] sm:$0xff]
        %v2747 = vld [vmem:[#allocation4 + $0x98] sm:$0xff]
        %v2748 = vld [vmem:[#allocation4 + $0xa0] sm:$0xff]
        %v2749 = vld [vmem:[#allocation4 + $0xa8] sm:$0xff]
        %v2750 = vld [vmem:[#allocation4 + $0xb0] sm:$0xff]
        %v2751 = vld [vmem:[%s588] ss:$8 sm:$0xf]
        %v2752 = vld [vmem:[%s588] ss:$8 sm:$0xf0]
        %v2753 = vor.u32 %v2751, %v2752
        %v2754 = vld [vmem:[%s592] ss:$8 sm:$0x1]
        %v2757 = vlaneseq
        %v2758 = vshrl.u32 %v2757, 7
        %v2759 = vsub.s32 0, %v2758
        %v2760 = vrot.slane %v2753, %v2759
        %v2761 = vlaneseq
        %v2762 = vshrl.u32 %v2761, 7
        %v2763 = vsub.s32 1, %v2762
        %v2764 = vrot.slane %v2753, %v2763
        %v2765 = vlaneseq
        %v2766 = vshrl.u32 %v2765, 7
        %v2767 = vsub.s32 2, %v2766
        %v2768 = vrot.slane %v2753, %v2767
        %v2769 = vlaneseq
        %v2770 = vshrl.u32 %v2769, 7
        %v2771 = vsub.s32 3, %v2770
        %v2772 = vrot.slane %v2753, %v2771
        %v2773 = vlaneseq
        %v2774 = vshrl.u32 %v2773, 7
        %v2775 = vsub.s32 4, %v2774
        %v2776 = vrot.slane %v2753, %v2775
        %v2777 = vlaneseq
        %v2778 = vshrl.u32 %v2777, 7
        %v2779 = vsub.s32 5, %v2778
        %v2780 = vrot.slane %v2753, %v2779
        %v2781 = vlaneseq
        %v2782 = vshrl.u32 %v2781, 7
        %v2783 = vsub.s32 6, %v2782
        %v2784 = vrot.slane %v2753, %v2783
        %v2785 = vlaneseq
        %v2786 = vshrl.u32 %v2785, 7
        %v2787 = vsub.s32 7, %v2786
        %v2788 = vrot.slane %v2753, %v2787
        %v2789 = vlaneseq
        %v2790 = vshrl.u32 %v2789, 7
        %v2791 = vsub.s32 0, %v2790
        %v2792 = vrot.slane %v2754, %v2791
        %2793 = vrot.lane.b32.xlu0 %v2760, 113
        %v2794 = vpop.permute.xlu0 %2793
        %2795 = vrot.lane.b32.xlu0 %v2764, 113
        %v2796 = vpop.permute.xlu0 %2795
        %2797 = vrot.lane.b32.xlu0 %v2768, 113
        %v2798 = vpop.permute.xlu0 %2797
        %2799 = vrot.lane.b32.xlu0 %v2772, 113
        %v2800 = vpop.permute.xlu0 %2799
        %2801 = vrot.lane.b32.xlu0 %v2776, 113
        %v2802 = vpop.permute.xlu0 %2801
        %2803 = vrot.lane.b32.xlu0 %v2780, 113
        %v2804 = vpop.permute.xlu0 %2803
        %2805 = vrot.lane.b32.xlu0 %v2784, 113
        %v2806 = vpop.permute.xlu0 %2805
        %2807 = vrot.lane.b32.xlu0 %v2788, 113
        %v2808 = vpop.permute.xlu0 %2807
        %2809 = vrot.lane.b32.xlu0 %v2792, 113
        %v2810 = vpop.permute.xlu0 %2809
        %v2811 = vsel %vm602, %v2794, %v2796
        %v2812 = vsel %vm602, %v2796, %v2798
        %v2813 = vsel %vm602, %v2798, %v2800
        %v2814 = vsel %vm602, %v2800, %v2802
        %v2815 = vsel %vm602, %v2802, %v2804
        %v2816 = vsel %vm602, %v2804, %v2806
        %v2817 = vsel %vm602, %v2806, %v2808
        %v2818 = vsel %vm602, %v2808, %v2810
        %v2829 = vmul.f32 %v2731, %v2794
        %v2830 = vmul.f32 %v2732, %v2811
        %v2831 = vmul.f32 %v2733, %v2812
        %v2832 = vmul.f32 %v2734, %v2813
        %v2833 = vmul.f32 %v2735, %v2814
        %v2834 = vmul.f32 %v2736, %v2815
        %v2835 = vmul.f32 %v2737, %v2816
        %v2836 = vmul.f32 %v2738, %v2817
        %v2837 = vmul.f32 %v2739, %v2818
        %v2838 = vmul.f32 %v2740, %v2810
        %v2839 = vmul.f32 %v2741, %v2794
        %v2840 = vmul.f32 %v2742, %v2811
        %v2841 = vmul.f32 %v2743, %v2812
        %v2842 = vmul.f32 %v2744, %v2813
        %v2843 = vmul.f32 %v2745, %v2814
        %v2844 = vmul.f32 %v2746, %v2815
        %v2845 = vmul.f32 %v2747, %v2816
        %v2846 = vmul.f32 %v2748, %v2817
        %v2847 = vmul.f32 %v2749, %v2818
        %v2848 = vmul.f32 %v2750, %v2810
        %v2849 = vpack.c.bf16 %v2839, %v2829
        %v2850 = vpack.c.bf16 %v2840, %v2830
        %v2851 = vpack.c.bf16 %v2841, %v2831
        %v2852 = vpack.c.bf16 %v2842, %v2832
        %v2853 = vpack.c.bf16 %v2843, %v2833
        %v2854 = vpack.c.bf16 %v2844, %v2834
        %v2855 = vpack.c.bf16 %v2845, %v2835
        %v2856 = vpack.c.bf16 %v2846, %v2836
        %v2857 = vpack.c.bf16 %v2847, %v2837
        %v2858 = vpack.c.bf16 %v2848, %v2838
        %2869 = vrot.lane.b32.xlu0 %v2849, 15
        %v2870 = vpop.permute.xlu0 %2869
        %2871 = vrot.lane.b32.xlu0 %v2850, 15
        %v2872 = vpop.permute.xlu0 %2871
        %2873 = vrot.lane.b32.xlu0 %v2851, 15
        %v2874 = vpop.permute.xlu0 %2873
        %2875 = vrot.lane.b32.xlu0 %v2852, 15
        %v2876 = vpop.permute.xlu0 %2875
        %2877 = vrot.lane.b32.xlu0 %v2853, 15
        %v2878 = vpop.permute.xlu0 %2877
        %2879 = vrot.lane.b32.xlu0 %v2854, 15
        %v2880 = vpop.permute.xlu0 %2879
        %2881 = vrot.lane.b32.xlu0 %v2855, 15
        %v2882 = vpop.permute.xlu0 %2881
        %2883 = vrot.lane.b32.xlu0 %v2856, 15
        %v2884 = vpop.permute.xlu0 %2883
        %2885 = vrot.lane.b32.xlu0 %v2857, 15
        %v2886 = vpop.permute.xlu0 %2885
        %2887 = vrot.lane.b32.xlu0 %v2858, 15
        %v2888 = vpop.permute.xlu0 %2887
        %vm2889 = vcmask 121856
        %v2890 = vsel %vm2889, %v2870, %v2872
        %v2891 = vsel %vm2889, %v2872, %v2874
        %v2892 = vsel %vm2889, %v2874, %v2876
        %v2893 = vsel %vm2889, %v2876, %v2878
        %v2894 = vsel %vm2889, %v2878, %v2880
        %v2895 = vsel %vm2889, %v2880, %v2882
        %v2896 = vsel %vm2889, %v2882, %v2884
        %v2897 = vsel %vm2889, %v2884, %v2886
        %v2898 = vsel %vm2889, %v2886, %v2888
        %2908 = vst [vmem:[#allocation5 + $0x168] sm:$0xff] %v2890
        %2909 = vst [vmem:[#allocation5 + $0x170] sm:$0xff] %v2891
        %2910 = vst [vmem:[#allocation5 + $0x178] sm:$0xff] %v2892
        %2911 = vst [vmem:[#allocation5 + $0x180] sm:$0xff] %v2893
        %2912 = vst [vmem:[#allocation5 + $0x188] sm:$0xff] %v2894
        %2913 = vst [vmem:[#allocation5 + $0x190] sm:$0xff] %v2895
        %2914 = vst [vmem:[#allocation5 + $0x198] sm:$0xff] %v2896
        %2915 = vst [vmem:[#allocation5 + $0x1a0] sm:$0xff] %v2897
        %2916 = vst [vmem:[#allocation5 + $0x1a8] sm:$0xff] %v2898
        %v2917 = vld [vmem:[#allocation4] sm:$0xff]
        %v2918 = vld [vmem:[#allocation4 + $0x8] sm:$0xff]
        %v2919 = vld [vmem:[#allocation4 + $0x10] sm:$0xff]
        %v2920 = vld [vmem:[#allocation4 + $0x18] sm:$0xff]
        %v2921 = vld [vmem:[#allocation4 + $0x20] sm:$0xff]
        %v2922 = vld [vmem:[#allocation4 + $0x28] sm:$0xff]
        %v2923 = vld [vmem:[#allocation4 + $0x30] sm:$0xff]
        %v2924 = vld [vmem:[#allocation4 + $0x38] sm:$0xff]
        %v2925 = vld [vmem:[#allocation4 + $0x40] sm:$0xff]
        %v2926 = vld [vmem:[#allocation4 + $0x48] sm:$0xff]
        %v2927 = vld [vmem:[#allocation4 + $0x68] sm:$0xff]
        %v2928 = vld [vmem:[#allocation4 + $0x70] sm:$0xff]
        %v2929 = vld [vmem:[#allocation4 + $0x78] sm:$0xff]
        %v2930 = vld [vmem:[#allocation4 + $0x80] sm:$0xff]
        %v2931 = vld [vmem:[#allocation4 + $0x88] sm:$0xff]
        %v2932 = vld [vmem:[#allocation4 + $0x90] sm:$0xff]
        %v2933 = vld [vmem:[#allocation4 + $0x98] sm:$0xff]
        %v2934 = vld [vmem:[#allocation4 + $0xa0] sm:$0xff]
        %v2935 = vld [vmem:[#allocation4 + $0xa8] sm:$0xff]
        %v2936 = vld [vmem:[#allocation4 + $0xb0] sm:$0xff]
        %v2937 = vld [vmem:[%s632] ss:$8 sm:$0xf]
        %v2938 = vld [vmem:[%s632] ss:$8 sm:$0xf0]
        %v2939 = vor.u32 %v2937, %v2938
        %v2940 = vld [vmem:[%s636] ss:$8 sm:$0x1]
        %v2943 = vlaneseq
        %v2944 = vshrl.u32 %v2943, 7
        %v2945 = vsub.s32 0, %v2944
        %v2946 = vrot.slane %v2939, %v2945
        %v2947 = vlaneseq
        %v2948 = vshrl.u32 %v2947, 7
        %v2949 = vsub.s32 1, %v2948
        %v2950 = vrot.slane %v2939, %v2949
        %v2951 = vlaneseq
        %v2952 = vshrl.u32 %v2951, 7
        %v2953 = vsub.s32 2, %v2952
        %v2954 = vrot.slane %v2939, %v2953
        %v2955 = vlaneseq
        %v2956 = vshrl.u32 %v2955, 7
        %v2957 = vsub.s32 3, %v2956
        %v2958 = vrot.slane %v2939, %v2957
        %v2959 = vlaneseq
        %v2960 = vshrl.u32 %v2959, 7
        %v2961 = vsub.s32 4, %v2960
        %v2962 = vrot.slane %v2939, %v2961
        %v2963 = vlaneseq
        %v2964 = vshrl.u32 %v2963, 7
        %v2965 = vsub.s32 5, %v2964
        %v2966 = vrot.slane %v2939, %v2965
        %v2967 = vlaneseq
        %v2968 = vshrl.u32 %v2967, 7
        %v2969 = vsub.s32 6, %v2968
        %v2970 = vrot.slane %v2939, %v2969
        %v2971 = vlaneseq
        %v2972 = vshrl.u32 %v2971, 7
        %v2973 = vsub.s32 7, %v2972
        %v2974 = vrot.slane %v2939, %v2973
        %v2975 = vlaneseq
        %v2976 = vshrl.u32 %v2975, 7
        %v2977 = vsub.s32 0, %v2976
        %v2978 = vrot.slane %v2940, %v2977
        %2979 = vrot.lane.b32.xlu0 %v2946, 127
        %v2980 = vpop.permute.xlu0 %2979
        %2981 = vrot.lane.b32.xlu0 %v2950, 127
        %v2982 = vpop.permute.xlu0 %2981
        %2983 = vrot.lane.b32.xlu0 %v2954, 127
        %v2984 = vpop.permute.xlu0 %2983
        %2985 = vrot.lane.b32.xlu0 %v2958, 127
        %v2986 = vpop.permute.xlu0 %2985
        %2987 = vrot.lane.b32.xlu0 %v2962, 127
        %v2988 = vpop.permute.xlu0 %2987
        %2989 = vrot.lane.b32.xlu0 %v2966, 127
        %v2990 = vpop.permute.xlu0 %2989
        %2991 = vrot.lane.b32.xlu0 %v2970, 127
        %v2992 = vpop.permute.xlu0 %2991
        %2993 = vrot.lane.b32.xlu0 %v2974, 127
        %v2994 = vpop.permute.xlu0 %2993
        %2995 = vrot.lane.b32.xlu0 %v2978, 127
        %v2996 = vpop.permute.xlu0 %2995
        %v2997 = vsel %vm646, %v2980, %v2982
        %v2998 = vsel %vm646, %v2982, %v2984
        %v2999 = vsel %vm646, %v2984, %v2986
        %v3000 = vsel %vm646, %v2986, %v2988
        %v3001 = vsel %vm646, %v2988, %v2990
        %v3002 = vsel %vm646, %v2990, %v2992
        %v3003 = vsel %vm646, %v2992, %v2994
        %v3004 = vsel %vm646, %v2994, %v2996
        %v3015 = vmul.f32 %v2917, %v2980
        %v3016 = vmul.f32 %v2918, %v2997
        %v3017 = vmul.f32 %v2919, %v2998
        %v3018 = vmul.f32 %v2920, %v2999
        %v3019 = vmul.f32 %v2921, %v3000
        %v3020 = vmul.f32 %v2922, %v3001
        %v3021 = vmul.f32 %v2923, %v3002
        %v3022 = vmul.f32 %v2924, %v3003
        %v3023 = vmul.f32 %v2925, %v3004
        %v3024 = vmul.f32 %v2926, %v2996
        %v3025 = vmul.f32 %v2927, %v2980
        %v3026 = vmul.f32 %v2928, %v2997
        %v3027 = vmul.f32 %v2929, %v2998
        %v3028 = vmul.f32 %v2930, %v2999
        %v3029 = vmul.f32 %v2931, %v3000
        %v3030 = vmul.f32 %v2932, %v3001
        %v3031 = vmul.f32 %v2933, %v3002
        %v3032 = vmul.f32 %v2934, %v3003
        %v3033 = vmul.f32 %v2935, %v3004
        %v3034 = vmul.f32 %v2936, %v2996
        %v3035 = vpack.c.bf16 %v3025, %v3015
        %v3036 = vpack.c.bf16 %v3026, %v3016
        %v3037 = vpack.c.bf16 %v3027, %v3017
        %v3038 = vpack.c.bf16 %v3028, %v3018
        %v3039 = vpack.c.bf16 %v3029, %v3019
        %v3040 = vpack.c.bf16 %v3030, %v3020
        %v3041 = vpack.c.bf16 %v3031, %v3021
        %v3042 = vpack.c.bf16 %v3032, %v3022
        %v3043 = vpack.c.bf16 %v3033, %v3023
        %v3044 = vpack.c.bf16 %v3034, %v3024
        %3055 = vrot.lane.b32.xlu0 %v3035, 1
        %v3056 = vpop.permute.xlu0 %3055
        %3057 = vrot.lane.b32.xlu0 %v3036, 1
        %v3058 = vpop.permute.xlu0 %3057
        %3059 = vrot.lane.b32.xlu0 %v3037, 1
        %v3060 = vpop.permute.xlu0 %3059
        %3061 = vrot.lane.b32.xlu0 %v3038, 1
        %v3062 = vpop.permute.xlu0 %3061
        %3063 = vrot.lane.b32.xlu0 %v3039, 1
        %v3064 = vpop.permute.xlu0 %3063
        %3065 = vrot.lane.b32.xlu0 %v3040, 1
        %v3066 = vpop.permute.xlu0 %3065
        %3067 = vrot.lane.b32.xlu0 %v3041, 1
        %v3068 = vpop.permute.xlu0 %3067
        %3069 = vrot.lane.b32.xlu0 %v3042, 1
        %v3070 = vpop.permute.xlu0 %3069
        %3071 = vrot.lane.b32.xlu0 %v3043, 1
        %v3072 = vpop.permute.xlu0 %3071
        %3073 = vrot.lane.b32.xlu0 %v3044, 1
        %v3074 = vpop.permute.xlu0 %3073
        %vm3075 = vcmask 7168
        %v3076 = vsel %vm3075, %v3056, %v3058
        %v3077 = vsel %vm3075, %v3058, %v3060
        %v3078 = vsel %vm3075, %v3060, %v3062
        %v3079 = vsel %vm3075, %v3062, %v3064
        %v3080 = vsel %vm3075, %v3064, %v3066
        %v3081 = vsel %vm3075, %v3066, %v3068
        %v3082 = vsel %vm3075, %v3068, %v3070
        %v3083 = vsel %vm3075, %v3070, %v3072
        %v3084 = vsel %vm3075, %v3072, %v3074
        %3094 = vst [vmem:[#allocation5 + $0x1b0] sm:$0xff] %v3076
        %3095 = vst [vmem:[#allocation5 + $0x1b8] sm:$0xff] %v3077
        %3096 = vst [vmem:[#allocation5 + $0x1c0] sm:$0xff] %v3078
        %3097 = vst [vmem:[#allocation5 + $0x1c8] sm:$0xff] %v3079
        %3098 = vst [vmem:[#allocation5 + $0x1d0] sm:$0xff] %v3080
        %3099 = vst [vmem:[#allocation5 + $0x1d8] sm:$0xff] %v3081
        %3100 = vst [vmem:[#allocation5 + $0x1e0] sm:$0xff] %v3082
        %3101 = vst [vmem:[#allocation5 + $0x1e8] sm:$0xff] %v3083
        %3102 = vst [vmem:[#allocation5 + $0x1f0] sm:$0xff] %v3084
        %v3103 = vld [vmem:[#allocation4 + $0x8] sm:$0xff]
        %v3104 = vld [vmem:[#allocation4 + $0x10] sm:$0xff]
        %v3105 = vld [vmem:[#allocation4 + $0x18] sm:$0xff]
        %v3106 = vld [vmem:[#allocation4 + $0x20] sm:$0xff]
        %v3107 = vld [vmem:[#allocation4 + $0x28] sm:$0xff]
        %v3108 = vld [vmem:[#allocation4 + $0x30] sm:$0xff]
        %v3109 = vld [vmem:[#allocation4 + $0x38] sm:$0xff]
        %v3110 = vld [vmem:[#allocation4 + $0x40] sm:$0xff]
        %v3111 = vld [vmem:[#allocation4 + $0x48] sm:$0xff]
        %v3112 = vld [vmem:[#allocation4 + $0x70] sm:$0xff]
        %v3113 = vld [vmem:[#allocation4 + $0x78] sm:$0xff]
        %v3114 = vld [vmem:[#allocation4 + $0x80] sm:$0xff]
        %v3115 = vld [vmem:[#allocation4 + $0x88] sm:$0xff]
        %v3116 = vld [vmem:[#allocation4 + $0x90] sm:$0xff]
        %v3117 = vld [vmem:[#allocation4 + $0x98] sm:$0xff]
        %v3118 = vld [vmem:[#allocation4 + $0xa0] sm:$0xff]
        %v3119 = vld [vmem:[#allocation4 + $0xa8] sm:$0xff]
        %v3120 = vld [vmem:[#allocation4 + $0xb0] sm:$0xff]
        %v3121 = vld [vmem:[%s676] ss:$8 sm:$0xf]
        %v3122 = vld [vmem:[%s676] ss:$8 sm:$0xf0]
        %v3123 = vor.u32 %v3121, %v3122
        %v3124 = vld [vmem:[%s680] ss:$8 sm:$0x1]
        %v3127 = vlaneseq
        %v3128 = vshrl.u32 %v3127, 7
        %v3129 = vsub.s32 0, %v3128
        %v3130 = vrot.slane %v3123, %v3129
        %v3131 = vlaneseq
        %v3132 = vshrl.u32 %v3131, 7
        %v3133 = vsub.s32 1, %v3132
        %v3134 = vrot.slane %v3123, %v3133
        %v3135 = vlaneseq
        %v3136 = vshrl.u32 %v3135, 7
        %v3137 = vsub.s32 2, %v3136
        %v3138 = vrot.slane %v3123, %v3137
        %v3139 = vlaneseq
        %v3140 = vshrl.u32 %v3139, 7
        %v3141 = vsub.s32 3, %v3140
        %v3142 = vrot.slane %v3123, %v3141
        %v3143 = vlaneseq
        %v3144 = vshrl.u32 %v3143, 7
        %v3145 = vsub.s32 4, %v3144
        %v3146 = vrot.slane %v3123, %v3145
        %v3147 = vlaneseq
        %v3148 = vshrl.u32 %v3147, 7
        %v3149 = vsub.s32 5, %v3148
        %v3150 = vrot.slane %v3123, %v3149
        %v3151 = vlaneseq
        %v3152 = vshrl.u32 %v3151, 7
        %v3153 = vsub.s32 6, %v3152
        %v3154 = vrot.slane %v3123, %v3153
        %v3155 = vlaneseq
        %v3156 = vshrl.u32 %v3155, 7
        %v3157 = vsub.s32 7, %v3156
        %v3158 = vrot.slane %v3123, %v3157
        %v3159 = vlaneseq
        %v3160 = vshrl.u32 %v3159, 7
        %v3161 = vsub.s32 0, %v3160
        %v3162 = vrot.slane %v3124, %v3161
        %v3172 = vmul.f32 %v3103, %v3130
        %v3173 = vmul.f32 %v3104, %v3134
        %v3174 = vmul.f32 %v3105, %v3138
        %v3175 = vmul.f32 %v3106, %v3142
        %v3176 = vmul.f32 %v3107, %v3146
        %v3177 = vmul.f32 %v3108, %v3150
        %v3178 = vmul.f32 %v3109, %v3154
        %v3179 = vmul.f32 %v3110, %v3158
        %v3180 = vmul.f32 %v3111, %v3162
        %v3181 = vmul.f32 %v3112, %v3130
        %v3182 = vmul.f32 %v3113, %v3134
        %v3183 = vmul.f32 %v3114, %v3138
        %v3184 = vmul.f32 %v3115, %v3142
        %v3185 = vmul.f32 %v3116, %v3146
        %v3186 = vmul.f32 %v3117, %v3150
        %v3187 = vmul.f32 %v3118, %v3154
        %v3188 = vmul.f32 %v3119, %v3158
        %v3189 = vmul.f32 %v3120, %v3162
        %v3190 = vpack.c.bf16 %v3181, %v3172
        %v3191 = vpack.c.bf16 %v3182, %v3173
        %v3192 = vpack.c.bf16 %v3183, %v3174
        %v3193 = vpack.c.bf16 %v3184, %v3175
        %v3194 = vpack.c.bf16 %v3185, %v3176
        %v3195 = vpack.c.bf16 %v3186, %v3177
        %v3196 = vpack.c.bf16 %v3187, %v3178
        %v3197 = vpack.c.bf16 %v3188, %v3179
        %v3198 = vpack.c.bf16 %v3189, %v3180
        %3199 = vst [vmem:[#allocation5 + $0x1f8] sm:$0xff] %v3190
        %3200 = vst [vmem:[#allocation5 + $0x200] sm:$0xff] %v3191
        %3201 = vst [vmem:[#allocation5 + $0x208] sm:$0xff] %v3192
        %3202 = vst [vmem:[#allocation5 + $0x210] sm:$0xff] %v3193
        %3203 = vst [vmem:[#allocation5 + $0x218] sm:$0xff] %v3194
        %3204 = vst [vmem:[#allocation5 + $0x220] sm:$0xff] %v3195
        %3205 = vst [vmem:[#allocation5 + $0x228] sm:$0xff] %v3196
        %3206 = vst [vmem:[#allocation5 + $0x230] sm:$0xff] %v3197
        %3207 = vst [vmem:[#allocation5 + $0x238] sm:$0xff] %v3198
        %v3208 = vld [vmem:[#allocation4 + $0x8] sm:$0xff]
        %v3209 = vld [vmem:[#allocation4 + $0x10] sm:$0xff]
        %v3210 = vld [vmem:[#allocation4 + $0x18] sm:$0xff]
        %v3211 = vld [vmem:[#allocation4 + $0x20] sm:$0xff]
        %v3212 = vld [vmem:[#allocation4 + $0x28] sm:$0xff]
        %v3213 = vld [vmem:[#allocation4 + $0x30] sm:$0xff]
        %v3214 = vld [vmem:[#allocation4 + $0x38] sm:$0xff]
        %v3215 = vld [vmem:[#allocation4 + $0x40] sm:$0xff]
        %v3216 = vld [vmem:[#allocation4 + $0x48] sm:$0xff]
        %v3217 = vld [vmem:[#allocation4 + $0x50] sm:$0xff]
        %v3218 = vld [vmem:[#allocation4 + $0x70] sm:$0xff]
        %v3219 = vld [vmem:[#allocation4 + $0x78] sm:$0xff]
        %v3220 = vld [vmem:[#allocation4 + $0x80] sm:$0xff]
        %v3221 = vld [vmem:[#allocation4 + $0x88] sm:$0xff]
        %v3222 = vld [vmem:[#allocation4 + $0x90] sm:$0xff]
        %v3223 = vld [vmem:[#allocation4 + $0x98] sm:$0xff]
        %v3224 = vld [vmem:[#allocation4 + $0xa0] sm:$0xff]
        %v3225 = vld [vmem:[#allocation4 + $0xa8] sm:$0xff]
        %v3226 = vld [vmem:[#allocation4 + $0xb0] sm:$0xff]
        %v3227 = vld [vmem:[#allocation4 + $0xb8] sm:$0xff]
        %v3228 = vld [vmem:[%s692] ss:$8 sm:$0xf]
        %v3229 = vld [vmem:[%s692] ss:$8 sm:$0xf0]
        %v3230 = vor.u32 %v3228, %v3229
        %v3231 = vld [vmem:[%s696] ss:$8 sm:$0x1]
        %v3234 = vlaneseq
        %v3235 = vshrl.u32 %v3234, 7
        %v3236 = vsub.s32 0, %v3235
        %v3237 = vrot.slane %v3230, %v3236
        %v3238 = vlaneseq
        %v3239 = vshrl.u32 %v3238, 7
        %v3240 = vsub.s32 1, %v3239
        %v3241 = vrot.slane %v3230, %v3240
        %v3242 = vlaneseq
        %v3243 = vshrl.u32 %v3242, 7
        %v3244 = vsub.s32 2, %v3243
        %v3245 = vrot.slane %v3230, %v3244
        %v3246 = vlaneseq
        %v3247 = vshrl.u32 %v3246, 7
        %v3248 = vsub.s32 3, %v3247
        %v3249 = vrot.slane %v3230, %v3248
        %v3250 = vlaneseq
        %v3251 = vshrl.u32 %v3250, 7
        %v3252 = vsub.s32 4, %v3251
        %v3253 = vrot.slane %v3230, %v3252
        %v3254 = vlaneseq
        %v3255 = vshrl.u32 %v3254, 7
        %v3256 = vsub.s32 5, %v3255
        %v3257 = vrot.slane %v3230, %v3256
        %v3258 = vlaneseq
        %v3259 = vshrl.u32 %v3258, 7
        %v3260 = vsub.s32 6, %v3259
        %v3261 = vrot.slane %v3230, %v3260
        %v3262 = vlaneseq
        %v3263 = vshrl.u32 %v3262, 7
        %v3264 = vsub.s32 7, %v3263
        %v3265 = vrot.slane %v3230, %v3264
        %v3266 = vlaneseq
        %v3267 = vshrl.u32 %v3266, 7
        %v3268 = vsub.s32 0, %v3267
        %v3269 = vrot.slane %v3231, %v3268
        %3270 = vrot.lane.b32.xlu0 %v3237, 1
        %v3271 = vpop.permute.xlu0 %3270
        %3272 = vrot.lane.b32.xlu0 %v3241, 1
        %v3273 = vpop.permute.xlu0 %3272
        %3274 = vrot.lane.b32.xlu0 %v3245, 1
        %v3275 = vpop.permute.xlu0 %3274
        %3276 = vrot.lane.b32.xlu0 %v3249, 1
        %v3277 = vpop.permute.xlu0 %3276
        %3278 = vrot.lane.b32.xlu0 %v3253, 1
        %v3279 = vpop.permute.xlu0 %3278
        %3280 = vrot.lane.b32.xlu0 %v3257, 1
        %v3281 = vpop.permute.xlu0 %3280
        %3282 = vrot.lane.b32.xlu0 %v3261, 1
        %v3283 = vpop.permute.xlu0 %3282
        %3284 = vrot.lane.b32.xlu0 %v3265, 1
        %v3285 = vpop.permute.xlu0 %3284
        %3286 = vrot.lane.b32.xlu0 %v3269, 1
        %v3287 = vpop.permute.xlu0 %3286
        %v3288 = vsel %vm663, %v3271, %v3273
        %v3289 = vsel %vm663, %v3273, %v3275
        %v3290 = vsel %vm663, %v3275, %v3277
        %v3291 = vsel %vm663, %v3277, %v3279
        %v3292 = vsel %vm663, %v3279, %v3281
        %v3293 = vsel %vm663, %v3281, %v3283
        %v3294 = vsel %vm663, %v3283, %v3285
        %v3295 = vsel %vm663, %v3285, %v3287
        %v3306 = vmul.f32 %v3208, %v3271
        %v3307 = vmul.f32 %v3209, %v3288
        %v3308 = vmul.f32 %v3210, %v3289
        %v3309 = vmul.f32 %v3211, %v3290
        %v3310 = vmul.f32 %v3212, %v3291
        %v3311 = vmul.f32 %v3213, %v3292
        %v3312 = vmul.f32 %v3214, %v3293
        %v3313 = vmul.f32 %v3215, %v3294
        %v3314 = vmul.f32 %v3216, %v3295
        %v3315 = vmul.f32 %v3217, %v3287
        %v3316 = vmul.f32 %v3218, %v3271
        %v3317 = vmul.f32 %v3219, %v3288
        %v3318 = vmul.f32 %v3220, %v3289
        %v3319 = vmul.f32 %v3221, %v3290
        %v3320 = vmul.f32 %v3222, %v3291
        %v3321 = vmul.f32 %v3223, %v3292
        %v3322 = vmul.f32 %v3224, %v3293
        %v3323 = vmul.f32 %v3225, %v3294
        %v3324 = vmul.f32 %v3226, %v3295
        %v3325 = vmul.f32 %v3227, %v3287
        %v3326 = vpack.c.bf16 %v3316, %v3306
        %v3327 = vpack.c.bf16 %v3317, %v3307
        %v3328 = vpack.c.bf16 %v3318, %v3308
        %v3329 = vpack.c.bf16 %v3319, %v3309
        %v3330 = vpack.c.bf16 %v3320, %v3310
        %v3331 = vpack.c.bf16 %v3321, %v3311
        %v3332 = vpack.c.bf16 %v3322, %v3312
        %v3333 = vpack.c.bf16 %v3323, %v3313
        %v3334 = vpack.c.bf16 %v3324, %v3314
        %v3335 = vpack.c.bf16 %v3325, %v3315
        %3346 = vrot.lane.b32.xlu0 %v3326, 127
        %v3347 = vpop.permute.xlu0 %3346
        %3348 = vrot.lane.b32.xlu0 %v3327, 127
        %v3349 = vpop.permute.xlu0 %3348
        %3350 = vrot.lane.b32.xlu0 %v3328, 127
        %v3351 = vpop.permute.xlu0 %3350
        %3352 = vrot.lane.b32.xlu0 %v3329, 127
        %v3353 = vpop.permute.xlu0 %3352
        %3354 = vrot.lane.b32.xlu0 %v3330, 127
        %v3355 = vpop.permute.xlu0 %3354
        %3356 = vrot.lane.b32.xlu0 %v3331, 127
        %v3357 = vpop.permute.xlu0 %3356
        %3358 = vrot.lane.b32.xlu0 %v3332, 127
        %v3359 = vpop.permute.xlu0 %3358
        %3360 = vrot.lane.b32.xlu0 %v3333, 127
        %v3361 = vpop.permute.xlu0 %3360
        %3362 = vrot.lane.b32.xlu0 %v3334, 127
        %v3363 = vpop.permute.xlu0 %3362
        %3364 = vrot.lane.b32.xlu0 %v3335, 127
        %v3365 = vpop.permute.xlu0 %3364
        %vm3366 = vcmask 1039360
        %v3367 = vsel %vm3366, %v3347, %v3349
        %v3368 = vsel %vm3366, %v3349, %v3351
        %v3369 = vsel %vm3366, %v3351, %v3353
        %v3370 = vsel %vm3366, %v3353, %v3355
        %v3371 = vsel %vm3366, %v3355, %v3357
        %v3372 = vsel %vm3366, %v3357, %v3359
        %v3373 = vsel %vm3366, %v3359, %v3361
        %v3374 = vsel %vm3366, %v3361, %v3363
        %v3375 = vsel %vm3366, %v3363, %v3365
        %3385 = vst [vmem:[#allocation5 + $0x240] sm:$0xff] %v3367
        %3386 = vst [vmem:[#allocation5 + $0x248] sm:$0xff] %v3368
        %3387 = vst [vmem:[#allocation5 + $0x250] sm:$0xff] %v3369
        %3388 = vst [vmem:[#allocation5 + $0x258] sm:$0xff] %v3370
        %3389 = vst [vmem:[#allocation5 + $0x260] sm:$0xff] %v3371
        %3390 = vst [vmem:[#allocation5 + $0x268] sm:$0xff] %v3372
        %3391 = vst [vmem:[#allocation5 + $0x270] sm:$0xff] %v3373
        %3392 = vst [vmem:[#allocation5 + $0x278] sm:$0xff] %v3374
        %3393 = vst [vmem:[#allocation5 + $0x280] sm:$0xff] %v3375
        %v3394 = vld [vmem:[#allocation4 + $0x8] sm:$0xff]
        %v3395 = vld [vmem:[#allocation4 + $0x10] sm:$0xff]
        %v3396 = vld [vmem:[#allocation4 + $0x18] sm:$0xff]
        %v3397 = vld [vmem:[#allocation4 + $0x20] sm:$0xff]
        %v3398 = vld [vmem:[#allocation4 + $0x28] sm:$0xff]
        %v3399 = vld [vmem:[#allocation4 + $0x30] sm:$0xff]
        %v3400 = vld [vmem:[#allocation4 + $0x38] sm:$0xff]
        %v3401 = vld [vmem:[#allocation4 + $0x40] sm:$0xff]
        %v3402 = vld [vmem:[#allocation4 + $0x48] sm:$0xff]
        %v3403 = vld [vmem:[#allocation4 + $0x50] sm:$0xff]
        %v3404 = vld [vmem:[#allocation4 + $0x70] sm:$0xff]
        %v3405 = vld [vmem:[#allocation4 + $0x78] sm:$0xff]
        %v3406 = vld [vmem:[#allocation4 + $0x80] sm:$0xff]
        %v3407 = vld [vmem:[#allocation4 + $0x88] sm:$0xff]
        %v3408 = vld [vmem:[#allocation4 + $0x90] sm:$0xff]
        %v3409 = vld [vmem:[#allocation4 + $0x98] sm:$0xff]
        %v3410 = vld [vmem:[#allocation4 + $0xa0] sm:$0xff]
        %v3411 = vld [vmem:[#allocation4 + $0xa8] sm:$0xff]
        %v3412 = vld [vmem:[#allocation4 + $0xb0] sm:$0xff]
        %v3413 = vld [vmem:[#allocation4 + $0xb8] sm:$0xff]
        %v3414 = vld [vmem:[%s734] ss:$8 sm:$0xf]
        %v3415 = vld [vmem:[%s734] ss:$8 sm:$0xf0]
        %v3416 = vor.u32 %v3414, %v3415
        %v3417 = vld [vmem:[%s738] ss:$8 sm:$0x1]
        %v3420 = vlaneseq
        %v3421 = vshrl.u32 %v3420, 7
        %v3422 = vsub.s32 0, %v3421
        %v3423 = vrot.slane %v3416, %v3422
        %v3424 = vlaneseq
        %v3425 = vshrl.u32 %v3424, 7
        %v3426 = vsub.s32 1, %v3425
        %v3427 = vrot.slane %v3416, %v3426
        %v3428 = vlaneseq
        %v3429 = vshrl.u32 %v3428, 7
        %v3430 = vsub.s32 2, %v3429
        %v3431 = vrot.slane %v3416, %v3430
        %v3432 = vlaneseq
        %v3433 = vshrl.u32 %v3432, 7
        %v3434 = vsub.s32 3, %v3433
        %v3435 = vrot.slane %v3416, %v3434
        %v3436 = vlaneseq
        %v3437 = vshrl.u32 %v3436, 7
        %v3438 = vsub.s32 4, %v3437
        %v3439 = vrot.slane %v3416, %v3438
        %v3440 = vlaneseq
        %v3441 = vshrl.u32 %v3440, 7
        %v3442 = vsub.s32 5, %v3441
        %v3443 = vrot.slane %v3416, %v3442
        %v3444 = vlaneseq
        %v3445 = vshrl.u32 %v3444, 7
        %v3446 = vsub.s32 6, %v3445
        %v3447 = vrot.slane %v3416, %v3446
        %v3448 = vlaneseq
        %v3449 = vshrl.u32 %v3448, 7
        %v3450 = vsub.s32 7, %v3449
        %v3451 = vrot.slane %v3416, %v3450
        %v3452 = vlaneseq
        %v3453 = vshrl.u32 %v3452, 7
        %v3454 = vsub.s32 0, %v3453
        %v3455 = vrot.slane %v3417, %v3454
        %3456 = vrot.lane.b32.xlu0 %v3423, 111
        %v3457 = vpop.permute.xlu0 %3456
        %3458 = vrot.lane.b32.xlu0 %v3427, 111
        %v3459 = vpop.permute.xlu0 %3458
        %3460 = vrot.lane.b32.xlu0 %v3431, 111
        %v3461 = vpop.permute.xlu0 %3460
        %3462 = vrot.lane.b32.xlu0 %v3435, 111
        %v3463 = vpop.permute.xlu0 %3462
        %3464 = vrot.lane.b32.xlu0 %v3439, 111
        %v3465 = vpop.permute.xlu0 %3464
        %3466 = vrot.lane.b32.xlu0 %v3443, 111
        %v3467 = vpop.permute.xlu0 %3466
        %3468 = vrot.lane.b32.xlu0 %v3447, 111
        %v3469 = vpop.permute.xlu0 %3468
        %3470 = vrot.lane.b32.xlu0 %v3451, 111
        %v3471 = vpop.permute.xlu0 %3470
        %3472 = vrot.lane.b32.xlu0 %v3455, 111
        %v3473 = vpop.permute.xlu0 %3472
        %v3474 = vsel %vm514, %v3457, %v3459
        %v3475 = vsel %vm514, %v3459, %v3461
        %v3476 = vsel %vm514, %v3461, %v3463
        %v3477 = vsel %vm514, %v3463, %v3465
        %v3478 = vsel %vm514, %v3465, %v3467
        %v3479 = vsel %vm514, %v3467, %v3469
        %v3480 = vsel %vm514, %v3469, %v3471
        %v3481 = vsel %vm514, %v3471, %v3473
        %v3492 = vmul.f32 %v3394, %v3457
        %v3493 = vmul.f32 %v3395, %v3474
        %v3494 = vmul.f32 %v3396, %v3475
        %v3495 = vmul.f32 %v3397, %v3476
        %v3496 = vmul.f32 %v3398, %v3477
        %v3497 = vmul.f32 %v3399, %v3478
        %v3498 = vmul.f32 %v3400, %v3479
        %v3499 = vmul.f32 %v3401, %v3480
        %v3500 = vmul.f32 %v3402, %v3481
        %v3501 = vmul.f32 %v3403, %v3473
        %v3502 = vmul.f32 %v3404, %v3457
        %v3503 = vmul.f32 %v3405, %v3474
        %v3504 = vmul.f32 %v3406, %v3475
        %v3505 = vmul.f32 %v3407, %v3476
        %v3506 = vmul.f32 %v3408, %v3477
        %v3507 = vmul.f32 %v3409, %v3478
        %v3508 = vmul.f32 %v3410, %v3479
        %v3509 = vmul.f32 %v3411, %v3480
        %v3510 = vmul.f32 %v3412, %v3481
        %v3511 = vmul.f32 %v3413, %v3473
        %v3512 = vpack.c.bf16 %v3502, %v3492
        %v3513 = vpack.c.bf16 %v3503, %v3493
        %v3514 = vpack.c.bf16 %v3504, %v3494
        %v3515 = vpack.c.bf16 %v3505, %v3495
        %v3516 = vpack.c.bf16 %v3506, %v3496
        %v3517 = vpack.c.bf16 %v3507, %v3497
        %v3518 = vpack.c.bf16 %v3508, %v3498
        %v3519 = vpack.c.bf16 %v3509, %v3499
        %v3520 = vpack.c.bf16 %v3510, %v3500
        %v3521 = vpack.c.bf16 %v3511, %v3501
        %3532 = vrot.lane.b32.xlu0 %v3512, 17
        %v3533 = vpop.permute.xlu0 %3532
        %3534 = vrot.lane.b32.xlu0 %v3513, 17
        %v3535 = vpop.permute.xlu0 %3534
        %3536 = vrot.lane.b32.xlu0 %v3514, 17
        %v3537 = vpop.permute.xlu0 %3536
        %3538 = vrot.lane.b32.xlu0 %v3515, 17
        %v3539 = vpop.permute.xlu0 %3538
        %3540 = vrot.lane.b32.xlu0 %v3516, 17
        %v3541 = vpop.permute.xlu0 %3540
        %3542 = vrot.lane.b32.xlu0 %v3517, 17
        %v3543 = vpop.permute.xlu0 %3542
        %3544 = vrot.lane.b32.xlu0 %v3518, 17
        %v3545 = vpop.permute.xlu0 %3544
        %3546 = vrot.lane.b32.xlu0 %v3519, 17
        %v3547 = vpop.permute.xlu0 %3546
        %3548 = vrot.lane.b32.xlu0 %v3520, 17
        %v3549 = vpop.permute.xlu0 %3548
        %3550 = vrot.lane.b32.xlu0 %v3521, 17
        %v3551 = vpop.permute.xlu0 %3550
        %v3552 = vsel %vm2517, %v3533, %v3535
        %v3553 = vsel %vm2517, %v3535, %v3537
        %v3554 = vsel %vm2517, %v3537, %v3539
        %v3555 = vsel %vm2517, %v3539, %v3541
        %v3556 = vsel %vm2517, %v3541, %v3543
        %v3557 = vsel %vm2517, %v3543, %v3545
        %v3558 = vsel %vm2517, %v3545, %v3547
        %v3559 = vsel %vm2517, %v3547, %v3549
        %v3560 = vsel %vm2517, %v3549, %v3551
        %3570 = vst [vmem:[#allocation5 + $0x288] sm:$0xff] %v3552
        %3571 = vst [vmem:[#allocation5 + $0x290] sm:$0xff] %v3553
        %3572 = vst [vmem:[#allocation5 + $0x298] sm:$0xff] %v3554
        %3573 = vst [vmem:[#allocation5 + $0x2a0] sm:$0xff] %v3555
        %3574 = vst [vmem:[#allocation5 + $0x2a8] sm:$0xff] %v3556
        %3575 = vst [vmem:[#allocation5 + $0x2b0] sm:$0xff] %v3557
        %3576 = vst [vmem:[#allocation5 + $0x2b8] sm:$0xff] %v3558
        %3577 = vst [vmem:[#allocation5 + $0x2c0] sm:$0xff] %v3559
        %3578 = vst [vmem:[#allocation5 + $0x2c8] sm:$0xff] %v3560
        %v3579 = vld [vmem:[#allocation4 + $0x8] sm:$0xff]
        %v3580 = vld [vmem:[#allocation4 + $0x10] sm:$0xff]
        %v3581 = vld [vmem:[#allocation4 + $0x18] sm:$0xff]
        %v3582 = vld [vmem:[#allocation4 + $0x20] sm:$0xff]
        %v3583 = vld [vmem:[#allocation4 + $0x28] sm:$0xff]
        %v3584 = vld [vmem:[#allocation4 + $0x30] sm:$0xff]
        %v3585 = vld [vmem:[#allocation4 + $0x38] sm:$0xff]
        %v3586 = vld [vmem:[#allocation4 + $0x40] sm:$0xff]
        %v3587 = vld [vmem:[#allocation4 + $0x48] sm:$0xff]
        %v3588 = vld [vmem:[#allocation4 + $0x50] sm:$0xff]
        %v3589 = vld [vmem:[#allocation4 + $0x70] sm:$0xff]
        %v3590 = vld [vmem:[#allocation4 + $0x78] sm:$0xff]
        %v3591 = vld [vmem:[#allocation4 + $0x80] sm:$0xff]
        %v3592 = vld [vmem:[#allocation4 + $0x88] sm:$0xff]
        %v3593 = vld [vmem:[#allocation4 + $0x90] sm:$0xff]
        %v3594 = vld [vmem:[#allocation4 + $0x98] sm:$0xff]
        %v3595 = vld [vmem:[#allocation4 + $0xa0] sm:$0xff]
        %v3596 = vld [vmem:[#allocation4 + $0xa8] sm:$0xff]
        %v3597 = vld [vmem:[#allocation4 + $0xb0] sm:$0xff]
        %v3598 = vld [vmem:[#allocation4 + $0xb8] sm:$0xff]
        %v3599 = vld [vmem:[%s776] ss:$8 sm:$0xf]
        %v3600 = vld [vmem:[%s776] ss:$8 sm:$0xf0]
        %v3601 = vor.u32 %v3599, %v3600
        %v3602 = vld [vmem:[%s780] ss:$8 sm:$0x1]
        %v3605 = vlaneseq
        %v3606 = vshrl.u32 %v3605, 7
        %v3607 = vsub.s32 0, %v3606
        %v3608 = vrot.slane %v3601, %v3607
        %v3609 = vlaneseq
        %v3610 = vshrl.u32 %v3609, 7
        %v3611 = vsub.s32 1, %v3610
        %v3612 = vrot.slane %v3601, %v3611
        %v3613 = vlaneseq
        %v3614 = vshrl.u32 %v3613, 7
        %v3615 = vsub.s32 2, %v3614
        %v3616 = vrot.slane %v3601, %v3615
        %v3617 = vlaneseq
        %v3618 = vshrl.u32 %v3617, 7
        %v3619 = vsub.s32 3, %v3618
        %v3620 = vrot.slane %v3601, %v3619
        %v3621 = vlaneseq
        %v3622 = vshrl.u32 %v3621, 7
        %v3623 = vsub.s32 4, %v3622
        %v3624 = vrot.slane %v3601, %v3623
        %v3625 = vlaneseq
        %v3626 = vshrl.u32 %v3625, 7
        %v3627 = vsub.s32 5, %v3626
        %v3628 = vrot.slane %v3601, %v3627
        %v3629 = vlaneseq
        %v3630 = vshrl.u32 %v3629, 7
        %v3631 = vsub.s32 6, %v3630
        %v3632 = vrot.slane %v3601, %v3631
        %v3633 = vlaneseq
        %v3634 = vshrl.u32 %v3633, 7
        %v3635 = vsub.s32 7, %v3634
        %v3636 = vrot.slane %v3601, %v3635
        %v3637 = vlaneseq
        %v3638 = vshrl.u32 %v3637, 7
        %v3639 = vsub.s32 0, %v3638
        %v3640 = vrot.slane %v3602, %v3639
        %3641 = vrot.lane.b32.xlu0 %v3608, 112
        %v3642 = vpop.permute.xlu0 %3641
        %3643 = vrot.lane.b32.xlu0 %v3612, 112
        %v3644 = vpop.permute.xlu0 %3643
        %3645 = vrot.lane.b32.xlu0 %v3616, 112
        %v3646 = vpop.permute.xlu0 %3645
        %3647 = vrot.lane.b32.xlu0 %v3620, 112
        %v3648 = vpop.permute.xlu0 %3647
        %3649 = vrot.lane.b32.xlu0 %v3624, 112
        %v3650 = vpop.permute.xlu0 %3649
        %3651 = vrot.lane.b32.xlu0 %v3628, 112
        %v3652 = vpop.permute.xlu0 %3651
        %3653 = vrot.lane.b32.xlu0 %v3632, 112
        %v3654 = vpop.permute.xlu0 %3653
        %3655 = vrot.lane.b32.xlu0 %v3636, 112
        %v3656 = vpop.permute.xlu0 %3655
        %3657 = vrot.lane.b32.xlu0 %v3640, 112
        %v3658 = vpop.permute.xlu0 %3657
        %v3659 = vsel %vm558, %v3642, %v3644
        %v3660 = vsel %vm558, %v3644, %v3646
        %v3661 = vsel %vm558, %v3646, %v3648
        %v3662 = vsel %vm558, %v3648, %v3650
        %v3663 = vsel %vm558, %v3650, %v3652
        %v3664 = vsel %vm558, %v3652, %v3654
        %v3665 = vsel %vm558, %v3654, %v3656
        %v3666 = vsel %vm558, %v3656, %v3658
        %v3677 = vmul.f32 %v3579, %v3642
        %v3678 = vmul.f32 %v3580, %v3659
        %v3679 = vmul.f32 %v3581, %v3660
        %v3680 = vmul.f32 %v3582, %v3661
        %v3681 = vmul.f32 %v3583, %v3662
        %v3682 = vmul.f32 %v3584, %v3663
        %v3683 = vmul.f32 %v3585, %v3664
        %v3684 = vmul.f32 %v3586, %v3665
        %v3685 = vmul.f32 %v3587, %v3666
        %v3686 = vmul.f32 %v3588, %v3658
        %v3687 = vmul.f32 %v3589, %v3642
        %v3688 = vmul.f32 %v3590, %v3659
        %v3689 = vmul.f32 %v3591, %v3660
        %v3690 = vmul.f32 %v3592, %v3661
        %v3691 = vmul.f32 %v3593, %v3662
        %v3692 = vmul.f32 %v3594, %v3663
        %v3693 = vmul.f32 %v3595, %v3664
        %v3694 = vmul.f32 %v3596, %v3665
        %v3695 = vmul.f32 %v3597, %v3666
        %v3696 = vmul.f32 %v3598, %v3658
        %v3697 = vpack.c.bf16 %v3687, %v3677
        %v3698 = vpack.c.bf16 %v3688, %v3678
        %v3699 = vpack.c.bf16 %v3689, %v3679
        %v3700 = vpack.c.bf16 %v3690, %v3680
        %v3701 = vpack.c.bf16 %v3691, %v3681
        %v3702 = vpack.c.bf16 %v3692, %v3682
        %v3703 = vpack.c.bf16 %v3693, %v3683
        %v3704 = vpack.c.bf16 %v3694, %v3684
        %v3705 = vpack.c.bf16 %v3695, %v3685
        %v3706 = vpack.c.bf16 %v3696, %v3686
        %3717 = vrot.lane.b32.xlu0 %v3697, 16
        %v3718 = vpop.permute.xlu0 %3717
        %3719 = vrot.lane.b32.xlu0 %v3698, 16
        %v3720 = vpop.permute.xlu0 %3719
        %3721 = vrot.lane.b32.xlu0 %v3699, 16
        %v3722 = vpop.permute.xlu0 %3721
        %3723 = vrot.lane.b32.xlu0 %v3700, 16
        %v3724 = vpop.permute.xlu0 %3723
        %3725 = vrot.lane.b32.xlu0 %v3701, 16
        %v3726 = vpop.permute.xlu0 %3725
        %3727 = vrot.lane.b32.xlu0 %v3702, 16
        %v3728 = vpop.permute.xlu0 %3727
        %3729 = vrot.lane.b32.xlu0 %v3703, 16
        %v3730 = vpop.permute.xlu0 %3729
        %3731 = vrot.lane.b32.xlu0 %v3704, 16
        %v3732 = vpop.permute.xlu0 %3731
        %3733 = vrot.lane.b32.xlu0 %v3705, 16
        %v3734 = vpop.permute.xlu0 %3733
        %3735 = vrot.lane.b32.xlu0 %v3706, 16
        %v3736 = vpop.permute.xlu0 %3735
        %v3737 = vsel %vm2703, %v3718, %v3720
        %v3738 = vsel %vm2703, %v3720, %v3722
        %v3739 = vsel %vm2703, %v3722, %v3724
        %v3740 = vsel %vm2703, %v3724, %v3726
        %v3741 = vsel %vm2703, %v3726, %v3728
        %v3742 = vsel %vm2703, %v3728, %v3730
        %v3743 = vsel %vm2703, %v3730, %v3732
        %v3744 = vsel %vm2703, %v3732, %v3734
        %v3745 = vsel %vm2703, %v3734, %v3736
        %3755 = vst [vmem:[#allocation5 + $0x2d0] sm:$0xff] %v3737
        %3756 = vst [vmem:[#allocation5 + $0x2d8] sm:$0xff] %v3738
        %3757 = vst [vmem:[#allocation5 + $0x2e0] sm:$0xff] %v3739
        %3758 = vst [vmem:[#allocation5 + $0x2e8] sm:$0xff] %v3740
        %3759 = vst [vmem:[#allocation5 + $0x2f0] sm:$0xff] %v3741
        %3760 = vst [vmem:[#allocation5 + $0x2f8] sm:$0xff] %v3742
        %3761 = vst [vmem:[#allocation5 + $0x300] sm:$0xff] %v3743
        %3762 = vst [vmem:[#allocation5 + $0x308] sm:$0xff] %v3744
        %3763 = vst [vmem:[#allocation5 + $0x310] sm:$0xff] %v3745
        %v3764 = vld [vmem:[#allocation4 + $0x8] sm:$0xff]
        %v3765 = vld [vmem:[#allocation4 + $0x10] sm:$0xff]
        %v3766 = vld [vmem:[#allocation4 + $0x18] sm:$0xff]
        %v3767 = vld [vmem:[#allocation4 + $0x20] sm:$0xff]
        %v3768 = vld [vmem:[#allocation4 + $0x28] sm:$0xff]
        %v3769 = vld [vmem:[#allocation4 + $0x30] sm:$0xff]
        %v3770 = vld [vmem:[#allocation4 + $0x38] sm:$0xff]
        %v3771 = vld [vmem:[#allocation4 + $0x40] sm:$0xff]
        %v3772 = vld [vmem:[#allocation4 + $0x48] sm:$0xff]
        %v3773 = vld [vmem:[#allocation4 + $0x50] sm:$0xff]
        %v3774 = vld [vmem:[#allocation4 + $0x70] sm:$0xff]
        %v3775 = vld [vmem:[#allocation4 + $0x78] sm:$0xff]
        %v3776 = vld [vmem:[#allocation4 + $0x80] sm:$0xff]
        %v3777 = vld [vmem:[#allocation4 + $0x88] sm:$0xff]
        %v3778 = vld [vmem:[#allocation4 + $0x90] sm:$0xff]
        %v3779 = vld [vmem:[#allocation4 + $0x98] sm:$0xff]
        %v3780 = vld [vmem:[#allocation4 + $0xa0] sm:$0xff]
        %v3781 = vld [vmem:[#allocation4 + $0xa8] sm:$0xff]
        %v3782 = vld [vmem:[#allocation4 + $0xb0] sm:$0xff]
        %v3783 = vld [vmem:[#allocation4 + $0xb8] sm:$0xff]
        %v3784 = vld [vmem:[%s818] ss:$8 sm:$0xf]
        %v3785 = vld [vmem:[%s818] ss:$8 sm:$0xf0]
        %v3786 = vor.u32 %v3784, %v3785
        %v3787 = vld [vmem:[%s822] ss:$8 sm:$0x1]
        %v3790 = vlaneseq
        %v3791 = vshrl.u32 %v3790, 7
        %v3792 = vsub.s32 0, %v3791
        %v3793 = vrot.slane %v3786, %v3792
        %v3794 = vlaneseq
        %v3795 = vshrl.u32 %v3794, 7
        %v3796 = vsub.s32 1, %v3795
        %v3797 = vrot.slane %v3786, %v3796
        %v3798 = vlaneseq
        %v3799 = vshrl.u32 %v3798, 7
        %v3800 = vsub.s32 2, %v3799
        %v3801 = vrot.slane %v3786, %v3800
        %v3802 = vlaneseq
        %v3803 = vshrl.u32 %v3802, 7
        %v3804 = vsub.s32 3, %v3803
        %v3805 = vrot.slane %v3786, %v3804
        %v3806 = vlaneseq
        %v3807 = vshrl.u32 %v3806, 7
        %v3808 = vsub.s32 4, %v3807
        %v3809 = vrot.slane %v3786, %v3808
        %v3810 = vlaneseq
        %v3811 = vshrl.u32 %v3810, 7
        %v3812 = vsub.s32 5, %v3811
        %v3813 = vrot.slane %v3786, %v3812
        %v3814 = vlaneseq
        %v3815 = vshrl.u32 %v3814, 7
        %v3816 = vsub.s32 6, %v3815
        %v3817 = vrot.slane %v3786, %v3816
        %v3818 = vlaneseq
        %v3819 = vshrl.u32 %v3818, 7
        %v3820 = vsub.s32 7, %v3819
        %v3821 = vrot.slane %v3786, %v3820
        %v3822 = vlaneseq
        %v3823 = vshrl.u32 %v3822, 7
        %v3824 = vsub.s32 0, %v3823
        %v3825 = vrot.slane %v3787, %v3824
        %3826 = vrot.lane.b32.xlu0 %v3793, 113
        %v3827 = vpop.permute.xlu0 %3826
        %3828 = vrot.lane.b32.xlu0 %v3797, 113
        %v3829 = vpop.permute.xlu0 %3828
        %3830 = vrot.lane.b32.xlu0 %v3801, 113
        %v3831 = vpop.permute.xlu0 %3830
        %3832 = vrot.lane.b32.xlu0 %v3805, 113
        %v3833 = vpop.permute.xlu0 %3832
        %3834 = vrot.lane.b32.xlu0 %v3809, 113
        %v3835 = vpop.permute.xlu0 %3834
        %3836 = vrot.lane.b32.xlu0 %v3813, 113
        %v3837 = vpop.permute.xlu0 %3836
        %3838 = vrot.lane.b32.xlu0 %v3817, 113
        %v3839 = vpop.permute.xlu0 %3838
        %3840 = vrot.lane.b32.xlu0 %v3821, 113
        %v3841 = vpop.permute.xlu0 %3840
        %3842 = vrot.lane.b32.xlu0 %v3825, 113
        %v3843 = vpop.permute.xlu0 %3842
        %v3844 = vsel %vm602, %v3827, %v3829
        %v3845 = vsel %vm602, %v3829, %v3831
        %v3846 = vsel %vm602, %v3831, %v3833
        %v3847 = vsel %vm602, %v3833, %v3835
        %v3848 = vsel %vm602, %v3835, %v3837
        %v3849 = vsel %vm602, %v3837, %v3839
        %v3850 = vsel %vm602, %v3839, %v3841
        %v3851 = vsel %vm602, %v3841, %v3843
        %v3862 = vmul.f32 %v3764, %v3827
        %v3863 = vmul.f32 %v3765, %v3844
        %v3864 = vmul.f32 %v3766, %v3845
        %v3865 = vmul.f32 %v3767, %v3846
        %v3866 = vmul.f32 %v3768, %v3847
        %v3867 = vmul.f32 %v3769, %v3848
        %v3868 = vmul.f32 %v3770, %v3849
        %v3869 = vmul.f32 %v3771, %v3850
        %v3870 = vmul.f32 %v3772, %v3851
        %v3871 = vmul.f32 %v3773, %v3843
        %v3872 = vmul.f32 %v3774, %v3827
        %v3873 = vmul.f32 %v3775, %v3844
        %v3874 = vmul.f32 %v3776, %v3845
        %v3875 = vmul.f32 %v3777, %v3846
        %v3876 = vmul.f32 %v3778, %v3847
        %v3877 = vmul.f32 %v3779, %v3848
        %v3878 = vmul.f32 %v3780, %v3849
        %v3879 = vmul.f32 %v3781, %v3850
        %v3880 = vmul.f32 %v3782, %v3851
        %v3881 = vmul.f32 %v3783, %v3843
        %v3882 = vpack.c.bf16 %v3872, %v3862
        %v3883 = vpack.c.bf16 %v3873, %v3863
        %v3884 = vpack.c.bf16 %v3874, %v3864
        %v3885 = vpack.c.bf16 %v3875, %v3865
        %v3886 = vpack.c.bf16 %v3876, %v3866
        %v3887 = vpack.c.bf16 %v3877, %v3867
        %v3888 = vpack.c.bf16 %v3878, %v3868
        %v3889 = vpack.c.bf16 %v3879, %v3869
        %v3890 = vpack.c.bf16 %v3880, %v3870
        %v3891 = vpack.c.bf16 %v3881, %v3871
        %3902 = vrot.lane.b32.xlu0 %v3882, 15
        %v3903 = vpop.permute.xlu0 %3902
        %3904 = vrot.lane.b32.xlu0 %v3883, 15
        %v3905 = vpop.permute.xlu0 %3904
        %3906 = vrot.lane.b32.xlu0 %v3884, 15
        %v3907 = vpop.permute.xlu0 %3906
        %3908 = vrot.lane.b32.xlu0 %v3885, 15
        %v3909 = vpop.permute.xlu0 %3908
        %3910 = vrot.lane.b32.xlu0 %v3886, 15
        %v3911 = vpop.permute.xlu0 %3910
        %3912 = vrot.lane.b32.xlu0 %v3887, 15
        %v3913 = vpop.permute.xlu0 %3912
        %3914 = vrot.lane.b32.xlu0 %v3888, 15
        %v3915 = vpop.permute.xlu0 %3914
        %3916 = vrot.lane.b32.xlu0 %v3889, 15
        %v3917 = vpop.permute.xlu0 %3916
        %3918 = vrot.lane.b32.xlu0 %v3890, 15
        %v3919 = vpop.permute.xlu0 %3918
        %3920 = vrot.lane.b32.xlu0 %v3891, 15
        %v3921 = vpop.permute.xlu0 %3920
        %v3922 = vsel %vm2889, %v3903, %v3905
        %v3923 = vsel %vm2889, %v3905, %v3907
        %v3924 = vsel %vm2889, %v3907, %v3909
        %v3925 = vsel %vm2889, %v3909, %v3911
        %v3926 = vsel %vm2889, %v3911, %v3913
        %v3927 = vsel %vm2889, %v3913, %v3915
        %v3928 = vsel %vm2889, %v3915, %v3917
        %v3929 = vsel %vm2889, %v3917, %v3919
        %v3930 = vsel %vm2889, %v3919, %v3921
        %3940 = vst [vmem:[#allocation5 + $0x318] sm:$0xff] %v3922
        %3941 = vst [vmem:[#allocation5 + $0x320] sm:$0xff] %v3923
        %3942 = vst [vmem:[#allocation5 + $0x328] sm:$0xff] %v3924
        %3943 = vst [vmem:[#allocation5 + $0x330] sm:$0xff] %v3925
        %3944 = vst [vmem:[#allocation5 + $0x338] sm:$0xff] %v3926
        %3945 = vst [vmem:[#allocation5 + $0x340] sm:$0xff] %v3927
        %3946 = vst [vmem:[#allocation5 + $0x348] sm:$0xff] %v3928
        %3947 = vst [vmem:[#allocation5 + $0x350] sm:$0xff] %v3929
        %3948 = vst [vmem:[#allocation5 + $0x358] sm:$0xff] %v3930
        %v3949 = vld [vmem:[#allocation4 + $0x8] sm:$0xff]
        %v3950 = vld [vmem:[#allocation4 + $0x10] sm:$0xff]
        %v3951 = vld [vmem:[#allocation4 + $0x18] sm:$0xff]
        %v3952 = vld [vmem:[#allocation4 + $0x20] sm:$0xff]
        %v3953 = vld [vmem:[#allocation4 + $0x28] sm:$0xff]
        %v3954 = vld [vmem:[#allocation4 + $0x30] sm:$0xff]
        %v3955 = vld [vmem:[#allocation4 + $0x38] sm:$0xff]
        %v3956 = vld [vmem:[#allocation4 + $0x40] sm:$0xff]
        %v3957 = vld [vmem:[#allocation4 + $0x48] sm:$0xff]
        %v3958 = vld [vmem:[#allocation4 + $0x50] sm:$0xff]
        %v3959 = vld [vmem:[#allocation4 + $0x70] sm:$0xff]
        %v3960 = vld [vmem:[#allocation4 + $0x78] sm:$0xff]
        %v3961 = vld [vmem:[#allocation4 + $0x80] sm:$0xff]
        %v3962 = vld [vmem:[#allocation4 + $0x88] sm:$0xff]
        %v3963 = vld [vmem:[#allocation4 + $0x90] sm:$0xff]
        %v3964 = vld [vmem:[#allocation4 + $0x98] sm:$0xff]
        %v3965 = vld [vmem:[#allocation4 + $0xa0] sm:$0xff]
        %v3966 = vld [vmem:[#allocation4 + $0xa8] sm:$0xff]
        %v3967 = vld [vmem:[#allocation4 + $0xb0] sm:$0xff]
        %v3968 = vld [vmem:[#allocation4 + $0xb8] sm:$0xff]
        %v3969 = vld [vmem:[%s860] ss:$8 sm:$0xf]
        %v3970 = vld [vmem:[%s860] ss:$8 sm:$0xf0]
        %v3971 = vor.u32 %v3969, %v3970
        %v3972 = vld [vmem:[%s864] ss:$8 sm:$0x1]
        %v3975 = vlaneseq
        %v3976 = vshrl.u32 %v3975, 7
        %v3977 = vsub.s32 0, %v3976
        %v3978 = vrot.slane %v3971, %v3977
        %v3979 = vlaneseq
        %v3980 = vshrl.u32 %v3979, 7
        %v3981 = vsub.s32 1, %v3980
        %v3982 = vrot.slane %v3971, %v3981
        %v3983 = vlaneseq
        %v3984 = vshrl.u32 %v3983, 7
        %v3985 = vsub.s32 2, %v3984
        %v3986 = vrot.slane %v3971, %v3985
        %v3987 = vlaneseq
        %v3988 = vshrl.u32 %v3987, 7
        %v3989 = vsub.s32 3, %v3988
        %v3990 = vrot.slane %v3971, %v3989
        %v3991 = vlaneseq
        %v3992 = vshrl.u32 %v3991, 7
        %v3993 = vsub.s32 4, %v3992
        %v3994 = vrot.slane %v3971, %v3993
        %v3995 = vlaneseq
        %v3996 = vshrl.u32 %v3995, 7
        %v3997 = vsub.s32 5, %v3996
        %v3998 = vrot.slane %v3971, %v3997
        %v3999 = vlaneseq
        %v4000 = vshrl.u32 %v3999, 7
        %v4001 = vsub.s32 6, %v4000
        %v4002 = vrot.slane %v3971, %v4001
        %v4003 = vlaneseq
        %v4004 = vshrl.u32 %v4003, 7
        %v4005 = vsub.s32 7, %v4004
        %v4006 = vrot.slane %v3971, %v4005
        %v4007 = vlaneseq
        %v4008 = vshrl.u32 %v4007, 7
        %v4009 = vsub.s32 0, %v4008
        %v4010 = vrot.slane %v3972, %v4009
        %4011 = vrot.lane.b32.xlu0 %v3978, 127
        %v4012 = vpop.permute.xlu0 %4011
        %4013 = vrot.lane.b32.xlu0 %v3982, 127
        %v4014 = vpop.permute.xlu0 %4013
        %4015 = vrot.lane.b32.xlu0 %v3986, 127
        %v4016 = vpop.permute.xlu0 %4015
        %4017 = vrot.lane.b32.xlu0 %v3990, 127
        %v4018 = vpop.permute.xlu0 %4017
        %4019 = vrot.lane.b32.xlu0 %v3994, 127
        %v4020 = vpop.permute.xlu0 %4019
        %4021 = vrot.lane.b32.xlu0 %v3998, 127
        %v4022 = vpop.permute.xlu0 %4021
        %4023 = vrot.lane.b32.xlu0 %v4002, 127
        %v4024 = vpop.permute.xlu0 %4023
        %4025 = vrot.lane.b32.xlu0 %v4006, 127
        %v4026 = vpop.permute.xlu0 %4025
        %4027 = vrot.lane.b32.xlu0 %v4010, 127
        %v4028 = vpop.permute.xlu0 %4027
        %v4029 = vsel %vm646, %v4012, %v4014
        %v4030 = vsel %vm646, %v4014, %v4016
        %v4031 = vsel %vm646, %v4016, %v4018
        %v4032 = vsel %vm646, %v4018, %v4020
        %v4033 = vsel %vm646, %v4020, %v4022
        %v4034 = vsel %vm646, %v4022, %v4024
        %v4035 = vsel %vm646, %v4024, %v4026
        %v4036 = vsel %vm646, %v4026, %v4028
        %v4047 = vmul.f32 %v3949, %v4012
        %v4048 = vmul.f32 %v3950, %v4029
        %v4049 = vmul.f32 %v3951, %v4030
        %v4050 = vmul.f32 %v3952, %v4031
        %v4051 = vmul.f32 %v3953, %v4032
        %v4052 = vmul.f32 %v3954, %v4033
        %v4053 = vmul.f32 %v3955, %v4034
        %v4054 = vmul.f32 %v3956, %v4035
        %v4055 = vmul.f32 %v3957, %v4036
        %v4056 = vmul.f32 %v3958, %v4028
        %v4057 = vmul.f32 %v3959, %v4012
        %v4058 = vmul.f32 %v3960, %v4029
        %v4059 = vmul.f32 %v3961, %v4030
        %v4060 = vmul.f32 %v3962, %v4031
        %v4061 = vmul.f32 %v3963, %v4032
        %v4062 = vmul.f32 %v3964, %v4033
        %v4063 = vmul.f32 %v3965, %v4034
        %v4064 = vmul.f32 %v3966, %v4035
        %v4065 = vmul.f32 %v3967, %v4036
        %v4066 = vmul.f32 %v3968, %v4028
        %v4067 = vpack.c.bf16 %v4057, %v4047
        %v4068 = vpack.c.bf16 %v4058, %v4048
        %v4069 = vpack.c.bf16 %v4059, %v4049
        %v4070 = vpack.c.bf16 %v4060, %v4050
        %v4071 = vpack.c.bf16 %v4061, %v4051
        %v4072 = vpack.c.bf16 %v4062, %v4052
        %v4073 = vpack.c.bf16 %v4063, %v4053
        %v4074 = vpack.c.bf16 %v4064, %v4054
        %v4075 = vpack.c.bf16 %v4065, %v4055
        %v4076 = vpack.c.bf16 %v4066, %v4056
        %4087 = vrot.lane.b32.xlu0 %v4067, 1
        %v4088 = vpop.permute.xlu0 %4087
        %4089 = vrot.lane.b32.xlu0 %v4068, 1
        %v4090 = vpop.permute.xlu0 %4089
        %4091 = vrot.lane.b32.xlu0 %v4069, 1
        %v4092 = vpop.permute.xlu0 %4091
        %4093 = vrot.lane.b32.xlu0 %v4070, 1
        %v4094 = vpop.permute.xlu0 %4093
        %4095 = vrot.lane.b32.xlu0 %v4071, 1
        %v4096 = vpop.permute.xlu0 %4095
        %4097 = vrot.lane.b32.xlu0 %v4072, 1
        %v4098 = vpop.permute.xlu0 %4097
        %4099 = vrot.lane.b32.xlu0 %v4073, 1
        %v4100 = vpop.permute.xlu0 %4099
        %4101 = vrot.lane.b32.xlu0 %v4074, 1
        %v4102 = vpop.permute.xlu0 %4101
        %4103 = vrot.lane.b32.xlu0 %v4075, 1
        %v4104 = vpop.permute.xlu0 %4103
        %4105 = vrot.lane.b32.xlu0 %v4076, 1
        %v4106 = vpop.permute.xlu0 %4105
        %v4107 = vsel %vm3075, %v4088, %v4090
        %v4108 = vsel %vm3075, %v4090, %v4092
        %v4109 = vsel %vm3075, %v4092, %v4094
        %v4110 = vsel %vm3075, %v4094, %v4096
        %v4111 = vsel %vm3075, %v4096, %v4098
        %v4112 = vsel %vm3075, %v4098, %v4100
        %v4113 = vsel %vm3075, %v4100, %v4102
        %v4114 = vsel %vm3075, %v4102, %v4104
        %v4115 = vsel %vm3075, %v4104, %v4106
        %4125 = vst [vmem:[#allocation5 + $0x360] sm:$0xff] %v4107
        %4126 = vst [vmem:[#allocation5 + $0x368] sm:$0xff] %v4108
        %4127 = vst [vmem:[#allocation5 + $0x370] sm:$0xff] %v4109
        %4128 = vst [vmem:[#allocation5 + $0x378] sm:$0xff] %v4110
        %4129 = vst [vmem:[#allocation5 + $0x380] sm:$0xff] %v4111
        %4130 = vst [vmem:[#allocation5 + $0x388] sm:$0xff] %v4112
        %4131 = vst [vmem:[#allocation5 + $0x390] sm:$0xff] %v4113
        %4132 = vst [vmem:[#allocation5 + $0x398] sm:$0xff] %v4114
        %4133 = vst [vmem:[#allocation5 + $0x3a0] sm:$0xff] %v4115
        %v4134 = vld [vmem:[#allocation4 + $0x10] sm:$0xff]
        %v4135 = vld [vmem:[#allocation4 + $0x18] sm:$0xff]
        %v4136 = vld [vmem:[#allocation4 + $0x20] sm:$0xff]
        %v4137 = vld [vmem:[#allocation4 + $0x28] sm:$0xff]
        %v4138 = vld [vmem:[#allocation4 + $0x30] sm:$0xff]
        %v4139 = vld [vmem:[#allocation4 + $0x38] sm:$0xff]
        %v4140 = vld [vmem:[#allocation4 + $0x40] sm:$0xff]
        %v4141 = vld [vmem:[#allocation4 + $0x48] sm:$0xff]
        %v4142 = vld [vmem:[#allocation4 + $0x50] sm:$0xff]
        %v4143 = vld [vmem:[#allocation4 + $0x78] sm:$0xff]
        %v4144 = vld [vmem:[#allocation4 + $0x80] sm:$0xff]
        %v4145 = vld [vmem:[#allocation4 + $0x88] sm:$0xff]
        %v4146 = vld [vmem:[#allocation4 + $0x90] sm:$0xff]
        %v4147 = vld [vmem:[#allocation4 + $0x98] sm:$0xff]
        %v4148 = vld [vmem:[#allocation4 + $0xa0] sm:$0xff]
        %v4149 = vld [vmem:[#allocation4 + $0xa8] sm:$0xff]
        %v4150 = vld [vmem:[#allocation4 + $0xb0] sm:$0xff]
        %v4151 = vld [vmem:[#allocation4 + $0xb8] sm:$0xff]
        %v4152 = vld [vmem:[%s902] ss:$8 sm:$0xf]
        %v4153 = vld [vmem:[%s902] ss:$8 sm:$0xf0]
        %v4154 = vor.u32 %v4152, %v4153
        %v4155 = vld [vmem:[%s906] ss:$8 sm:$0x1]
        %v4158 = vlaneseq
        %v4159 = vshrl.u32 %v4158, 7
        %v4160 = vsub.s32 0, %v4159
        %v4161 = vrot.slane %v4154, %v4160
        %v4162 = vlaneseq
        %v4163 = vshrl.u32 %v4162, 7
        %v4164 = vsub.s32 1, %v4163
        %v4165 = vrot.slane %v4154, %v4164
        %v4166 = vlaneseq
        %v4167 = vshrl.u32 %v4166, 7
        %v4168 = vsub.s32 2, %v4167
        %v4169 = vrot.slane %v4154, %v4168
        %v4170 = vlaneseq
        %v4171 = vshrl.u32 %v4170, 7
        %v4172 = vsub.s32 3, %v4171
        %v4173 = vrot.slane %v4154, %v4172
        %v4174 = vlaneseq
        %v4175 = vshrl.u32 %v4174, 7
        %v4176 = vsub.s32 4, %v4175
        %v4177 = vrot.slane %v4154, %v4176
        %v4178 = vlaneseq
        %v4179 = vshrl.u32 %v4178, 7
        %v4180 = vsub.s32 5, %v4179
        %v4181 = vrot.slane %v4154, %v4180
        %v4182 = vlaneseq
        %v4183 = vshrl.u32 %v4182, 7
        %v4184 = vsub.s32 6, %v4183
        %v4185 = vrot.slane %v4154, %v4184
        %v4186 = vlaneseq
        %v4187 = vshrl.u32 %v4186, 7
        %v4188 = vsub.s32 7, %v4187
        %v4189 = vrot.slane %v4154, %v4188
        %v4190 = vlaneseq
        %v4191 = vshrl.u32 %v4190, 7
        %v4192 = vsub.s32 0, %v4191
        %v4193 = vrot.slane %v4155, %v4192
        %v4203 = vmul.f32 %v4134, %v4161
        %v4204 = vmul.f32 %v4135, %v4165
        %v4205 = vmul.f32 %v4136, %v4169
        %v4206 = vmul.f32 %v4137, %v4173
        %v4207 = vmul.f32 %v4138, %v4177
        %v4208 = vmul.f32 %v4139, %v4181
        %v4209 = vmul.f32 %v4140, %v4185
        %v4210 = vmul.f32 %v4141, %v4189
        %v4211 = vmul.f32 %v4142, %v4193
        %v4212 = vmul.f32 %v4143, %v4161
        %v4213 = vmul.f32 %v4144, %v4165
        %v4214 = vmul.f32 %v4145, %v4169
        %v4215 = vmul.f32 %v4146, %v4173
        %v4216 = vmul.f32 %v4147, %v4177
        %v4217 = vmul.f32 %v4148, %v4181
        %v4218 = vmul.f32 %v4149, %v4185
        %v4219 = vmul.f32 %v4150, %v4189
        %v4220 = vmul.f32 %v4151, %v4193
        %v4221 = vpack.c.bf16 %v4212, %v4203
        %v4222 = vpack.c.bf16 %v4213, %v4204
        %v4223 = vpack.c.bf16 %v4214, %v4205
        %v4224 = vpack.c.bf16 %v4215, %v4206
        %v4225 = vpack.c.bf16 %v4216, %v4207
        %v4226 = vpack.c.bf16 %v4217, %v4208
        %v4227 = vpack.c.bf16 %v4218, %v4209
        %v4228 = vpack.c.bf16 %v4219, %v4210
        %v4229 = vpack.c.bf16 %v4220, %v4211
        %4230 = vst [vmem:[#allocation5 + $0x3a8] sm:$0xff] %v4221
        %4231 = vst [vmem:[#allocation5 + $0x3b0] sm:$0xff] %v4222
        %4232 = vst [vmem:[#allocation5 + $0x3b8] sm:$0xff] %v4223
        %4233 = vst [vmem:[#allocation5 + $0x3c0] sm:$0xff] %v4224
        %4234 = vst [vmem:[#allocation5 + $0x3c8] sm:$0xff] %v4225
        %4235 = vst [vmem:[#allocation5 + $0x3d0] sm:$0xff] %v4226
        %4236 = vst [vmem:[#allocation5 + $0x3d8] sm:$0xff] %v4227
        %4237 = vst [vmem:[#allocation5 + $0x3e0] sm:$0xff] %v4228
        %4238 = vst [vmem:[#allocation5 + $0x3e8] sm:$0xff] %v4229
        %v4239 = vld [vmem:[#allocation4 + $0x10] sm:$0xff]
        %v4240 = vld [vmem:[#allocation4 + $0x18] sm:$0xff]
        %v4241 = vld [vmem:[#allocation4 + $0x20] sm:$0xff]
        %v4242 = vld [vmem:[#allocation4 + $0x28] sm:$0xff]
        %v4243 = vld [vmem:[#allocation4 + $0x30] sm:$0xff]
        %v4244 = vld [vmem:[#allocation4 + $0x38] sm:$0xff]
        %v4245 = vld [vmem:[#allocation4 + $0x40] sm:$0xff]
        %v4246 = vld [vmem:[#allocation4 + $0x48] sm:$0xff]
        %v4247 = vld [vmem:[#allocation4 + $0x50] sm:$0xff]
        %v4248 = vld [vmem:[#allocation4 + $0x58] sm:$0xff]
        %v4249 = vld [vmem:[#allocation4 + $0x78] sm:$0xff]
        %v4250 = vld [vmem:[#allocation4 + $0x80] sm:$0xff]
        %v4251 = vld [vmem:[#allocation4 + $0x88] sm:$0xff]
        %v4252 = vld [vmem:[#allocation4 + $0x90] sm:$0xff]
        %v4253 = vld [vmem:[#allocation4 + $0x98] sm:$0xff]
        %v4254 = vld [vmem:[#allocation4 + $0xa0] sm:$0xff]
        %v4255 = vld [vmem:[#allocation4 + $0xa8] sm:$0xff]
        %v4256 = vld [vmem:[#allocation4 + $0xb0] sm:$0xff]
        %v4257 = vld [vmem:[#allocation4 + $0xb8] sm:$0xff]
        %v4258 = vld [vmem:[#allocation4 + $0xc0] sm:$0xff]
        %v4259 = vld [vmem:[%s918] ss:$8 sm:$0xf]
        %v4260 = vld [vmem:[%s918] ss:$8 sm:$0xf0]
        %v4261 = vor.u32 %v4259, %v4260
        %v4262 = vld [vmem:[%s922] ss:$8 sm:$0x1]
        %v4265 = vlaneseq
        %v4266 = vshrl.u32 %v4265, 7
        %v4267 = vsub.s32 0, %v4266
        %v4268 = vrot.slane %v4261, %v4267
        %v4269 = vlaneseq
        %v4270 = vshrl.u32 %v4269, 7
        %v4271 = vsub.s32 1, %v4270
        %v4272 = vrot.slane %v4261, %v4271
        %v4273 = vlaneseq
        %v4274 = vshrl.u32 %v4273, 7
        %v4275 = vsub.s32 2, %v4274
        %v4276 = vrot.slane %v4261, %v4275
        %v4277 = vlaneseq
        %v4278 = vshrl.u32 %v4277, 7
        %v4279 = vsub.s32 3, %v4278
        %v4280 = vrot.slane %v4261, %v4279
        %v4281 = vlaneseq
        %v4282 = vshrl.u32 %v4281, 7
        %v4283 = vsub.s32 4, %v4282
        %v4284 = vrot.slane %v4261, %v4283
        %v4285 = vlaneseq
        %v4286 = vshrl.u32 %v4285, 7
        %v4287 = vsub.s32 5, %v4286
        %v4288 = vrot.slane %v4261, %v4287
        %v4289 = vlaneseq
        %v4290 = vshrl.u32 %v4289, 7
        %v4291 = vsub.s32 6, %v4290
        %v4292 = vrot.slane %v4261, %v4291
        %v4293 = vlaneseq
        %v4294 = vshrl.u32 %v4293, 7
        %v4295 = vsub.s32 7, %v4294
        %v4296 = vrot.slane %v4261, %v4295
        %v4297 = vlaneseq
        %v4298 = vshrl.u32 %v4297, 7
        %v4299 = vsub.s32 0, %v4298
        %v4300 = vrot.slane %v4262, %v4299
        %4301 = vrot.lane.b32.xlu0 %v4268, 1
        %v4302 = vpop.permute.xlu0 %4301
        %4303 = vrot.lane.b32.xlu0 %v4272, 1
        %v4304 = vpop.permute.xlu0 %4303
        %4305 = vrot.lane.b32.xlu0 %v4276, 1
        %v4306 = vpop.permute.xlu0 %4305
        %4307 = vrot.lane.b32.xlu0 %v4280, 1
        %v4308 = vpop.permute.xlu0 %4307
        %4309 = vrot.lane.b32.xlu0 %v4284, 1
        %v4310 = vpop.permute.xlu0 %4309
        %4311 = vrot.lane.b32.xlu0 %v4288, 1
        %v4312 = vpop.permute.xlu0 %4311
        %4313 = vrot.lane.b32.xlu0 %v4292, 1
        %v4314 = vpop.permute.xlu0 %4313
        %4315 = vrot.lane.b32.xlu0 %v4296, 1
        %v4316 = vpop.permute.xlu0 %4315
        %4317 = vrot.lane.b32.xlu0 %v4300, 1
        %v4318 = vpop.permute.xlu0 %4317
        %v4319 = vsel %vm663, %v4302, %v4304
        %v4320 = vsel %vm663, %v4304, %v4306
        %v4321 = vsel %vm663, %v4306, %v4308
        %v4322 = vsel %vm663, %v4308, %v4310
        %v4323 = vsel %vm663, %v4310, %v4312
        %v4324 = vsel %vm663, %v4312, %v4314
        %v4325 = vsel %vm663, %v4314, %v4316
        %v4326 = vsel %vm663, %v4316, %v4318
        %v4337 = vmul.f32 %v4239, %v4302
        %v4338 = vmul.f32 %v4240, %v4319
        %v4339 = vmul.f32 %v4241, %v4320
        %v4340 = vmul.f32 %v4242, %v4321
        %v4341 = vmul.f32 %v4243, %v4322
        %v4342 = vmul.f32 %v4244, %v4323
        %v4343 = vmul.f32 %v4245, %v4324
        %v4344 = vmul.f32 %v4246, %v4325
        %v4345 = vmul.f32 %v4247, %v4326
        %v4346 = vmul.f32 %v4248, %v4318
        %v4347 = vmul.f32 %v4249, %v4302
        %v4348 = vmul.f32 %v4250, %v4319
        %v4349 = vmul.f32 %v4251, %v4320
        %v4350 = vmul.f32 %v4252, %v4321
        %v4351 = vmul.f32 %v4253, %v4322
        %v4352 = vmul.f32 %v4254, %v4323
        %v4353 = vmul.f32 %v4255, %v4324
        %v4354 = vmul.f32 %v4256, %v4325
        %v4355 = vmul.f32 %v4257, %v4326
        %v4356 = vmul.f32 %v4258, %v4318
        %v4357 = vpack.c.bf16 %v4347, %v4337
        %v4358 = vpack.c.bf16 %v4348, %v4338
        %v4359 = vpack.c.bf16 %v4349, %v4339
        %v4360 = vpack.c.bf16 %v4350, %v4340
        %v4361 = vpack.c.bf16 %v4351, %v4341
        %v4362 = vpack.c.bf16 %v4352, %v4342
        %v4363 = vpack.c.bf16 %v4353, %v4343
        %v4364 = vpack.c.bf16 %v4354, %v4344
        %v4365 = vpack.c.bf16 %v4355, %v4345
        %v4366 = vpack.c.bf16 %v4356, %v4346
        %4377 = vrot.lane.b32.xlu0 %v4357, 127
        %v4378 = vpop.permute.xlu0 %4377
        %4379 = vrot.lane.b32.xlu0 %v4358, 127
        %v4380 = vpop.permute.xlu0 %4379
        %4381 = vrot.lane.b32.xlu0 %v4359, 127
        %v4382 = vpop.permute.xlu0 %4381
        %4383 = vrot.lane.b32.xlu0 %v4360, 127
        %v4384 = vpop.permute.xlu0 %4383
        %4385 = vrot.lane.b32.xlu0 %v4361, 127
        %v4386 = vpop.permute.xlu0 %4385
        %4387 = vrot.lane.b32.xlu0 %v4362, 127
        %v4388 = vpop.permute.xlu0 %4387
        %4389 = vrot.lane.b32.xlu0 %v4363, 127
        %v4390 = vpop.permute.xlu0 %4389
        %4391 = vrot.lane.b32.xlu0 %v4364, 127
        %v4392 = vpop.permute.xlu0 %4391
        %4393 = vrot.lane.b32.xlu0 %v4365, 127
        %v4394 = vpop.permute.xlu0 %4393
        %4395 = vrot.lane.b32.xlu0 %v4366, 127
        %v4396 = vpop.permute.xlu0 %4395
        %v4397 = vsel %vm3366, %v4378, %v4380
        %v4398 = vsel %vm3366, %v4380, %v4382
        %v4399 = vsel %vm3366, %v4382, %v4384
        %v4400 = vsel %vm3366, %v4384, %v4386
        %v4401 = vsel %vm3366, %v4386, %v4388
        %v4402 = vsel %vm3366, %v4388, %v4390
        %v4403 = vsel %vm3366, %v4390, %v4392
        %v4404 = vsel %vm3366, %v4392, %v4394
        %v4405 = vsel %vm3366, %v4394, %v4396
        %4415 = vst [vmem:[#allocation5 + $0x3f0] sm:$0xff] %v4397
        %4416 = vst [vmem:[#allocation5 + $0x3f8] sm:$0xff] %v4398
        %4417 = vst [vmem:[#allocation5 + $0x400] sm:$0xff] %v4399
        %4418 = vst [vmem:[#allocation5 + $0x408] sm:$0xff] %v4400
        %4419 = vst [vmem:[#allocation5 + $0x410] sm:$0xff] %v4401
        %4420 = vst [vmem:[#allocation5 + $0x418] sm:$0xff] %v4402
        %4421 = vst [vmem:[#allocation5 + $0x420] sm:$0xff] %v4403
        %4422 = vst [vmem:[#allocation5 + $0x428] sm:$0xff] %v4404
        %4423 = vst [vmem:[#allocation5 + $0x430] sm:$0xff] %v4405
        %v4424 = vld [vmem:[#allocation4 + $0x10] sm:$0xff]
        %v4425 = vld [vmem:[#allocation4 + $0x18] sm:$0xff]
        %v4426 = vld [vmem:[#allocation4 + $0x20] sm:$0xff]
        %v4427 = vld [vmem:[#allocation4 + $0x28] sm:$0xff]
        %v4428 = vld [vmem:[#allocation4 + $0x30] sm:$0xff]
        %v4429 = vld [vmem:[#allocation4 + $0x38] sm:$0xff]
        %v4430 = vld [vmem:[#allocation4 + $0x40] sm:$0xff]
        %v4431 = vld [vmem:[#allocation4 + $0x48] sm:$0xff]
        %v4432 = vld [vmem:[#allocation4 + $0x50] sm:$0xff]
        %v4433 = vld [vmem:[#allocation4 + $0x58] sm:$0xff]
        %v4434 = vld [vmem:[#allocation4 + $0x78] sm:$0xff]
        %v4435 = vld [vmem:[#allocation4 + $0x80] sm:$0xff]
        %v4436 = vld [vmem:[#allocation4 + $0x88] sm:$0xff]
        %v4437 = vld [vmem:[#allocation4 + $0x90] sm:$0xff]
        %v4438 = vld [vmem:[#allocation4 + $0x98] sm:$0xff]
        %v4439 = vld [vmem:[#allocation4 + $0xa0] sm:$0xff]
        %v4440 = vld [vmem:[#allocation4 + $0xa8] sm:$0xff]
        %v4441 = vld [vmem:[#allocation4 + $0xb0] sm:$0xff]
        %v4442 = vld [vmem:[#allocation4 + $0xb8] sm:$0xff]
        %v4443 = vld [vmem:[#allocation4 + $0xc0] sm:$0xff]
        %v4444 = vld [vmem:[%s960] ss:$8 sm:$0xf]
        %v4445 = vld [vmem:[%s960] ss:$8 sm:$0xf0]
        %v4446 = vor.u32 %v4444, %v4445
        %v4447 = vld [vmem:[%s964] ss:$8 sm:$0x1]
        %v4450 = vlaneseq
        %v4451 = vshrl.u32 %v4450, 7
        %v4452 = vsub.s32 0, %v4451
        %v4453 = vrot.slane %v4446, %v4452
        %v4454 = vlaneseq
        %v4455 = vshrl.u32 %v4454, 7
        %v4456 = vsub.s32 1, %v4455
        %v4457 = vrot.slane %v4446, %v4456
        %v4458 = vlaneseq
        %v4459 = vshrl.u32 %v4458, 7
        %v4460 = vsub.s32 2, %v4459
        %v4461 = vrot.slane %v4446, %v4460
        %v4462 = vlaneseq
        %v4463 = vshrl.u32 %v4462, 7
        %v4464 = vsub.s32 3, %v4463
        %v4465 = vrot.slane %v4446, %v4464
        %v4466 = vlaneseq
        %v4467 = vshrl.u32 %v4466, 7
        %v4468 = vsub.s32 4, %v4467
        %v4469 = vrot.slane %v4446, %v4468
        %v4470 = vlaneseq
        %v4471 = vshrl.u32 %v4470, 7
        %v4472 = vsub.s32 5, %v4471
        %v4473 = vrot.slane %v4446, %v4472
        %v4474 = vlaneseq
        %v4475 = vshrl.u32 %v4474, 7
        %v4476 = vsub.s32 6, %v4475
        %v4477 = vrot.slane %v4446, %v4476
        %v4478 = vlaneseq
        %v4479 = vshrl.u32 %v4478, 7
        %v4480 = vsub.s32 7, %v4479
        %v4481 = vrot.slane %v4446, %v4480
        %v4482 = vlaneseq
        %v4483 = vshrl.u32 %v4482, 7
        %v4484 = vsub.s32 0, %v4483
        %v4485 = vrot.slane %v4447, %v4484
        %4486 = vrot.lane.b32.xlu0 %v4453, 15
        %v4487 = vpop.permute.xlu0 %4486
        %4488 = vrot.lane.b32.xlu0 %v4457, 15
        %v4489 = vpop.permute.xlu0 %4488
        %4490 = vrot.lane.b32.xlu0 %v4461, 15
        %v4491 = vpop.permute.xlu0 %4490
        %4492 = vrot.lane.b32.xlu0 %v4465, 15
        %v4493 = vpop.permute.xlu0 %4492
        %4494 = vrot.lane.b32.xlu0 %v4469, 15
        %v4495 = vpop.permute.xlu0 %4494
        %4496 = vrot.lane.b32.xlu0 %v4473, 15
        %v4497 = vpop.permute.xlu0 %4496
        %4498 = vrot.lane.b32.xlu0 %v4477, 15
        %v4499 = vpop.permute.xlu0 %4498
        %4500 = vrot.lane.b32.xlu0 %v4481, 15
        %v4501 = vpop.permute.xlu0 %4500
        %4502 = vrot.lane.b32.xlu0 %v4485, 15
        %v4503 = vpop.permute.xlu0 %4502
        %v4504 = vsel %vm619, %v4487, %v4489
        %v4505 = vsel %vm619, %v4489, %v4491
        %v4506 = vsel %vm619, %v4491, %v4493
        %v4507 = vsel %vm619, %v4493, %v4495
        %v4508 = vsel %vm619, %v4495, %v4497
        %v4509 = vsel %vm619, %v4497, %v4499
        %v4510 = vsel %vm619, %v4499, %v4501
        %v4511 = vsel %vm619, %v4501, %v4503
        %v4522 = vmul.f32 %v4424, %v4487
        %v4523 = vmul.f32 %v4425, %v4504
        %v4524 = vmul.f32 %v4426, %v4505
        %v4525 = vmul.f32 %v4427, %v4506
        %v4526 = vmul.f32 %v4428, %v4507
        %v4527 = vmul.f32 %v4429, %v4508
        %v4528 = vmul.f32 %v4430, %v4509
        %v4529 = vmul.f32 %v4431, %v4510
        %v4530 = vmul.f32 %v4432, %v4511
        %v4531 = vmul.f32 %v4433, %v4503
        %v4532 = vmul.f32 %v4434, %v4487
        %v4533 = vmul.f32 %v4435, %v4504
        %v4534 = vmul.f32 %v4436, %v4505
        %v4535 = vmul.f32 %v4437, %v4506
        %v4536 = vmul.f32 %v4438, %v4507
        %v4537 = vmul.f32 %v4439, %v4508
        %v4538 = vmul.f32 %v4440, %v4509
        %v4539 = vmul.f32 %v4441, %v4510
        %v4540 = vmul.f32 %v4442, %v4511
        %v4541 = vmul.f32 %v4443, %v4503
        %v4542 = vpack.c.bf16 %v4532, %v4522
        %v4543 = vpack.c.bf16 %v4533, %v4523
        %v4544 = vpack.c.bf16 %v4534, %v4524
        %v4545 = vpack.c.bf16 %v4535, %v4525
        %v4546 = vpack.c.bf16 %v4536, %v4526
        %v4547 = vpack.c.bf16 %v4537, %v4527
        %v4548 = vpack.c.bf16 %v4538, %v4528
        %v4549 = vpack.c.bf16 %v4539, %v4529
        %v4550 = vpack.c.bf16 %v4540, %v4530
        %v4551 = vpack.c.bf16 %v4541, %v4531
        %4562 = vrot.lane.b32.xlu0 %v4542, 113
        %v4563 = vpop.permute.xlu0 %4562
        %4564 = vrot.lane.b32.xlu0 %v4543, 113
        %v4565 = vpop.permute.xlu0 %4564
        %4566 = vrot.lane.b32.xlu0 %v4544, 113
        %v4567 = vpop.permute.xlu0 %4566
        %4568 = vrot.lane.b32.xlu0 %v4545, 113
        %v4569 = vpop.permute.xlu0 %4568
        %4570 = vrot.lane.b32.xlu0 %v4546, 113
        %v4571 = vpop.permute.xlu0 %4570
        %4572 = vrot.lane.b32.xlu0 %v4547, 113
        %v4573 = vpop.permute.xlu0 %4572
        %4574 = vrot.lane.b32.xlu0 %v4548, 113
        %v4575 = vpop.permute.xlu0 %4574
        %4576 = vrot.lane.b32.xlu0 %v4549, 113
        %v4577 = vpop.permute.xlu0 %4576
        %4578 = vrot.lane.b32.xlu0 %v4550, 113
        %v4579 = vpop.permute.xlu0 %4578
        %4580 = vrot.lane.b32.xlu0 %v4551, 113
        %v4581 = vpop.permute.xlu0 %4580
        %vm4582 = vcmask 924672
        %v4583 = vsel %vm4582, %v4563, %v4565
        %v4584 = vsel %vm4582, %v4565, %v4567
        %v4585 = vsel %vm4582, %v4567, %v4569
        %v4586 = vsel %vm4582, %v4569, %v4571
        %v4587 = vsel %vm4582, %v4571, %v4573
        %v4588 = vsel %vm4582, %v4573, %v4575
        %v4589 = vsel %vm4582, %v4575, %v4577
        %v4590 = vsel %vm4582, %v4577, %v4579
        %v4591 = vsel %vm4582, %v4579, %v4581
        %4601 = vst [vmem:[#allocation5 + $0x438] sm:$0xff] %v4583
        %4602 = vst [vmem:[#allocation5 + $0x440] sm:$0xff] %v4584
        %4603 = vst [vmem:[#allocation5 + $0x448] sm:$0xff] %v4585
        %4604 = vst [vmem:[#allocation5 + $0x450] sm:$0xff] %v4586
        %4605 = vst [vmem:[#allocation5 + $0x458] sm:$0xff] %v4587
        %4606 = vst [vmem:[#allocation5 + $0x460] sm:$0xff] %v4588
        %4607 = vst [vmem:[#allocation5 + $0x468] sm:$0xff] %v4589
        %4608 = vst [vmem:[#allocation5 + $0x470] sm:$0xff] %v4590
        %4609 = vst [vmem:[#allocation5 + $0x478] sm:$0xff] %v4591
        %v4610 = vld [vmem:[#allocation4 + $0x10] sm:$0xff]
        %v4611 = vld [vmem:[#allocation4 + $0x18] sm:$0xff]
        %v4612 = vld [vmem:[#allocation4 + $0x20] sm:$0xff]
        %v4613 = vld [vmem:[#allocation4 + $0x28] sm:$0xff]
        %v4614 = vld [vmem:[#allocation4 + $0x30] sm:$0xff]
        %v4615 = vld [vmem:[#allocation4 + $0x38] sm:$0xff]
        %v4616 = vld [vmem:[#allocation4 + $0x40] sm:$0xff]
        %v4617 = vld [vmem:[#allocation4 + $0x48] sm:$0xff]
        %v4618 = vld [vmem:[#allocation4 + $0x50] sm:$0xff]
        %v4619 = vld [vmem:[#allocation4 + $0x58] sm:$0xff]
        %v4620 = vld [vmem:[#allocation4 + $0x78] sm:$0xff]
        %v4621 = vld [vmem:[#allocation4 + $0x80] sm:$0xff]
        %v4622 = vld [vmem:[#allocation4 + $0x88] sm:$0xff]
        %v4623 = vld [vmem:[#allocation4 + $0x90] sm:$0xff]
        %v4624 = vld [vmem:[#allocation4 + $0x98] sm:$0xff]
        %v4625 = vld [vmem:[#allocation4 + $0xa0] sm:$0xff]
        %v4626 = vld [vmem:[#allocation4 + $0xa8] sm:$0xff]
        %v4627 = vld [vmem:[#allocation4 + $0xb0] sm:$0xff]
        %v4628 = vld [vmem:[#allocation4 + $0xb8] sm:$0xff]
        %v4629 = vld [vmem:[#allocation4 + $0xc0] sm:$0xff]
        %v4630 = vld [vmem:[%s1002] ss:$8 sm:$0xf]
        %v4631 = vld [vmem:[%s1002] ss:$8 sm:$0xf0]
        %v4632 = vor.u32 %v4630, %v4631
        %v4633 = vld [vmem:[%s1006] ss:$8 sm:$0x1]
        %v4636 = vlaneseq
        %v4637 = vshrl.u32 %v4636, 7
        %v4638 = vsub.s32 0, %v4637
        %v4639 = vrot.slane %v4632, %v4638
        %v4640 = vlaneseq
        %v4641 = vshrl.u32 %v4640, 7
        %v4642 = vsub.s32 1, %v4641
        %v4643 = vrot.slane %v4632, %v4642
        %v4644 = vlaneseq
        %v4645 = vshrl.u32 %v4644, 7
        %v4646 = vsub.s32 2, %v4645
        %v4647 = vrot.slane %v4632, %v4646
        %v4648 = vlaneseq
        %v4649 = vshrl.u32 %v4648, 7
        %v4650 = vsub.s32 3, %v4649
        %v4651 = vrot.slane %v4632, %v4650
        %v4652 = vlaneseq
        %v4653 = vshrl.u32 %v4652, 7
        %v4654 = vsub.s32 4, %v4653
        %v4655 = vrot.slane %v4632, %v4654
        %v4656 = vlaneseq
        %v4657 = vshrl.u32 %v4656, 7
        %v4658 = vsub.s32 5, %v4657
        %v4659 = vrot.slane %v4632, %v4658
        %v4660 = vlaneseq
        %v4661 = vshrl.u32 %v4660, 7
        %v4662 = vsub.s32 6, %v4661
        %v4663 = vrot.slane %v4632, %v4662
        %v4664 = vlaneseq
        %v4665 = vshrl.u32 %v4664, 7
        %v4666 = vsub.s32 7, %v4665
        %v4667 = vrot.slane %v4632, %v4666
        %v4668 = vlaneseq
        %v4669 = vshrl.u32 %v4668, 7
        %v4670 = vsub.s32 0, %v4669
        %v4671 = vrot.slane %v4633, %v4670
        %4672 = vrot.lane.b32.xlu0 %v4639, 16
        %v4673 = vpop.permute.xlu0 %4672
        %4674 = vrot.lane.b32.xlu0 %v4643, 16
        %v4675 = vpop.permute.xlu0 %4674
        %4676 = vrot.lane.b32.xlu0 %v4647, 16
        %v4677 = vpop.permute.xlu0 %4676
        %4678 = vrot.lane.b32.xlu0 %v4651, 16
        %v4679 = vpop.permute.xlu0 %4678
        %4680 = vrot.lane.b32.xlu0 %v4655, 16
        %v4681 = vpop.permute.xlu0 %4680
        %4682 = vrot.lane.b32.xlu0 %v4659, 16
        %v4683 = vpop.permute.xlu0 %4682
        %4684 = vrot.lane.b32.xlu0 %v4663, 16
        %v4685 = vpop.permute.xlu0 %4684
        %4686 = vrot.lane.b32.xlu0 %v4667, 16
        %v4687 = vpop.permute.xlu0 %4686
        %4688 = vrot.lane.b32.xlu0 %v4671, 16
        %v4689 = vpop.permute.xlu0 %4688
        %v4690 = vsel %vm575, %v4673, %v4675
        %v4691 = vsel %vm575, %v4675, %v4677
        %v4692 = vsel %vm575, %v4677, %v4679
        %v4693 = vsel %vm575, %v4679, %v4681
        %v4694 = vsel %vm575, %v4681, %v4683
        %v4695 = vsel %vm575, %v4683, %v4685
        %v4696 = vsel %vm575, %v4685, %v4687
        %v4697 = vsel %vm575, %v4687, %v4689
        %v4708 = vmul.f32 %v4610, %v4673
        %v4709 = vmul.f32 %v4611, %v4690
        %v4710 = vmul.f32 %v4612, %v4691
        %v4711 = vmul.f32 %v4613, %v4692
        %v4712 = vmul.f32 %v4614, %v4693
        %v4713 = vmul.f32 %v4615, %v4694
        %v4714 = vmul.f32 %v4616, %v4695
        %v4715 = vmul.f32 %v4617, %v4696
        %v4716 = vmul.f32 %v4618, %v4697
        %v4717 = vmul.f32 %v4619, %v4689
        %v4718 = vmul.f32 %v4620, %v4673
        %v4719 = vmul.f32 %v4621, %v4690
        %v4720 = vmul.f32 %v4622, %v4691
        %v4721 = vmul.f32 %v4623, %v4692
        %v4722 = vmul.f32 %v4624, %v4693
        %v4723 = vmul.f32 %v4625, %v4694
        %v4724 = vmul.f32 %v4626, %v4695
        %v4725 = vmul.f32 %v4627, %v4696
        %v4726 = vmul.f32 %v4628, %v4697
        %v4727 = vmul.f32 %v4629, %v4689
        %v4728 = vpack.c.bf16 %v4718, %v4708
        %v4729 = vpack.c.bf16 %v4719, %v4709
        %v4730 = vpack.c.bf16 %v4720, %v4710
        %v4731 = vpack.c.bf16 %v4721, %v4711
        %v4732 = vpack.c.bf16 %v4722, %v4712
        %v4733 = vpack.c.bf16 %v4723, %v4713
        %v4734 = vpack.c.bf16 %v4724, %v4714
        %v4735 = vpack.c.bf16 %v4725, %v4715
        %v4736 = vpack.c.bf16 %v4726, %v4716
        %v4737 = vpack.c.bf16 %v4727, %v4717
        %4748 = vrot.lane.b32.xlu0 %v4728, 112
        %v4749 = vpop.permute.xlu0 %4748
        %4750 = vrot.lane.b32.xlu0 %v4729, 112
        %v4751 = vpop.permute.xlu0 %4750
        %4752 = vrot.lane.b32.xlu0 %v4730, 112
        %v4753 = vpop.permute.xlu0 %4752
        %4754 = vrot.lane.b32.xlu0 %v4731, 112
        %v4755 = vpop.permute.xlu0 %4754
        %4756 = vrot.lane.b32.xlu0 %v4732, 112
        %v4757 = vpop.permute.xlu0 %4756
        %4758 = vrot.lane.b32.xlu0 %v4733, 112
        %v4759 = vpop.permute.xlu0 %4758
        %4760 = vrot.lane.b32.xlu0 %v4734, 112
        %v4761 = vpop.permute.xlu0 %4760
        %4762 = vrot.lane.b32.xlu0 %v4735, 112
        %v4763 = vpop.permute.xlu0 %4762
        %4764 = vrot.lane.b32.xlu0 %v4736, 112
        %v4765 = vpop.permute.xlu0 %4764
        %4766 = vrot.lane.b32.xlu0 %v4737, 112
        %v4767 = vpop.permute.xlu0 %4766
        %vm4768 = vcmask 916480
        %v4769 = vsel %vm4768, %v4749, %v4751
        %v4770 = vsel %vm4768, %v4751, %v4753
        %v4771 = vsel %vm4768, %v4753, %v4755
        %v4772 = vsel %vm4768, %v4755, %v4757
        %v4773 = vsel %vm4768, %v4757, %v4759
        %v4774 = vsel %vm4768, %v4759, %v4761
        %v4775 = vsel %vm4768, %v4761, %v4763
        %v4776 = vsel %vm4768, %v4763, %v4765
        %v4777 = vsel %vm4768, %v4765, %v4767
        %4787 = vst [vmem:[#allocation5 + $0x480] sm:$0xff] %v4769
        %4788 = vst [vmem:[#allocation5 + $0x488] sm:$0xff] %v4770
        %4789 = vst [vmem:[#allocation5 + $0x490] sm:$0xff] %v4771
        %4790 = vst [vmem:[#allocation5 + $0x498] sm:$0xff] %v4772
        %4791 = vst [vmem:[#allocation5 + $0x4a0] sm:$0xff] %v4773
        %4792 = vst [vmem:[#allocation5 + $0x4a8] sm:$0xff] %v4774
        %4793 = vst [vmem:[#allocation5 + $0x4b0] sm:$0xff] %v4775
        %4794 = vst [vmem:[#allocation5 + $0x4b8] sm:$0xff] %v4776
        %4795 = vst [vmem:[#allocation5 + $0x4c0] sm:$0xff] %v4777
        %v4796 = vld [vmem:[#allocation4 + $0x10] sm:$0xff]
        %v4797 = vld [vmem:[#allocation4 + $0x18] sm:$0xff]
        %v4798 = vld [vmem:[#allocation4 + $0x20] sm:$0xff]
        %v4799 = vld [vmem:[#allocation4 + $0x28] sm:$0xff]
        %v4800 = vld [vmem:[#allocation4 + $0x30] sm:$0xff]
        %v4801 = vld [vmem:[#allocation4 + $0x38] sm:$0xff]
        %v4802 = vld [vmem:[#allocation4 + $0x40] sm:$0xff]
        %v4803 = vld [vmem:[#allocation4 + $0x48] sm:$0xff]
        %v4804 = vld [vmem:[#allocation4 + $0x50] sm:$0xff]
        %v4805 = vld [vmem:[#allocation4 + $0x58] sm:$0xff]
        %v4806 = vld [vmem:[#allocation4 + $0x78] sm:$0xff]
        %v4807 = vld [vmem:[#allocation4 + $0x80] sm:$0xff]
        %v4808 = vld [vmem:[#allocation4 + $0x88] sm:$0xff]
        %v4809 = vld [vmem:[#allocation4 + $0x90] sm:$0xff]
        %v4810 = vld [vmem:[#allocation4 + $0x98] sm:$0xff]
        %v4811 = vld [vmem:[#allocation4 + $0xa0] sm:$0xff]
        %v4812 = vld [vmem:[#allocation4 + $0xa8] sm:$0xff]
        %v4813 = vld [vmem:[#allocation4 + $0xb0] sm:$0xff]
        %v4814 = vld [vmem:[#allocation4 + $0xb8] sm:$0xff]
        %v4815 = vld [vmem:[#allocation4 + $0xc0] sm:$0xff]
        %v4816 = vld [vmem:[%s1044] ss:$8 sm:$0xf]
        %v4817 = vld [vmem:[%s1044] ss:$8 sm:$0xf0]
        %v4818 = vor.u32 %v4816, %v4817
        %v4819 = vld [vmem:[%s1048] ss:$8 sm:$0x1]
        %v4822 = vlaneseq
        %v4823 = vshrl.u32 %v4822, 7
        %v4824 = vsub.s32 0, %v4823
        %v4825 = vrot.slane %v4818, %v4824
        %v4826 = vlaneseq
        %v4827 = vshrl.u32 %v4826, 7
        %v4828 = vsub.s32 1, %v4827
        %v4829 = vrot.slane %v4818, %v4828
        %v4830 = vlaneseq
        %v4831 = vshrl.u32 %v4830, 7
        %v4832 = vsub.s32 2, %v4831
        %v4833 = vrot.slane %v4818, %v4832
        %v4834 = vlaneseq
        %v4835 = vshrl.u32 %v4834, 7
        %v4836 = vsub.s32 3, %v4835
        %v4837 = vrot.slane %v4818, %v4836
        %v4838 = vlaneseq
        %v4839 = vshrl.u32 %v4838, 7
        %v4840 = vsub.s32 4, %v4839
        %v4841 = vrot.slane %v4818, %v4840
        %v4842 = vlaneseq
        %v4843 = vshrl.u32 %v4842, 7
        %v4844 = vsub.s32 5, %v4843
        %v4845 = vrot.slane %v4818, %v4844
        %v4846 = vlaneseq
        %v4847 = vshrl.u32 %v4846, 7
        %v4848 = vsub.s32 6, %v4847
        %v4849 = vrot.slane %v4818, %v4848
        %v4850 = vlaneseq
        %v4851 = vshrl.u32 %v4850, 7
        %v4852 = vsub.s32 7, %v4851
        %v4853 = vrot.slane %v4818, %v4852
        %v4854 = vlaneseq
        %v4855 = vshrl.u32 %v4854, 7
        %v4856 = vsub.s32 0, %v4855
        %v4857 = vrot.slane %v4819, %v4856
        %4858 = vrot.lane.b32.xlu0 %v4825, 17
        %v4859 = vpop.permute.xlu0 %4858
        %4860 = vrot.lane.b32.xlu0 %v4829, 17
        %v4861 = vpop.permute.xlu0 %4860
        %4862 = vrot.lane.b32.xlu0 %v4833, 17
        %v4863 = vpop.permute.xlu0 %4862
        %4864 = vrot.lane.b32.xlu0 %v4837, 17
        %v4865 = vpop.permute.xlu0 %4864
        %4866 = vrot.lane.b32.xlu0 %v4841, 17
        %v4867 = vpop.permute.xlu0 %4866
        %4868 = vrot.lane.b32.xlu0 %v4845, 17
        %v4869 = vpop.permute.xlu0 %4868
        %4870 = vrot.lane.b32.xlu0 %v4849, 17
        %v4871 = vpop.permute.xlu0 %4870
        %4872 = vrot.lane.b32.xlu0 %v4853, 17
        %v4873 = vpop.permute.xlu0 %4872
        %4874 = vrot.lane.b32.xlu0 %v4857, 17
        %v4875 = vpop.permute.xlu0 %4874
        %v4876 = vsel %vm531, %v4859, %v4861
        %v4877 = vsel %vm531, %v4861, %v4863
        %v4878 = vsel %vm531, %v4863, %v4865
        %v4879 = vsel %vm531, %v4865, %v4867
        %v4880 = vsel %vm531, %v4867, %v4869
        %v4881 = vsel %vm531, %v4869, %v4871
        %v4882 = vsel %vm531, %v4871, %v4873
        %v4883 = vsel %vm531, %v4873, %v4875
        %v4894 = vmul.f32 %v4796, %v4859
        %v4895 = vmul.f32 %v4797, %v4876
        %v4896 = vmul.f32 %v4798, %v4877
        %v4897 = vmul.f32 %v4799, %v4878
        %v4898 = vmul.f32 %v4800, %v4879
        %v4899 = vmul.f32 %v4801, %v4880
        %v4900 = vmul.f32 %v4802, %v4881
        %v4901 = vmul.f32 %v4803, %v4882
        %v4902 = vmul.f32 %v4804, %v4883
        %v4903 = vmul.f32 %v4805, %v4875
        %v4904 = vmul.f32 %v4806, %v4859
        %v4905 = vmul.f32 %v4807, %v4876
        %v4906 = vmul.f32 %v4808, %v4877
        %v4907 = vmul.f32 %v4809, %v4878
        %v4908 = vmul.f32 %v4810, %v4879
        %v4909 = vmul.f32 %v4811, %v4880
        %v4910 = vmul.f32 %v4812, %v4881
        %v4911 = vmul.f32 %v4813, %v4882
        %v4912 = vmul.f32 %v4814, %v4883
        %v4913 = vmul.f32 %v4815, %v4875
        %v4914 = vpack.c.bf16 %v4904, %v4894
        %v4915 = vpack.c.bf16 %v4905, %v4895
        %v4916 = vpack.c.bf16 %v4906, %v4896
        %v4917 = vpack.c.bf16 %v4907, %v4897
        %v4918 = vpack.c.bf16 %v4908, %v4898
        %v4919 = vpack.c.bf16 %v4909, %v4899
        %v4920 = vpack.c.bf16 %v4910, %v4900
        %v4921 = vpack.c.bf16 %v4911, %v4901
        %v4922 = vpack.c.bf16 %v4912, %v4902
        %v4923 = vpack.c.bf16 %v4913, %v4903
        %4934 = vrot.lane.b32.xlu0 %v4914, 111
        %v4935 = vpop.permute.xlu0 %4934
        %4936 = vrot.lane.b32.xlu0 %v4915, 111
        %v4937 = vpop.permute.xlu0 %4936
        %4938 = vrot.lane.b32.xlu0 %v4916, 111
        %v4939 = vpop.permute.xlu0 %4938
        %4940 = vrot.lane.b32.xlu0 %v4917, 111
        %v4941 = vpop.permute.xlu0 %4940
        %4942 = vrot.lane.b32.xlu0 %v4918, 111
        %v4943 = vpop.permute.xlu0 %4942
        %4944 = vrot.lane.b32.xlu0 %v4919, 111
        %v4945 = vpop.permute.xlu0 %4944
        %4946 = vrot.lane.b32.xlu0 %v4920, 111
        %v4947 = vpop.permute.xlu0 %4946
        %4948 = vrot.lane.b32.xlu0 %v4921, 111
        %v4949 = vpop.permute.xlu0 %4948
        %4950 = vrot.lane.b32.xlu0 %v4922, 111
        %v4951 = vpop.permute.xlu0 %4950
        %4952 = vrot.lane.b32.xlu0 %v4923, 111
        %v4953 = vpop.permute.xlu0 %4952
        %vm4954 = vcmask 908288
        %v4955 = vsel %vm4954, %v4935, %v4937
        %v4956 = vsel %vm4954, %v4937, %v4939
        %v4957 = vsel %vm4954, %v4939, %v4941
        %v4958 = vsel %vm4954, %v4941, %v4943
        %v4959 = vsel %vm4954, %v4943, %v4945
        %v4960 = vsel %vm4954, %v4945, %v4947
        %v4961 = vsel %vm4954, %v4947, %v4949
        %v4962 = vsel %vm4954, %v4949, %v4951
        %v4963 = vsel %vm4954, %v4951, %v4953
        %4973 = vst [vmem:[#allocation5 + $0x4c8] sm:$0xff] %v4955
        %4974 = vst [vmem:[#allocation5 + $0x4d0] sm:$0xff] %v4956
        %4975 = vst [vmem:[#allocation5 + $0x4d8] sm:$0xff] %v4957
        %4976 = vst [vmem:[#allocation5 + $0x4e0] sm:$0xff] %v4958
        %4977 = vst [vmem:[#allocation5 + $0x4e8] sm:$0xff] %v4959
        %4978 = vst [vmem:[#allocation5 + $0x4f0] sm:$0xff] %v4960
        %4979 = vst [vmem:[#allocation5 + $0x4f8] sm:$0xff] %v4961
        %4980 = vst [vmem:[#allocation5 + $0x500] sm:$0xff] %v4962
        %4981 = vst [vmem:[#allocation5 + $0x508] sm:$0xff] %v4963
        %v4982 = vld [vmem:[#allocation4 + $0x10] sm:$0xff]
        %v4983 = vld [vmem:[#allocation4 + $0x18] sm:$0xff]
        %v4984 = vld [vmem:[#allocation4 + $0x20] sm:$0xff]
        %v4985 = vld [vmem:[#allocation4 + $0x28] sm:$0xff]
        %v4986 = vld [vmem:[#allocation4 + $0x30] sm:$0xff]
        %v4987 = vld [vmem:[#allocation4 + $0x38] sm:$0xff]
        %v4988 = vld [vmem:[#allocation4 + $0x40] sm:$0xff]
        %v4989 = vld [vmem:[#allocation4 + $0x48] sm:$0xff]
        %v4990 = vld [vmem:[#allocation4 + $0x50] sm:$0xff]
        %v4991 = vld [vmem:[#allocation4 + $0x58] sm:$0xff]
        %v4992 = vld [vmem:[#allocation4 + $0x78] sm:$0xff]
        %v4993 = vld [vmem:[#allocation4 + $0x80] sm:$0xff]
        %v4994 = vld [vmem:[#allocation4 + $0x88] sm:$0xff]
        %v4995 = vld [vmem:[#allocation4 + $0x90] sm:$0xff]
        %v4996 = vld [vmem:[#allocation4 + $0x98] sm:$0xff]
        %v4997 = vld [vmem:[#allocation4 + $0xa0] sm:$0xff]
        %v4998 = vld [vmem:[#allocation4 + $0xa8] sm:$0xff]
        %v4999 = vld [vmem:[#allocation4 + $0xb0] sm:$0xff]
        %v5000 = vld [vmem:[#allocation4 + $0xb8] sm:$0xff]
        %v5001 = vld [vmem:[#allocation4 + $0xc0] sm:$0xff]
        %v5002 = vld [vmem:[%s1086] ss:$8 sm:$0xf]
        %v5003 = vld [vmem:[%s1086] ss:$8 sm:$0xf0]
        %v5004 = vor.u32 %v5002, %v5003
        %v5005 = vld [vmem:[%s1090] ss:$8 sm:$0x1]
        %v5008 = vlaneseq
        %v5009 = vshrl.u32 %v5008, 7
        %v5010 = vsub.s32 0, %v5009
        %v5011 = vrot.slane %v5004, %v5010
        %v5012 = vlaneseq
        %v5013 = vshrl.u32 %v5012, 7
        %v5014 = vsub.s32 1, %v5013
        %v5015 = vrot.slane %v5004, %v5014
        %v5016 = vlaneseq
        %v5017 = vshrl.u32 %v5016, 7
        %v5018 = vsub.s32 2, %v5017
        %v5019 = vrot.slane %v5004, %v5018
        %v5020 = vlaneseq
        %v5021 = vshrl.u32 %v5020, 7
        %v5022 = vsub.s32 3, %v5021
        %v5023 = vrot.slane %v5004, %v5022
        %v5024 = vlaneseq
        %v5025 = vshrl.u32 %v5024, 7
        %v5026 = vsub.s32 4, %v5025
        %v5027 = vrot.slane %v5004, %v5026
        %v5028 = vlaneseq
        %v5029 = vshrl.u32 %v5028, 7
        %v5030 = vsub.s32 5, %v5029
        %v5031 = vrot.slane %v5004, %v5030
        %v5032 = vlaneseq
        %v5033 = vshrl.u32 %v5032, 7
        %v5034 = vsub.s32 6, %v5033
        %v5035 = vrot.slane %v5004, %v5034
        %v5036 = vlaneseq
        %v5037 = vshrl.u32 %v5036, 7
        %v5038 = vsub.s32 7, %v5037
        %v5039 = vrot.slane %v5004, %v5038
        %v5040 = vlaneseq
        %v5041 = vshrl.u32 %v5040, 7
        %v5042 = vsub.s32 0, %v5041
        %v5043 = vrot.slane %v5005, %v5042
        %5044 = vrot.lane.b32.xlu0 %v5011, 127
        %v5045 = vpop.permute.xlu0 %5044
        %5046 = vrot.lane.b32.xlu0 %v5015, 127
        %v5047 = vpop.permute.xlu0 %5046
        %5048 = vrot.lane.b32.xlu0 %v5019, 127
        %v5049 = vpop.permute.xlu0 %5048
        %5050 = vrot.lane.b32.xlu0 %v5023, 127
        %v5051 = vpop.permute.xlu0 %5050
        %5052 = vrot.lane.b32.xlu0 %v5027, 127
        %v5053 = vpop.permute.xlu0 %5052
        %5054 = vrot.lane.b32.xlu0 %v5031, 127
        %v5055 = vpop.permute.xlu0 %5054
        %5056 = vrot.lane.b32.xlu0 %v5035, 127
        %v5057 = vpop.permute.xlu0 %5056
        %5058 = vrot.lane.b32.xlu0 %v5039, 127
        %v5059 = vpop.permute.xlu0 %5058
        %5060 = vrot.lane.b32.xlu0 %v5043, 127
        %v5061 = vpop.permute.xlu0 %5060
        %v5062 = vsel %vm646, %v5045, %v5047
        %v5063 = vsel %vm646, %v5047, %v5049
        %v5064 = vsel %vm646, %v5049, %v5051
        %v5065 = vsel %vm646, %v5051, %v5053
        %v5066 = vsel %vm646, %v5053, %v5055
        %v5067 = vsel %vm646, %v5055, %v5057
        %v5068 = vsel %vm646, %v5057, %v5059
        %v5069 = vsel %vm646, %v5059, %v5061
        %v5080 = vmul.f32 %v4982, %v5045
        %v5081 = vmul.f32 %v4983, %v5062
        %v5082 = vmul.f32 %v4984, %v5063
        %v5083 = vmul.f32 %v4985, %v5064
        %v5084 = vmul.f32 %v4986, %v5065
        %v5085 = vmul.f32 %v4987, %v5066
        %v5086 = vmul.f32 %v4988, %v5067
        %v5087 = vmul.f32 %v4989, %v5068
        %v5088 = vmul.f32 %v4990, %v5069
        %v5089 = vmul.f32 %v4991, %v5061
        %v5090 = vmul.f32 %v4992, %v5045
        %v5091 = vmul.f32 %v4993, %v5062
        %v5092 = vmul.f32 %v4994, %v5063
        %v5093 = vmul.f32 %v4995, %v5064
        %v5094 = vmul.f32 %v4996, %v5065
        %v5095 = vmul.f32 %v4997, %v5066
        %v5096 = vmul.f32 %v4998, %v5067
        %v5097 = vmul.f32 %v4999, %v5068
        %v5098 = vmul.f32 %v5000, %v5069
        %v5099 = vmul.f32 %v5001, %v5061
        %v5100 = vpack.c.bf16 %v5090, %v5080
        %v5101 = vpack.c.bf16 %v5091, %v5081
        %v5102 = vpack.c.bf16 %v5092, %v5082
        %v5103 = vpack.c.bf16 %v5093, %v5083
        %v5104 = vpack.c.bf16 %v5094, %v5084
        %v5105 = vpack.c.bf16 %v5095, %v5085
        %v5106 = vpack.c.bf16 %v5096, %v5086
        %v5107 = vpack.c.bf16 %v5097, %v5087
        %v5108 = vpack.c.bf16 %v5098, %v5088
        %v5109 = vpack.c.bf16 %v5099, %v5089
        %5120 = vrot.lane.b32.xlu0 %v5100, 1
        %v5121 = vpop.permute.xlu0 %5120
        %5122 = vrot.lane.b32.xlu0 %v5101, 1
        %v5123 = vpop.permute.xlu0 %5122
        %5124 = vrot.lane.b32.xlu0 %v5102, 1
        %v5125 = vpop.permute.xlu0 %5124
        %5126 = vrot.lane.b32.xlu0 %v5103, 1
        %v5127 = vpop.permute.xlu0 %5126
        %5128 = vrot.lane.b32.xlu0 %v5104, 1
        %v5129 = vpop.permute.xlu0 %5128
        %5130 = vrot.lane.b32.xlu0 %v5105, 1
        %v5131 = vpop.permute.xlu0 %5130
        %5132 = vrot.lane.b32.xlu0 %v5106, 1
        %v5133 = vpop.permute.xlu0 %5132
        %5134 = vrot.lane.b32.xlu0 %v5107, 1
        %v5135 = vpop.permute.xlu0 %5134
        %5136 = vrot.lane.b32.xlu0 %v5108, 1
        %v5137 = vpop.permute.xlu0 %5136
        %5138 = vrot.lane.b32.xlu0 %v5109, 1
        %v5139 = vpop.permute.xlu0 %5138
        %v5140 = vsel %vm3075, %v5121, %v5123
        %v5141 = vsel %vm3075, %v5123, %v5125
        %v5142 = vsel %vm3075, %v5125, %v5127
        %v5143 = vsel %vm3075, %v5127, %v5129
        %v5144 = vsel %vm3075, %v5129, %v5131
        %v5145 = vsel %vm3075, %v5131, %v5133
        %v5146 = vsel %vm3075, %v5133, %v5135
        %v5147 = vsel %vm3075, %v5135, %v5137
        %v5148 = vsel %vm3075, %v5137, %v5139
        %5158 = vst [vmem:[#allocation5 + $0x510] sm:$0xff] %v5140
        %5159 = vst [vmem:[#allocation5 + $0x518] sm:$0xff] %v5141
        %5160 = vst [vmem:[#allocation5 + $0x520] sm:$0xff] %v5142
        %5161 = vst [vmem:[#allocation5 + $0x528] sm:$0xff] %v5143
        %5162 = vst [vmem:[#allocation5 + $0x530] sm:$0xff] %v5144
        %5163 = vst [vmem:[#allocation5 + $0x538] sm:$0xff] %v5145
        %5164 = vst [vmem:[#allocation5 + $0x540] sm:$0xff] %v5146
        %5165 = vst [vmem:[#allocation5 + $0x548] sm:$0xff] %v5147
        %5166 = vst [vmem:[#allocation5 + $0x550] sm:$0xff] %v5148
        %v5167 = vld [vmem:[#allocation4 + $0x18] sm:$0xff]
        %v5168 = vld [vmem:[#allocation4 + $0x20] sm:$0xff]
        %v5169 = vld [vmem:[#allocation4 + $0x28] sm:$0xff]
        %v5170 = vld [vmem:[#allocation4 + $0x30] sm:$0xff]
        %v5171 = vld [vmem:[#allocation4 + $0x38] sm:$0xff]
        %v5172 = vld [vmem:[#allocation4 + $0x40] sm:$0xff]
        %v5173 = vld [vmem:[#allocation4 + $0x48] sm:$0xff]
        %v5174 = vld [vmem:[#allocation4 + $0x50] sm:$0xff]
        %v5175 = vld [vmem:[#allocation4 + $0x58] sm:$0xff]
        %v5176 = vld [vmem:[#allocation4 + $0x80] sm:$0xff]
        %v5177 = vld [vmem:[#allocation4 + $0x88] sm:$0xff]
        %v5178 = vld [vmem:[#allocation4 + $0x90] sm:$0xff]
        %v5179 = vld [vmem:[#allocation4 + $0x98] sm:$0xff]
        %v5180 = vld [vmem:[#allocation4 + $0xa0] sm:$0xff]
        %v5181 = vld [vmem:[#allocation4 + $0xa8] sm:$0xff]
        %v5182 = vld [vmem:[#allocation4 + $0xb0] sm:$0xff]
        %v5183 = vld [vmem:[#allocation4 + $0xb8] sm:$0xff]
        %v5184 = vld [vmem:[#allocation4 + $0xc0] sm:$0xff]
        %v5185 = vld [vmem:[%s1128] ss:$8 sm:$0xf]
        %v5186 = vld [vmem:[%s1128] ss:$8 sm:$0xf0]
        %v5187 = vor.u32 %v5185, %v5186
        %v5188 = vld [vmem:[%s1132] ss:$8 sm:$0x1]
        %v5191 = vlaneseq
        %v5192 = vshrl.u32 %v5191, 7
        %v5193 = vsub.s32 0, %v5192
        %v5194 = vrot.slane %v5187, %v5193
        %v5195 = vlaneseq
        %v5196 = vshrl.u32 %v5195, 7
        %v5197 = vsub.s32 1, %v5196
        %v5198 = vrot.slane %v5187, %v5197
        %v5199 = vlaneseq
        %v5200 = vshrl.u32 %v5199, 7
        %v5201 = vsub.s32 2, %v5200
        %v5202 = vrot.slane %v5187, %v5201
        %v5203 = vlaneseq
        %v5204 = vshrl.u32 %v5203, 7
        %v5205 = vsub.s32 3, %v5204
        %v5206 = vrot.slane %v5187, %v5205
        %v5207 = vlaneseq
        %v5208 = vshrl.u32 %v5207, 7
        %v5209 = vsub.s32 4, %v5208
        %v5210 = vrot.slane %v5187, %v5209
        %v5211 = vlaneseq
        %v5212 = vshrl.u32 %v5211, 7
        %v5213 = vsub.s32 5, %v5212
        %v5214 = vrot.slane %v5187, %v5213
        %v5215 = vlaneseq
        %v5216 = vshrl.u32 %v5215, 7
        %v5217 = vsub.s32 6, %v5216
        %v5218 = vrot.slane %v5187, %v5217
        %v5219 = vlaneseq
        %v5220 = vshrl.u32 %v5219, 7
        %v5221 = vsub.s32 7, %v5220
        %v5222 = vrot.slane %v5187, %v5221
        %v5223 = vlaneseq
        %v5224 = vshrl.u32 %v5223, 7
        %v5225 = vsub.s32 0, %v5224
        %v5226 = vrot.slane %v5188, %v5225
        %v5236 = vmul.f32 %v5167, %v5194
        %v5237 = vmul.f32 %v5168, %v5198
        %v5238 = vmul.f32 %v5169, %v5202
        %v5239 = vmul.f32 %v5170, %v5206
        %v5240 = vmul.f32 %v5171, %v5210
        %v5241 = vmul.f32 %v5172, %v5214
        %v5242 = vmul.f32 %v5173, %v5218
        %v5243 = vmul.f32 %v5174, %v5222
        %v5244 = vmul.f32 %v5175, %v5226
        %v5245 = vmul.f32 %v5176, %v5194
        %v5246 = vmul.f32 %v5177, %v5198
        %v5247 = vmul.f32 %v5178, %v5202
        %v5248 = vmul.f32 %v5179, %v5206
        %v5249 = vmul.f32 %v5180, %v5210
        %v5250 = vmul.f32 %v5181, %v5214
        %v5251 = vmul.f32 %v5182, %v5218
        %v5252 = vmul.f32 %v5183, %v5222
        %v5253 = vmul.f32 %v5184, %v5226
        %v5254 = vpack.c.bf16 %v5245, %v5236
        %v5255 = vpack.c.bf16 %v5246, %v5237
        %v5256 = vpack.c.bf16 %v5247, %v5238
        %v5257 = vpack.c.bf16 %v5248, %v5239
        %v5258 = vpack.c.bf16 %v5249, %v5240
        %v5259 = vpack.c.bf16 %v5250, %v5241
        %v5260 = vpack.c.bf16 %v5251, %v5242
        %v5261 = vpack.c.bf16 %v5252, %v5243
        %v5262 = vpack.c.bf16 %v5253, %v5244
        %5263 = vst [vmem:[#allocation5 + $0x558] sm:$0xff] %v5254
        %5264 = vst [vmem:[#allocation5 + $0x560] sm:$0xff] %v5255
        %5265 = vst [vmem:[#allocation5 + $0x568] sm:$0xff] %v5256
        %5266 = vst [vmem:[#allocation5 + $0x570] sm:$0xff] %v5257
        %5267 = vst [vmem:[#allocation5 + $0x578] sm:$0xff] %v5258
        %5268 = vst [vmem:[#allocation5 + $0x580] sm:$0xff] %v5259
        %5269 = vst [vmem:[#allocation5 + $0x588] sm:$0xff] %v5260
        %5270 = vst [vmem:[#allocation5 + $0x590] sm:$0xff] %v5261
        %5271 = vst [vmem:[#allocation5 + $0x598] sm:$0xff] %v5262
        %v5272 = vld [vmem:[#allocation4 + $0x18] sm:$0xff]
        %v5273 = vld [vmem:[#allocation4 + $0x20] sm:$0xff]
        %v5274 = vld [vmem:[#allocation4 + $0x28] sm:$0xff]
        %v5275 = vld [vmem:[#allocation4 + $0x30] sm:$0xff]
        %v5276 = vld [vmem:[#allocation4 + $0x38] sm:$0xff]
        %v5277 = vld [vmem:[#allocation4 + $0x40] sm:$0xff]
        %v5278 = vld [vmem:[#allocation4 + $0x48] sm:$0xff]
        %v5279 = vld [vmem:[#allocation4 + $0x50] sm:$0xff]
        %v5280 = vld [vmem:[#allocation4 + $0x58] sm:$0xff]
        %v5281 = vld [vmem:[#allocation4 + $0x60] sm:$0xff]
        %v5282 = vld [vmem:[#allocation4 + $0x80] sm:$0xff]
        %v5283 = vld [vmem:[#allocation4 + $0x88] sm:$0xff]
        %v5284 = vld [vmem:[#allocation4 + $0x90] sm:$0xff]
        %v5285 = vld [vmem:[#allocation4 + $0x98] sm:$0xff]
        %v5286 = vld [vmem:[#allocation4 + $0xa0] sm:$0xff]
        %v5287 = vld [vmem:[#allocation4 + $0xa8] sm:$0xff]
        %v5288 = vld [vmem:[#allocation4 + $0xb0] sm:$0xff]
        %v5289 = vld [vmem:[#allocation4 + $0xb8] sm:$0xff]
        %v5290 = vld [vmem:[#allocation4 + $0xc0] sm:$0xff]
        %v5291 = vld [vmem:[#allocation4 + $0xc8] sm:$0xff]
        %v5292 = vld [vmem:[%s1144] ss:$8 sm:$0xf]
        %v5293 = vld [vmem:[%s1144] ss:$8 sm:$0xf0]
        %v5294 = vor.u32 %v5292, %v5293
        %v5295 = vld [vmem:[%s1148] ss:$8 sm:$0x1]
        %v5298 = vlaneseq
        %v5299 = vshrl.u32 %v5298, 7
        %v5300 = vsub.s32 0, %v5299
        %v5301 = vrot.slane %v5294, %v5300
        %v5302 = vlaneseq
        %v5303 = vshrl.u32 %v5302, 7
        %v5304 = vsub.s32 1, %v5303
        %v5305 = vrot.slane %v5294, %v5304
        %v5306 = vlaneseq
        %v5307 = vshrl.u32 %v5306, 7
        %v5308 = vsub.s32 2, %v5307
        %v5309 = vrot.slane %v5294, %v5308
        %v5310 = vlaneseq
        %v5311 = vshrl.u32 %v5310, 7
        %v5312 = vsub.s32 3, %v5311
        %v5313 = vrot.slane %v5294, %v5312
        %v5314 = vlaneseq
        %v5315 = vshrl.u32 %v5314, 7
        %v5316 = vsub.s32 4, %v5315
        %v5317 = vrot.slane %v5294, %v5316
        %v5318 = vlaneseq
        %v5319 = vshrl.u32 %v5318, 7
        %v5320 = vsub.s32 5, %v5319
        %v5321 = vrot.slane %v5294, %v5320
        %v5322 = vlaneseq
        %v5323 = vshrl.u32 %v5322, 7
        %v5324 = vsub.s32 6, %v5323
        %v5325 = vrot.slane %v5294, %v5324
        %v5326 = vlaneseq
        %v5327 = vshrl.u32 %v5326, 7
        %v5328 = vsub.s32 7, %v5327
        %v5329 = vrot.slane %v5294, %v5328
        %v5330 = vlaneseq
        %v5331 = vshrl.u32 %v5330, 7
        %v5332 = vsub.s32 0, %v5331
        %v5333 = vrot.slane %v5295, %v5332
        %5334 = vrot.lane.b32.xlu0 %v5301, 1
        %v5335 = vpop.permute.xlu0 %5334
        %5336 = vrot.lane.b32.xlu0 %v5305, 1
        %v5337 = vpop.permute.xlu0 %5336
        %5338 = vrot.lane.b32.xlu0 %v5309, 1
        %v5339 = vpop.permute.xlu0 %5338
        %5340 = vrot.lane.b32.xlu0 %v5313, 1
        %v5341 = vpop.permute.xlu0 %5340
        %5342 = vrot.lane.b32.xlu0 %v5317, 1
        %v5343 = vpop.permute.xlu0 %5342
        %5344 = vrot.lane.b32.xlu0 %v5321, 1
        %v5345 = vpop.permute.xlu0 %5344
        %5346 = vrot.lane.b32.xlu0 %v5325, 1
        %v5347 = vpop.permute.xlu0 %5346
        %5348 = vrot.lane.b32.xlu0 %v5329, 1
        %v5349 = vpop.permute.xlu0 %5348
        %5350 = vrot.lane.b32.xlu0 %v5333, 1
        %v5351 = vpop.permute.xlu0 %5350
        %v5352 = vsel %vm663, %v5335, %v5337
        %v5353 = vsel %vm663, %v5337, %v5339
        %v5354 = vsel %vm663, %v5339, %v5341
        %v5355 = vsel %vm663, %v5341, %v5343
        %v5356 = vsel %vm663, %v5343, %v5345
        %v5357 = vsel %vm663, %v5345, %v5347
        %v5358 = vsel %vm663, %v5347, %v5349
        %v5359 = vsel %vm663, %v5349, %v5351
        %v5370 = vmul.f32 %v5272, %v5335
        %v5371 = vmul.f32 %v5273, %v5352
        %v5372 = vmul.f32 %v5274, %v5353
        %v5373 = vmul.f32 %v5275, %v5354
        %v5374 = vmul.f32 %v5276, %v5355
        %v5375 = vmul.f32 %v5277, %v5356
        %v5376 = vmul.f32 %v5278, %v5357
        %v5377 = vmul.f32 %v5279, %v5358
        %v5378 = vmul.f32 %v5280, %v5359
        %v5379 = vmul.f32 %v5281, %v5351
        %v5380 = vmul.f32 %v5282, %v5335
        %v5381 = vmul.f32 %v5283, %v5352
        %v5382 = vmul.f32 %v5284, %v5353
        %v5383 = vmul.f32 %v5285, %v5354
        %v5384 = vmul.f32 %v5286, %v5355
        %v5385 = vmul.f32 %v5287, %v5356
        %v5386 = vmul.f32 %v5288, %v5357
        %v5387 = vmul.f32 %v5289, %v5358
        %v5388 = vmul.f32 %v5290, %v5359
        %v5389 = vmul.f32 %v5291, %v5351
        %v5390 = vpack.c.bf16 %v5380, %v5370
        %v5391 = vpack.c.bf16 %v5381, %v5371
        %v5392 = vpack.c.bf16 %v5382, %v5372
        %v5393 = vpack.c.bf16 %v5383, %v5373
        %v5394 = vpack.c.bf16 %v5384, %v5374
        %v5395 = vpack.c.bf16 %v5385, %v5375
        %v5396 = vpack.c.bf16 %v5386, %v5376
        %v5397 = vpack.c.bf16 %v5387, %v5377
        %v5398 = vpack.c.bf16 %v5388, %v5378
        %v5399 = vpack.c.bf16 %v5389, %v5379
        %5410 = vrot.lane.b32.xlu0 %v5390, 127
        %v5411 = vpop.permute.xlu0 %5410
        %5412 = vrot.lane.b32.xlu0 %v5391, 127
        %v5413 = vpop.permute.xlu0 %5412
        %5414 = vrot.lane.b32.xlu0 %v5392, 127
        %v5415 = vpop.permute.xlu0 %5414
        %5416 = vrot.lane.b32.xlu0 %v5393, 127
        %v5417 = vpop.permute.xlu0 %5416
        %5418 = vrot.lane.b32.xlu0 %v5394, 127
        %v5419 = vpop.permute.xlu0 %5418
        %5420 = vrot.lane.b32.xlu0 %v5395, 127
        %v5421 = vpop.permute.xlu0 %5420
        %5422 = vrot.lane.b32.xlu0 %v5396, 127
        %v5423 = vpop.permute.xlu0 %5422
        %5424 = vrot.lane.b32.xlu0 %v5397, 127
        %v5425 = vpop.permute.xlu0 %5424
        %5426 = vrot.lane.b32.xlu0 %v5398, 127
        %v5427 = vpop.permute.xlu0 %5426
        %5428 = vrot.lane.b32.xlu0 %v5399, 127
        %v5429 = vpop.permute.xlu0 %5428
        %v5430 = vsel %vm3366, %v5411, %v5413
        %v5431 = vsel %vm3366, %v5413, %v5415
        %v5432 = vsel %vm3366, %v5415, %v5417
        %v5433 = vsel %vm3366, %v5417, %v5419
        %v5434 = vsel %vm3366, %v5419, %v5421
        %v5435 = vsel %vm3366, %v5421, %v5423
        %v5436 = vsel %vm3366, %v5423, %v5425
        %v5437 = vsel %vm3366, %v5425, %v5427
        %v5438 = vsel %vm3366, %v5427, %v5429
        %5448 = vst [vmem:[#allocation5 + $0x5a0] sm:$0xff] %v5430
        %5449 = vst [vmem:[#allocation5 + $0x5a8] sm:$0xff] %v5431
        %5450 = vst [vmem:[#allocation5 + $0x5b0] sm:$0xff] %v5432
        %5451 = vst [vmem:[#allocation5 + $0x5b8] sm:$0xff] %v5433
        %5452 = vst [vmem:[#allocation5 + $0x5c0] sm:$0xff] %v5434
        %5453 = vst [vmem:[#allocation5 + $0x5c8] sm:$0xff] %v5435
        %5454 = vst [vmem:[#allocation5 + $0x5d0] sm:$0xff] %v5436
        %5455 = vst [vmem:[#allocation5 + $0x5d8] sm:$0xff] %v5437
        %5456 = vst [vmem:[#allocation5 + $0x5e0] sm:$0xff] %v5438
        %v5457 = vld [vmem:[#allocation4 + $0x18] sm:$0xff]
        %v5458 = vld [vmem:[#allocation4 + $0x20] sm:$0xff]
        %v5459 = vld [vmem:[#allocation4 + $0x28] sm:$0xff]
        %v5460 = vld [vmem:[#allocation4 + $0x30] sm:$0xff]
        %v5461 = vld [vmem:[#allocation4 + $0x38] sm:$0xff]
        %v5462 = vld [vmem:[#allocation4 + $0x40] sm:$0xff]
        %v5463 = vld [vmem:[#allocation4 + $0x48] sm:$0xff]
        %v5464 = vld [vmem:[#allocation4 + $0x50] sm:$0xff]
        %v5465 = vld [vmem:[#allocation4 + $0x58] sm:$0xff]
        %v5466 = vld [vmem:[#allocation4 + $0x60] sm:$0xff]
        %v5467 = vld [vmem:[#allocation4 + $0x80] sm:$0xff]
        %v5468 = vld [vmem:[#allocation4 + $0x88] sm:$0xff]
        %v5469 = vld [vmem:[#allocation4 + $0x90] sm:$0xff]
        %v5470 = vld [vmem:[#allocation4 + $0x98] sm:$0xff]
        %v5471 = vld [vmem:[#allocation4 + $0xa0] sm:$0xff]
        %v5472 = vld [vmem:[#allocation4 + $0xa8] sm:$0xff]
        %v5473 = vld [vmem:[#allocation4 + $0xb0] sm:$0xff]
        %v5474 = vld [vmem:[#allocation4 + $0xb8] sm:$0xff]
        %v5475 = vld [vmem:[#allocation4 + $0xc0] sm:$0xff]
        %v5476 = vld [vmem:[#allocation4 + $0xc8] sm:$0xff]
        %v5477 = vld [vmem:[%s1186] ss:$8 sm:$0xf]
        %v5478 = vld [vmem:[%s1186] ss:$8 sm:$0xf0]
        %v5479 = vor.u32 %v5477, %v5478
        %v5480 = vld [vmem:[%s1190] ss:$8 sm:$0x1]
        %v5483 = vlaneseq
        %v5484 = vshrl.u32 %v5483, 7
        %v5485 = vsub.s32 0, %v5484
        %v5486 = vrot.slane %v5479, %v5485
        %v5487 = vlaneseq
        %v5488 = vshrl.u32 %v5487, 7
        %v5489 = vsub.s32 1, %v5488
        %v5490 = vrot.slane %v5479, %v5489
        %v5491 = vlaneseq
        %v5492 = vshrl.u32 %v5491, 7
        %v5493 = vsub.s32 2, %v5492
        %v5494 = vrot.slane %v5479, %v5493
        %v5495 = vlaneseq
        %v5496 = vshrl.u32 %v5495, 7
        %v5497 = vsub.s32 3, %v5496
        %v5498 = vrot.slane %v5479, %v5497
        %v5499 = vlaneseq
        %v5500 = vshrl.u32 %v5499, 7
        %v5501 = vsub.s32 4, %v5500
        %v5502 = vrot.slane %v5479, %v5501
        %v5503 = vlaneseq
        %v5504 = vshrl.u32 %v5503, 7
        %v5505 = vsub.s32 5, %v5504
        %v5506 = vrot.slane %v5479, %v5505
        %v5507 = vlaneseq
        %v5508 = vshrl.u32 %v5507, 7
        %v5509 = vsub.s32 6, %v5508
        %v5510 = vrot.slane %v5479, %v5509
        %v5511 = vlaneseq
        %v5512 = vshrl.u32 %v5511, 7
        %v5513 = vsub.s32 7, %v5512
        %v5514 = vrot.slane %v5479, %v5513
        %v5515 = vlaneseq
        %v5516 = vshrl.u32 %v5515, 7
        %v5517 = vsub.s32 0, %v5516
        %v5518 = vrot.slane %v5480, %v5517
        %5519 = vrot.lane.b32.xlu0 %v5486, 15
        %v5520 = vpop.permute.xlu0 %5519
        %5521 = vrot.lane.b32.xlu0 %v5490, 15
        %v5522 = vpop.permute.xlu0 %5521
        %5523 = vrot.lane.b32.xlu0 %v5494, 15
        %v5524 = vpop.permute.xlu0 %5523
        %5525 = vrot.lane.b32.xlu0 %v5498, 15
        %v5526 = vpop.permute.xlu0 %5525
        %5527 = vrot.lane.b32.xlu0 %v5502, 15
        %v5528 = vpop.permute.xlu0 %5527
        %5529 = vrot.lane.b32.xlu0 %v5506, 15
        %v5530 = vpop.permute.xlu0 %5529
        %5531 = vrot.lane.b32.xlu0 %v5510, 15
        %v5532 = vpop.permute.xlu0 %5531
        %5533 = vrot.lane.b32.xlu0 %v5514, 15
        %v5534 = vpop.permute.xlu0 %5533
        %5535 = vrot.lane.b32.xlu0 %v5518, 15
        %v5536 = vpop.permute.xlu0 %5535
        %v5537 = vsel %vm619, %v5520, %v5522
        %v5538 = vsel %vm619, %v5522, %v5524
        %v5539 = vsel %vm619, %v5524, %v5526
        %v5540 = vsel %vm619, %v5526, %v5528
        %v5541 = vsel %vm619, %v5528, %v5530
        %v5542 = vsel %vm619, %v5530, %v5532
        %v5543 = vsel %vm619, %v5532, %v5534
        %v5544 = vsel %vm619, %v5534, %v5536
        %v5555 = vmul.f32 %v5457, %v5520
        %v5556 = vmul.f32 %v5458, %v5537
        %v5557 = vmul.f32 %v5459, %v5538
        %v5558 = vmul.f32 %v5460, %v5539
        %v5559 = vmul.f32 %v5461, %v5540
        %v5560 = vmul.f32 %v5462, %v5541
        %v5561 = vmul.f32 %v5463, %v5542
        %v5562 = vmul.f32 %v5464, %v5543
        %v5563 = vmul.f32 %v5465, %v5544
        %v5564 = vmul.f32 %v5466, %v5536
        %v5565 = vmul.f32 %v5467, %v5520
        %v5566 = vmul.f32 %v5468, %v5537
        %v5567 = vmul.f32 %v5469, %v5538
        %v5568 = vmul.f32 %v5470, %v5539
        %v5569 = vmul.f32 %v5471, %v5540
        %v5570 = vmul.f32 %v5472, %v5541
        %v5571 = vmul.f32 %v5473, %v5542
        %v5572 = vmul.f32 %v5474, %v5543
        %v5573 = vmul.f32 %v5475, %v5544
        %v5574 = vmul.f32 %v5476, %v5536
        %v5575 = vpack.c.bf16 %v5565, %v5555
        %v5576 = vpack.c.bf16 %v5566, %v5556
        %v5577 = vpack.c.bf16 %v5567, %v5557
        %v5578 = vpack.c.bf16 %v5568, %v5558
        %v5579 = vpack.c.bf16 %v5569, %v5559
        %v5580 = vpack.c.bf16 %v5570, %v5560
        %v5581 = vpack.c.bf16 %v5571, %v5561
        %v5582 = vpack.c.bf16 %v5572, %v5562
        %v5583 = vpack.c.bf16 %v5573, %v5563
        %v5584 = vpack.c.bf16 %v5574, %v5564
        %5595 = vrot.lane.b32.xlu0 %v5575, 113
        %v5596 = vpop.permute.xlu0 %5595
        %5597 = vrot.lane.b32.xlu0 %v5576, 113
        %v5598 = vpop.permute.xlu0 %5597
        %5599 = vrot.lane.b32.xlu0 %v5577, 113
        %v5600 = vpop.permute.xlu0 %5599
        %5601 = vrot.lane.b32.xlu0 %v5578, 113
        %v5602 = vpop.permute.xlu0 %5601
        %5603 = vrot.lane.b32.xlu0 %v5579, 113
        %v5604 = vpop.permute.xlu0 %5603
        %5605 = vrot.lane.b32.xlu0 %v5580, 113
        %v5606 = vpop.permute.xlu0 %5605
        %5607 = vrot.lane.b32.xlu0 %v5581, 113
        %v5608 = vpop.permute.xlu0 %5607
        %5609 = vrot.lane.b32.xlu0 %v5582, 113
        %v5610 = vpop.permute.xlu0 %5609
        %5611 = vrot.lane.b32.xlu0 %v5583, 113
        %v5612 = vpop.permute.xlu0 %5611
        %5613 = vrot.lane.b32.xlu0 %v5584, 113
        %v5614 = vpop.permute.xlu0 %5613
        %v5615 = vsel %vm4582, %v5596, %v5598
        %v5616 = vsel %vm4582, %v5598, %v5600
        %v5617 = vsel %vm4582, %v5600, %v5602
        %v5618 = vsel %vm4582, %v5602, %v5604
        %v5619 = vsel %vm4582, %v5604, %v5606
        %v5620 = vsel %vm4582, %v5606, %v5608
        %v5621 = vsel %vm4582, %v5608, %v5610
        %v5622 = vsel %vm4582, %v5610, %v5612
        %v5623 = vsel %vm4582, %v5612, %v5614
        %5633 = vst [vmem:[#allocation5 + $0x5e8] sm:$0xff] %v5615
        %5634 = vst [vmem:[#allocation5 + $0x5f0] sm:$0xff] %v5616
        %5635 = vst [vmem:[#allocation5 + $0x5f8] sm:$0xff] %v5617
        %5636 = vst [vmem:[#allocation5 + $0x600] sm:$0xff] %v5618
        %5637 = vst [vmem:[#allocation5 + $0x608] sm:$0xff] %v5619
        %5638 = vst [vmem:[#allocation5 + $0x610] sm:$0xff] %v5620
        %5639 = vst [vmem:[#allocation5 + $0x618] sm:$0xff] %v5621
        %5640 = vst [vmem:[#allocation5 + $0x620] sm:$0xff] %v5622
        %5641 = vst [vmem:[#allocation5 + $0x628] sm:$0xff] %v5623
        %v5642 = vld [vmem:[#allocation4 + $0x18] sm:$0xff]
        %v5643 = vld [vmem:[#allocation4 + $0x20] sm:$0xff]
        %v5644 = vld [vmem:[#allocation4 + $0x28] sm:$0xff]
        %v5645 = vld [vmem:[#allocation4 + $0x30] sm:$0xff]
        %v5646 = vld [vmem:[#allocation4 + $0x38] sm:$0xff]
        %v5647 = vld [vmem:[#allocation4 + $0x40] sm:$0xff]
        %v5648 = vld [vmem:[#allocation4 + $0x48] sm:$0xff]
        %v5649 = vld [vmem:[#allocation4 + $0x50] sm:$0xff]
        %v5650 = vld [vmem:[#allocation4 + $0x58] sm:$0xff]
        %v5651 = vld [vmem:[#allocation4 + $0x60] sm:$0xff]
        %v5652 = vld [vmem:[#allocation4 + $0x80] sm:$0xff]
        %v5653 = vld [vmem:[#allocation4 + $0x88] sm:$0xff]
        %v5654 = vld [vmem:[#allocation4 + $0x90] sm:$0xff]
        %v5655 = vld [vmem:[#allocation4 + $0x98] sm:$0xff]
        %v5656 = vld [vmem:[#allocation4 + $0xa0] sm:$0xff]
        %v5657 = vld [vmem:[#allocation4 + $0xa8] sm:$0xff]
        %v5658 = vld [vmem:[#allocation4 + $0xb0] sm:$0xff]
        %v5659 = vld [vmem:[#allocation4 + $0xb8] sm:$0xff]
        %v5660 = vld [vmem:[#allocation4 + $0xc0] sm:$0xff]
        %v5661 = vld [vmem:[#allocation4 + $0xc8] sm:$0xff]
        %v5662 = vld [vmem:[%s1228] ss:$8 sm:$0xf]
        %v5663 = vld [vmem:[%s1228] ss:$8 sm:$0xf0]
        %v5664 = vor.u32 %v5662, %v5663
        %v5665 = vld [vmem:[%s1232] ss:$8 sm:$0x1]
        %v5668 = vlaneseq
        %v5669 = vshrl.u32 %v5668, 7
        %v5670 = vsub.s32 0, %v5669
        %v5671 = vrot.slane %v5664, %v5670
        %v5672 = vlaneseq
        %v5673 = vshrl.u32 %v5672, 7
        %v5674 = vsub.s32 1, %v5673
        %v5675 = vrot.slane %v5664, %v5674
        %v5676 = vlaneseq
        %v5677 = vshrl.u32 %v5676, 7
        %v5678 = vsub.s32 2, %v5677
        %v5679 = vrot.slane %v5664, %v5678
        %v5680 = vlaneseq
        %v5681 = vshrl.u32 %v5680, 7
        %v5682 = vsub.s32 3, %v5681
        %v5683 = vrot.slane %v5664, %v5682
        %v5684 = vlaneseq
        %v5685 = vshrl.u32 %v5684, 7
        %v5686 = vsub.s32 4, %v5685
        %v5687 = vrot.slane %v5664, %v5686
        %v5688 = vlaneseq
        %v5689 = vshrl.u32 %v5688, 7
        %v5690 = vsub.s32 5, %v5689
        %v5691 = vrot.slane %v5664, %v5690
        %v5692 = vlaneseq
        %v5693 = vshrl.u32 %v5692, 7
        %v5694 = vsub.s32 6, %v5693
        %v5695 = vrot.slane %v5664, %v5694
        %v5696 = vlaneseq
        %v5697 = vshrl.u32 %v5696, 7
        %v5698 = vsub.s32 7, %v5697
        %v5699 = vrot.slane %v5664, %v5698
        %v5700 = vlaneseq
        %v5701 = vshrl.u32 %v5700, 7
        %v5702 = vsub.s32 0, %v5701
        %v5703 = vrot.slane %v5665, %v5702
        %5704 = vrot.lane.b32.xlu0 %v5671, 16
        %v5705 = vpop.permute.xlu0 %5704
        %5706 = vrot.lane.b32.xlu0 %v5675, 16
        %v5707 = vpop.permute.xlu0 %5706
        %5708 = vrot.lane.b32.xlu0 %v5679, 16
        %v5709 = vpop.permute.xlu0 %5708
        %5710 = vrot.lane.b32.xlu0 %v5683, 16
        %v5711 = vpop.permute.xlu0 %5710
        %5712 = vrot.lane.b32.xlu0 %v5687, 16
        %v5713 = vpop.permute.xlu0 %5712
        %5714 = vrot.lane.b32.xlu0 %v5691, 16
        %v5715 = vpop.permute.xlu0 %5714
        %5716 = vrot.lane.b32.xlu0 %v5695, 16
        %v5717 = vpop.permute.xlu0 %5716
        %5718 = vrot.lane.b32.xlu0 %v5699, 16
        %v5719 = vpop.permute.xlu0 %5718
        %5720 = vrot.lane.b32.xlu0 %v5703, 16
        %v5721 = vpop.permute.xlu0 %5720
        %v5722 = vsel %vm575, %v5705, %v5707
        %v5723 = vsel %vm575, %v5707, %v5709
        %v5724 = vsel %vm575, %v5709, %v5711
        %v5725 = vsel %vm575, %v5711, %v5713
        %v5726 = vsel %vm575, %v5713, %v5715
        %v5727 = vsel %vm575, %v5715, %v5717
        %v5728 = vsel %vm575, %v5717, %v5719
        %v5729 = vsel %vm575, %v5719, %v5721
        %v5740 = vmul.f32 %v5642, %v5705
        %v5741 = vmul.f32 %v5643, %v5722
        %v5742 = vmul.f32 %v5644, %v5723
        %v5743 = vmul.f32 %v5645, %v5724
        %v5744 = vmul.f32 %v5646, %v5725
        %v5745 = vmul.f32 %v5647, %v5726
        %v5746 = vmul.f32 %v5648, %v5727
        %v5747 = vmul.f32 %v5649, %v5728
        %v5748 = vmul.f32 %v5650, %v5729
        %v5749 = vmul.f32 %v5651, %v5721
        %v5750 = vmul.f32 %v5652, %v5705
        %v5751 = vmul.f32 %v5653, %v5722
        %v5752 = vmul.f32 %v5654, %v5723
        %v5753 = vmul.f32 %v5655, %v5724
        %v5754 = vmul.f32 %v5656, %v5725
        %v5755 = vmul.f32 %v5657, %v5726
        %v5756 = vmul.f32 %v5658, %v5727
        %v5757 = vmul.f32 %v5659, %v5728
        %v5758 = vmul.f32 %v5660, %v5729
        %v5759 = vmul.f32 %v5661, %v5721
        %v5760 = vpack.c.bf16 %v5750, %v5740
        %v5761 = vpack.c.bf16 %v5751, %v5741
        %v5762 = vpack.c.bf16 %v5752, %v5742
        %v5763 = vpack.c.bf16 %v5753, %v5743
        %v5764 = vpack.c.bf16 %v5754, %v5744
        %v5765 = vpack.c.bf16 %v5755, %v5745
        %v5766 = vpack.c.bf16 %v5756, %v5746
        %v5767 = vpack.c.bf16 %v5757, %v5747
        %v5768 = vpack.c.bf16 %v5758, %v5748
        %v5769 = vpack.c.bf16 %v5759, %v5749
        %5780 = vrot.lane.b32.xlu0 %v5760, 112
        %v5781 = vpop.permute.xlu0 %5780
        %5782 = vrot.lane.b32.xlu0 %v5761, 112
        %v5783 = vpop.permute.xlu0 %5782
        %5784 = vrot.lane.b32.xlu0 %v5762, 112
        %v5785 = vpop.permute.xlu0 %5784
        %5786 = vrot.lane.b32.xlu0 %v5763, 112
        %v5787 = vpop.permute.xlu0 %5786
        %5788 = vrot.lane.b32.xlu0 %v5764, 112
        %v5789 = vpop.permute.xlu0 %5788
        %5790 = vrot.lane.b32.xlu0 %v5765, 112
        %v5791 = vpop.permute.xlu0 %5790
        %5792 = vrot.lane.b32.xlu0 %v5766, 112
        %v5793 = vpop.permute.xlu0 %5792
        %5794 = vrot.lane.b32.xlu0 %v5767, 112
        %v5795 = vpop.permute.xlu0 %5794
        %5796 = vrot.lane.b32.xlu0 %v5768, 112
        %v5797 = vpop.permute.xlu0 %5796
        %5798 = vrot.lane.b32.xlu0 %v5769, 112
        %v5799 = vpop.permute.xlu0 %5798
        %v5800 = vsel %vm4768, %v5781, %v5783
        %v5801 = vsel %vm4768, %v5783, %v5785
        %v5802 = vsel %vm4768, %v5785, %v5787
        %v5803 = vsel %vm4768, %v5787, %v5789
        %v5804 = vsel %vm4768, %v5789, %v5791
        %v5805 = vsel %vm4768, %v5791, %v5793
        %v5806 = vsel %vm4768, %v5793, %v5795
        %v5807 = vsel %vm4768, %v5795, %v5797
        %v5808 = vsel %vm4768, %v5797, %v5799
        %5818 = vst [vmem:[#allocation5 + $0x630] sm:$0xff] %v5800
        %5819 = vst [vmem:[#allocation5 + $0x638] sm:$0xff] %v5801
        %5820 = vst [vmem:[#allocation5 + $0x640] sm:$0xff] %v5802
        %5821 = vst [vmem:[#allocation5 + $0x648] sm:$0xff] %v5803
        %5822 = vst [vmem:[#allocation5 + $0x650] sm:$0xff] %v5804
        %5823 = vst [vmem:[#allocation5 + $0x658] sm:$0xff] %v5805
        %5824 = vst [vmem:[#allocation5 + $0x660] sm:$0xff] %v5806
        %5825 = vst [vmem:[#allocation5 + $0x668] sm:$0xff] %v5807
        %5826 = vst [vmem:[#allocation5 + $0x670] sm:$0xff] %v5808
        %v5827 = vld [vmem:[#allocation4 + $0x18] sm:$0xff]
        %v5828 = vld [vmem:[#allocation4 + $0x20] sm:$0xff]
        %v5829 = vld [vmem:[#allocation4 + $0x28] sm:$0xff]
        %v5830 = vld [vmem:[#allocation4 + $0x30] sm:$0xff]
        %v5831 = vld [vmem:[#allocation4 + $0x38] sm:$0xff]
        %v5832 = vld [vmem:[#allocation4 + $0x40] sm:$0xff]
        %v5833 = vld [vmem:[#allocation4 + $0x48] sm:$0xff]
        %v5834 = vld [vmem:[#allocation4 + $0x50] sm:$0xff]
        %v5835 = vld [vmem:[#allocation4 + $0x58] sm:$0xff]
        %v5836 = vld [vmem:[#allocation4 + $0x60] sm:$0xff]
        %v5837 = vld [vmem:[#allocation4 + $0x80] sm:$0xff]
        %v5838 = vld [vmem:[#allocation4 + $0x88] sm:$0xff]
        %v5839 = vld [vmem:[#allocation4 + $0x90] sm:$0xff]
        %v5840 = vld [vmem:[#allocation4 + $0x98] sm:$0xff]
        %v5841 = vld [vmem:[#allocation4 + $0xa0] sm:$0xff]
        %v5842 = vld [vmem:[#allocation4 + $0xa8] sm:$0xff]
        %v5843 = vld [vmem:[#allocation4 + $0xb0] sm:$0xff]
        %v5844 = vld [vmem:[#allocation4 + $0xb8] sm:$0xff]
        %v5845 = vld [vmem:[#allocation4 + $0xc0] sm:$0xff]
        %v5846 = vld [vmem:[#allocation4 + $0xc8] sm:$0xff]
        %v5847 = vld [vmem:[%s1270] ss:$8 sm:$0xf]
        %v5848 = vld [vmem:[%s1270] ss:$8 sm:$0xf0]
        %v5849 = vor.u32 %v5847, %v5848
        %v5850 = vld [vmem:[%s1274] ss:$8 sm:$0x1]
        %v5853 = vlaneseq
        %v5854 = vshrl.u32 %v5853, 7
        %v5855 = vsub.s32 0, %v5854
        %v5856 = vrot.slane %v5849, %v5855
        %v5857 = vlaneseq
        %v5858 = vshrl.u32 %v5857, 7
        %v5859 = vsub.s32 1, %v5858
        %v5860 = vrot.slane %v5849, %v5859
        %v5861 = vlaneseq
        %v5862 = vshrl.u32 %v5861, 7
        %v5863 = vsub.s32 2, %v5862
        %v5864 = vrot.slane %v5849, %v5863
        %v5865 = vlaneseq
        %v5866 = vshrl.u32 %v5865, 7
        %v5867 = vsub.s32 3, %v5866
        %v5868 = vrot.slane %v5849, %v5867
        %v5869 = vlaneseq
        %v5870 = vshrl.u32 %v5869, 7
        %v5871 = vsub.s32 4, %v5870
        %v5872 = vrot.slane %v5849, %v5871
        %v5873 = vlaneseq
        %v5874 = vshrl.u32 %v5873, 7
        %v5875 = vsub.s32 5, %v5874
        %v5876 = vrot.slane %v5849, %v5875
        %v5877 = vlaneseq
        %v5878 = vshrl.u32 %v5877, 7
        %v5879 = vsub.s32 6, %v5878
        %v5880 = vrot.slane %v5849, %v5879
        %v5881 = vlaneseq
        %v5882 = vshrl.u32 %v5881, 7
        %v5883 = vsub.s32 7, %v5882
        %v5884 = vrot.slane %v5849, %v5883
        %v5885 = vlaneseq
        %v5886 = vshrl.u32 %v5885, 7
        %v5887 = vsub.s32 0, %v5886
        %v5888 = vrot.slane %v5850, %v5887
        %5889 = vrot.lane.b32.xlu0 %v5856, 17
        %v5890 = vpop.permute.xlu0 %5889
        %5891 = vrot.lane.b32.xlu0 %v5860, 17
        %v5892 = vpop.permute.xlu0 %5891
        %5893 = vrot.lane.b32.xlu0 %v5864, 17
        %v5894 = vpop.permute.xlu0 %5893
        %5895 = vrot.lane.b32.xlu0 %v5868, 17
        %v5896 = vpop.permute.xlu0 %5895
        %5897 = vrot.lane.b32.xlu0 %v5872, 17
        %v5898 = vpop.permute.xlu0 %5897
        %5899 = vrot.lane.b32.xlu0 %v5876, 17
        %v5900 = vpop.permute.xlu0 %5899
        %5901 = vrot.lane.b32.xlu0 %v5880, 17
        %v5902 = vpop.permute.xlu0 %5901
        %5903 = vrot.lane.b32.xlu0 %v5884, 17
        %v5904 = vpop.permute.xlu0 %5903
        %5905 = vrot.lane.b32.xlu0 %v5888, 17
        %v5906 = vpop.permute.xlu0 %5905
        %v5907 = vsel %vm531, %v5890, %v5892
        %v5908 = vsel %vm531, %v5892, %v5894
        %v5909 = vsel %vm531, %v5894, %v5896
        %v5910 = vsel %vm531, %v5896, %v5898
        %v5911 = vsel %vm531, %v5898, %v5900
        %v5912 = vsel %vm531, %v5900, %v5902
        %v5913 = vsel %vm531, %v5902, %v5904
        %v5914 = vsel %vm531, %v5904, %v5906
        %v5925 = vmul.f32 %v5827, %v5890
        %v5926 = vmul.f32 %v5828, %v5907
        %v5927 = vmul.f32 %v5829, %v5908
        %v5928 = vmul.f32 %v5830, %v5909
        %v5929 = vmul.f32 %v5831, %v5910
        %v5930 = vmul.f32 %v5832, %v5911
        %v5931 = vmul.f32 %v5833, %v5912
        %v5932 = vmul.f32 %v5834, %v5913
        %v5933 = vmul.f32 %v5835, %v5914
        %v5934 = vmul.f32 %v5836, %v5906
        %v5935 = vmul.f32 %v5837, %v5890
        %v5936 = vmul.f32 %v5838, %v5907
        %v5937 = vmul.f32 %v5839, %v5908
        %v5938 = vmul.f32 %v5840, %v5909
        %v5939 = vmul.f32 %v5841, %v5910
        %v5940 = vmul.f32 %v5842, %v5911
        %v5941 = vmul.f32 %v5843, %v5912
        %v5942 = vmul.f32 %v5844, %v5913
        %v5943 = vmul.f32 %v5845, %v5914
        %v5944 = vmul.f32 %v5846, %v5906
        %v5945 = vpack.c.bf16 %v5935, %v5925
        %v5946 = vpack.c.bf16 %v5936, %v5926
        %v5947 = vpack.c.bf16 %v5937, %v5927
        %v5948 = vpack.c.bf16 %v5938, %v5928
        %v5949 = vpack.c.bf16 %v5939, %v5929
        %v5950 = vpack.c.bf16 %v5940, %v5930
        %v5951 = vpack.c.bf16 %v5941, %v5931
        %v5952 = vpack.c.bf16 %v5942, %v5932
        %v5953 = vpack.c.bf16 %v5943, %v5933
        %v5954 = vpack.c.bf16 %v5944, %v5934
        %5965 = vrot.lane.b32.xlu0 %v5945, 111
        %v5966 = vpop.permute.xlu0 %5965
        %5967 = vrot.lane.b32.xlu0 %v5946, 111
        %v5968 = vpop.permute.xlu0 %5967
        %5969 = vrot.lane.b32.xlu0 %v5947, 111
        %v5970 = vpop.permute.xlu0 %5969
        %5971 = vrot.lane.b32.xlu0 %v5948, 111
        %v5972 = vpop.permute.xlu0 %5971
        %5973 = vrot.lane.b32.xlu0 %v5949, 111
        %v5974 = vpop.permute.xlu0 %5973
        %5975 = vrot.lane.b32.xlu0 %v5950, 111
        %v5976 = vpop.permute.xlu0 %5975
        %5977 = vrot.lane.b32.xlu0 %v5951, 111
        %v5978 = vpop.permute.xlu0 %5977
        %5979 = vrot.lane.b32.xlu0 %v5952, 111
        %v5980 = vpop.permute.xlu0 %5979
        %5981 = vrot.lane.b32.xlu0 %v5953, 111
        %v5982 = vpop.permute.xlu0 %5981
        %5983 = vrot.lane.b32.xlu0 %v5954, 111
        %v5984 = vpop.permute.xlu0 %5983
        %v5985 = vsel %vm4954, %v5966, %v5968
        %v5986 = vsel %vm4954, %v5968, %v5970
        %v5987 = vsel %vm4954, %v5970, %v5972
        %v5988 = vsel %vm4954, %v5972, %v5974
        %v5989 = vsel %vm4954, %v5974, %v5976
        %v5990 = vsel %vm4954, %v5976, %v5978
        %v5991 = vsel %vm4954, %v5978, %v5980
        %v5992 = vsel %vm4954, %v5980, %v5982
        %v5993 = vsel %vm4954, %v5982, %v5984
        %6003 = vst [vmem:[#allocation5 + $0x678] sm:$0xff] %v5985
        %6004 = vst [vmem:[#allocation5 + $0x680] sm:$0xff] %v5986
        %6005 = vst [vmem:[#allocation5 + $0x688] sm:$0xff] %v5987
        %6006 = vst [vmem:[#allocation5 + $0x690] sm:$0xff] %v5988
        %6007 = vst [vmem:[#allocation5 + $0x698] sm:$0xff] %v5989
        %6008 = vst [vmem:[#allocation5 + $0x6a0] sm:$0xff] %v5990
        %6009 = vst [vmem:[#allocation5 + $0x6a8] sm:$0xff] %v5991
        %6010 = vst [vmem:[#allocation5 + $0x6b0] sm:$0xff] %v5992
        %6011 = vst [vmem:[#allocation5 + $0x6b8] sm:$0xff] %v5993
        %v6012 = vld [vmem:[#allocation4 + $0x18] sm:$0xff]
        %v6013 = vld [vmem:[#allocation4 + $0x20] sm:$0xff]
        %v6014 = vld [vmem:[#allocation4 + $0x28] sm:$0xff]
        %v6015 = vld [vmem:[#allocation4 + $0x30] sm:$0xff]
        %v6016 = vld [vmem:[#allocation4 + $0x38] sm:$0xff]
        %v6017 = vld [vmem:[#allocation4 + $0x40] sm:$0xff]
        %v6018 = vld [vmem:[#allocation4 + $0x48] sm:$0xff]
        %v6019 = vld [vmem:[#allocation4 + $0x50] sm:$0xff]
        %v6020 = vld [vmem:[#allocation4 + $0x58] sm:$0xff]
        %v6021 = vld [vmem:[#allocation4 + $0x60] sm:$0xff]
        %v6022 = vld [vmem:[#allocation4 + $0x80] sm:$0xff]
        %v6023 = vld [vmem:[#allocation4 + $0x88] sm:$0xff]
        %v6024 = vld [vmem:[#allocation4 + $0x90] sm:$0xff]
        %v6025 = vld [vmem:[#allocation4 + $0x98] sm:$0xff]
        %v6026 = vld [vmem:[#allocation4 + $0xa0] sm:$0xff]
        %v6027 = vld [vmem:[#allocation4 + $0xa8] sm:$0xff]
        %v6028 = vld [vmem:[#allocation4 + $0xb0] sm:$0xff]
        %v6029 = vld [vmem:[#allocation4 + $0xb8] sm:$0xff]
        %v6030 = vld [vmem:[#allocation4 + $0xc0] sm:$0xff]
        %v6031 = vld [vmem:[#allocation4 + $0xc8] sm:$0xff]
        %v6032 = vld [vmem:[%s1312] ss:$8 sm:$0xf]
        %v6033 = vld [vmem:[%s1312] ss:$8 sm:$0xf0]
        %v6034 = vor.u32 %v6032, %v6033
        %v6035 = vld [vmem:[%s1316] ss:$8 sm:$0x1]
        %v6038 = vlaneseq
        %v6039 = vshrl.u32 %v6038, 7
        %v6040 = vsub.s32 0, %v6039
        %v6041 = vrot.slane %v6034, %v6040
        %v6042 = vlaneseq
        %v6043 = vshrl.u32 %v6042, 7
        %v6044 = vsub.s32 1, %v6043
        %v6045 = vrot.slane %v6034, %v6044
        %v6046 = vlaneseq
        %v6047 = vshrl.u32 %v6046, 7
        %v6048 = vsub.s32 2, %v6047
        %v6049 = vrot.slane %v6034, %v6048
        %v6050 = vlaneseq
        %v6051 = vshrl.u32 %v6050, 7
        %v6052 = vsub.s32 3, %v6051
        %v6053 = vrot.slane %v6034, %v6052
        %v6054 = vlaneseq
        %v6055 = vshrl.u32 %v6054, 7
        %v6056 = vsub.s32 4, %v6055
        %v6057 = vrot.slane %v6034, %v6056
        %v6058 = vlaneseq
        %v6059 = vshrl.u32 %v6058, 7
        %v6060 = vsub.s32 5, %v6059
        %v6061 = vrot.slane %v6034, %v6060
        %v6062 = vlaneseq
        %v6063 = vshrl.u32 %v6062, 7
        %v6064 = vsub.s32 6, %v6063
        %v6065 = vrot.slane %v6034, %v6064
        %v6066 = vlaneseq
        %v6067 = vshrl.u32 %v6066, 7
        %v6068 = vsub.s32 7, %v6067
        %v6069 = vrot.slane %v6034, %v6068
        %v6070 = vlaneseq
        %v6071 = vshrl.u32 %v6070, 7
        %v6072 = vsub.s32 0, %v6071
        %v6073 = vrot.slane %v6035, %v6072
        %6074 = vrot.lane.b32.xlu0 %v6041, 31
        %v6075 = vpop.permute.xlu0 %6074
        %6076 = vrot.lane.b32.xlu0 %v6045, 31
        %v6077 = vpop.permute.xlu0 %6076
        %6078 = vrot.lane.b32.xlu0 %v6049, 31
        %v6079 = vpop.permute.xlu0 %6078
        %6080 = vrot.lane.b32.xlu0 %v6053, 31
        %v6081 = vpop.permute.xlu0 %6080
        %6082 = vrot.lane.b32.xlu0 %v6057, 31
        %v6083 = vpop.permute.xlu0 %6082
        %6084 = vrot.lane.b32.xlu0 %v6061, 31
        %v6085 = vpop.permute.xlu0 %6084
        %6086 = vrot.lane.b32.xlu0 %v6065, 31
        %v6087 = vpop.permute.xlu0 %6086
        %6088 = vrot.lane.b32.xlu0 %v6069, 31
        %v6089 = vpop.permute.xlu0 %6088
        %6090 = vrot.lane.b32.xlu0 %v6073, 31
        %v6091 = vpop.permute.xlu0 %6090
        %v6092 = vsel %vm487, %v6075, %v6077
        %v6093 = vsel %vm487, %v6077, %v6079
        %v6094 = vsel %vm487, %v6079, %v6081
        %v6095 = vsel %vm487, %v6081, %v6083
        %v6096 = vsel %vm487, %v6083, %v6085
        %v6097 = vsel %vm487, %v6085, %v6087
        %v6098 = vsel %vm487, %v6087, %v6089
        %v6099 = vsel %vm487, %v6089, %v6091
        %v6110 = vmul.f32 %v6012, %v6075
        %v6111 = vmul.f32 %v6013, %v6092
        %v6112 = vmul.f32 %v6014, %v6093
        %v6113 = vmul.f32 %v6015, %v6094
        %v6114 = vmul.f32 %v6016, %v6095
        %v6115 = vmul.f32 %v6017, %v6096
        %v6116 = vmul.f32 %v6018, %v6097
        %v6117 = vmul.f32 %v6019, %v6098
        %v6118 = vmul.f32 %v6020, %v6099
        %v6119 = vmul.f32 %v6021, %v6091
        %v6120 = vmul.f32 %v6022, %v6075
        %v6121 = vmul.f32 %v6023, %v6092
        %v6122 = vmul.f32 %v6024, %v6093
        %v6123 = vmul.f32 %v6025, %v6094
        %v6124 = vmul.f32 %v6026, %v6095
        %v6125 = vmul.f32 %v6027, %v6096
        %v6126 = vmul.f32 %v6028, %v6097
        %v6127 = vmul.f32 %v6029, %v6098
        %v6128 = vmul.f32 %v6030, %v6099
        %v6129 = vmul.f32 %v6031, %v6091
        %v6130 = vpack.c.bf16 %v6120, %v6110
        %v6131 = vpack.c.bf16 %v6121, %v6111
        %v6132 = vpack.c.bf16 %v6122, %v6112
        %v6133 = vpack.c.bf16 %v6123, %v6113
        %v6134 = vpack.c.bf16 %v6124, %v6114
        %v6135 = vpack.c.bf16 %v6125, %v6115
        %v6136 = vpack.c.bf16 %v6126, %v6116
        %v6137 = vpack.c.bf16 %v6127, %v6117
        %v6138 = vpack.c.bf16 %v6128, %v6118
        %v6139 = vpack.c.bf16 %v6129, %v6119
        %6150 = vrot.lane.b32.xlu0 %v6130, 97
        %v6151 = vpop.permute.xlu0 %6150
        %6152 = vrot.lane.b32.xlu0 %v6131, 97
        %v6153 = vpop.permute.xlu0 %6152
        %6154 = vrot.lane.b32.xlu0 %v6132, 97
        %v6155 = vpop.permute.xlu0 %6154
        %6156 = vrot.lane.b32.xlu0 %v6133, 97
        %v6157 = vpop.permute.xlu0 %6156
        %6158 = vrot.lane.b32.xlu0 %v6134, 97
        %v6159 = vpop.permute.xlu0 %6158
        %6160 = vrot.lane.b32.xlu0 %v6135, 97
        %v6161 = vpop.permute.xlu0 %6160
        %6162 = vrot.lane.b32.xlu0 %v6136, 97
        %v6163 = vpop.permute.xlu0 %6162
        %6164 = vrot.lane.b32.xlu0 %v6137, 97
        %v6165 = vpop.permute.xlu0 %6164
        %6166 = vrot.lane.b32.xlu0 %v6138, 97
        %v6167 = vpop.permute.xlu0 %6166
        %6168 = vrot.lane.b32.xlu0 %v6139, 97
        %v6169 = vpop.permute.xlu0 %6168
        %vm6170 = vcmask 793600
        %v6171 = vsel %vm6170, %v6151, %v6153
        %v6172 = vsel %vm6170, %v6153, %v6155
        %v6173 = vsel %vm6170, %v6155, %v6157
        %v6174 = vsel %vm6170, %v6157, %v6159
        %v6175 = vsel %vm6170, %v6159, %v6161
        %v6176 = vsel %vm6170, %v6161, %v6163
        %v6177 = vsel %vm6170, %v6163, %v6165
        %v6178 = vsel %vm6170, %v6165, %v6167
        %v6179 = vsel %vm6170, %v6167, %v6169
        %6189 = vst [vmem:[#allocation5 + $0x6c0] sm:$0xff] %v6171
        %6190 = vst [vmem:[#allocation5 + $0x6c8] sm:$0xff] %v6172
        %6191 = vst [vmem:[#allocation5 + $0x6d0] sm:$0xff] %v6173
        %6192 = vst [vmem:[#allocation5 + $0x6d8] sm:$0xff] %v6174
        %6193 = vst [vmem:[#allocation5 + $0x6e0] sm:$0xff] %v6175
        %6194 = vst [vmem:[#allocation5 + $0x6e8] sm:$0xff] %v6176
        %6195 = vst [vmem:[#allocation5 + $0x6f0] sm:$0xff] %v6177
        %6196 = vst [vmem:[#allocation5 + $0x6f8] sm:$0xff] %v6178
        %6197 = vst [vmem:[#allocation5 + $0x700] sm:$0xff] %v6179
        %v6198 = vld [vmem:[#allocation4 + $0x18] sm:$0xff]
        %v6199 = vld [vmem:[#allocation4 + $0x20] sm:$0xff]
        %v6200 = vld [vmem:[#allocation4 + $0x28] sm:$0xff]
        %v6201 = vld [vmem:[#allocation4 + $0x30] sm:$0xff]
        %v6202 = vld [vmem:[#allocation4 + $0x38] sm:$0xff]
        %v6203 = vld [vmem:[#allocation4 + $0x40] sm:$0xff]
        %v6204 = vld [vmem:[#allocation4 + $0x48] sm:$0xff]
        %v6205 = vld [vmem:[#allocation4 + $0x50] sm:$0xff]
        %v6206 = vld [vmem:[#allocation4 + $0x58] sm:$0xff]
        %v6207 = vld [vmem:[#allocation4 + $0x60] sm:$0xff]
        %v6208 = vld [vmem:[#allocation4 + $0x80] sm:$0xff]
        %v6209 = vld [vmem:[#allocation4 + $0x88] sm:$0xff]
        %v6210 = vld [vmem:[#allocation4 + $0x90] sm:$0xff]
        %v6211 = vld [vmem:[#allocation4 + $0x98] sm:$0xff]
        %v6212 = vld [vmem:[#allocation4 + $0xa0] sm:$0xff]
        %v6213 = vld [vmem:[#allocation4 + $0xa8] sm:$0xff]
        %v6214 = vld [vmem:[#allocation4 + $0xb0] sm:$0xff]
        %v6215 = vld [vmem:[#allocation4 + $0xb8] sm:$0xff]
        %v6216 = vld [vmem:[#allocation4 + $0xc0] sm:$0xff]
        %v6217 = vld [vmem:[#allocation4 + $0xc8] sm:$0xff]
        %v6218 = vld [vmem:[%s1354] ss:$8 sm:$0xf]
        %v6219 = vld [vmem:[%s1354] ss:$8 sm:$0xf0]
        %v6220 = vor.u32 %v6218, %v6219
        %v6221 = vld [vmem:[%s1358] ss:$8 sm:$0x1]
        %v6224 = vlaneseq
        %v6225 = vshrl.u32 %v6224, 7
        %v6226 = vsub.s32 0, %v6225
        %v6227 = vrot.slane %v6220, %v6226
        %v6228 = vlaneseq
        %v6229 = vshrl.u32 %v6228, 7
        %v6230 = vsub.s32 1, %v6229
        %v6231 = vrot.slane %v6220, %v6230
        %v6232 = vlaneseq
        %v6233 = vshrl.u32 %v6232, 7
        %v6234 = vsub.s32 2, %v6233
        %v6235 = vrot.slane %v6220, %v6234
        %v6236 = vlaneseq
        %v6237 = vshrl.u32 %v6236, 7
        %v6238 = vsub.s32 3, %v6237
        %v6239 = vrot.slane %v6220, %v6238
        %v6240 = vlaneseq
        %v6241 = vshrl.u32 %v6240, 7
        %v6242 = vsub.s32 4, %v6241
        %v6243 = vrot.slane %v6220, %v6242
        %v6244 = vlaneseq
        %v6245 = vshrl.u32 %v6244, 7
        %v6246 = vsub.s32 5, %v6245
        %v6247 = vrot.slane %v6220, %v6246
        %v6248 = vlaneseq
        %v6249 = vshrl.u32 %v6248, 7
        %v6250 = vsub.s32 6, %v6249
        %v6251 = vrot.slane %v6220, %v6250
        %v6252 = vlaneseq
        %v6253 = vshrl.u32 %v6252, 7
        %v6254 = vsub.s32 7, %v6253
        %v6255 = vrot.slane %v6220, %v6254
        %v6256 = vlaneseq
        %v6257 = vshrl.u32 %v6256, 7
        %v6258 = vsub.s32 0, %v6257
        %v6259 = vrot.slane %v6221, %v6258
        %6260 = vrot.lane.b32.xlu0 %v6227, 32
        %v6261 = vpop.permute.xlu0 %6260
        %6262 = vrot.lane.b32.xlu0 %v6231, 32
        %v6263 = vpop.permute.xlu0 %6262
        %6264 = vrot.lane.b32.xlu0 %v6235, 32
        %v6265 = vpop.permute.xlu0 %6264
        %6266 = vrot.lane.b32.xlu0 %v6239, 32
        %v6267 = vpop.permute.xlu0 %6266
        %6268 = vrot.lane.b32.xlu0 %v6243, 32
        %v6269 = vpop.permute.xlu0 %6268
        %6270 = vrot.lane.b32.xlu0 %v6247, 32
        %v6271 = vpop.permute.xlu0 %6270
        %6272 = vrot.lane.b32.xlu0 %v6251, 32
        %v6273 = vpop.permute.xlu0 %6272
        %6274 = vrot.lane.b32.xlu0 %v6255, 32
        %v6275 = vpop.permute.xlu0 %6274
        %6276 = vrot.lane.b32.xlu0 %v6259, 32
        %v6277 = vpop.permute.xlu0 %6276
        %v6278 = vsel %vm443, %v6261, %v6263
        %v6279 = vsel %vm443, %v6263, %v6265
        %v6280 = vsel %vm443, %v6265, %v6267
        %v6281 = vsel %vm443, %v6267, %v6269
        %v6282 = vsel %vm443, %v6269, %v6271
        %v6283 = vsel %vm443, %v6271, %v6273
        %v6284 = vsel %vm443, %v6273, %v6275
        %v6285 = vsel %vm443, %v6275, %v6277
        %v6296 = vmul.f32 %v6198, %v6261
        %v6297 = vmul.f32 %v6199, %v6278
        %v6298 = vmul.f32 %v6200, %v6279
        %v6299 = vmul.f32 %v6201, %v6280
        %v6300 = vmul.f32 %v6202, %v6281
        %v6301 = vmul.f32 %v6203, %v6282
        %v6302 = vmul.f32 %v6204, %v6283
        %v6303 = vmul.f32 %v6205, %v6284
        %v6304 = vmul.f32 %v6206, %v6285
        %v6305 = vmul.f32 %v6207, %v6277
        %v6306 = vmul.f32 %v6208, %v6261
        %v6307 = vmul.f32 %v6209, %v6278
        %v6308 = vmul.f32 %v6210, %v6279
        %v6309 = vmul.f32 %v6211, %v6280
        %v6310 = vmul.f32 %v6212, %v6281
        %v6311 = vmul.f32 %v6213, %v6282
        %v6312 = vmul.f32 %v6214, %v6283
        %v6313 = vmul.f32 %v6215, %v6284
        %v6314 = vmul.f32 %v6216, %v6285
        %v6315 = vmul.f32 %v6217, %v6277
        %v6316 = vpack.c.bf16 %v6306, %v6296
        %v6317 = vpack.c.bf16 %v6307, %v6297
        %v6318 = vpack.c.bf16 %v6308, %v6298
        %v6319 = vpack.c.bf16 %v6309, %v6299
        %v6320 = vpack.c.bf16 %v6310, %v6300
        %v6321 = vpack.c.bf16 %v6311, %v6301
        %v6322 = vpack.c.bf16 %v6312, %v6302
        %v6323 = vpack.c.bf16 %v6313, %v6303
        %v6324 = vpack.c.bf16 %v6314, %v6304
        %v6325 = vpack.c.bf16 %v6315, %v6305
        %6336 = vrot.lane.b32.xlu0 %v6316, 96
        %v6337 = vpop.permute.xlu0 %6336
        %6338 = vrot.lane.b32.xlu0 %v6317, 96
        %v6339 = vpop.permute.xlu0 %6338
        %6340 = vrot.lane.b32.xlu0 %v6318, 96
        %v6341 = vpop.permute.xlu0 %6340
        %6342 = vrot.lane.b32.xlu0 %v6319, 96
        %v6343 = vpop.permute.xlu0 %6342
        %6344 = vrot.lane.b32.xlu0 %v6320, 96
        %v6345 = vpop.permute.xlu0 %6344
        %6346 = vrot.lane.b32.xlu0 %v6321, 96
        %v6347 = vpop.permute.xlu0 %6346
        %6348 = vrot.lane.b32.xlu0 %v6322, 96
        %v6349 = vpop.permute.xlu0 %6348
        %6350 = vrot.lane.b32.xlu0 %v6323, 96
        %v6351 = vpop.permute.xlu0 %6350
        %6352 = vrot.lane.b32.xlu0 %v6324, 96
        %v6353 = vpop.permute.xlu0 %6352
        %6354 = vrot.lane.b32.xlu0 %v6325, 96
        %v6355 = vpop.permute.xlu0 %6354
        %vm6356 = vcmask 785408
        %v6357 = vsel %vm6356, %v6337, %v6339
        %v6358 = vsel %vm6356, %v6339, %v6341
        %v6359 = vsel %vm6356, %v6341, %v6343
        %v6360 = vsel %vm6356, %v6343, %v6345
        %v6361 = vsel %vm6356, %v6345, %v6347
        %v6362 = vsel %vm6356, %v6347, %v6349
        %v6363 = vsel %vm6356, %v6349, %v6351
        %v6364 = vsel %vm6356, %v6351, %v6353
        %v6365 = vsel %vm6356, %v6353, %v6355
        %6375 = vst [vmem:[#allocation5 + $0x708] sm:$0xff] %v6357
        %6376 = vst [vmem:[#allocation5 + $0x710] sm:$0xff] %v6358
        %6377 = vst [vmem:[#allocation5 + $0x718] sm:$0xff] %v6359
        %6378 = vst [vmem:[#allocation5 + $0x720] sm:$0xff] %v6360
        %6379 = vst [vmem:[#allocation5 + $0x728] sm:$0xff] %v6361
        %6380 = vst [vmem:[#allocation5 + $0x730] sm:$0xff] %v6362
        %6381 = vst [vmem:[#allocation5 + $0x738] sm:$0xff] %v6363
        %6382 = vst [vmem:[#allocation5 + $0x740] sm:$0xff] %v6364
        %6383 = vst [vmem:[#allocation5 + $0x748] sm:$0xff] %v6365
        %v6384 = vld [vmem:[#allocation4 + $0x18] sm:$0xff]
        %v6385 = vld [vmem:[#allocation4 + $0x20] sm:$0xff]
        %v6386 = vld [vmem:[#allocation4 + $0x28] sm:$0xff]
        %v6387 = vld [vmem:[#allocation4 + $0x30] sm:$0xff]
        %v6388 = vld [vmem:[#allocation4 + $0x38] sm:$0xff]
        %v6389 = vld [vmem:[#allocation4 + $0x40] sm:$0xff]
        %v6390 = vld [vmem:[#allocation4 + $0x48] sm:$0xff]
        %v6391 = vld [vmem:[#allocation4 + $0x50] sm:$0xff]
        %v6392 = vld [vmem:[#allocation4 + $0x58] sm:$0xff]
        %v6393 = vld [vmem:[#allocation4 + $0x60] sm:$0xff]
        %v6394 = vld [vmem:[#allocation4 + $0x80] sm:$0xff]
        %v6395 = vld [vmem:[#allocation4 + $0x88] sm:$0xff]
        %v6396 = vld [vmem:[#allocation4 + $0x90] sm:$0xff]
        %v6397 = vld [vmem:[#allocation4 + $0x98] sm:$0xff]
        %v6398 = vld [vmem:[#allocation4 + $0xa0] sm:$0xff]
        %v6399 = vld [vmem:[#allocation4 + $0xa8] sm:$0xff]
        %v6400 = vld [vmem:[#allocation4 + $0xb0] sm:$0xff]
        %v6401 = vld [vmem:[#allocation4 + $0xb8] sm:$0xff]
        %v6402 = vld [vmem:[#allocation4 + $0xc0] sm:$0xff]
        %v6403 = vld [vmem:[#allocation4 + $0xc8] sm:$0xff]
        %v6404 = vld [vmem:[%s1396] ss:$8 sm:$0xf]
        %v6405 = vld [vmem:[%s1396] ss:$8 sm:$0xf0]
        %v6406 = vor.u32 %v6404, %v6405
        %v6407 = vld [vmem:[%s1400] ss:$8 sm:$0x1]
        %v6410 = vlaneseq
        %v6411 = vshrl.u32 %v6410, 7
        %v6412 = vsub.s32 0, %v6411
        %v6413 = vrot.slane %v6406, %v6412
        %v6414 = vlaneseq
        %v6415 = vshrl.u32 %v6414, 7
        %v6416 = vsub.s32 1, %v6415
        %v6417 = vrot.slane %v6406, %v6416
        %v6418 = vlaneseq
        %v6419 = vshrl.u32 %v6418, 7
        %v6420 = vsub.s32 2, %v6419
        %v6421 = vrot.slane %v6406, %v6420
        %v6422 = vlaneseq
        %v6423 = vshrl.u32 %v6422, 7
        %v6424 = vsub.s32 3, %v6423
        %v6425 = vrot.slane %v6406, %v6424
        %v6426 = vlaneseq
        %v6427 = vshrl.u32 %v6426, 7
        %v6428 = vsub.s32 4, %v6427
        %v6429 = vrot.slane %v6406, %v6428
        %v6430 = vlaneseq
        %v6431 = vshrl.u32 %v6430, 7
        %v6432 = vsub.s32 5, %v6431
        %v6433 = vrot.slane %v6406, %v6432
        %v6434 = vlaneseq
        %v6435 = vshrl.u32 %v6434, 7
        %v6436 = vsub.s32 6, %v6435
        %v6437 = vrot.slane %v6406, %v6436
        %v6438 = vlaneseq
        %v6439 = vshrl.u32 %v6438, 7
        %v6440 = vsub.s32 7, %v6439
        %v6441 = vrot.slane %v6406, %v6440
        %v6442 = vlaneseq
        %v6443 = vshrl.u32 %v6442, 7
        %v6444 = vsub.s32 0, %v6443
        %v6445 = vrot.slane %v6407, %v6444
        %6446 = vrot.lane.b32.xlu0 %v6413, 33
        %v6447 = vpop.permute.xlu0 %6446
        %6448 = vrot.lane.b32.xlu0 %v6417, 33
        %v6449 = vpop.permute.xlu0 %6448
        %6450 = vrot.lane.b32.xlu0 %v6421, 33
        %v6451 = vpop.permute.xlu0 %6450
        %6452 = vrot.lane.b32.xlu0 %v6425, 33
        %v6453 = vpop.permute.xlu0 %6452
        %6454 = vrot.lane.b32.xlu0 %v6429, 33
        %v6455 = vpop.permute.xlu0 %6454
        %6456 = vrot.lane.b32.xlu0 %v6433, 33
        %v6457 = vpop.permute.xlu0 %6456
        %6458 = vrot.lane.b32.xlu0 %v6437, 33
        %v6459 = vpop.permute.xlu0 %6458
        %6460 = vrot.lane.b32.xlu0 %v6441, 33
        %v6461 = vpop.permute.xlu0 %6460
        %6462 = vrot.lane.b32.xlu0 %v6445, 33
        %v6463 = vpop.permute.xlu0 %6462
        %v6464 = vsel %vm400, %v6447, %v6449
        %v6465 = vsel %vm400, %v6449, %v6451
        %v6466 = vsel %vm400, %v6451, %v6453
        %v6467 = vsel %vm400, %v6453, %v6455
        %v6468 = vsel %vm400, %v6455, %v6457
        %v6469 = vsel %vm400, %v6457, %v6459
        %v6470 = vsel %vm400, %v6459, %v6461
        %v6471 = vsel %vm400, %v6461, %v6463
        %v6482 = vmul.f32 %v6384, %v6447
        %v6483 = vmul.f32 %v6385, %v6464
        %v6484 = vmul.f32 %v6386, %v6465
        %v6485 = vmul.f32 %v6387, %v6466
        %v6486 = vmul.f32 %v6388, %v6467
        %v6487 = vmul.f32 %v6389, %v6468
        %v6488 = vmul.f32 %v6390, %v6469
        %v6489 = vmul.f32 %v6391, %v6470
        %v6490 = vmul.f32 %v6392, %v6471
        %v6491 = vmul.f32 %v6393, %v6463
        %v6492 = vmul.f32 %v6394, %v6447
        %v6493 = vmul.f32 %v6395, %v6464
        %v6494 = vmul.f32 %v6396, %v6465
        %v6495 = vmul.f32 %v6397, %v6466
        %v6496 = vmul.f32 %v6398, %v6467
        %v6497 = vmul.f32 %v6399, %v6468
        %v6498 = vmul.f32 %v6400, %v6469
        %v6499 = vmul.f32 %v6401, %v6470
        %v6500 = vmul.f32 %v6402, %v6471
        %v6501 = vmul.f32 %v6403, %v6463
        %v6502 = vpack.c.bf16 %v6492, %v6482
        %v6503 = vpack.c.bf16 %v6493, %v6483
        %v6504 = vpack.c.bf16 %v6494, %v6484
        %v6505 = vpack.c.bf16 %v6495, %v6485
        %v6506 = vpack.c.bf16 %v6496, %v6486
        %v6507 = vpack.c.bf16 %v6497, %v6487
        %v6508 = vpack.c.bf16 %v6498, %v6488
        %v6509 = vpack.c.bf16 %v6499, %v6489
        %v6510 = vpack.c.bf16 %v6500, %v6490
        %v6511 = vpack.c.bf16 %v6501, %v6491
        %6522 = vrot.lane.b32.xlu0 %v6502, 95
        %v6523 = vpop.permute.xlu0 %6522
        %6524 = vrot.lane.b32.xlu0 %v6503, 95
        %v6525 = vpop.permute.xlu0 %6524
        %6526 = vrot.lane.b32.xlu0 %v6504, 95
        %v6527 = vpop.permute.xlu0 %6526
        %6528 = vrot.lane.b32.xlu0 %v6505, 95
        %v6529 = vpop.permute.xlu0 %6528
        %6530 = vrot.lane.b32.xlu0 %v6506, 95
        %v6531 = vpop.permute.xlu0 %6530
        %6532 = vrot.lane.b32.xlu0 %v6507, 95
        %v6533 = vpop.permute.xlu0 %6532
        %6534 = vrot.lane.b32.xlu0 %v6508, 95
        %v6535 = vpop.permute.xlu0 %6534
        %6536 = vrot.lane.b32.xlu0 %v6509, 95
        %v6537 = vpop.permute.xlu0 %6536
        %6538 = vrot.lane.b32.xlu0 %v6510, 95
        %v6539 = vpop.permute.xlu0 %6538
        %6540 = vrot.lane.b32.xlu0 %v6511, 95
        %v6541 = vpop.permute.xlu0 %6540
        %vm6542 = vcmask 777216
        %v6543 = vsel %vm6542, %v6523, %v6525
        %v6544 = vsel %vm6542, %v6525, %v6527
        %v6545 = vsel %vm6542, %v6527, %v6529
        %v6546 = vsel %vm6542, %v6529, %v6531
        %v6547 = vsel %vm6542, %v6531, %v6533
        %v6548 = vsel %vm6542, %v6533, %v6535
        %v6549 = vsel %vm6542, %v6535, %v6537
        %v6550 = vsel %vm6542, %v6537, %v6539
        %v6551 = vsel %vm6542, %v6539, %v6541
        %6561 = vst [vmem:[#allocation5 + $0x750] sm:$0xff] %v6543
        %6562 = vst [vmem:[#allocation5 + $0x758] sm:$0xff] %v6544
        %6563 = vst [vmem:[#allocation5 + $0x760] sm:$0xff] %v6545
        %6564 = vst [vmem:[#allocation5 + $0x768] sm:$0xff] %v6546
        %6565 = vst [vmem:[#allocation5 + $0x770] sm:$0xff] %v6547
        %6566 = vst [vmem:[#allocation5 + $0x778] sm:$0xff] %v6548
        %6567 = vst [vmem:[#allocation5 + $0x780] sm:$0xff] %v6549
        %6568 = vst [vmem:[#allocation5 + $0x788] sm:$0xff] %v6550
        %6569 = vst [vmem:[#allocation5 + $0x790] sm:$0xff] %v6551
        %v6570 = vld [vmem:[%s4] sm:$0xff]
        %v6571 = vld [vmem:[%s4 + $0x8] sm:$0xff]
        %v6572 = vld [vmem:[%s4 + $0x10] sm:$0xff]
        %v6573 = vld [vmem:[%s4 + $0x18] sm:$0xff]
        %v6574 = vld [vmem:[%s4 + $0x20] sm:$0xff]
        %v6575 = vld [vmem:[%s4 + $0x28] sm:$0xff]
        %v6576 = vld [vmem:[%s4 + $0x30] sm:$0xff]
        %v6577 = vld [vmem:[%s4 + $0x38] sm:$0xff]
        %v6578 = vld [vmem:[#allocation5] sm:$0xff]
        %v6579 = vld [vmem:[#allocation5 + $0x8] sm:$0xff]
        %v6580 = vld [vmem:[#allocation5 + $0x10] sm:$0xff]
        %v6581 = vld [vmem:[#allocation5 + $0x18] sm:$0xff]
        %v6582 = vld [vmem:[#allocation5 + $0x20] sm:$0xff]
        %v6583 = vld [vmem:[#allocation5 + $0x28] sm:$0xff]
        %v6584 = vld [vmem:[#allocation5 + $0x30] sm:$0xff]
        %v6585 = vld [vmem:[#allocation5 + $0x38] sm:$0xff]
        %v6586 = vld [vmem:[#allocation5 + $0x40] sm:$0xff]
        %v6587 = vld [vmem:[#allocation5 + $0x48] sm:$0xff]
        %v6588 = vld [vmem:[#allocation5 + $0x50] sm:$0xff]
        %v6589 = vld [vmem:[#allocation5 + $0x58] sm:$0xff]
        %v6590 = vld [vmem:[#allocation5 + $0x60] sm:$0xff]
        %v6591 = vld [vmem:[#allocation5 + $0x68] sm:$0xff]
        %v6592 = vld [vmem:[#allocation5 + $0x70] sm:$0xff]
        %v6593 = vld [vmem:[#allocation5 + $0x78] sm:$0xff]
        %v6594 = vld [vmem:[#allocation5 + $0x80] sm:$0xff]
        %v6595 = vld [vmem:[#allocation5 + $0x88] sm:$0xff]
        %v6596 = vld [vmem:[#allocation5 + $0x90] sm:$0xff]
        %v6597 = vld [vmem:[#allocation5 + $0x98] sm:$0xff]
        %v6598 = vld [vmem:[#allocation5 + $0xa0] sm:$0xff]
        %v6599 = vld [vmem:[#allocation5 + $0xa8] sm:$0xff]
        %v6600 = vld [vmem:[#allocation5 + $0xb0] sm:$0xff]
        %v6601 = vld [vmem:[#allocation5 + $0xb8] sm:$0xff]
        %v6602 = vld [vmem:[#allocation5 + $0xc0] sm:$0xff]
        %v6603 = vld [vmem:[#allocation5 + $0xc8] sm:$0xff]
        %v6604 = vld [vmem:[#allocation5 + $0xd0] sm:$0xff]
        %v6605 = vld [vmem:[#allocation5 + $0xd8] sm:$0xff]
        %v6606 = vld [vmem:[#allocation5 + $0xe0] sm:$0xff]
        %v6607 = vld [vmem:[#allocation5 + $0xe8] sm:$0xff]
        %v6608 = vld [vmem:[#allocation5 + $0xf0] sm:$0xff]
        %v6609 = vld [vmem:[#allocation5 + $0xf8] sm:$0xff]
        %v6610 = vld [vmem:[#allocation5 + $0x100] sm:$0xff]
        %v6611 = vld [vmem:[#allocation5 + $0x108] sm:$0xff]
        %v6612 = vld [vmem:[#allocation5 + $0x110] sm:$0xff]
        %v6613 = vld [vmem:[#allocation5 + $0x118] sm:$0xff]
        %v6614 = vld [vmem:[#allocation5 + $0x120] sm:$0xff]
        %v6615 = vld [vmem:[#allocation5 + $0x128] sm:$0xff]
        %v6616 = vld [vmem:[#allocation5 + $0x130] sm:$0xff]
        %v6617 = vld [vmem:[#allocation5 + $0x138] sm:$0xff]
        %v6618 = vld [vmem:[#allocation5 + $0x140] sm:$0xff]
        %v6619 = vld [vmem:[#allocation5 + $0x148] sm:$0xff]
        %v6620 = vld [vmem:[#allocation5 + $0x150] sm:$0xff]
        %v6621 = vld [vmem:[#allocation5 + $0x158] sm:$0xff]
        %v6622 = vld [vmem:[#allocation5 + $0x160] sm:$0xff]
        %v6623 = vld [vmem:[#allocation5 + $0x168] sm:$0xff]
        %v6624 = vld [vmem:[#allocation5 + $0x170] sm:$0xff]
        %v6625 = vld [vmem:[#allocation5 + $0x178] sm:$0xff]
        %v6626 = vld [vmem:[#allocation5 + $0x180] sm:$0xff]
        %v6627 = vld [vmem:[#allocation5 + $0x188] sm:$0xff]
        %v6628 = vld [vmem:[#allocation5 + $0x190] sm:$0xff]
        %v6629 = vld [vmem:[#allocation5 + $0x198] sm:$0xff]
        %v6630 = vld [vmem:[#allocation5 + $0x1a0] sm:$0xff]
        %v6631 = vld [vmem:[#allocation5 + $0x1a8] sm:$0xff]
        %v6632 = vld [vmem:[#allocation5 + $0x1b0] sm:$0xff]
        %v6633 = vld [vmem:[#allocation5 + $0x1b8] sm:$0xff]
        %v6634 = vld [vmem:[#allocation5 + $0x1c0] sm:$0xff]
        %v6635 = vld [vmem:[#allocation5 + $0x1c8] sm:$0xff]
        %v6636 = vld [vmem:[#allocation5 + $0x1d0] sm:$0xff]
        %v6637 = vld [vmem:[#allocation5 + $0x1d8] sm:$0xff]
        %v6638 = vld [vmem:[#allocation5 + $0x1e0] sm:$0xff]
        %v6639 = vld [vmem:[#allocation5 + $0x1e8] sm:$0xff]
        %v6640 = vld [vmem:[#allocation5 + $0x1f0] sm:$0xff]
        %v6641 = vld [vmem:[#allocation5 + $0x1f8] sm:$0xff]
        %v6642 = vld [vmem:[#allocation5 + $0x200] sm:$0xff]
        %v6643 = vld [vmem:[#allocation5 + $0x208] sm:$0xff]
        %v6644 = vld [vmem:[#allocation5 + $0x210] sm:$0xff]
        %v6645 = vld [vmem:[#allocation5 + $0x218] sm:$0xff]
        %v6646 = vld [vmem:[#allocation5 + $0x220] sm:$0xff]
        %v6647 = vld [vmem:[#allocation5 + $0x228] sm:$0xff]
        %v6648 = vld [vmem:[#allocation5 + $0x230] sm:$0xff]
        %v6649 = vld [vmem:[#allocation5 + $0x238] sm:$0xff]
        %v6650 = vld [vmem:[#allocation5 + $0x240] sm:$0xff]
        %v6651 = vld [vmem:[#allocation5 + $0x248] sm:$0xff]
        %v6652 = vld [vmem:[#allocation5 + $0x250] sm:$0xff]
        %v6653 = vld [vmem:[#allocation5 + $0x258] sm:$0xff]
        %v6654 = vld [vmem:[#allocation5 + $0x260] sm:$0xff]
        %v6655 = vld [vmem:[#allocation5 + $0x268] sm:$0xff]
        %v6656 = vld [vmem:[#allocation5 + $0x270] sm:$0xff]
        %v6657 = vld [vmem:[#allocation5 + $0x278] sm:$0xff]
        %v6658 = vld [vmem:[#allocation5 + $0x280] sm:$0xff]
        %v6659 = vld [vmem:[#allocation5 + $0x288] sm:$0xff]
        %v6660 = vld [vmem:[#allocation5 + $0x290] sm:$0xff]
        %v6661 = vld [vmem:[#allocation5 + $0x298] sm:$0xff]
        %v6662 = vld [vmem:[#allocation5 + $0x2a0] sm:$0xff]
        %v6663 = vld [vmem:[#allocation5 + $0x2a8] sm:$0xff]
        %v6664 = vld [vmem:[#allocation5 + $0x2b0] sm:$0xff]
        %v6665 = vld [vmem:[#allocation5 + $0x2b8] sm:$0xff]
        %v6666 = vld [vmem:[#allocation5 + $0x2c0] sm:$0xff]
        %v6667 = vld [vmem:[#allocation5 + $0x2c8] sm:$0xff]
        %v6668 = vld [vmem:[#allocation5 + $0x2d0] sm:$0xff]
        %v6669 = vld [vmem:[#allocation5 + $0x2d8] sm:$0xff]
        %v6670 = vld [vmem:[#allocation5 + $0x2e0] sm:$0xff]
        %v6671 = vld [vmem:[#allocation5 + $0x2e8] sm:$0xff]
        %v6672 = vld [vmem:[#allocation5 + $0x2f0] sm:$0xff]
        %v6673 = vld [vmem:[#allocation5 + $0x2f8] sm:$0xff]
        %v6674 = vld [vmem:[#allocation5 + $0x300] sm:$0xff]
        %v6675 = vld [vmem:[#allocation5 + $0x308] sm:$0xff]
        %v6676 = vld [vmem:[#allocation5 + $0x310] sm:$0xff]
        %v6677 = vld [vmem:[#allocation5 + $0x318] sm:$0xff]
        %v6678 = vld [vmem:[#allocation5 + $0x320] sm:$0xff]
        %v6679 = vld [vmem:[#allocation5 + $0x328] sm:$0xff]
        %v6680 = vld [vmem:[#allocation5 + $0x330] sm:$0xff]
        %v6681 = vld [vmem:[#allocation5 + $0x338] sm:$0xff]
        %v6682 = vld [vmem:[#allocation5 + $0x340] sm:$0xff]
        %v6683 = vld [vmem:[#allocation5 + $0x348] sm:$0xff]
        %v6684 = vld [vmem:[#allocation5 + $0x350] sm:$0xff]
        %v6685 = vld [vmem:[#allocation5 + $0x358] sm:$0xff]
        %v6686 = vld [vmem:[#allocation5 + $0x360] sm:$0xff]
        %v6687 = vld [vmem:[#allocation5 + $0x368] sm:$0xff]
        %v6688 = vld [vmem:[#allocation5 + $0x370] sm:$0xff]
        %v6689 = vld [vmem:[#allocation5 + $0x378] sm:$0xff]
        %v6690 = vld [vmem:[#allocation5 + $0x380] sm:$0xff]
        %v6691 = vld [vmem:[#allocation5 + $0x388] sm:$0xff]
        %v6692 = vld [vmem:[#allocation5 + $0x390] sm:$0xff]
        %v6693 = vld [vmem:[#allocation5 + $0x398] sm:$0xff]
        %v6694 = vld [vmem:[#allocation5 + $0x3a0] sm:$0xff]
        %v6695 = vld [vmem:[#allocation5 + $0x3a8] sm:$0xff]
        %v6696 = vld [vmem:[#allocation5 + $0x3b0] sm:$0xff]
        %v6697 = vld [vmem:[#allocation5 + $0x3b8] sm:$0xff]
        %v6698 = vld [vmem:[#allocation5 + $0x3c0] sm:$0xff]
        %v6699 = vld [vmem:[#allocation5 + $0x3c8] sm:$0xff]
        %v6700 = vld [vmem:[#allocation5 + $0x3d0] sm:$0xff]
        %v6701 = vld [vmem:[#allocation5 + $0x3d8] sm:$0xff]
        %v6702 = vld [vmem:[#allocation5 + $0x3e0] sm:$0xff]
        %v6703 = vld [vmem:[#allocation5 + $0x3e8] sm:$0xff]
        %v6704 = vld [vmem:[#allocation5 + $0x3f0] sm:$0xff]
        %v6705 = vld [vmem:[#allocation5 + $0x3f8] sm:$0xff]
        %v6706 = vld [vmem:[#allocation5 + $0x400] sm:$0xff]
        %v6707 = vld [vmem:[#allocation5 + $0x408] sm:$0xff]
        %v6708 = vld [vmem:[#allocation5 + $0x410] sm:$0xff]
        %v6709 = vld [vmem:[#allocation5 + $0x418] sm:$0xff]
        %v6710 = vld [vmem:[#allocation5 + $0x420] sm:$0xff]
        %v6711 = vld [vmem:[#allocation5 + $0x428] sm:$0xff]
        %v6712 = vld [vmem:[#allocation5 + $0x430] sm:$0xff]
        %v6713 = vld [vmem:[#allocation5 + $0x438] sm:$0xff]
        %v6714 = vld [vmem:[#allocation5 + $0x440] sm:$0xff]
        %v6715 = vld [vmem:[#allocation5 + $0x448] sm:$0xff]
        %v6716 = vld [vmem:[#allocation5 + $0x450] sm:$0xff]
        %v6717 = vld [vmem:[#allocation5 + $0x458] sm:$0xff]
        %v6718 = vld [vmem:[#allocation5 + $0x460] sm:$0xff]
        %v6719 = vld [vmem:[#allocation5 + $0x468] sm:$0xff]
        %v6720 = vld [vmem:[#allocation5 + $0x470] sm:$0xff]
        %v6721 = vld [vmem:[#allocation5 + $0x478] sm:$0xff]
        %v6722 = vld [vmem:[#allocation5 + $0x480] sm:$0xff]
        %v6723 = vld [vmem:[#allocation5 + $0x488] sm:$0xff]
        %v6724 = vld [vmem:[#allocation5 + $0x490] sm:$0xff]
        %v6725 = vld [vmem:[#allocation5 + $0x498] sm:$0xff]
        %v6726 = vld [vmem:[#allocation5 + $0x4a0] sm:$0xff]
        %v6727 = vld [vmem:[#allocation5 + $0x4a8] sm:$0xff]
        %v6728 = vld [vmem:[#allocation5 + $0x4b0] sm:$0xff]
        %v6729 = vld [vmem:[#allocation5 + $0x4b8] sm:$0xff]
        %v6730 = vld [vmem:[#allocation5 + $0x4c0] sm:$0xff]
        %v6731 = vld [vmem:[#allocation5 + $0x4c8] sm:$0xff]
        %v6732 = vld [vmem:[#allocation5 + $0x4d0] sm:$0xff]
        %v6733 = vld [vmem:[#allocation5 + $0x4d8] sm:$0xff]
        %v6734 = vld [vmem:[#allocation5 + $0x4e0] sm:$0xff]
        %v6735 = vld [vmem:[#allocation5 + $0x4e8] sm:$0xff]
        %v6736 = vld [vmem:[#allocation5 + $0x4f0] sm:$0xff]
        %v6737 = vld [vmem:[#allocation5 + $0x4f8] sm:$0xff]
        %v6738 = vld [vmem:[#allocation5 + $0x500] sm:$0xff]
        %v6739 = vld [vmem:[#allocation5 + $0x508] sm:$0xff]
        %v6740 = vld [vmem:[#allocation5 + $0x510] sm:$0xff]
        %v6741 = vld [vmem:[#allocation5 + $0x518] sm:$0xff]
        %v6742 = vld [vmem:[#allocation5 + $0x520] sm:$0xff]
        %v6743 = vld [vmem:[#allocation5 + $0x528] sm:$0xff]
        %v6744 = vld [vmem:[#allocation5 + $0x530] sm:$0xff]
        %v6745 = vld [vmem:[#allocation5 + $0x538] sm:$0xff]
        %v6746 = vld [vmem:[#allocation5 + $0x540] sm:$0xff]
        %v6747 = vld [vmem:[#allocation5 + $0x548] sm:$0xff]
        %v6748 = vld [vmem:[#allocation5 + $0x550] sm:$0xff]
        %v6749 = vld [vmem:[#allocation5 + $0x558] sm:$0xff]
        %v6750 = vld [vmem:[#allocation5 + $0x560] sm:$0xff]
        %v6751 = vld [vmem:[#allocation5 + $0x568] sm:$0xff]
        %v6752 = vld [vmem:[#allocation5 + $0x570] sm:$0xff]
        %v6753 = vld [vmem:[#allocation5 + $0x578] sm:$0xff]
        %v6754 = vld [vmem:[#allocation5 + $0x580] sm:$0xff]
        %v6755 = vld [vmem:[#allocation5 + $0x588] sm:$0xff]
        %v6756 = vld [vmem:[#allocation5 + $0x590] sm:$0xff]
        %v6757 = vld [vmem:[#allocation5 + $0x598] sm:$0xff]
        %v6758 = vld [vmem:[#allocation5 + $0x5a0] sm:$0xff]
        %v6759 = vld [vmem:[#allocation5 + $0x5a8] sm:$0xff]
        %v6760 = vld [vmem:[#allocation5 + $0x5b0] sm:$0xff]
        %v6761 = vld [vmem:[#allocation5 + $0x5b8] sm:$0xff]
        %v6762 = vld [vmem:[#allocation5 + $0x5c0] sm:$0xff]
        %v6763 = vld [vmem:[#allocation5 + $0x5c8] sm:$0xff]
        %v6764 = vld [vmem:[#allocation5 + $0x5d0] sm:$0xff]
        %v6765 = vld [vmem:[#allocation5 + $0x5d8] sm:$0xff]
        %v6766 = vld [vmem:[#allocation5 + $0x5e0] sm:$0xff]
        %v6767 = vld [vmem:[#allocation5 + $0x5e8] sm:$0xff]
        %v6768 = vld [vmem:[#allocation5 + $0x5f0] sm:$0xff]
        %v6769 = vld [vmem:[#allocation5 + $0x5f8] sm:$0xff]
        %v6770 = vld [vmem:[#allocation5 + $0x600] sm:$0xff]
        %v6771 = vld [vmem:[#allocation5 + $0x608] sm:$0xff]
        %v6772 = vld [vmem:[#allocation5 + $0x610] sm:$0xff]
        %v6773 = vld [vmem:[#allocation5 + $0x618] sm:$0xff]
        %v6774 = vld [vmem:[#allocation5 + $0x620] sm:$0xff]
        %v6775 = vld [vmem:[#allocation5 + $0x628] sm:$0xff]
        %v6776 = vld [vmem:[#allocation5 + $0x630] sm:$0xff]
        %v6777 = vld [vmem:[#allocation5 + $0x638] sm:$0xff]
        %v6778 = vld [vmem:[#allocation5 + $0x640] sm:$0xff]
        %v6779 = vld [vmem:[#allocation5 + $0x648] sm:$0xff]
        %v6780 = vld [vmem:[#allocation5 + $0x650] sm:$0xff]
        %v6781 = vld [vmem:[#allocation5 + $0x658] sm:$0xff]
        %v6782 = vld [vmem:[#allocation5 + $0x660] sm:$0xff]
        %v6783 = vld [vmem:[#allocation5 + $0x668] sm:$0xff]
        %v6784 = vld [vmem:[#allocation5 + $0x670] sm:$0xff]
        %v6785 = vld [vmem:[#allocation5 + $0x678] sm:$0xff]
        %v6786 = vld [vmem:[#allocation5 + $0x680] sm:$0xff]
        %v6787 = vld [vmem:[#allocation5 + $0x688] sm:$0xff]
        %v6788 = vld [vmem:[#allocation5 + $0x690] sm:$0xff]
        %v6789 = vld [vmem:[#allocation5 + $0x698] sm:$0xff]
        %v6790 = vld [vmem:[#allocation5 + $0x6a0] sm:$0xff]
        %v6791 = vld [vmem:[#allocation5 + $0x6a8] sm:$0xff]
        %v6792 = vld [vmem:[#allocation5 + $0x6b0] sm:$0xff]
        %v6793 = vld [vmem:[#allocation5 + $0x6b8] sm:$0xff]
        %v6794 = vld [vmem:[#allocation5 + $0x6c0] sm:$0xff]
        %v6795 = vld [vmem:[#allocation5 + $0x6c8] sm:$0xff]
        %v6796 = vld [vmem:[#allocation5 + $0x6d0] sm:$0xff]
        %v6797 = vld [vmem:[#allocation5 + $0x6d8] sm:$0xff]
        %v6798 = vld [vmem:[#allocation5 + $0x6e0] sm:$0xff]
        %v6799 = vld [vmem:[#allocation5 + $0x6e8] sm:$0xff]
        %v6800 = vld [vmem:[#allocation5 + $0x6f0] sm:$0xff]
        %v6801 = vld [vmem:[#allocation5 + $0x6f8] sm:$0xff]
        %v6802 = vld [vmem:[#allocation5 + $0x700] sm:$0xff]
        %v6803 = vld [vmem:[#allocation5 + $0x708] sm:$0xff]
        %v6804 = vld [vmem:[#allocation5 + $0x710] sm:$0xff]
        %v6805 = vld [vmem:[#allocation5 + $0x718] sm:$0xff]
        %v6806 = vld [vmem:[#allocation5 + $0x720] sm:$0xff]
        %v6807 = vld [vmem:[#allocation5 + $0x728] sm:$0xff]
        %v6808 = vld [vmem:[#allocation5 + $0x730] sm:$0xff]
        %v6809 = vld [vmem:[#allocation5 + $0x738] sm:$0xff]
        %v6810 = vld [vmem:[#allocation5 + $0x740] sm:$0xff]
        %v6811 = vld [vmem:[#allocation5 + $0x748] sm:$0xff]
        %v6812 = vld [vmem:[#allocation5 + $0x750] sm:$0xff]
        %v6813 = vld [vmem:[#allocation5 + $0x758] sm:$0xff]
        %v6814 = vld [vmem:[#allocation5 + $0x760] sm:$0xff]
        %v6815 = vld [vmem:[#allocation5 + $0x768] sm:$0xff]
        %v6816 = vld [vmem:[#allocation5 + $0x770] sm:$0xff]
        %v6817 = vld [vmem:[#allocation5 + $0x778] sm:$0xff]
        %v6818 = vld [vmem:[#allocation5 + $0x780] sm:$0xff]
        %v6819 = vld [vmem:[#allocation5 + $0x788] sm:$0xff]
        %v6820 = vld [vmem:[#allocation5 + $0x790] sm:$0xff]
        %v6821 = vld [vmem:[%s5] sm:$0xff]
        %v6822 = vld [vmem:[%s5 + $0x8] sm:$0xff]
        %v6823 = vld [vmem:[%s5 + $0x10] sm:$0xff]
        %v6824 = vld [vmem:[%s5 + $0x18] sm:$0xff]
        %6826 = vset.pattern.permute.xlu0 0
        %6827 = vperm.xlu0 %6826, %v6821
        %v6828 = vpop.permute.xlu0 %6827
        %6831 = vset.pattern.permute.xlu0 0
        %6832 = vperm.xlu0 %6831, %v6822
        %v6833 = vpop.permute.xlu0 %6832
        %6836 = vset.pattern.permute.xlu0 0
        %6837 = vperm.xlu0 %6836, %v6823
        %v6838 = vpop.permute.xlu0 %6837
        %6841 = vset.pattern.permute.xlu0 0
        %6842 = vperm.xlu0 %6841, %v6824
        %v6843 = vpop.permute.xlu0 %6842
        %v6853 = vunpack.c.l.b16 %v6570
        %v6854 = vunpack.c.h.b16 %v6570
        %v6855 = vunpack.c.l.b16 %v6571
        %v6856 = vunpack.c.h.b16 %v6571
        %v6857 = vunpack.c.l.b16 %v6572
        %v6858 = vunpack.c.h.b16 %v6572
        %v6859 = vunpack.c.l.b16 %v6573
        %v6860 = vunpack.c.h.b16 %v6573
        %v6861 = vunpack.c.l.b16 %v6574
        %v6862 = vunpack.c.h.b16 %v6574
        %v6863 = vunpack.c.l.b16 %v6575
        %v6864 = vunpack.c.h.b16 %v6575
        %v6865 = vunpack.c.l.b16 %v6576
        %v6866 = vunpack.c.h.b16 %v6576
        %v6867 = vunpack.c.l.b16 %v6577
        %v6868 = vunpack.c.h.b16 %v6577
        %v6869 = vpack.c.b16 %v6857, %v6853
        %v6870 = vpack.c.b16 %v6858, %v6854
        %v6871 = vpack.c.b16 %v6859, %v6855
        %v6872 = vpack.c.b16 %v6860, %v6856
        %v6873 = vpack.c.b16 %v6865, %v6861
        %v6874 = vpack.c.b16 %v6866, %v6862
        %v6875 = vpack.c.b16 %v6867, %v6863
        %v6876 = vpack.c.b16 %v6868, %v6864
        %vm6883 = vcmask 392192
        %v6885 = vsel %vm6883, %v6872, 0
        %v6888 = vsel %vm6883, %v6876, 0
        %6890 = vmatprep.subr.bf16.mxu0 %v6579
        %6891 = vmatpush1.bf16.msra.mxu0 %v6578
        %6892 = vmatprep.subr.bf16.mxu0 %v6588
        %6893 = vmatpush1.bf16.msra.mxu0 %v6587
        %6894 = vmatprep.subr.bf16.mxu0 %v6597
        %6895 = vmatpush1.bf16.msra.mxu0 %v6596
        %6896 = vmatprep.subr.bf16.mxu0 %v6606
        %6897 = vmatpush1.bf16.msra.mxu0 %v6605
        %6898 = vmatprep.subr.bf16.mxu0 %v6615
        %6899 = vmatpush1.bf16.msra.mxu0 %v6614
        %6900 = vmatprep.subr.bf16.mxu0 %v6624
        %6901 = vmatpush1.bf16.msra.mxu0 %v6623
        %6902 = vmatprep.subr.bf16.mxu0 %v6633
        %6903 = vmatpush1.bf16.msra.mxu0 %v6632
        %6904 = vmatprep.subr.bf16.mxu0 %v6642
        %6905 = vmatpush1.bf16.msra.mxu0 %v6641
        %6906 = vmatprep.subr.bf16.mxu0 %v6651
        %6907 = vmatpush1.bf16.msra.mxu0 %v6650
        %6908 = vmatprep.subr.bf16.mxu0 %v6660
        %6909 = vmatpush1.bf16.msra.mxu0 %v6659
        %6910 = vmatprep.subr.bf16.mxu0 %v6669
        %6911 = vmatpush1.bf16.msra.mxu0 %v6668
        %6912 = vmatprep.subr.bf16.mxu0 %v6678
        %6913 = vmatpush1.bf16.msra.mxu0 %v6677
        %6914 = vmatprep.subr.bf16.mxu0 %v6687
        %6915 = vmatpush1.bf16.msra.mxu0 %v6686
        %6916 = vmatprep.subr.bf16.mxu0 %v6696
        %6917 = vmatpush1.bf16.msra.mxu0 %v6695
        %6918 = vmatprep.subr.bf16.mxu0 %v6705
        %6919 = vmatpush1.bf16.msra.mxu0 %v6704
        %6920 = vmatprep.subr.bf16.mxu0 %v6714
        %6921 = vmatpush1.bf16.msra.mxu0 %v6713
        %6922 = vmatprep.mubr.bf16.mxu0 %v6870
        %6923 = vmatmul.mubr.bf16.gmra.mrb[0].mxu0 %v6869
        %v6924 = vpop.f32.mrb[0].mxu0
        %v6925 = vadd.f32 %v6828, %v6924
        %v6926 = vpop.f32.mrb[0].mxu0
        %v6927 = vadd.f32 %v6828, %v6926
        %v6928 = vpop.f32.mrb[0].mxu0
        %v6929 = vadd.f32 %v6833, %v6928
        %v6930 = vpop.f32.mrb[0].mxu0
        %v6931 = vadd.f32 %v6833, %v6930
        %6932 = vmatprep.mubr.bf16.mxu0 %v6874
        %6933 = vmatmul.mubr.bf16.gmra.mrb[0].mxu0 %v6873
        %v6934 = vpop.f32.mrb[0].mxu0
        %v6935 = vadd.f32 %v6838, %v6934
        %v6936 = vpop.f32.mrb[0].mxu0
        %v6937 = vadd.f32 %v6838, %v6936
        %v6938 = vpop.f32.mrb[0].mxu0
        %v6939 = vadd.f32 %v6843, %v6938
        %v6940 = vpop.f32.mrb[0].mxu0
        %v6941 = vadd.f32 %v6843, %v6940
        %6942 = vdwg.mxu0
        %6943 = vmatprep.subr.bf16.mxu0 %v6723
        %6944 = vmatpush1.bf16.msra.mxu0 %v6722
        %6945 = vmatprep.subr.bf16.mxu0 %v6732
        %6946 = vmatpush1.bf16.msra.mxu0 %v6731
        %6947 = vmatprep.subr.bf16.mxu0 %v6741
        %6948 = vmatpush1.bf16.msra.mxu0 %v6740
        %6949 = vmatprep.subr.bf16.mxu0 %v6750
        %6950 = vmatpush1.bf16.msra.mxu0 %v6749
        %6951 = vmatprep.subr.bf16.mxu0 %v6759
        %6952 = vmatpush1.bf16.msra.mxu0 %v6758
        %6953 = vmatprep.subr.bf16.mxu0 %v6768
        %6954 = vmatpush1.bf16.msra.mxu0 %v6767
        %6955 = vmatprep.subr.bf16.mxu0 %v6777
        %6956 = vmatpush1.bf16.msra.mxu0 %v6776
        %6957 = vmatprep.subr.bf16.mxu0 %v6786
        %6958 = vmatpush1.bf16.msra.mxu0 %v6785
        %6959 = vmatprep.subr.bf16.mxu0 %v6795
        %6960 = vmatpush1.bf16.msra.mxu0 %v6794
        %6961 = vmatprep.subr.bf16.mxu0 %v6804
        %6962 = vmatpush1.bf16.msra.mxu0 %v6803
        %6963 = vmatprep.subr.bf16.mxu0 %v6813
        %6964 = vmatpush1.bf16.msra.mxu0 %v6812
        %6965 = vmatprep.subr.bf16.mxu0 0
        %6966 = vmatpush1.bf16.msra.mxu0 0
        %6967 = vmatprep.subr.bf16.mxu0 0
        %6968 = vmatpush1.bf16.msra.mxu0 0
        %6969 = vmatprep.subr.bf16.mxu0 0
        %6970 = vmatpush1.bf16.msra.mxu0 0
        %6971 = vmatprep.subr.bf16.mxu0 0
        %6972 = vmatpush1.bf16.msra.mxu0 0
        %6973 = vmatprep.subr.bf16.mxu0 0
        %6974 = vmatpush1.bf16.msra.mxu0 0
        %6975 = vmatprep.mubr.bf16.mxu0 %v6885
        %6976 = vmatmul.mubr.bf16.gmra.mrb[0].mxu0 %v6871
        %v6977 = vpop.f32.mrb[0].mxu0
        %v6978 = vadd.f32 %v6925, %v6977
        %v6979 = vpop.f32.mrb[0].mxu0
        %v6980 = vadd.f32 %v6927, %v6979
        %v6981 = vpop.f32.mrb[0].mxu0
        %v6982 = vadd.f32 %v6929, %v6981
        %v6983 = vpop.f32.mrb[0].mxu0
        %v6984 = vadd.f32 %v6931, %v6983
        %6985 = vmatprep.mubr.bf16.mxu0 %v6888
        %6986 = vmatmul.mubr.bf16.gmra.mrb[0].mxu0 %v6875
        %v6987 = vpop.f32.mrb[0].mxu0
        %v6988 = vadd.f32 %v6935, %v6987
        %v6989 = vpop.f32.mrb[0].mxu0
        %v6990 = vadd.f32 %v6937, %v6989
        %v6991 = vpop.f32.mrb[0].mxu0
        %v6992 = vadd.f32 %v6939, %v6991
        %v6993 = vpop.f32.mrb[0].mxu0
        %v6994 = vadd.f32 %v6941, %v6993
        %6995 = vdwg.mxu0
        %6996 = vmatprep.subr.bf16.mxu0 %v6581
        %6997 = vmatpush1.bf16.msra.mxu0 %v6580
        %6998 = vmatprep.subr.bf16.mxu0 %v6590
        %6999 = vmatpush1.bf16.msra.mxu0 %v6589
        %7000 = vmatprep.subr.bf16.mxu0 %v6599
        %7001 = vmatpush1.bf16.msra.mxu0 %v6598
        %7002 = vmatprep.subr.bf16.mxu0 %v6608
        %7003 = vmatpush1.bf16.msra.mxu0 %v6607
        %7004 = vmatprep.subr.bf16.mxu0 %v6617
        %7005 = vmatpush1.bf16.msra.mxu0 %v6616
        %7006 = vmatprep.subr.bf16.mxu0 %v6626
        %7007 = vmatpush1.bf16.msra.mxu0 %v6625
        %7008 = vmatprep.subr.bf16.mxu0 %v6635
        %7009 = vmatpush1.bf16.msra.mxu0 %v6634
        %7010 = vmatprep.subr.bf16.mxu0 %v6644
        %7011 = vmatpush1.bf16.msra.mxu0 %v6643
        %7012 = vmatprep.subr.bf16.mxu0 %v6653
        %7013 = vmatpush1.bf16.msra.mxu0 %v6652
        %7014 = vmatprep.subr.bf16.mxu0 %v6662
        %7015 = vmatpush1.bf16.msra.mxu0 %v6661
        %7016 = vmatprep.subr.bf16.mxu0 %v6671
        %7017 = vmatpush1.bf16.msra.mxu0 %v6670
        %7018 = vmatprep.subr.bf16.mxu0 %v6680
        %7019 = vmatpush1.bf16.msra.mxu0 %v6679
        %7020 = vmatprep.subr.bf16.mxu0 %v6689
        %7021 = vmatpush1.bf16.msra.mxu0 %v6688
        %7022 = vmatprep.subr.bf16.mxu0 %v6698
        %7023 = vmatpush1.bf16.msra.mxu0 %v6697
        %7024 = vmatprep.subr.bf16.mxu0 %v6707
        %7025 = vmatpush1.bf16.msra.mxu0 %v6706
        %7026 = vmatprep.subr.bf16.mxu0 %v6716
        %7027 = vmatpush1.bf16.msra.mxu0 %v6715
        %7028 = vmatprep.mubr.bf16.mxu0 %v6870
        %7029 = vmatmul.mubr.bf16.gmra.mrb[0].mxu0 %v6869
        %v7030 = vpop.f32.mrb[0].mxu0
        %v7031 = vadd.f32 %v6828, %v7030
        %v7032 = vpop.f32.mrb[0].mxu0
        %v7033 = vadd.f32 %v6828, %v7032
        %v7034 = vpop.f32.mrb[0].mxu0
        %v7035 = vadd.f32 %v6833, %v7034
        %v7036 = vpop.f32.mrb[0].mxu0
        %v7037 = vadd.f32 %v6833, %v7036
        %7038 = vmatprep.mubr.bf16.mxu0 %v6874
        %7039 = vmatmul.mubr.bf16.gmra.mrb[0].mxu0 %v6873
        %v7040 = vpop.f32.mrb[0].mxu0
        %v7041 = vadd.f32 %v6838, %v7040
        %v7042 = vpop.f32.mrb[0].mxu0
        %v7043 = vadd.f32 %v6838, %v7042
        %v7044 = vpop.f32.mrb[0].mxu0
        %v7045 = vadd.f32 %v6843, %v7044
        %v7046 = vpop.f32.mrb[0].mxu0
        %v7047 = vadd.f32 %v6843, %v7046
        %7048 = vdwg.mxu0
        %7049 = vmatprep.subr.bf16.mxu0 %v6725
        %7050 = vmatpush1.bf16.msra.mxu0 %v6724
        %7051 = vmatprep.subr.bf16.mxu0 %v6734
        %7052 = vmatpush1.bf16.msra.mxu0 %v6733
        %7053 = vmatprep.subr.bf16.mxu0 %v6743
        %7054 = vmatpush1.bf16.msra.mxu0 %v6742
        %7055 = vmatprep.subr.bf16.mxu0 %v6752
        %7056 = vmatpush1.bf16.msra.mxu0 %v6751
        %7057 = vmatprep.subr.bf16.mxu0 %v6761
        %7058 = vmatpush1.bf16.msra.mxu0 %v6760
        %7059 = vmatprep.subr.bf16.mxu0 %v6770
        %7060 = vmatpush1.bf16.msra.mxu0 %v6769
        %7061 = vmatprep.subr.bf16.mxu0 %v6779
        %7062 = vmatpush1.bf16.msra.mxu0 %v6778
        %7063 = vmatprep.subr.bf16.mxu0 %v6788
        %7064 = vmatpush1.bf16.msra.mxu0 %v6787
        %7065 = vmatprep.subr.bf16.mxu0 %v6797
        %7066 = vmatpush1.bf16.msra.mxu0 %v6796
        %7067 = vmatprep.subr.bf16.mxu0 %v6806
        %7068 = vmatpush1.bf16.msra.mxu0 %v6805
        %7069 = vmatprep.subr.bf16.mxu0 %v6815
        %7070 = vmatpush1.bf16.msra.mxu0 %v6814
        %7071 = vmatprep.subr.bf16.mxu0 0
        %7072 = vmatpush1.bf16.msra.mxu0 0
        %7073 = vmatprep.subr.bf16.mxu0 0
        %7074 = vmatpush1.bf16.msra.mxu0 0
        %7075 = vmatprep.subr.bf16.mxu0 0
        %7076 = vmatpush1.bf16.msra.mxu0 0
        %7077 = vmatprep.subr.bf16.mxu0 0
        %7078 = vmatpush1.bf16.msra.mxu0 0
        %7079 = vmatprep.subr.bf16.mxu0 0
        %7080 = vmatpush1.bf16.msra.mxu0 0
        %7081 = vmatprep.mubr.bf16.mxu0 %v6885
        %7082 = vmatmul.mubr.bf16.gmra.mrb[0].mxu0 %v6871
        %v7083 = vpop.f32.mrb[0].mxu0
        %v7084 = vadd.f32 %v7031, %v7083
        %v7085 = vpop.f32.mrb[0].mxu0
        %v7086 = vadd.f32 %v7033, %v7085
        %v7087 = vpop.f32.mrb[0].mxu0
        %v7088 = vadd.f32 %v7035, %v7087
        %v7089 = vpop.f32.mrb[0].mxu0
        %v7090 = vadd.f32 %v7037, %v7089
        %7091 = vmatprep.mubr.bf16.mxu0 %v6888
        %7092 = vmatmul.mubr.bf16.gmra.mrb[0].mxu0 %v6875
        %v7093 = vpop.f32.mrb[0].mxu0
        %v7094 = vadd.f32 %v7041, %v7093
        %v7095 = vpop.f32.mrb[0].mxu0
        %v7096 = vadd.f32 %v7043, %v7095
        %v7097 = vpop.f32.mrb[0].mxu0
        %v7098 = vadd.f32 %v7045, %v7097
        %v7099 = vpop.f32.mrb[0].mxu0
        %v7100 = vadd.f32 %v7047, %v7099
        %7101 = vdwg.mxu0
        %7102 = vmatprep.subr.bf16.mxu0 %v6583
        %7103 = vmatpush1.bf16.msra.mxu0 %v6582
        %7104 = vmatprep.subr.bf16.mxu0 %v6592
        %7105 = vmatpush1.bf16.msra.mxu0 %v6591
        %7106 = vmatprep.subr.bf16.mxu0 %v6601
        %7107 = vmatpush1.bf16.msra.mxu0 %v6600
        %7108 = vmatprep.subr.bf16.mxu0 %v6610
        %7109 = vmatpush1.bf16.msra.mxu0 %v6609
        %7110 = vmatprep.subr.bf16.mxu0 %v6619
        %7111 = vmatpush1.bf16.msra.mxu0 %v6618
        %7112 = vmatprep.subr.bf16.mxu0 %v6628
        %7113 = vmatpush1.bf16.msra.mxu0 %v6627
        %7114 = vmatprep.subr.bf16.mxu0 %v6637
        %7115 = vmatpush1.bf16.msra.mxu0 %v6636
        %7116 = vmatprep.subr.bf16.mxu0 %v6646
        %7117 = vmatpush1.bf16.msra.mxu0 %v6645
        %7118 = vmatprep.subr.bf16.mxu0 %v6655
        %7119 = vmatpush1.bf16.msra.mxu0 %v6654
        %7120 = vmatprep.subr.bf16.mxu0 %v6664
        %7121 = vmatpush1.bf16.msra.mxu0 %v6663
        %7122 = vmatprep.subr.bf16.mxu0 %v6673
        %7123 = vmatpush1.bf16.msra.mxu0 %v6672
        %7124 = vmatprep.subr.bf16.mxu0 %v6682
        %7125 = vmatpush1.bf16.msra.mxu0 %v6681
        %7126 = vmatprep.subr.bf16.mxu0 %v6691
        %7127 = vmatpush1.bf16.msra.mxu0 %v6690
        %7128 = vmatprep.subr.bf16.mxu0 %v6700
        %7129 = vmatpush1.bf16.msra.mxu0 %v6699
        %7130 = vmatprep.subr.bf16.mxu0 %v6709
        %7131 = vmatpush1.bf16.msra.mxu0 %v6708
        %7132 = vmatprep.subr.bf16.mxu0 %v6718
        %7133 = vmatpush1.bf16.msra.mxu0 %v6717
        %7134 = vmatprep.mubr.bf16.mxu0 %v6870
        %7135 = vmatmul.mubr.bf16.gmra.mrb[0].mxu0 %v6869
        %v7136 = vpop.f32.mrb[0].mxu0
        %v7137 = vadd.f32 %v6828, %v7136
        %v7138 = vpop.f32.mrb[0].mxu0
        %v7139 = vadd.f32 %v6828, %v7138
        %v7140 = vpop.f32.mrb[0].mxu0
        %v7141 = vadd.f32 %v6833, %v7140
        %v7142 = vpop.f32.mrb[0].mxu0
        %v7143 = vadd.f32 %v6833, %v7142
        %7144 = vmatprep.mubr.bf16.mxu0 %v6874
        %7145 = vmatmul.mubr.bf16.gmra.mrb[0].mxu0 %v6873
        %v7146 = vpop.f32.mrb[0].mxu0
        %v7147 = vadd.f32 %v6838, %v7146
        %v7148 = vpop.f32.mrb[0].mxu0
        %v7149 = vadd.f32 %v6838, %v7148
        %v7150 = vpop.f32.mrb[0].mxu0
        %v7151 = vadd.f32 %v6843, %v7150
        %v7152 = vpop.f32.mrb[0].mxu0
        %v7153 = vadd.f32 %v6843, %v7152
        %7154 = vdwg.mxu0
        %7155 = vmatprep.subr.bf16.mxu0 %v6727
        %7156 = vmatpush1.bf16.msra.mxu0 %v6726
        %7157 = vmatprep.subr.bf16.mxu0 %v6736
        %7158 = vmatpush1.bf16.msra.mxu0 %v6735
        %7159 = vmatprep.subr.bf16.mxu0 %v6745
        %7160 = vmatpush1.bf16.msra.mxu0 %v6744
        %7161 = vmatprep.subr.bf16.mxu0 %v6754
        %7162 = vmatpush1.bf16.msra.mxu0 %v6753
        %7163 = vmatprep.subr.bf16.mxu0 %v6763
        %7164 = vmatpush1.bf16.msra.mxu0 %v6762
        %7165 = vmatprep.subr.bf16.mxu0 %v6772
        %7166 = vmatpush1.bf16.msra.mxu0 %v6771
        %7167 = vmatprep.subr.bf16.mxu0 %v6781
        %7168 = vmatpush1.bf16.msra.mxu0 %v6780
        %7169 = vmatprep.subr.bf16.mxu0 %v6790
        %7170 = vmatpush1.bf16.msra.mxu0 %v6789
        %7171 = vmatprep.subr.bf16.mxu0 %v6799
        %7172 = vmatpush1.bf16.msra.mxu0 %v6798
        %7173 = vmatprep.subr.bf16.mxu0 %v6808
        %7174 = vmatpush1.bf16.msra.mxu0 %v6807
        %7175 = vmatprep.subr.bf16.mxu0 %v6817
        %7176 = vmatpush1.bf16.msra.mxu0 %v6816
        %7177 = vmatprep.subr.bf16.mxu0 0
        %7178 = vmatpush1.bf16.msra.mxu0 0
        %7179 = vmatprep.subr.bf16.mxu0 0
        %7180 = vmatpush1.bf16.msra.mxu0 0
        %7181 = vmatprep.subr.bf16.mxu0 0
        %7182 = vmatpush1.bf16.msra.mxu0 0
        %7183 = vmatprep.subr.bf16.mxu0 0
        %7184 = vmatpush1.bf16.msra.mxu0 0
        %7185 = vmatprep.subr.bf16.mxu0 0
        %7186 = vmatpush1.bf16.msra.mxu0 0
        %7187 = vmatprep.mubr.bf16.mxu0 %v6885
        %7188 = vmatmul.mubr.bf16.gmra.mrb[0].mxu0 %v6871
        %v7189 = vpop.f32.mrb[0].mxu0
        %v7190 = vadd.f32 %v7137, %v7189
        %v7191 = vpop.f32.mrb[0].mxu0
        %v7192 = vadd.f32 %v7139, %v7191
        %v7193 = vpop.f32.mrb[0].mxu0
        %v7194 = vadd.f32 %v7141, %v7193
        %v7195 = vpop.f32.mrb[0].mxu0
        %v7196 = vadd.f32 %v7143, %v7195
        %7197 = vmatprep.mubr.bf16.mxu0 %v6888
        %7198 = vmatmul.mubr.bf16.gmra.mrb[0].mxu0 %v6875
        %v7199 = vpop.f32.mrb[0].mxu0
        %v7200 = vadd.f32 %v7147, %v7199
        %v7201 = vpop.f32.mrb[0].mxu0
        %v7202 = vadd.f32 %v7149, %v7201
        %v7203 = vpop.f32.mrb[0].mxu0
        %v7204 = vadd.f32 %v7151, %v7203
        %v7205 = vpop.f32.mrb[0].mxu0
        %v7206 = vadd.f32 %v7153, %v7205
        %7207 = vdwg.mxu0
        %7208 = vmatprep.subr.bf16.mxu0 %v6585
        %7209 = vmatpush1.bf16.msra.mxu0 %v6584
        %7210 = vmatprep.subr.bf16.mxu0 %v6594
        %7211 = vmatpush1.bf16.msra.mxu0 %v6593
        %7212 = vmatprep.subr.bf16.mxu0 %v6603
        %7213 = vmatpush1.bf16.msra.mxu0 %v6602
        %7214 = vmatprep.subr.bf16.mxu0 %v6612
        %7215 = vmatpush1.bf16.msra.mxu0 %v6611
        %7216 = vmatprep.subr.bf16.mxu0 %v6621
        %7217 = vmatpush1.bf16.msra.mxu0 %v6620
        %7218 = vmatprep.subr.bf16.mxu0 %v6630
        %7219 = vmatpush1.bf16.msra.mxu0 %v6629
        %7220 = vmatprep.subr.bf16.mxu0 %v6639
        %7221 = vmatpush1.bf16.msra.mxu0 %v6638
        %7222 = vmatprep.subr.bf16.mxu0 %v6648
        %7223 = vmatpush1.bf16.msra.mxu0 %v6647
        %7224 = vmatprep.subr.bf16.mxu0 %v6657
        %7225 = vmatpush1.bf16.msra.mxu0 %v6656
        %7226 = vmatprep.subr.bf16.mxu0 %v6666
        %7227 = vmatpush1.bf16.msra.mxu0 %v6665
        %7228 = vmatprep.subr.bf16.mxu0 %v6675
        %7229 = vmatpush1.bf16.msra.mxu0 %v6674
        %7230 = vmatprep.subr.bf16.mxu0 %v6684
        %7231 = vmatpush1.bf16.msra.mxu0 %v6683
        %7232 = vmatprep.subr.bf16.mxu0 %v6693
        %7233 = vmatpush1.bf16.msra.mxu0 %v6692
        %7234 = vmatprep.subr.bf16.mxu0 %v6702
        %7235 = vmatpush1.bf16.msra.mxu0 %v6701
        %7236 = vmatprep.subr.bf16.mxu0 %v6711
        %7237 = vmatpush1.bf16.msra.mxu0 %v6710
        %7238 = vmatprep.subr.bf16.mxu0 %v6720
        %7239 = vmatpush1.bf16.msra.mxu0 %v6719
        %7240 = vmatprep.mubr.bf16.mxu0 %v6870
        %7241 = vmatmul.mubr.bf16.gmra.mrb[0].mxu0 %v6869
        %v7242 = vpop.f32.mrb[0].mxu0
        %v7243 = vadd.f32 %v6828, %v7242
        %v7244 = vpop.f32.mrb[0].mxu0
        %v7245 = vadd.f32 %v6828, %v7244
        %v7246 = vpop.f32.mrb[0].mxu0
        %v7247 = vadd.f32 %v6833, %v7246
        %v7248 = vpop.f32.mrb[0].mxu0
        %v7249 = vadd.f32 %v6833, %v7248
        %7250 = vmatprep.mubr.bf16.mxu0 %v6874
        %7251 = vmatmul.mubr.bf16.gmra.mrb[0].mxu0 %v6873
        %v7252 = vpop.f32.mrb[0].mxu0
        %v7253 = vadd.f32 %v6838, %v7252
        %v7254 = vpop.f32.mrb[0].mxu0
        %v7255 = vadd.f32 %v6838, %v7254
        %v7256 = vpop.f32.mrb[0].mxu0
        %v7257 = vadd.f32 %v6843, %v7256
        %v7258 = vpop.f32.mrb[0].mxu0
        %v7259 = vadd.f32 %v6843, %v7258
        %7260 = vdwg.mxu0
        %7261 = vmatprep.subr.bf16.mxu0 %v6729
        %7262 = vmatpush1.bf16.msra.mxu0 %v6728
        %7263 = vmatprep.subr.bf16.mxu0 %v6738
        %7264 = vmatpush1.bf16.msra.mxu0 %v6737
        %7265 = vmatprep.subr.bf16.mxu0 %v6747
        %7266 = vmatpush1.bf16.msra.mxu0 %v6746
        %7267 = vmatprep.subr.bf16.mxu0 %v6756
        %7268 = vmatpush1.bf16.msra.mxu0 %v6755
        %7269 = vmatprep.subr.bf16.mxu0 %v6765
        %7270 = vmatpush1.bf16.msra.mxu0 %v6764
        %7271 = vmatprep.subr.bf16.mxu0 %v6774
        %7272 = vmatpush1.bf16.msra.mxu0 %v6773
        %7273 = vmatprep.subr.bf16.mxu0 %v6783
        %7274 = vmatpush1.bf16.msra.mxu0 %v6782
        %7275 = vmatprep.subr.bf16.mxu0 %v6792
        %7276 = vmatpush1.bf16.msra.mxu0 %v6791
        %7277 = vmatprep.subr.bf16.mxu0 %v6801
        %7278 = vmatpush1.bf16.msra.mxu0 %v6800
        %7279 = vmatprep.subr.bf16.mxu0 %v6810
        %7280 = vmatpush1.bf16.msra.mxu0 %v6809
        %7281 = vmatprep.subr.bf16.mxu0 %v6819
        %7282 = vmatpush1.bf16.msra.mxu0 %v6818
        %7283 = vmatprep.subr.bf16.mxu0 0
        %7284 = vmatpush1.bf16.msra.mxu0 0
        %7285 = vmatprep.subr.bf16.mxu0 0
        %7286 = vmatpush1.bf16.msra.mxu0 0
        %7287 = vmatprep.subr.bf16.mxu0 0
        %7288 = vmatpush1.bf16.msra.mxu0 0
        %7289 = vmatprep.subr.bf16.mxu0 0
        %7290 = vmatpush1.bf16.msra.mxu0 0
        %7291 = vmatprep.subr.bf16.mxu0 0
        %7292 = vmatpush1.bf16.msra.mxu0 0
        %7293 = vmatprep.mubr.bf16.mxu0 %v6885
        %7294 = vmatmul.mubr.bf16.gmra.mrb[0].mxu0 %v6871
        %v7295 = vpop.f32.mrb[0].mxu0
        %v7296 = vadd.f32 %v7243, %v7295
        %v7297 = vpop.f32.mrb[0].mxu0
        %v7298 = vadd.f32 %v7245, %v7297
        %v7299 = vpop.f32.mrb[0].mxu0
        %v7300 = vadd.f32 %v7247, %v7299
        %v7301 = vpop.f32.mrb[0].mxu0
        %v7302 = vadd.f32 %v7249, %v7301
        %7303 = vmatprep.mubr.bf16.mxu0 %v6888
        %7304 = vmatmul.mubr.bf16.gmra.mrb[0].mxu0 %v6875
        %v7305 = vpop.f32.mrb[0].mxu0
        %v7306 = vadd.f32 %v7253, %v7305
        %v7307 = vpop.f32.mrb[0].mxu0
        %v7308 = vadd.f32 %v7255, %v7307
        %v7309 = vpop.f32.mrb[0].mxu0
        %v7310 = vadd.f32 %v7257, %v7309
        %v7311 = vpop.f32.mrb[0].mxu0
        %v7312 = vadd.f32 %v7259, %v7311
        %7313 = vdwg.mxu0
        %7314 = vmatprep.subr.bf16.mxu0 0
        %7315 = vmatpush1.bf16.msra.mxu0 %v6586
        %7316 = vmatprep.subr.bf16.mxu0 0
        %7317 = vmatpush1.bf16.msra.mxu0 %v6595
        %7318 = vmatprep.subr.bf16.mxu0 0
        %7319 = vmatpush1.bf16.msra.mxu0 %v6604
        %7320 = vmatprep.subr.bf16.mxu0 0
        %7321 = vmatpush1.bf16.msra.mxu0 %v6613
        %7322 = vmatprep.subr.bf16.mxu0 0
        %7323 = vmatpush1.bf16.msra.mxu0 %v6622
        %7324 = vmatprep.subr.bf16.mxu0 0
        %7325 = vmatpush1.bf16.msra.mxu0 %v6631
        %7326 = vmatprep.subr.bf16.mxu0 0
        %7327 = vmatpush1.bf16.msra.mxu0 %v6640
        %7328 = vmatprep.subr.bf16.mxu0 0
        %7329 = vmatpush1.bf16.msra.mxu0 %v6649
        %7330 = vmatprep.subr.bf16.mxu0 0
        %7331 = vmatpush1.bf16.msra.mxu0 %v6658
        %7332 = vmatprep.subr.bf16.mxu0 0
        %7333 = vmatpush1.bf16.msra.mxu0 %v6667
        %7334 = vmatprep.subr.bf16.mxu0 0
        %7335 = vmatpush1.bf16.msra.mxu0 %v6676
        %7336 = vmatprep.subr.bf16.mxu0 0
        %7337 = vmatpush1.bf16.msra.mxu0 %v6685
        %7338 = vmatprep.subr.bf16.mxu0 0
        %7339 = vmatpush1.bf16.msra.mxu0 %v6694
        %7340 = vmatprep.subr.bf16.mxu0 0
        %7341 = vmatpush1.bf16.msra.mxu0 %v6703
        %7342 = vmatprep.subr.bf16.mxu0 0
        %7343 = vmatpush1.bf16.msra.mxu0 %v6712
        %7344 = vmatprep.subr.bf16.mxu0 0
        %7345 = vmatpush1.bf16.msra.mxu0 %v6721
        %7346 = vmatprep.mubr.bf16.mxu0 %v6870
        %7347 = vmatmul.mubr.bf16.gmra.mrb[0].mxu0 %v6869
        %v7348 = vpop.f32.mrb[0].mxu0
        %v7349 = vadd.f32 %v6828, %v7348
        %v7350 = vpop.f32.mrb[0].mxu0
        %v7351 = vpop.f32.mrb[0].mxu0
        %v7352 = vadd.f32 %v6833, %v7351
        %v7353 = vpop.f32.mrb[0].mxu0
        %7354 = vmatprep.mubr.bf16.mxu0 %v6874
        %7355 = vmatmul.mubr.bf16.gmra.mrb[0].mxu0 %v6873
        %v7356 = vpop.f32.mrb[0].mxu0
        %v7357 = vadd.f32 %v6838, %v7356
        %v7358 = vpop.f32.mrb[0].mxu0
        %v7359 = vpop.f32.mrb[0].mxu0
        %v7360 = vadd.f32 %v6843, %v7359
        %v7361 = vpop.f32.mrb[0].mxu0
        %7362 = vdwg.mxu0
        %7363 = vmatprep.subr.bf16.mxu0 0
        %7364 = vmatpush1.bf16.msra.mxu0 %v6730
        %7365 = vmatprep.subr.bf16.mxu0 0
        %7366 = vmatpush1.bf16.msra.mxu0 %v6739
        %7367 = vmatprep.subr.bf16.mxu0 0
        %7368 = vmatpush1.bf16.msra.mxu0 %v6748
        %7369 = vmatprep.subr.bf16.mxu0 0
        %7370 = vmatpush1.bf16.msra.mxu0 %v6757
        %7371 = vmatprep.subr.bf16.mxu0 0
        %7372 = vmatpush1.bf16.msra.mxu0 %v6766
        %7373 = vmatprep.subr.bf16.mxu0 0
        %7374 = vmatpush1.bf16.msra.mxu0 %v6775
        %7375 = vmatprep.subr.bf16.mxu0 0
        %7376 = vmatpush1.bf16.msra.mxu0 %v6784
        %7377 = vmatprep.subr.bf16.mxu0 0
        %7378 = vmatpush1.bf16.msra.mxu0 %v6793
        %7379 = vmatprep.subr.bf16.mxu0 0
        %7380 = vmatpush1.bf16.msra.mxu0 %v6802
        %7381 = vmatprep.subr.bf16.mxu0 0
        %7382 = vmatpush1.bf16.msra.mxu0 %v6811
        %7383 = vmatprep.subr.bf16.mxu0 0
        %7384 = vmatpush1.bf16.msra.mxu0 %v6820
        %7385 = vmatprep.subr.bf16.mxu0 0
        %7386 = vmatpush1.bf16.msra.mxu0 0
        %7387 = vmatprep.subr.bf16.mxu0 0
        %7388 = vmatpush1.bf16.msra.mxu0 0
        %7389 = vmatprep.subr.bf16.mxu0 0
        %7390 = vmatpush1.bf16.msra.mxu0 0
        %7391 = vmatprep.subr.bf16.mxu0 0
        %7392 = vmatpush1.bf16.msra.mxu0 0
        %7393 = vmatprep.subr.bf16.mxu0 0
        %7394 = vmatpush1.bf16.msra.mxu0 0
        %7395 = vmatprep.mubr.bf16.mxu0 %v6885
        %7396 = vmatmul.mubr.bf16.gmra.mrb[0].mxu0 %v6871
        %v7397 = vpop.f32.mrb[0].mxu0
        %v7398 = vadd.f32 %v7349, %v7397
        %v7399 = vpop.f32.mrb[0].mxu0
        %v7400 = vpop.f32.mrb[0].mxu0
        %v7401 = vadd.f32 %v7352, %v7400
        %v7402 = vpop.f32.mrb[0].mxu0
        %7403 = vmatprep.mubr.bf16.mxu0 %v6888
        %7404 = vmatmul.mubr.bf16.gmra.mrb[0].mxu0 %v6875
        %v7405 = vpop.f32.mrb[0].mxu0
        %v7406 = vadd.f32 %v7357, %v7405
        %v7407 = vpop.f32.mrb[0].mxu0
        %v7408 = vpop.f32.mrb[0].mxu0
        %v7409 = vadd.f32 %v7360, %v7408
        %v7410 = vpop.f32.mrb[0].mxu0
        %7411 = vdwg.mxu0
        %v7412 = vmax.f32 %v6978, 0.0
        %v7413 = vmax.f32 %v6980, 0.0
        %v7414 = vmax.f32 %v7084, 0.0
        %v7415 = vmax.f32 %v7086, 0.0
        %v7416 = vmax.f32 %v7190, 0.0
        %v7417 = vmax.f32 %v7192, 0.0
        %v7418 = vmax.f32 %v7296, 0.0
        %v7419 = vmax.f32 %v7298, 0.0
        %v7420 = vmax.f32 %v7398, 0.0
        %v7421 = vmax.f32 %v6982, 0.0
        %v7422 = vmax.f32 %v6984, 0.0
        %v7423 = vmax.f32 %v7088, 0.0
        %v7424 = vmax.f32 %v7090, 0.0
        %v7425 = vmax.f32 %v7194, 0.0
        %v7426 = vmax.f32 %v7196, 0.0
        %v7427 = vmax.f32 %v7300, 0.0
        %v7428 = vmax.f32 %v7302, 0.0
        %v7429 = vmax.f32 %v7401, 0.0
        %v7430 = vmax.f32 %v6988, 0.0
        %v7431 = vmax.f32 %v6990, 0.0
        %v7432 = vmax.f32 %v7094, 0.0
        %v7433 = vmax.f32 %v7096, 0.0
        %v7434 = vmax.f32 %v7200, 0.0
        %v7435 = vmax.f32 %v7202, 0.0
        %v7436 = vmax.f32 %v7306, 0.0
        %v7437 = vmax.f32 %v7308, 0.0
        %v7438 = vmax.f32 %v7406, 0.0
        %v7439 = vmax.f32 %v6992, 0.0
        %v7440 = vmax.f32 %v6994, 0.0
        %v7441 = vmax.f32 %v7098, 0.0
        %v7442 = vmax.f32 %v7100, 0.0
        %v7443 = vmax.f32 %v7204, 0.0
        %v7444 = vmax.f32 %v7206, 0.0
        %v7445 = vmax.f32 %v7310, 0.0
        %v7446 = vmax.f32 %v7312, 0.0
        %v7447 = vmax.f32 %v7409, 0.0
        %v7448 = vadd.f32 %v7412, %v7413
        %v7449 = vadd.f32 %v7448, %v7414
        %v7450 = vadd.f32 %v7449, %v7415
        %v7451 = vadd.f32 %v7450, %v7416
        %v7452 = vadd.f32 %v7451, %v7417
        %v7453 = vadd.f32 %v7452, %v7418
        %v7454 = vadd.f32 %v7453, %v7419
        %v7455 = vadd.f32 %v7454, %v7420
        %7456 = vadd.xlane.f32.xlu0 %v7455
        %v7457 = vpop.xlane.xlu0 %7456
        %v7458 = vadd.f32 %v7421, %v7422
        %v7459 = vadd.f32 %v7458, %v7423
        %v7460 = vadd.f32 %v7459, %v7424
        %v7461 = vadd.f32 %v7460, %v7425
        %v7462 = vadd.f32 %v7461, %v7426
        %v7463 = vadd.f32 %v7462, %v7427
        %v7464 = vadd.f32 %v7463, %v7428
        %v7465 = vadd.f32 %v7464, %v7429
        %7466 = vadd.xlane.f32.xlu0 %v7465
        %v7467 = vpop.xlane.xlu0 %7466
        %v7468 = vadd.f32 %v7430, %v7431
        %v7469 = vadd.f32 %v7468, %v7432
        %v7470 = vadd.f32 %v7469, %v7433
        %v7471 = vadd.f32 %v7470, %v7434
        %v7472 = vadd.f32 %v7471, %v7435
        %v7473 = vadd.f32 %v7472, %v7436
        %v7474 = vadd.f32 %v7473, %v7437
        %v7475 = vadd.f32 %v7474, %v7438
        %7476 = vadd.xlane.f32.xlu0 %v7475
        %v7477 = vpop.xlane.xlu0 %7476
        %v7478 = vadd.f32 %v7439, %v7440
        %v7479 = vadd.f32 %v7478, %v7441
        %v7480 = vadd.f32 %v7479, %v7442
        %v7481 = vadd.f32 %v7480, %v7443
        %v7482 = vadd.f32 %v7481, %v7444
        %v7483 = vadd.f32 %v7482, %v7445
        %v7484 = vadd.f32 %v7483, %v7446
        %v7485 = vadd.f32 %v7484, %v7447
        %7486 = vadd.xlane.f32.xlu0 %v7485
        %v7487 = vpop.xlane.xlu0 %7486
        %v7488 = vmul.f32 %v7457, 0.00086805556
        %v7489 = vmul.f32 %v7467, 0.00086805556
        %v7490 = vmul.f32 %v7477, 0.00086805556
        %v7491 = vmul.f32 %v7487, 0.00086805556
        %v7492 = vld [vmem:[%s6] sm:$0xff]
        %v7493 = vld [vmem:[%s6 + $0x8] sm:$0xff]
        %v7494 = vld [vmem:[%s6 + $0x10] sm:$0xff]
        %v7495 = vld [vmem:[%s6 + $0x18] sm:$0xff]
        %v7496 = vld [vmem:[%s7] sm:$0xff]
        %v7497 = vld [vmem:[%s7 + $0x8] sm:$0xff]
        %v7498 = vld [vmem:[%s7 + $0x10] sm:$0xff]
        %v7499 = vld [vmem:[%s7 + $0x18] sm:$0xff]
        %v7501 = vsel %vm443, %v7492, 0
        %v7504 = vsel %vm443, %v7493, 0
        %v7507 = vsel %vm443, %v7494, 0
        %v7510 = vsel %vm443, %v7495, 0
        %7512 = vmatprep.subr.mxu0 0.0
        %7513 = vmatpush1.msra.mxu0 %v7488
        %7514 = vmatprep.subr.mxu0 0.0
        %7515 = vmatpush1.msra.mxu0 %v7489
        %7516 = vmatprep.subr.mxu0 0.0
        %7517 = vmatpush1.msra.mxu0 %v7490
        %7518 = vmatprep.subr.mxu0 0.0
        %7519 = vmatpush1.msra.mxu0 %v7491
        %7520 = vmatprep.subr.mxu0 0.0
        %7521 = vmatpush1.msra.mxu0 0.0
        %7522 = vmatprep.subr.mxu0 0.0
        %7523 = vmatpush1.msra.mxu0 0.0
        %7524 = vmatprep.subr.mxu0 0.0
        %7525 = vmatpush1.msra.mxu0 0.0
        %7526 = vmatprep.subr.mxu0 0.0
        %7527 = vmatpush1.msra.mxu0 0.0
        %7528 = vmatprep.subr.mxu0 0.0
        %7529 = vmatpush1.msra.mxu0 0.0
        %7530 = vmatprep.subr.mxu0 0.0
        %7531 = vmatpush1.msra.mxu0 0.0
        %7532 = vmatprep.subr.mxu0 0.0
        %7533 = vmatpush1.msra.mxu0 0.0
        %7534 = vmatprep.subr.mxu0 0.0
        %7535 = vmatpush1.msra.mxu0 0.0
        %7536 = vmatprep.subr.mxu0 0.0
        %7537 = vmatpush1.msra.mxu0 0.0
        %7538 = vmatprep.subr.mxu0 0.0
        %7539 = vmatpush1.msra.mxu0 0.0
        %7540 = vmatprep.subr.mxu0 0.0
        %7541 = vmatpush1.msra.mxu0 0.0
        %7542 = vmatprep.subr.mxu0 0.0
        %7543 = vmatpush1.msra.mxu0 0.0
        %7544 = vmatprep.subr.mxu0 0.0
        %7545 = vmatpush1.msra.mxu0 0.0
        %7546 = vmatprep.subr.mxu0 0.0
        %7547 = vmatpush1.msra.mxu0 0.0
        %7548 = vmatprep.subr.mxu0 0.0
        %7549 = vmatpush1.msra.mxu0 0.0
        %7550 = vmatprep.subr.mxu0 0.0
        %7551 = vmatpush1.msra.mxu0 0.0
        %7552 = vmatprep.subr.mxu0 0.0
        %7553 = vmatpush1.msra.mxu0 0.0
        %7554 = vmatprep.subr.mxu0 0.0
        %7555 = vmatpush1.msra.mxu0 0.0
        %7556 = vmatprep.subr.mxu0 0.0
        %7557 = vmatpush1.msra.mxu0 0.0
        %7558 = vmatprep.subr.mxu0 0.0
        %7559 = vmatpush1.msra.mxu0 0.0
        %7560 = vmatprep.subr.mxu0 0.0
        %7561 = vmatpush1.msra.mxu0 0.0
        %7562 = vmatprep.subr.mxu0 0.0
        %7563 = vmatpush1.msra.mxu0 0.0
        %7564 = vmatprep.subr.mxu0 0.0
        %7565 = vmatpush1.msra.mxu0 0.0
        %7566 = vmatprep.subr.mxu0 0.0
        %7567 = vmatpush1.msra.mxu0 0.0
        %7568 = vmatprep.subr.mxu0 0.0
        %7569 = vmatpush1.msra.mxu0 0.0
        %7570 = vmatprep.subr.mxu0 0.0
        %7571 = vmatpush1.msra.mxu0 0.0
        %7572 = vmatprep.subr.mxu0 0.0
        %7573 = vmatpush1.msra.mxu0 0.0
        %7574 = vmatprep.subr.mxu0 0.0
        %7575 = vmatpush1.msra.mxu0 0.0
        %7576 = vmatprep.mubr.f32.mxu0 0.0
        %7577 = vmatmul.mubr.f32.gmra.mrb[0].mxu0 %v7501
        %v7578 = vpop.f32.mrb[0].mxu0
        %v7579 = vadd.f32 %v7496, %v7578
        %v7580 = vpop.f32.mrb[0].mxu0
        %7581 = vmatprep.mubr.f32.mxu0 0.0
        %7582 = vmatmul.mubr.f32.gmra.mrb[0].mxu0 %v7504
        %v7583 = vpop.f32.mrb[0].mxu0
        %v7584 = vadd.f32 %v7497, %v7583
        %v7585 = vpop.f32.mrb[0].mxu0
        %7586 = vmatprep.mubr.f32.mxu0 0.0
        %7587 = vmatmul.mubr.f32.gmra.mrb[0].mxu0 %v7507
        %v7588 = vpop.f32.mrb[0].mxu0
        %v7589 = vadd.f32 %v7498, %v7588
        %v7590 = vpop.f32.mrb[0].mxu0
        %7591 = vmatprep.mubr.f32.mxu0 0.0
        %7592 = vmatmul.mubr.f32.gmra.mrb[0].mxu0 %v7510
        %v7593 = vpop.f32.mrb[0].mxu0
        %v7594 = vadd.f32 %v7499, %v7593
        %v7595 = vpop.f32.mrb[0].mxu0
        %7596 = vdwg.mxu0
        %7597 = vst.msk [vmem:[%s352] sm:$0xff] %vm663, %v7579
        %7598 = vst.msk [vmem:[%s352 + $0x8] sm:$0xff] %vm663, %v7584
        %7599 = vst.msk [vmem:[%s352 + $0x10] sm:$0xff] %vm663, %v7589
        %7600 = vst.msk [vmem:[%s352 + $0x18] sm:$0xff] %vm663, %v7594
        %p7601 = scmp.lt.s32.totalorder %s23, 1
        %s7602 = scalar_select %p7601, %s23, 1
        %s7603 = smul.addr %s7602, 4
        %s7604 = smul.addr %s7603, 8
        %s7605 = scalar_lea.vmem %s8, %s7604
        // Predicated region
        $region65: #{tpu_custom_call.1} parent=51 // pred_check
          %p7606 = pneg %p214
        $region66: #{tpu_custom_call.1} parent=51 // pred_check_branch
          %7608 = sbr.rel (%p7606) target = $region68
        $region67: #{tpu_custom_call.1} parent=51 // pred_region
          _
        $region68: #{tpu_custom_call.1} parent=51 // pred_fallthru
          _
      $region52: #{tpu_custom_call.1} parent=5 // pred_fallthru
        _
      %p7609 = scmp.le.s32.totalorder 2, %s18
      // Predicated region
      $region69: #{tpu_custom_call.1} parent=5 // pred_check
        %p7610 = pneg %p7609
      $region70: #{tpu_custom_call.1} parent=5 // pred_check_branch
        %7612 = sbr.rel (%p7610) target = $region72
      $region71: #{tpu_custom_call.1} parent=5 // pred_region
        %s7613 = ssub.s32 %s18, 2
        // Predicated region
        $region73: #{tpu_custom_call.1} parent=71 // pred_check
          %p7614 = pneg %p220
        $region74: #{tpu_custom_call.1} parent=71 // pred_check_branch
          %7616 = sbr.rel (%p7614) target = $region76
        $region75: #{tpu_custom_call.1} parent=71 // pred_region
          %p7617 = scmp.lt.s32.totalorder %s24, 1
          %s7618 = scalar_select %p7617, %s24, 1
          %s7619 = smul.addr %s7618, 4
          %s7620 = smul.addr %s7619, 8
          %s7621 = scalar_lea.vmem %s8, %s7620
        $region76: #{tpu_custom_call.1} parent=71 // pred_fallthru
          _
      $region72: #{tpu_custom_call.1} parent=5 // pred_fallthru
        _
    $region6: #{tpu_custom_call.1} parent=1 // loop_footer
      %s22 = sadd.s32 1, %s18
    $region7: #{tpu_custom_call.1} parent=1 // loop_footer_branch
      %17 = sbr.rel target = $region3
    $region8: #{tpu_custom_call.1} parent=1 // loop_exit
      _
    %7622 = vsyncpa [#allocation7], 1
    %s7623 = scalar_lea.sflag [#allocation7], 1
    %7624 = vsyncpa %s7623, 1
    %7625 = vsyncpa [#allocation9], 1

</llo_original>
